<compile_context>
chip_gen: v7x
topology: tpu7x:2x2x1
jax: 0.10.0
libtpu: 0.0.40
codegen_flags: <defaults>
</compile_context>

<pallas_src>
import jax
import jax.numpy as jnp
from jax import lax
from jax.experimental import pallas as pl
from jax.experimental.pallas import tpu as pltpu


# ----------------------------------------------------------------------------
# Small synthetic Wav2Vec2-style config (eval mode => dropout identity)
# ----------------------------------------------------------------------------
HIDDEN = 32        # encoder hidden size
CONV_C = 16        # feature-extractor channels
N_HEADS = 4
HEAD_D = HIDDEN // N_HEADS
FFN = 64
N_LAYERS = 2
CONV1_K, CONV1_S = 10, 5
CONV2_K, CONV2_S = 2, 2
LN_EPS = 1e-5
ATTN_SCALE = 1.0 / (HEAD_D ** 0.5)

AUDIO_LEN = 325
T1 = (AUDIO_LEN - CONV1_K) // CONV1_S + 1      # 64 conv1 frames
T2 = (T1 - CONV2_K) // CONV2_S + 1             # 32 conv2 / encoder frames
assert T1 == 2 * T2

BB = 4                                         # batch elements per grid step
BBT2 = BB * T2                                 # 128 encoder rows per step
NHT2 = N_HEADS * T2                            # 128 packed-head lane width


# ----------------------------------------------------------------------------
# In-kernel helpers (all elementwise math kept in f32 - v5e has no bf16 VPU)
# ----------------------------------------------------------------------------
def _gelu(x):
    # TODO(synk): HF/PyTorch Wav2Vec2 uses exact erf GELU; tanh approximation
    # kept (erf has no guaranteed Mosaic lowering) => small numeric delta.
    return jax.nn.gelu(x, approximate=True)


def _layernorm(x, g, b):
    mean = jnp.mean(x, axis=-1, keepdims=True)
    var = jnp.mean(jnp.square(x - mean), axis=-1, keepdims=True)
    return (x - mean) * lax.rsqrt(var + LN_EPS) * g + b


# ----------------------------------------------------------------------------
# Fused whole-forward kernel (one grid step == BB batch elements)
# ----------------------------------------------------------------------------
def _wav2vec2_fused_kernel(
    patches_ref,                    # (1, 2*BBT2, CONV1_K)  rows: [parity, batch, time]
    c1w_ref,                        # (CONV1_K, C)        bf16
    c2w_ref,                        # (2, C, C)           bf16  (even/odd taps)
    fpw_ref,                        # (C, H)              bf16
    wqkv_ref,                       # (L, H, 3H)          bf16
    wo_ref,                         # (L, H, H)           bf16
    w1_ref,                         # (L, H, F)           bf16
    w2_ref,                         # (L, F, H)           bf16
    gsm_ref,                        # (9, 128)  f32 packed global bias/LN vectors
    lsm_ref,                        # (L, 8, 128) f32 packed per-layer bias/LN vectors
    erep_ref,                       # (T2, NHT2)  bf16  head-replication one-hot
    maskv_ref,                      # (NHT2, H)   bf16  block-diag head mask
    onesbd_ref,                     # (NHT2, NHT2) bf16 block-diag ones (softmax denom)
    out_ref,                        # (1, BB, H)  f32
):
    f32 = jnp.float32
    bf16 = jnp.bfloat16

    gsm = gsm_ref[...]
    erep = erep_ref[...]
    maskv = maskv_ref[...]
    onesbd = onesbd_ref[...]

    # ---- feature extractor: conv1 as flattened (im2col patches) @ W1 + b1 ----
    p1 = patches_ref[0].astype(bf16)                                     # (2*BBT2, K1)
    h1 = (jnp.dot(p1, c1w_ref[...], preferred_element_type=f32)
          + gsm[0:1, :CONV_C])                                           # (2*BBT2, C)

    # ---- GroupNorm(num_groups == C): per-(batch, channel) stats over time.
    # Rows were pre-ordered [even frames | odd frames] (batch-major inside),
    # so each batch element's T1 frames are two contiguous T2-row chunks. ----
    he = h1[:BBT2].reshape(BB, T2, CONV_C)
    ho = h1[BBT2:].reshape(BB, T2, CONV_C)
    s1 = jnp.sum(he, axis=1, keepdims=True) + jnp.sum(ho, axis=1, keepdims=True)
    s2 = (jnp.sum(he * he, axis=1, keepdims=True)
          + jnp.sum(ho * ho, axis=1, keepdims=True))
    mean = s1 * (1.0 / T1)
    var = s2 * (1.0 / T1) - mean * mean
    inv = lax.rsqrt(var + LN_EPS)
    gn_g = gsm[1:2, :CONV_C]
    gn_b = gsm[2:3, :CONV_C]
    he = _gelu(((he - mean) * inv).reshape(BBT2, CONV_C) * gn_g + gn_b)  # even frames
    ho = _gelu(((ho - mean) * inv).reshape(BBT2, CONV_C) * gn_g + gn_b)  # odd frames

    # ---- conv2 (kernel=2, stride=2): taps are exactly (even, odd) frames,
    # already separated by the row ordering -> two plain matmuls, no masks. ----
    h2 = (jnp.dot(he.astype(bf16), c2w_ref[0], preferred_element_type=f32)
          + jnp.dot(ho.astype(bf16), c2w_ref[1], preferred_element_type=f32)
          + gsm[3:4, :CONV_C])
    h2 = _gelu(h2)                                                       # (BBT2, C)

    # ---- feature projection: LN -> Linear -> encoder input LN ----
    h2 = _layernorm(h2, gsm[4:5, :CONV_C], gsm[5:6, :CONV_C])
    x = (jnp.dot(h2.astype(bf16), fpw_ref[...], preferred_element_type=f32)
         + gsm[6:7, :HIDDEN])
    # TODO(synk): the real Wav2Vec2 positional conv embedding (grouped conv1d
    # with weight norm) is omitted in this synthetic base model.
    x = _layernorm(x, gsm[7:8, :HIDDEN], gsm[8:9, :HIDDEN])              # (BBT2, H)

    # ---- transformer encoder layers (post-norm), everything VMEM-resident ----
    for l in range(N_LAYERS):
        ls = lsm_ref[l]                                                  # (8, 128) f32
        qkv = (jnp.dot(x.astype(bf16), wqkv_ref[l], preferred_element_type=f32)
               + ls[0:1, :3 * HIDDEN])                                   # (BBT2, 3H)
        q_all = qkv[:, :HIDDEN] * ATTN_SCALE
        k_all = qkv[:, HIDDEN:2 * HIDDEN].astype(bf16)
        v_all = qkv[:, 2 * HIDDEN:].astype(bf16)

        # Packed all-head attention per batch element (no cross-batch attention).
        outs = []
        for b in range(BB):
            r0 = b * T2
            q = q_all[r0:r0 + T2].astype(bf16)                           # (T2, H)
            k = k_all[r0:r0 + T2]
            v = v_all[r0:r0 + T2]
            # Block-diagonal K / V: row block h holds only head-h columns.
            kbd = (lax.dot_general(erep, k, (((0,), (0,)), ((), ())),
                                   preferred_element_type=f32) * maskv).astype(bf16)
            vbd = (lax.dot_general(erep, v, (((0,), (0,)), ((), ())),
                                   preferred_element_type=f32) * maskv).astype(bf16)
            # All heads' scores in one lane-dense matmul: s[t, h*T2+t'] = q_h(t).k_h(t')
            s = lax.dot_general(q, kbd, (((1,), (1,)), ((), ())),
                                preferred_element_type=f32)              # (T2, NHT2)
            # Global row max is constant within each head block => softmax is
            # mathematically exact (underflow would need a >80 score gap).
            m = jnp.max(s, axis=-1, keepdims=True)
            p = jnp.exp(s - m)
            denom = jnp.dot(p.astype(bf16), onesbd,
                            preferred_element_type=f32)                  # block sums
            pn = (p * pl.reciprocal(denom, approx=True)).astype(bf16)
            # Output lands directly in (T2, H) head-column layout: no concat.
            outs.append(jnp.dot(pn, vbd, preferred_element_type=f32))    # (T2, H)
        attn = jnp.concatenate(outs, axis=0)                             # (BBT2, H)

        attn = (jnp.dot(attn.astype(bf16), wo_ref[l], preferred_element_type=f32)
                + ls[1:2, :HIDDEN])
        x = _layernorm(x + attn, ls[2:3, :HIDDEN], ls[3:4, :HIDDEN])
        ff = _gelu(jnp.dot(x.astype(bf16), w1_ref[l], preferred_element_type=f32)
                   + ls[4:5, :FFN])
        ff = (jnp.dot(ff.astype(bf16), w2_ref[l], preferred_element_type=f32)
              + ls[5:6, :HIDDEN])
        x = _layernorm(x + ff, ls[6:7, :HIDDEN], ls[7:8, :HIDDEN])

    # ---- Wav2Vec2Pooled.forward: last_hidden_state.mean(dim=1) ----
    # TODO(synk): no padding mask - matches the fixed-length synthetic module.
    x3 = x.reshape(BB, T2, HIDDEN)
    out_ref[0] = jnp.mean(x3, axis=1).astype(out_ref.dtype)              # (BB, H)


# ----------------------------------------------------------------------------
# One-time weight packing (outside the jitted forward)
# ----------------------------------------------------------------------------
def pack_params(p):
    f32, bf16 = jnp.float32, jnp.bfloat16

    def rowpad(v, width=128):
        v = v.astype(f32)
        return jnp.zeros((width,), f32).at[:v.shape[0]].set(v)

    gsm = jnp.stack([
        rowpad(p["conv1_b"]), rowpad(p["gn1_g"]), rowpad(p["gn1_b"]),
        rowpad(p["conv2_b"]),
        rowpad(p["fp_ln_g"]), rowpad(p["fp_ln_b"]), rowpad(p["fp_b"]),
        rowpad(p["enc_ln_g"]), rowpad(p["enc_ln_b"]),
    ])                                                                   # (9, 128)
    lsm = jnp.stack([
        jnp.stack([rowpad(jnp.concatenate([lp["bq"], lp["bk"], lp["bv"]])),
                   rowpad(lp["bo"]), rowpad(lp["ln1_g"]), rowpad(lp["ln1_b"]),
                   rowpad(lp["b1"]), rowpad(lp["b2"]),
                   rowpad(lp["ln2_g"]), rowpad(lp["ln2_b"])])
        for lp in p["layers"]])                                          # (L, 8, 128)

    wqkv = jnp.stack([jnp.concatenate([lp["wq"], lp["wk"], lp["wv"]], axis=1)
                      for lp in p["layers"]]).astype(bf16)               # (L, H, 3H)
    wo = jnp.stack([lp["wo"] for lp in p["layers"]]).astype(bf16)
    w1 = jnp.stack([lp["w1"] for lp in p["layers"]]).astype(bf16)
    w2 = jnp.stack([lp["w2"] for lp in p["layers"]]).astype(bf16)
    conv2_w = jnp.stack([p["conv2_w"][:CONV_C],
                         p["conv2_w"][CONV_C:]]).astype(bf16)            # (2, C, C)

    # Batch-invariant attention packing constants (built once, exact in bf16).
    erep = jnp.tile(jnp.eye(T2, dtype=f32), (1, N_HEADS)).astype(bf16)   # (T2, NHT2)
    rows_h = jnp.arange(NHT2) // T2
    cols_h = jnp.arange(HIDDEN) // HEAD_D
    maskv = (rows_h[:, None] == cols_h[None, :]).astype(bf16)            # (NHT2, H)
    onesbd = (rows_h[:, None] == rows_h[None, :]).astype(bf16)           # (NHT2, NHT2)

    return dict(conv1_w=p["conv1_w"].astype(bf16), conv2_w=conv2_w,
                fp_w=p["fp_w"].astype(bf16), wqkv=wqkv, wo=wo, w1=w1, w2=w2,
                gsm=gsm, lsm=lsm, erep=erep, maskv=maskv, onesbd=onesbd)


# ----------------------------------------------------------------------------
# Wrapper: one pallas_call for the whole forward pass
# ----------------------------------------------------------------------------
@jax.jit
def wav2vec2_pooled_forward(audio, packed):
    """audio: (B, L) raw waveform -> pooled (B, HIDDEN)."""
    B, L = audio.shape
    t1 = (L - CONV1_K) // CONV1_S + 1
    assert t1 == T1 and B % BB == 0
    G = B // BB

    # im2col for conv1 (JAX glue), with frames ordered [evens | odds] per batch
    # element so the in-kernel conv2 de-interleave is a free contiguous slice.
    t_order = jnp.concatenate([jnp.arange(0, T1, 2), jnp.arange(1, T1, 2)])
    idx = t_order[:, None] * CONV1_S + jnp.arange(CONV1_K)[None, :]
    patches = audio[:, idx].astype(jnp.float32)                          # (B, T1, K1)
    # -> (G, 2*BBT2, K1) with row order [parity, batch-within-block, time]
    patches = patches.reshape(G, BB, 2, T2, CONV1_K)
    patches = patches.transpose(0, 2, 1, 3, 4).reshape(G, 2 * BBT2, CONV1_K)

    def full_spec(a):
        nd = a.ndim
        return pl.BlockSpec(a.shape, lambda g, _nd=nd: (0,) * _nd)

    weights = [packed[n] for n in
               ("conv1_w", "conv2_w", "fp_w", "wqkv", "wo", "w1", "w2",
                "gsm", "lsm", "erep", "maskv", "onesbd")]
    in_specs = ([pl.BlockSpec((1, 2 * BBT2, CONV1_K), lambda g: (g, 0, 0))]
                + [full_spec(a) for a in weights])

    pooled = pl.pallas_call(
        _wav2vec2_fused_kernel,
        out_shape=jax.ShapeDtypeStruct((G, BB, HIDDEN), jnp.float32),
        grid=(G,),
        in_specs=in_specs,
        out_specs=pl.BlockSpec((1, BB, HIDDEN), lambda g: (g, 0, 0)),
        compiler_params=pltpu.CompilerParams(
            dimension_semantics=("parallel",)),   # v7x: shard grid across 2 TCs
    )(patches, *weights)
    return pooled.reshape(B, HIDDEN)


# ----------------------------------------------------------------------------
# Deterministic synthetic parameters (same init as the original script)
# ----------------------------------------------------------------------------
def init_params(key):
    def dense(k, fi, fo):
        return jax.random.normal(k, (fi, fo), jnp.float32) * (1.0 / jnp.sqrt(fi))

    ks = iter(jax.random.split(key, 64))
    p = {}
    p["conv1_w"] = dense(next(ks), CONV1_K * 1, CONV_C)
    p["conv1_b"] = jnp.zeros((CONV_C,), jnp.float32)
    p["gn1_g"] = jnp.ones((CONV_C,), jnp.float32)
    p["gn1_b"] = jnp.zeros((CONV_C,), jnp.float32)
    p["conv2_w"] = dense(next(ks), CONV2_K * CONV_C, CONV_C)
    p["conv2_b"] = jnp.zeros((CONV_C,), jnp.float32)
    p["fp_ln_g"] = jnp.ones((CONV_C,), jnp.float32)
    p["fp_ln_b"] = jnp.zeros((CONV_C,), jnp.float32)
    p["fp_w"] = dense(next(ks), CONV_C, HIDDEN)
    p["fp_b"] = jnp.zeros((HIDDEN,), jnp.float32)
    p["enc_ln_g"] = jnp.ones((HIDDEN,), jnp.float32)
    p["enc_ln_b"] = jnp.zeros((HIDDEN,), jnp.float32)
    p["layers"] = []
    for _ in range(N_LAYERS):
        lp = {
            "wq": dense(next(ks), HIDDEN, HIDDEN), "bq": jnp.zeros((HIDDEN,), jnp.float32),
            "wk": dense(next(ks), HIDDEN, HIDDEN), "bk": jnp.zeros((HIDDEN,), jnp.float32),
            "wv": dense(next(ks), HIDDEN, HIDDEN), "bv": jnp.zeros((HIDDEN,), jnp.float32),
            "wo": dense(next(ks), HIDDEN, HIDDEN), "bo": jnp.zeros((HIDDEN,), jnp.float32),
            "ln1_g": jnp.ones((HIDDEN,), jnp.float32), "ln1_b": jnp.zeros((HIDDEN,), jnp.float32),
            "w1": dense(next(ks), HIDDEN, FFN), "b1": jnp.zeros((FFN,), jnp.float32),
            "w2": dense(next(ks), FFN, HIDDEN), "b2": jnp.zeros((HIDDEN,), jnp.float32),
            "ln2_g": jnp.ones((HIDDEN,), jnp.float32), "ln2_b": jnp.zeros((HIDDEN,), jnp.float32),
        }
        p["layers"].append(lp)
    return p


# ----------------------------------------------------------------------------
# Main
# ----------------------------------------------------------------------------
if __name__ == "__main__":
    key = jax.random.PRNGKey(0)
    k_param, k_audio = jax.random.split(key)

    B, L = 8, AUDIO_LEN          # T1 = 64, T2 = 32; grid = B/BB = 2 steps of 4
    params = init_params(k_param)
    packed = pack_params(params)              # one-time packing, outside jit
    audio = jax.random.normal(k_audio, (B, L), jnp.float32)

    pooled = wav2vec2_pooled_forward(audio, packed)
    pooled = jax.block_until_ready(pooled)
    assert pooled.shape == (B, HIDDEN) and pooled.dtype == jnp.float32
    assert bool(jnp.all(jnp.isfinite(pooled)))
    print("KERNEL_OK")
</pallas_src>

<mosaic_0001>
module attributes {stable_mosaic.version = 11 : i64} {
  func.func @_wav2vec2_fused_kernel(%arg0: i32, %arg1: memref<1x256x10xf32, #tpu.memory_space<vmem>>, %arg2: memref<10x16xbf16, #tpu.memory_space<vmem>>, %arg3: memref<2x16x16xbf16, #tpu.memory_space<vmem>>, %arg4: memref<16x32xbf16, #tpu.memory_space<vmem>>, %arg5: memref<2x32x96xbf16, #tpu.memory_space<vmem>>, %arg6: memref<2x32x32xbf16, #tpu.memory_space<vmem>>, %arg7: memref<2x32x64xbf16, #tpu.memory_space<vmem>>, %arg8: memref<2x64x32xbf16, #tpu.memory_space<vmem>>, %arg9: memref<9x128xf32, #tpu.memory_space<vmem>>, %arg10: memref<2x8x128xf32, #tpu.memory_space<vmem>>, %arg11: memref<32x128xbf16, #tpu.memory_space<vmem>>, %arg12: memref<128x32xbf16, #tpu.memory_space<vmem>>, %arg13: memref<128x128xbf16, #tpu.memory_space<vmem>>, %arg14: memref<1x4x32xf32, #tpu.memory_space<vmem>>) attributes {dimension_semantics = [#tpu.dimension_semantics<parallel>], iteration_bounds = array<i64: 2>, scalar_prefetch = 0 : i64, scratch_operands = 0 : i64, tpu.core_type = #tpu.core_type<tc>, window_params = [{transform_indices = @transform_0, window_bounds = array<i64: 1, 256, 10>}, {pipeline_mode = #tpu.pipeline_mode<synchronous>, transform_indices = @transform_1, window_bounds = array<i64: 10, 16>}, {pipeline_mode = #tpu.pipeline_mode<synchronous>, transform_indices = @transform_2, window_bounds = array<i64: 2, 16, 16>}, {pipeline_mode = #tpu.pipeline_mode<synchronous>, transform_indices = @transform_3, window_bounds = array<i64: 16, 32>}, {pipeline_mode = #tpu.pipeline_mode<synchronous>, transform_indices = @transform_4, window_bounds = array<i64: 2, 32, 96>}, {pipeline_mode = #tpu.pipeline_mode<synchronous>, transform_indices = @transform_5, window_bounds = array<i64: 2, 32, 32>}, {pipeline_mode = #tpu.pipeline_mode<synchronous>, transform_indices = @transform_6, window_bounds = array<i64: 2, 32, 64>}, {pipeline_mode = #tpu.pipeline_mode<synchronous>, transform_indices = @transform_7, window_bounds = array<i64: 2, 64, 32>}, {pipeline_mode = #tpu.pipeline_mode<synchronous>, transform_indices = @transform_8, window_bounds = array<i64: 9, 128>}, {pipeline_mode = #tpu.pipeline_mode<synchronous>, transform_indices = @transform_9, window_bounds = array<i64: 2, 8, 128>}, {pipeline_mode = #tpu.pipeline_mode<synchronous>, transform_indices = @transform_10, window_bounds = array<i64: 32, 128>}, {pipeline_mode = #tpu.pipeline_mode<synchronous>, transform_indices = @transform_11, window_bounds = array<i64: 128, 32>}, {pipeline_mode = #tpu.pipeline_mode<synchronous>, transform_indices = @transform_12, window_bounds = array<i64: 128, 128>}, {transform_indices = @transform_13, window_bounds = array<i64: 1, 4, 32>}]} {
    %c0 = arith.constant 0 : index
    %c0_0 = arith.constant 0 : index
    %0 = vector.load %arg9[%c0, %c0_0] : memref<9x128xf32, #tpu.memory_space<vmem>>, vector<9x128xf32>
    %c0_1 = arith.constant 0 : index
    %c0_2 = arith.constant 0 : index
    %1 = vector.load %arg11[%c0_1, %c0_2] : memref<32x128xbf16, #tpu.memory_space<vmem>>, vector<32x128xbf16>
    %c0_3 = arith.constant 0 : index
    %c0_4 = arith.constant 0 : index
    %2 = vector.load %arg12[%c0_3, %c0_4] : memref<128x32xbf16, #tpu.memory_space<vmem>>, vector<128x32xbf16>
    %c0_5 = arith.constant 0 : index
    %c0_6 = arith.constant 0 : index
    %3 = vector.load %arg13[%c0_5, %c0_6] : memref<128x128xbf16, #tpu.memory_space<vmem>>, vector<128x128xbf16>
    %c0_7 = arith.constant 0 : index
    %c0_8 = arith.constant 0 : index
    %c0_9 = arith.constant 0 : index
    %4 = vector.load %arg1[%c0_7, %c0_8, %c0_9] : memref<1x256x10xf32, #tpu.memory_space<vmem>>, vector<1x256x10xf32>
    %5 = vector.shape_cast %4 : vector<1x256x10xf32> to vector<256x10xf32>
    %6 = arith.truncf %5 : vector<256x10xf32> to vector<256x10xbf16>
    %c0_10 = arith.constant 0 : index
    %c0_11 = arith.constant 0 : index
    %7 = vector.load %arg2[%c0_10, %c0_11] : memref<10x16xbf16, #tpu.memory_space<vmem>>, vector<10x16xbf16>
    %cst = arith.constant dense<0.000000e+00> : vector<256x16xf32>
    %8 = tpu.matmul %6, %7, %cst {dimension_numbers = #tpu.dot_dimension_numbers<[1], [0], [0], [1], [0, 0, 1, 1], [], []>} : vector<256x10xbf16>, vector<10x16xbf16>, vector<256x16xf32> -> vector<256x16xf32>
    %9 = vector.extract_strided_slice %0 {offsets = [0, 0], sizes = [1, 16], strides = [1, 1]} : vector<9x128xf32> to vector<1x16xf32>
    %10 = vector.broadcast %9 : vector<1x16xf32> to vector<256x16xf32>
    %11 = arith.addf %8, %10 : vector<256x16xf32>
    %12 = vector.extract_strided_slice %11 {offsets = [0, 0], sizes = [128, 16], strides = [1, 1]} : vector<256x16xf32> to vector<128x16xf32>
    %13 = vector.shape_cast %12 : vector<128x16xf32> to vector<4x32x16xf32>
    %14 = vector.extract_strided_slice %11 {offsets = [128, 0], sizes = [128, 16], strides = [1, 1]} : vector<256x16xf32> to vector<128x16xf32>
    %15 = vector.shape_cast %14 : vector<128x16xf32> to vector<4x32x16xf32>
    %cst_12 = arith.constant dense<0.000000e+00> : vector<4x16xf32>
    %16 = vector.multi_reduction <add>, %13, %cst_12 [1] : vector<4x32x16xf32> to vector<4x16xf32>
    %17 = vector.shape_cast %16 : vector<4x16xf32> to vector<4x1x16xf32>
    %cst_13 = arith.constant dense<0.000000e+00> : vector<4x16xf32>
    %18 = vector.multi_reduction <add>, %15, %cst_13 [1] : vector<4x32x16xf32> to vector<4x16xf32>
    %19 = vector.shape_cast %18 : vector<4x16xf32> to vector<4x1x16xf32>
    %20 = arith.addf %17, %19 : vector<4x1x16xf32>
    %21 = arith.mulf %13, %13 : vector<4x32x16xf32>
    %cst_14 = arith.constant dense<0.000000e+00> : vector<4x16xf32>
    %22 = vector.multi_reduction <add>, %21, %cst_14 [1] : vector<4x32x16xf32> to vector<4x16xf32>
    %23 = vector.shape_cast %22 : vector<4x16xf32> to vector<4x1x16xf32>
    %24 = arith.mulf %15, %15 : vector<4x32x16xf32>
    %cst_15 = arith.constant dense<0.000000e+00> : vector<4x16xf32>
    %25 = vector.multi_reduction <add>, %24, %cst_15 [1] : vector<4x32x16xf32> to vector<4x16xf32>
    %26 = vector.shape_cast %25 : vector<4x16xf32> to vector<4x1x16xf32>
    %27 = arith.addf %23, %26 : vector<4x1x16xf32>
    %cst_16 = arith.constant 1.562500e-02 : f32
    %28 = vector.broadcast %cst_16 : f32 to vector<4x1x16xf32>
    %29 = arith.mulf %20, %28 : vector<4x1x16xf32>
    %cst_17 = arith.constant 1.562500e-02 : f32
    %30 = vector.broadcast %cst_17 : f32 to vector<4x1x16xf32>
    %31 = arith.mulf %27, %30 : vector<4x1x16xf32>
    %32 = arith.mulf %29, %29 : vector<4x1x16xf32>
    %33 = arith.subf %31, %32 : vector<4x1x16xf32>
    %cst_18 = arith.constant 9.99999974E-6 : f32
    %34 = vector.broadcast %cst_18 : f32 to vector<4x1x16xf32>
    %35 = arith.addf %33, %34 : vector<4x1x16xf32>
    %36 = math.rsqrt %35 : vector<4x1x16xf32>
    %37 = vector.extract_strided_slice %0 {offsets = [1, 0], sizes = [1, 16], strides = [1, 1]} : vector<9x128xf32> to vector<1x16xf32>
    %38 = vector.extract_strided_slice %0 {offsets = [2, 0], sizes = [1, 16], strides = [1, 1]} : vector<9x128xf32> to vector<1x16xf32>
    %39 = vector.broadcast %29 : vector<4x1x16xf32> to vector<4x32x16xf32>
    %40 = arith.subf %13, %39 : vector<4x32x16xf32>
    %41 = vector.broadcast %36 : vector<4x1x16xf32> to vector<4x32x16xf32>
    %42 = arith.mulf %40, %41 : vector<4x32x16xf32>
    %43 = vector.shape_cast %42 : vector<4x32x16xf32> to vector<128x16xf32>
    %44 = vector.broadcast %37 : vector<1x16xf32> to vector<128x16xf32>
    %45 = arith.mulf %43, %44 : vector<128x16xf32>
    %46 = vector.broadcast %38 : vector<1x16xf32> to vector<128x16xf32>
    %47 = arith.addf %45, %46 : vector<128x16xf32>
    %48 = arith.mulf %47, %47 : vector<128x16xf32>
    %49 = arith.mulf %47, %48 : vector<128x16xf32>
    %cst_19 = arith.constant 4.471500e-02 : f32
    %50 = vector.broadcast %cst_19 : f32 to vector<128x16xf32>
    %51 = arith.mulf %50, %49 : vector<128x16xf32>
    %52 = arith.addf %47, %51 : vector<128x16xf32>
    %cst_20 = arith.constant 0.797884583 : f32
    %53 = vector.broadcast %cst_20 : f32 to vector<128x16xf32>
    %54 = arith.mulf %53, %52 : vector<128x16xf32>
    %55 = math.tanh %54 : vector<128x16xf32>
    %cst_21 = arith.constant 1.000000e+00 : f32
    %56 = vector.broadcast %cst_21 : f32 to vector<128x16xf32>
    %57 = arith.addf %56, %55 : vector<128x16xf32>
    %cst_22 = arith.constant 5.000000e-01 : f32
    %58 = vector.broadcast %cst_22 : f32 to vector<128x16xf32>
    %59 = arith.mulf %58, %57 : vector<128x16xf32>
    %60 = arith.mulf %47, %59 : vector<128x16xf32>
    %61 = vector.broadcast %29 : vector<4x1x16xf32> to vector<4x32x16xf32>
    %62 = arith.subf %15, %61 : vector<4x32x16xf32>
    %63 = vector.broadcast %36 : vector<4x1x16xf32> to vector<4x32x16xf32>
    %64 = arith.mulf %62, %63 : vector<4x32x16xf32>
    %65 = vector.shape_cast %64 : vector<4x32x16xf32> to vector<128x16xf32>
    %66 = vector.broadcast %37 : vector<1x16xf32> to vector<128x16xf32>
    %67 = arith.mulf %65, %66 : vector<128x16xf32>
    %68 = vector.broadcast %38 : vector<1x16xf32> to vector<128x16xf32>
    %69 = arith.addf %67, %68 : vector<128x16xf32>
    %70 = arith.mulf %69, %69 : vector<128x16xf32>
    %71 = arith.mulf %69, %70 : vector<128x16xf32>
    %cst_23 = arith.constant 4.471500e-02 : f32
    %72 = vector.broadcast %cst_23 : f32 to vector<128x16xf32>
    %73 = arith.mulf %72, %71 : vector<128x16xf32>
    %74 = arith.addf %69, %73 : vector<128x16xf32>
    %cst_24 = arith.constant 0.797884583 : f32
    %75 = vector.broadcast %cst_24 : f32 to vector<128x16xf32>
    %76 = arith.mulf %75, %74 : vector<128x16xf32>
    %77 = math.tanh %76 : vector<128x16xf32>
    %cst_25 = arith.constant 1.000000e+00 : f32
    %78 = vector.broadcast %cst_25 : f32 to vector<128x16xf32>
    %79 = arith.addf %78, %77 : vector<128x16xf32>
    %cst_26 = arith.constant 5.000000e-01 : f32
    %80 = vector.broadcast %cst_26 : f32 to vector<128x16xf32>
    %81 = arith.mulf %80, %79 : vector<128x16xf32>
    %82 = arith.mulf %69, %81 : vector<128x16xf32>
    %83 = arith.truncf %60 : vector<128x16xf32> to vector<128x16xbf16>
    %c0_27 = arith.constant 0 : index
    %c0_28 = arith.constant 0 : index
    %c0_29 = arith.constant 0 : index
    %84 = vector.load %arg3[%c0_27, %c0_28, %c0_29] : memref<2x16x16xbf16, #tpu.memory_space<vmem>>, vector<1x16x16xbf16>
    %85 = vector.shape_cast %84 : vector<1x16x16xbf16> to vector<16x16xbf16>
    %cst_30 = arith.constant dense<0.000000e+00> : vector<128x16xf32>
    %86 = tpu.matmul %83, %85, %cst_30 {dimension_numbers = #tpu.dot_dimension_numbers<[1], [0], [0], [1], [0, 0, 1, 1], [], []>} : vector<128x16xbf16>, vector<16x16xbf16>, vector<128x16xf32> -> vector<128x16xf32>
    %87 = arith.truncf %82 : vector<128x16xf32> to vector<128x16xbf16>
    %c1 = arith.constant 1 : index
    %c0_31 = arith.constant 0 : index
    %c0_32 = arith.constant 0 : index
    %88 = vector.load %arg3[%c1, %c0_31, %c0_32] : memref<2x16x16xbf16, #tpu.memory_space<vmem>>, vector<1x16x16xbf16>
    %89 = vector.shape_cast %88 : vector<1x16x16xbf16> to vector<16x16xbf16>
    %cst_33 = arith.constant dense<0.000000e+00> : vector<128x16xf32>
    %90 = tpu.matmul %87, %89, %cst_33 {dimension_numbers = #tpu.dot_dimension_numbers<[1], [0], [0], [1], [0, 0, 1, 1], [], []>} : vector<128x16xbf16>, vector<16x16xbf16>, vector<128x16xf32> -> vector<128x16xf32>
    %91 = arith.addf %86, %90 : vector<128x16xf32>
    %92 = vector.extract_strided_slice %0 {offsets = [3, 0], sizes = [1, 16], strides = [1, 1]} : vector<9x128xf32> to vector<1x16xf32>
    %93 = vector.broadcast %92 : vector<1x16xf32> to vector<128x16xf32>
    %94 = arith.addf %91, %93 : vector<128x16xf32>
    %95 = arith.mulf %94, %94 : vector<128x16xf32>
    %96 = arith.mulf %94, %95 : vector<128x16xf32>
    %cst_34 = arith.constant 4.471500e-02 : f32
    %97 = vector.broadcast %cst_34 : f32 to vector<128x16xf32>
    %98 = arith.mulf %97, %96 : vector<128x16xf32>
    %99 = arith.addf %94, %98 : vector<128x16xf32>
    %cst_35 = arith.constant 0.797884583 : f32
    %100 = vector.broadcast %cst_35 : f32 to vector<128x16xf32>
    %101 = arith.mulf %100, %99 : vector<128x16xf32>
    %102 = math.tanh %101 : vector<128x16xf32>
    %cst_36 = arith.constant 1.000000e+00 : f32
    %103 = vector.broadcast %cst_36 : f32 to vector<128x16xf32>
    %104 = arith.addf %103, %102 : vector<128x16xf32>
    %cst_37 = arith.constant 5.000000e-01 : f32
    %105 = vector.broadcast %cst_37 : f32 to vector<128x16xf32>
    %106 = arith.mulf %105, %104 : vector<128x16xf32>
    %107 = arith.mulf %94, %106 : vector<128x16xf32>
    %108 = vector.extract_strided_slice %0 {offsets = [4, 0], sizes = [1, 16], strides = [1, 1]} : vector<9x128xf32> to vector<1x16xf32>
    %109 = vector.extract_strided_slice %0 {offsets = [5, 0], sizes = [1, 16], strides = [1, 1]} : vector<9x128xf32> to vector<1x16xf32>
    %cst_38 = arith.constant dense<0.000000e+00> : vector<128xf32>
    %110 = vector.multi_reduction <add>, %107, %cst_38 [1] : vector<128x16xf32> to vector<128xf32>
    %111 = vector.shape_cast %110 : vector<128xf32> to vector<128x1xf32>
    %cst_39 = arith.constant 1.600000e+01 : f32
    %112 = vector.broadcast %cst_39 : f32 to vector<128x1xf32>
    %113 = arith.divf %111, %112 : vector<128x1xf32>
    %114 = vector.broadcast %113 : vector<128x1xf32> to vector<128x16xf32>
    %115 = arith.subf %107, %114 : vector<128x16xf32>
    %116 = arith.mulf %115, %115 : vector<128x16xf32>
    %cst_40 = arith.constant dense<0.000000e+00> : vector<128xf32>
    %117 = vector.multi_reduction <add>, %116, %cst_40 [1] : vector<128x16xf32> to vector<128xf32>
    %118 = vector.shape_cast %117 : vector<128xf32> to vector<128x1xf32>
    %cst_41 = arith.constant 1.600000e+01 : f32
    %119 = vector.broadcast %cst_41 : f32 to vector<128x1xf32>
    %120 = arith.divf %118, %119 : vector<128x1xf32>
    %121 = vector.broadcast %113 : vector<128x1xf32> to vector<128x16xf32>
    %122 = arith.subf %107, %121 : vector<128x16xf32>
    %cst_42 = arith.constant 9.99999974E-6 : f32
    %123 = vector.broadcast %cst_42 : f32 to vector<128x1xf32>
    %124 = arith.addf %120, %123 : vector<128x1xf32>
    %125 = math.rsqrt %124 : vector<128x1xf32>
    %126 = vector.broadcast %125 : vector<128x1xf32> to vector<128x16xf32>
    %127 = arith.mulf %122, %126 : vector<128x16xf32>
    %128 = vector.broadcast %108 : vector<1x16xf32> to vector<128x16xf32>
    %129 = arith.mulf %127, %128 : vector<128x16xf32>
    %130 = vector.broadcast %109 : vector<1x16xf32> to vector<128x16xf32>
    %131 = arith.addf %129, %130 : vector<128x16xf32>
    %132 = arith.truncf %131 : vector<128x16xf32> to vector<128x16xbf16>
    %c0_43 = arith.constant 0 : index
    %c0_44 = arith.constant 0 : index
    %133 = vector.load %arg4[%c0_43, %c0_44] : memref<16x32xbf16, #tpu.memory_space<vmem>>, vector<16x32xbf16>
    %cst_45 = arith.constant dense<0.000000e+00> : vector<128x32xf32>
    %134 = tpu.matmul %132, %133, %cst_45 {dimension_numbers = #tpu.dot_dimension_numbers<[1], [0], [0], [1], [0, 0, 1, 1], [], []>} : vector<128x16xbf16>, vector<16x32xbf16>, vector<128x32xf32> -> vector<128x32xf32>
    %135 = vector.extract_strided_slice %0 {offsets = [6, 0], sizes = [1, 32], strides = [1, 1]} : vector<9x128xf32> to vector<1x32xf32>
    %136 = vector.broadcast %135 : vector<1x32xf32> to vector<128x32xf32>
    %137 = arith.addf %134, %136 : vector<128x32xf32>
    %138 = vector.extract_strided_slice %0 {offsets = [7, 0], sizes = [1, 32], strides = [1, 1]} : vector<9x128xf32> to vector<1x32xf32>
    %139 = vector.extract_strided_slice %0 {offsets = [8, 0], sizes = [1, 32], strides = [1, 1]} : vector<9x128xf32> to vector<1x32xf32>
    %cst_46 = arith.constant dense<0.000000e+00> : vector<128xf32>
    %140 = vector.multi_reduction <add>, %137, %cst_46 [1] : vector<128x32xf32> to vector<128xf32>
    %141 = vector.shape_cast %140 : vector<128xf32> to vector<128x1xf32>
    %cst_47 = arith.constant 3.200000e+01 : f32
    %142 = vector.broadcast %cst_47 : f32 to vector<128x1xf32>
    %143 = arith.divf %141, %142 : vector<128x1xf32>
    %144 = vector.broadcast %143 : vector<128x1xf32> to vector<128x32xf32>
    %145 = arith.subf %137, %144 : vector<128x32xf32>
    %146 = arith.mulf %145, %145 : vector<128x32xf32>
    %cst_48 = arith.constant dense<0.000000e+00> : vector<128xf32>
    %147 = vector.multi_reduction <add>, %146, %cst_48 [1] : vector<128x32xf32> to vector<128xf32>
    %148 = vector.shape_cast %147 : vector<128xf32> to vector<128x1xf32>
    %cst_49 = arith.constant 3.200000e+01 : f32
    %149 = vector.broadcast %cst_49 : f32 to vector<128x1xf32>
    %150 = arith.divf %148, %149 : vector<128x1xf32>
    %151 = vector.broadcast %143 : vector<128x1xf32> to vector<128x32xf32>
    %152 = arith.subf %137, %151 : vector<128x32xf32>
    %cst_50 = arith.constant 9.99999974E-6 : f32
    %153 = vector.broadcast %cst_50 : f32 to vector<128x1xf32>
    %154 = arith.addf %150, %153 : vector<128x1xf32>
    %155 = math.rsqrt %154 : vector<128x1xf32>
    %156 = vector.broadcast %155 : vector<128x1xf32> to vector<128x32xf32>
    %157 = arith.mulf %152, %156 : vector<128x32xf32>
    %158 = vector.broadcast %138 : vector<1x32xf32> to vector<128x32xf32>
    %159 = arith.mulf %157, %158 : vector<128x32xf32>
    %160 = vector.broadcast %139 : vector<1x32xf32> to vector<128x32xf32>
    %161 = arith.addf %159, %160 : vector<128x32xf32>
    %c0_51 = arith.constant 0 : index
    %c0_52 = arith.constant 0 : index
    %c0_53 = arith.constant 0 : index
    %162 = vector.load %arg10[%c0_51, %c0_52, %c0_53] : memref<2x8x128xf32, #tpu.memory_space<vmem>>, vector<1x8x128xf32>
    %163 = vector.shape_cast %162 : vector<1x8x128xf32> to vector<8x128xf32>
    %164 = arith.truncf %161 : vector<128x32xf32> to vector<128x32xbf16>
    %c0_54 = arith.constant 0 : index
    %c0_55 = arith.constant 0 : index
    %c0_56 = arith.constant 0 : index
    %165 = vector.load %arg5[%c0_54, %c0_55, %c0_56] : memref<2x32x96xbf16, #tpu.memory_space<vmem>>, vector<1x32x96xbf16>
    %166 = vector.shape_cast %165 : vector<1x32x96xbf16> to vector<32x96xbf16>
    %cst_57 = arith.constant dense<0.000000e+00> : vector<128x96xf32>
    %167 = tpu.matmul %164, %166, %cst_57 {dimension_numbers = #tpu.dot_dimension_numbers<[1], [0], [0], [1], [0, 0, 1, 1], [], []>} : vector<128x32xbf16>, vector<32x96xbf16>, vector<128x96xf32> -> vector<128x96xf32>
    %168 = vector.extract_strided_slice %163 {offsets = [0, 0], sizes = [1, 96], strides = [1, 1]} : vector<8x128xf32> to vector<1x96xf32>
    %169 = vector.broadcast %168 : vector<1x96xf32> to vector<128x96xf32>
    %170 = arith.addf %167, %169 : vector<128x96xf32>
    %171 = vector.extract_strided_slice %170 {offsets = [0, 0], sizes = [128, 32], strides = [1, 1]} : vector<128x96xf32> to vector<128x32xf32>
    %cst_58 = arith.constant 0.353553385 : f32
    %172 = vector.broadcast %cst_58 : f32 to vector<128x32xf32>
    %173 = arith.mulf %171, %172 : vector<128x32xf32>
    %174 = vector.extract_strided_slice %170 {offsets = [0, 32], sizes = [128, 32], strides = [1, 1]} : vector<128x96xf32> to vector<128x32xf32>
    %175 = arith.truncf %174 : vector<128x32xf32> to vector<128x32xbf16>
    %176 = vector.extract_strided_slice %170 {offsets = [0, 64], sizes = [128, 32], strides = [1, 1]} : vector<128x96xf32> to vector<128x32xf32>
    %177 = arith.truncf %176 : vector<128x32xf32> to vector<128x32xbf16>
    %178 = vector.extract_strided_slice %173 {offsets = [0, 0], sizes = [32, 32], strides = [1, 1]} : vector<128x32xf32> to vector<32x32xf32>
    %179 = arith.truncf %178 : vector<32x32xf32> to vector<32x32xbf16>
    %180 = vector.extract_strided_slice %175 {offsets = [0, 0], sizes = [32, 32], strides = [1, 1]} : vector<128x32xbf16> to vector<32x32xbf16>
    %181 = vector.extract_strided_slice %177 {offsets = [0, 0], sizes = [32, 32], strides = [1, 1]} : vector<128x32xbf16> to vector<32x32xbf16>
    %cst_59 = arith.constant dense<0.000000e+00> : vector<128x32xf32>
    %182 = tpu.matmul %1, %180, %cst_59 {dimension_numbers = #tpu.dot_dimension_numbers<[0], [0], [1], [1], [0, 1, 1, 1], [], []>} : vector<32x128xbf16>, vector<32x32xbf16>, vector<128x32xf32> -> vector<128x32xf32>
    %183 = arith.extf %2 : vector<128x32xbf16> to vector<128x32xf32>
    %184 = arith.mulf %182, %183 : vector<128x32xf32>
    %185 = arith.truncf %184 : vector<128x32xf32> to vector<128x32xbf16>
    %cst_60 = arith.constant dense<0.000000e+00> : vector<128x32xf32>
    %186 = tpu.matmul %1, %181, %cst_60 {dimension_numbers = #tpu.dot_dimension_numbers<[0], [0], [1], [1], [0, 1, 1, 1], [], []>} : vector<32x128xbf16>, vector<32x32xbf16>, vector<128x32xf32> -> vector<128x32xf32>
    %187 = arith.extf %2 : vector<128x32xbf16> to vector<128x32xf32>
    %188 = arith.mulf %186, %187 : vector<128x32xf32>
    %189 = arith.truncf %188 : vector<128x32xf32> to vector<128x32xbf16>
    %cst_61 = arith.constant dense<0.000000e+00> : vector<32x128xf32>
    %190 = tpu.matmul %179, %185, %cst_61 {dimension_numbers = #tpu.dot_dimension_numbers<[1], [1], [0], [0], [0, 0, 1, 0], [], []>} : vector<32x32xbf16>, vector<128x32xbf16>, vector<32x128xf32> -> vector<32x128xf32>
    %cst_62 = arith.constant dense<0xFF800000> : vector<32xf32>
    %191 = vector.multi_reduction <maximumf>, %190, %cst_62 [1] : vector<32x128xf32> to vector<32xf32>
    %192 = vector.shape_cast %191 : vector<32xf32> to vector<32x1xf32>
    %193 = vector.broadcast %192 : vector<32x1xf32> to vector<32x128xf32>
    %194 = arith.subf %190, %193 : vector<32x128xf32>
    %195 = math.exp %194 : vector<32x128xf32>
    %196 = arith.truncf %195 : vector<32x128xf32> to vector<32x128xbf16>
    %cst_63 = arith.constant dense<0.000000e+00> : vector<32x128xf32>
    %197 = tpu.matmul %196, %3, %cst_63 {dimension_numbers = #tpu.dot_dimension_numbers<[1], [0], [0], [1], [0, 0, 1, 1], [], []>} : vector<32x128xbf16>, vector<128x128xbf16>, vector<32x128xf32> -> vector<32x128xf32>
    %198 = tpu.reciprocal %197 {approx = true} : vector<32x128xf32> -> vector<32x128xf32>
    %199 = arith.mulf %195, %198 : vector<32x128xf32>
    %200 = arith.truncf %199 : vector<32x128xf32> to vector<32x128xbf16>
    %cst_64 = arith.constant dense<0.000000e+00> : vector<32x32xf32>
    %201 = tpu.matmul %200, %189, %cst_64 {dimension_numbers = #tpu.dot_dimension_numbers<[1], [0], [0], [1], [0, 0, 1, 1], [], []>} : vector<32x128xbf16>, vector<128x32xbf16>, vector<32x32xf32> -> vector<32x32xf32>
    %202 = vector.extract_strided_slice %173 {offsets = [32, 0], sizes = [32, 32], strides = [1, 1]} : vector<128x32xf32> to vector<32x32xf32>
    %203 = arith.truncf %202 : vector<32x32xf32> to vector<32x32xbf16>
    %204 = vector.extract_strided_slice %175 {offsets = [32, 0], sizes = [32, 32], strides = [1, 1]} : vector<128x32xbf16> to vector<32x32xbf16>
    %205 = vector.extract_strided_slice %177 {offsets = [32, 0], sizes = [32, 32], strides = [1, 1]} : vector<128x32xbf16> to vector<32x32xbf16>
    %cst_65 = arith.constant dense<0.000000e+00> : vector<128x32xf32>
    %206 = tpu.matmul %1, %204, %cst_65 {dimension_numbers = #tpu.dot_dimension_numbers<[0], [0], [1], [1], [0, 1, 1, 1], [], []>} : vector<32x128xbf16>, vector<32x32xbf16>, vector<128x32xf32> -> vector<128x32xf32>
    %207 = arith.extf %2 : vector<128x32xbf16> to vector<128x32xf32>
    %208 = arith.mulf %206, %207 : vector<128x32xf32>
    %209 = arith.truncf %208 : vector<128x32xf32> to vector<128x32xbf16>
    %cst_66 = arith.constant dense<0.000000e+00> : vector<128x32xf32>
    %210 = tpu.matmul %1, %205, %cst_66 {dimension_numbers = #tpu.dot_dimension_numbers<[0], [0], [1], [1], [0, 1, 1, 1], [], []>} : vector<32x128xbf16>, vector<32x32xbf16>, vector<128x32xf32> -> vector<128x32xf32>
    %211 = arith.extf %2 : vector<128x32xbf16> to vector<128x32xf32>
    %212 = arith.mulf %210, %211 : vector<128x32xf32>
    %213 = arith.truncf %212 : vector<128x32xf32> to vector<128x32xbf16>
    %cst_67 = arith.constant dense<0.000000e+00> : vector<32x128xf32>
    %214 = tpu.matmul %203, %209, %cst_67 {dimension_numbers = #tpu.dot_dimension_numbers<[1], [1], [0], [0], [0, 0, 1, 0], [], []>} : vector<32x32xbf16>, vector<128x32xbf16>, vector<32x128xf32> -> vector<32x128xf32>
    %cst_68 = arith.constant dense<0xFF800000> : vector<32xf32>
    %215 = vector.multi_reduction <maximumf>, %214, %cst_68 [1] : vector<32x128xf32> to vector<32xf32>
    %216 = vector.shape_cast %215 : vector<32xf32> to vector<32x1xf32>
    %217 = vector.broadcast %216 : vector<32x1xf32> to vector<32x128xf32>
    %218 = arith.subf %214, %217 : vector<32x128xf32>
    %219 = math.exp %218 : vector<32x128xf32>
    %220 = arith.truncf %219 : vector<32x128xf32> to vector<32x128xbf16>
    %cst_69 = arith.constant dense<0.000000e+00> : vector<32x128xf32>
    %221 = tpu.matmul %220, %3, %cst_69 {dimension_numbers = #tpu.dot_dimension_numbers<[1], [0], [0], [1], [0, 0, 1, 1], [], []>} : vector<32x128xbf16>, vector<128x128xbf16>, vector<32x128xf32> -> vector<32x128xf32>
    %222 = tpu.reciprocal %221 {approx = true} : vector<32x128xf32> -> vector<32x128xf32>
    %223 = arith.mulf %219, %222 : vector<32x128xf32>
    %224 = arith.truncf %223 : vector<32x128xf32> to vector<32x128xbf16>
    %cst_70 = arith.constant dense<0.000000e+00> : vector<32x32xf32>
    %225 = tpu.matmul %224, %213, %cst_70 {dimension_numbers = #tpu.dot_dimension_numbers<[1], [0], [0], [1], [0, 0, 1, 1], [], []>} : vector<32x128xbf16>, vector<128x32xbf16>, vector<32x32xf32> -> vector<32x32xf32>
    %226 = vector.extract_strided_slice %173 {offsets = [64, 0], sizes = [32, 32], strides = [1, 1]} : vector<128x32xf32> to vector<32x32xf32>
    %227 = arith.truncf %226 : vector<32x32xf32> to vector<32x32xbf16>
    %228 = vector.extract_strided_slice %175 {offsets = [64, 0], sizes = [32, 32], strides = [1, 1]} : vector<128x32xbf16> to vector<32x32xbf16>
    %229 = vector.extract_strided_slice %177 {offsets = [64, 0], sizes = [32, 32], strides = [1, 1]} : vector<128x32xbf16> to vector<32x32xbf16>
    %cst_71 = arith.constant dense<0.000000e+00> : vector<128x32xf32>
    %230 = tpu.matmul %1, %228, %cst_71 {dimension_numbers = #tpu.dot_dimension_numbers<[0], [0], [1], [1], [0, 1, 1, 1], [], []>} : vector<32x128xbf16>, vector<32x32xbf16>, vector<128x32xf32> -> vector<128x32xf32>
    %231 = arith.extf %2 : vector<128x32xbf16> to vector<128x32xf32>
    %232 = arith.mulf %230, %231 : vector<128x32xf32>
    %233 = arith.truncf %232 : vector<128x32xf32> to vector<128x32xbf16>
    %cst_72 = arith.constant dense<0.000000e+00> : vector<128x32xf32>
    %234 = tpu.matmul %1, %229, %cst_72 {dimension_numbers = #tpu.dot_dimension_numbers<[0], [0], [1], [1], [0, 1, 1, 1], [], []>} : vector<32x128xbf16>, vector<32x32xbf16>, vector<128x32xf32> -> vector<128x32xf32>
    %235 = arith.extf %2 : vector<128x32xbf16> to vector<128x32xf32>
    %236 = arith.mulf %234, %235 : vector<128x32xf32>
    %237 = arith.truncf %236 : vector<128x32xf32> to vector<128x32xbf16>
    %cst_73 = arith.constant dense<0.000000e+00> : vector<32x128xf32>
    %238 = tpu.matmul %227, %233, %cst_73 {dimension_numbers = #tpu.dot_dimension_numbers<[1], [1], [0], [0], [0, 0, 1, 0], [], []>} : vector<32x32xbf16>, vector<128x32xbf16>, vector<32x128xf32> -> vector<32x128xf32>
    %cst_74 = arith.constant dense<0xFF800000> : vector<32xf32>
    %239 = vector.multi_reduction <maximumf>, %238, %cst_74 [1] : vector<32x128xf32> to vector<32xf32>
    %240 = vector.shape_cast %239 : vector<32xf32> to vector<32x1xf32>
    %241 = vector.broadcast %240 : vector<32x1xf32> to vector<32x128xf32>
    %242 = arith.subf %238, %241 : vector<32x128xf32>
    %243 = math.exp %242 : vector<32x128xf32>
    %244 = arith.truncf %243 : vector<32x128xf32> to vector<32x128xbf16>
    %cst_75 = arith.constant dense<0.000000e+00> : vector<32x128xf32>
    %245 = tpu.matmul %244, %3, %cst_75 {dimension_numbers = #tpu.dot_dimension_numbers<[1], [0], [0], [1], [0, 0, 1, 1], [], []>} : vector<32x128xbf16>, vector<128x128xbf16>, vector<32x128xf32> -> vector<32x128xf32>
    %246 = tpu.reciprocal %245 {approx = true} : vector<32x128xf32> -> vector<32x128xf32>
    %247 = arith.mulf %243, %246 : vector<32x128xf32>
    %248 = arith.truncf %247 : vector<32x128xf32> to vector<32x128xbf16>
    %cst_76 = arith.constant dense<0.000000e+00> : vector<32x32xf32>
    %249 = tpu.matmul %248, %237, %cst_76 {dimension_numbers = #tpu.dot_dimension_numbers<[1], [0], [0], [1], [0, 0, 1, 1], [], []>} : vector<32x128xbf16>, vector<128x32xbf16>, vector<32x32xf32> -> vector<32x32xf32>
    %250 = vector.extract_strided_slice %173 {offsets = [96, 0], sizes = [32, 32], strides = [1, 1]} : vector<128x32xf32> to vector<32x32xf32>
    %251 = arith.truncf %250 : vector<32x32xf32> to vector<32x32xbf16>
    %252 = vector.extract_strided_slice %175 {offsets = [96, 0], sizes = [32, 32], strides = [1, 1]} : vector<128x32xbf16> to vector<32x32xbf16>
    %253 = vector.extract_strided_slice %177 {offsets = [96, 0], sizes = [32, 32], strides = [1, 1]} : vector<128x32xbf16> to vector<32x32xbf16>
    %cst_77 = arith.constant dense<0.000000e+00> : vector<128x32xf32>
    %254 = tpu.matmul %1, %252, %cst_77 {dimension_numbers = #tpu.dot_dimension_numbers<[0], [0], [1], [1], [0, 1, 1, 1], [], []>} : vector<32x128xbf16>, vector<32x32xbf16>, vector<128x32xf32> -> vector<128x32xf32>
    %255 = arith.extf %2 : vector<128x32xbf16> to vector<128x32xf32>
    %256 = arith.mulf %254, %255 : vector<128x32xf32>
    %257 = arith.truncf %256 : vector<128x32xf32> to vector<128x32xbf16>
    %cst_78 = arith.constant dense<0.000000e+00> : vector<128x32xf32>
    %258 = tpu.matmul %1, %253, %cst_78 {dimension_numbers = #tpu.dot_dimension_numbers<[0], [0], [1], [1], [0, 1, 1, 1], [], []>} : vector<32x128xbf16>, vector<32x32xbf16>, vector<128x32xf32> -> vector<128x32xf32>
    %259 = arith.extf %2 : vector<128x32xbf16> to vector<128x32xf32>
    %260 = arith.mulf %258, %259 : vector<128x32xf32>
    %261 = arith.truncf %260 : vector<128x32xf32> to vector<128x32xbf16>
    %cst_79 = arith.constant dense<0.000000e+00> : vector<32x128xf32>
    %262 = tpu.matmul %251, %257, %cst_79 {dimension_numbers = #tpu.dot_dimension_numbers<[1], [1], [0], [0], [0, 0, 1, 0], [], []>} : vector<32x32xbf16>, vector<128x32xbf16>, vector<32x128xf32> -> vector<32x128xf32>
    %cst_80 = arith.constant dense<0xFF800000> : vector<32xf32>
    %263 = vector.multi_reduction <maximumf>, %262, %cst_80 [1] : vector<32x128xf32> to vector<32xf32>
    %264 = vector.shape_cast %263 : vector<32xf32> to vector<32x1xf32>
    %265 = vector.broadcast %264 : vector<32x1xf32> to vector<32x128xf32>
    %266 = arith.subf %262, %265 : vector<32x128xf32>
    %267 = math.exp %266 : vector<32x128xf32>
    %268 = arith.truncf %267 : vector<32x128xf32> to vector<32x128xbf16>
    %cst_81 = arith.constant dense<0.000000e+00> : vector<32x128xf32>
    %269 = tpu.matmul %268, %3, %cst_81 {dimension_numbers = #tpu.dot_dimension_numbers<[1], [0], [0], [1], [0, 0, 1, 1], [], []>} : vector<32x128xbf16>, vector<128x128xbf16>, vector<32x128xf32> -> vector<32x128xf32>
    %270 = tpu.reciprocal %269 {approx = true} : vector<32x128xf32> -> vector<32x128xf32>
    %271 = arith.mulf %267, %270 : vector<32x128xf32>
    %272 = arith.truncf %271 : vector<32x128xf32> to vector<32x128xbf16>
    %cst_82 = arith.constant dense<0.000000e+00> : vector<32x32xf32>
    %273 = tpu.matmul %272, %261, %cst_82 {dimension_numbers = #tpu.dot_dimension_numbers<[1], [0], [0], [1], [0, 0, 1, 1], [], []>} : vector<32x128xbf16>, vector<128x32xbf16>, vector<32x32xf32> -> vector<32x32xf32>
    %274 = tpu.concatenate %201, %225, %249, %273 in 0 : vector<32x32xf32>, vector<32x32xf32>, vector<32x32xf32>, vector<32x32xf32> -> vector<128x32xf32>
    %275 = arith.truncf %274 : vector<128x32xf32> to vector<128x32xbf16>
    %c0_83 = arith.constant 0 : index
    %c0_84 = arith.constant 0 : index
    %c0_85 = arith.constant 0 : index
    %276 = vector.load %arg6[%c0_83, %c0_84, %c0_85] : memref<2x32x32xbf16, #tpu.memory_space<vmem>>, vector<1x32x32xbf16>
    %277 = vector.shape_cast %276 : vector<1x32x32xbf16> to vector<32x32xbf16>
    %cst_86 = arith.constant dense<0.000000e+00> : vector<128x32xf32>
    %278 = tpu.matmul %275, %277, %cst_86 {dimension_numbers = #tpu.dot_dimension_numbers<[1], [0], [0], [1], [0, 0, 1, 1], [], []>} : vector<128x32xbf16>, vector<32x32xbf16>, vector<128x32xf32> -> vector<128x32xf32>
    %279 = vector.extract_strided_slice %163 {offsets = [1, 0], sizes = [1, 32], strides = [1, 1]} : vector<8x128xf32> to vector<1x32xf32>
    %280 = vector.broadcast %279 : vector<1x32xf32> to vector<128x32xf32>
    %281 = arith.addf %278, %280 : vector<128x32xf32>
    %282 = arith.addf %161, %281 : vector<128x32xf32>
    %283 = vector.extract_strided_slice %163 {offsets = [2, 0], sizes = [1, 32], strides = [1, 1]} : vector<8x128xf32> to vector<1x32xf32>
    %284 = vector.extract_strided_slice %163 {offsets = [3, 0], sizes = [1, 32], strides = [1, 1]} : vector<8x128xf32> to vector<1x32xf32>
    %cst_87 = arith.constant dense<0.000000e+00> : vector<128xf32>
    %285 = vector.multi_reduction <add>, %282, %cst_87 [1] : vector<128x32xf32> to vector<128xf32>
    %286 = vector.shape_cast %285 : vector<128xf32> to vector<128x1xf32>
    %cst_88 = arith.constant 3.200000e+01 : f32
    %287 = vector.broadcast %cst_88 : f32 to vector<128x1xf32>
    %288 = arith.divf %286, %287 : vector<128x1xf32>
    %289 = vector.broadcast %288 : vector<128x1xf32> to vector<128x32xf32>
    %290 = arith.subf %282, %289 : vector<128x32xf32>
    %291 = arith.mulf %290, %290 : vector<128x32xf32>
    %cst_89 = arith.constant dense<0.000000e+00> : vector<128xf32>
    %292 = vector.multi_reduction <add>, %291, %cst_89 [1] : vector<128x32xf32> to vector<128xf32>
    %293 = vector.shape_cast %292 : vector<128xf32> to vector<128x1xf32>
    %cst_90 = arith.constant 3.200000e+01 : f32
    %294 = vector.broadcast %cst_90 : f32 to vector<128x1xf32>
    %295 = arith.divf %293, %294 : vector<128x1xf32>
    %296 = vector.broadcast %288 : vector<128x1xf32> to vector<128x32xf32>
    %297 = arith.subf %282, %296 : vector<128x32xf32>
    %cst_91 = arith.constant 9.99999974E-6 : f32
    %298 = vector.broadcast %cst_91 : f32 to vector<128x1xf32>
    %299 = arith.addf %295, %298 : vector<128x1xf32>
    %300 = math.rsqrt %299 : vector<128x1xf32>
    %301 = vector.broadcast %300 : vector<128x1xf32> to vector<128x32xf32>
    %302 = arith.mulf %297, %301 : vector<128x32xf32>
    %303 = vector.broadcast %283 : vector<1x32xf32> to vector<128x32xf32>
    %304 = arith.mulf %302, %303 : vector<128x32xf32>
    %305 = vector.broadcast %284 : vector<1x32xf32> to vector<128x32xf32>
    %306 = arith.addf %304, %305 : vector<128x32xf32>
    %307 = arith.truncf %306 : vector<128x32xf32> to vector<128x32xbf16>
    %c0_92 = arith.constant 0 : index
    %c0_93 = arith.constant 0 : index
    %c0_94 = arith.constant 0 : index
    %308 = vector.load %arg7[%c0_92, %c0_93, %c0_94] : memref<2x32x64xbf16, #tpu.memory_space<vmem>>, vector<1x32x64xbf16>
    %309 = vector.shape_cast %308 : vector<1x32x64xbf16> to vector<32x64xbf16>
    %cst_95 = arith.constant dense<0.000000e+00> : vector<128x64xf32>
    %310 = tpu.matmul %307, %309, %cst_95 {dimension_numbers = #tpu.dot_dimension_numbers<[1], [0], [0], [1], [0, 0, 1, 1], [], []>} : vector<128x32xbf16>, vector<32x64xbf16>, vector<128x64xf32> -> vector<128x64xf32>
    %311 = vector.extract_strided_slice %163 {offsets = [4, 0], sizes = [1, 64], strides = [1, 1]} : vector<8x128xf32> to vector<1x64xf32>
    %312 = vector.broadcast %311 : vector<1x64xf32> to vector<128x64xf32>
    %313 = arith.addf %310, %312 : vector<128x64xf32>
    %314 = arith.mulf %313, %313 : vector<128x64xf32>
    %315 = arith.mulf %313, %314 : vector<128x64xf32>
    %cst_96 = arith.constant 4.471500e-02 : f32
    %316 = vector.broadcast %cst_96 : f32 to vector<128x64xf32>
    %317 = arith.mulf %316, %315 : vector<128x64xf32>
    %318 = arith.addf %313, %317 : vector<128x64xf32>
    %cst_97 = arith.constant 0.797884583 : f32
    %319 = vector.broadcast %cst_97 : f32 to vector<128x64xf32>
    %320 = arith.mulf %319, %318 : vector<128x64xf32>
    %321 = math.tanh %320 : vector<128x64xf32>
    %cst_98 = arith.constant 1.000000e+00 : f32
    %322 = vector.broadcast %cst_98 : f32 to vector<128x64xf32>
    %323 = arith.addf %322, %321 : vector<128x64xf32>
    %cst_99 = arith.constant 5.000000e-01 : f32
    %324 = vector.broadcast %cst_99 : f32 to vector<128x64xf32>
    %325 = arith.mulf %324, %323 : vector<128x64xf32>
    %326 = arith.mulf %313, %325 : vector<128x64xf32>
    %327 = arith.truncf %326 : vector<128x64xf32> to vector<128x64xbf16>
    %c0_100 = arith.constant 0 : index
    %c0_101 = arith.constant 0 : index
    %c0_102 = arith.constant 0 : index
    %328 = vector.load %arg8[%c0_100, %c0_101, %c0_102] : memref<2x64x32xbf16, #tpu.memory_space<vmem>>, vector<1x64x32xbf16>
    %329 = vector.shape_cast %328 : vector<1x64x32xbf16> to vector<64x32xbf16>
    %cst_103 = arith.constant dense<0.000000e+00> : vector<128x32xf32>
    %330 = tpu.matmul %327, %329, %cst_103 {dimension_numbers = #tpu.dot_dimension_numbers<[1], [0], [0], [1], [0, 0, 1, 1], [], []>} : vector<128x64xbf16>, vector<64x32xbf16>, vector<128x32xf32> -> vector<128x32xf32>
    %331 = vector.extract_strided_slice %163 {offsets = [5, 0], sizes = [1, 32], strides = [1, 1]} : vector<8x128xf32> to vector<1x32xf32>
    %332 = vector.broadcast %331 : vector<1x32xf32> to vector<128x32xf32>
    %333 = arith.addf %330, %332 : vector<128x32xf32>
    %334 = arith.addf %306, %333 : vector<128x32xf32>
    %335 = vector.extract_strided_slice %163 {offsets = [6, 0], sizes = [1, 32], strides = [1, 1]} : vector<8x128xf32> to vector<1x32xf32>
    %336 = vector.extract_strided_slice %163 {offsets = [7, 0], sizes = [1, 32], strides = [1, 1]} : vector<8x128xf32> to vector<1x32xf32>
    %cst_104 = arith.constant dense<0.000000e+00> : vector<128xf32>
    %337 = vector.multi_reduction <add>, %334, %cst_104 [1] : vector<128x32xf32> to vector<128xf32>
    %338 = vector.shape_cast %337 : vector<128xf32> to vector<128x1xf32>
    %cst_105 = arith.constant 3.200000e+01 : f32
    %339 = vector.broadcast %cst_105 : f32 to vector<128x1xf32>
    %340 = arith.divf %338, %339 : vector<128x1xf32>
    %341 = vector.broadcast %340 : vector<128x1xf32> to vector<128x32xf32>
    %342 = arith.subf %334, %341 : vector<128x32xf32>
    %343 = arith.mulf %342, %342 : vector<128x32xf32>
    %cst_106 = arith.constant dense<0.000000e+00> : vector<128xf32>
    %344 = vector.multi_reduction <add>, %343, %cst_106 [1] : vector<128x32xf32> to vector<128xf32>
    %345 = vector.shape_cast %344 : vector<128xf32> to vector<128x1xf32>
    %cst_107 = arith.constant 3.200000e+01 : f32
    %346 = vector.broadcast %cst_107 : f32 to vector<128x1xf32>
    %347 = arith.divf %345, %346 : vector<128x1xf32>
    %348 = vector.broadcast %340 : vector<128x1xf32> to vector<128x32xf32>
    %349 = arith.subf %334, %348 : vector<128x32xf32>
    %cst_108 = arith.constant 9.99999974E-6 : f32
    %350 = vector.broadcast %cst_108 : f32 to vector<128x1xf32>
    %351 = arith.addf %347, %350 : vector<128x1xf32>
    %352 = math.rsqrt %351 : vector<128x1xf32>
    %353 = vector.broadcast %352 : vector<128x1xf32> to vector<128x32xf32>
    %354 = arith.mulf %349, %353 : vector<128x32xf32>
    %355 = vector.broadcast %335 : vector<1x32xf32> to vector<128x32xf32>
    %356 = arith.mulf %354, %355 : vector<128x32xf32>
    %357 = vector.broadcast %336 : vector<1x32xf32> to vector<128x32xf32>
    %358 = arith.addf %356, %357 : vector<128x32xf32>
    %c1_109 = arith.constant 1 : index
    %c0_110 = arith.constant 0 : index
    %c0_111 = arith.constant 0 : index
    %359 = vector.load %arg10[%c1_109, %c0_110, %c0_111] : memref<2x8x128xf32, #tpu.memory_space<vmem>>, vector<1x8x128xf32>
    %360 = vector.shape_cast %359 : vector<1x8x128xf32> to vector<8x128xf32>
    %361 = arith.truncf %358 : vector<128x32xf32> to vector<128x32xbf16>
    %c1_112 = arith.constant 1 : index
    %c0_113 = arith.constant 0 : index
    %c0_114 = arith.constant 0 : index
    %362 = vector.load %arg5[%c1_112, %c0_113, %c0_114] : memref<2x32x96xbf16, #tpu.memory_space<vmem>>, vector<1x32x96xbf16>
    %363 = vector.shape_cast %362 : vector<1x32x96xbf16> to vector<32x96xbf16>
    %cst_115 = arith.constant dense<0.000000e+00> : vector<128x96xf32>
    %364 = tpu.matmul %361, %363, %cst_115 {dimension_numbers = #tpu.dot_dimension_numbers<[1], [0], [0], [1], [0, 0, 1, 1], [], []>} : vector<128x32xbf16>, vector<32x96xbf16>, vector<128x96xf32> -> vector<128x96xf32>
    %365 = vector.extract_strided_slice %360 {offsets = [0, 0], sizes = [1, 96], strides = [1, 1]} : vector<8x128xf32> to vector<1x96xf32>
    %366 = vector.broadcast %365 : vector<1x96xf32> to vector<128x96xf32>
    %367 = arith.addf %364, %366 : vector<128x96xf32>
    %368 = vector.extract_strided_slice %367 {offsets = [0, 0], sizes = [128, 32], strides = [1, 1]} : vector<128x96xf32> to vector<128x32xf32>
    %cst_116 = arith.constant 0.353553385 : f32
    %369 = vector.broadcast %cst_116 : f32 to vector<128x32xf32>
    %370 = arith.mulf %368, %369 : vector<128x32xf32>
    %371 = vector.extract_strided_slice %367 {offsets = [0, 32], sizes = [128, 32], strides = [1, 1]} : vector<128x96xf32> to vector<128x32xf32>
    %372 = arith.truncf %371 : vector<128x32xf32> to vector<128x32xbf16>
    %373 = vector.extract_strided_slice %367 {offsets = [0, 64], sizes = [128, 32], strides = [1, 1]} : vector<128x96xf32> to vector<128x32xf32>
    %374 = arith.truncf %373 : vector<128x32xf32> to vector<128x32xbf16>
    %375 = vector.extract_strided_slice %370 {offsets = [0, 0], sizes = [32, 32], strides = [1, 1]} : vector<128x32xf32> to vector<32x32xf32>
    %376 = arith.truncf %375 : vector<32x32xf32> to vector<32x32xbf16>
    %377 = vector.extract_strided_slice %372 {offsets = [0, 0], sizes = [32, 32], strides = [1, 1]} : vector<128x32xbf16> to vector<32x32xbf16>
    %378 = vector.extract_strided_slice %374 {offsets = [0, 0], sizes = [32, 32], strides = [1, 1]} : vector<128x32xbf16> to vector<32x32xbf16>
    %cst_117 = arith.constant dense<0.000000e+00> : vector<128x32xf32>
    %379 = tpu.matmul %1, %377, %cst_117 {dimension_numbers = #tpu.dot_dimension_numbers<[0], [0], [1], [1], [0, 1, 1, 1], [], []>} : vector<32x128xbf16>, vector<32x32xbf16>, vector<128x32xf32> -> vector<128x32xf32>
    %380 = arith.extf %2 : vector<128x32xbf16> to vector<128x32xf32>
    %381 = arith.mulf %379, %380 : vector<128x32xf32>
    %382 = arith.truncf %381 : vector<128x32xf32> to vector<128x32xbf16>
    %cst_118 = arith.constant dense<0.000000e+00> : vector<128x32xf32>
    %383 = tpu.matmul %1, %378, %cst_118 {dimension_numbers = #tpu.dot_dimension_numbers<[0], [0], [1], [1], [0, 1, 1, 1], [], []>} : vector<32x128xbf16>, vector<32x32xbf16>, vector<128x32xf32> -> vector<128x32xf32>
    %384 = arith.extf %2 : vector<128x32xbf16> to vector<128x32xf32>
    %385 = arith.mulf %383, %384 : vector<128x32xf32>
    %386 = arith.truncf %385 : vector<128x32xf32> to vector<128x32xbf16>
    %cst_119 = arith.constant dense<0.000000e+00> : vector<32x128xf32>
    %387 = tpu.matmul %376, %382, %cst_119 {dimension_numbers = #tpu.dot_dimension_numbers<[1], [1], [0], [0], [0, 0, 1, 0], [], []>} : vector<32x32xbf16>, vector<128x32xbf16>, vector<32x128xf32> -> vector<32x128xf32>
    %cst_120 = arith.constant dense<0xFF800000> : vector<32xf32>
    %388 = vector.multi_reduction <maximumf>, %387, %cst_120 [1] : vector<32x128xf32> to vector<32xf32>
    %389 = vector.shape_cast %388 : vector<32xf32> to vector<32x1xf32>
    %390 = vector.broadcast %389 : vector<32x1xf32> to vector<32x128xf32>
    %391 = arith.subf %387, %390 : vector<32x128xf32>
    %392 = math.exp %391 : vector<32x128xf32>
    %393 = arith.truncf %392 : vector<32x128xf32> to vector<32x128xbf16>
    %cst_121 = arith.constant dense<0.000000e+00> : vector<32x128xf32>
    %394 = tpu.matmul %393, %3, %cst_121 {dimension_numbers = #tpu.dot_dimension_numbers<[1], [0], [0], [1], [0, 0, 1, 1], [], []>} : vector<32x128xbf16>, vector<128x128xbf16>, vector<32x128xf32> -> vector<32x128xf32>
    %395 = tpu.reciprocal %394 {approx = true} : vector<32x128xf32> -> vector<32x128xf32>
    %396 = arith.mulf %392, %395 : vector<32x128xf32>
    %397 = arith.truncf %396 : vector<32x128xf32> to vector<32x128xbf16>
    %cst_122 = arith.constant dense<0.000000e+00> : vector<32x32xf32>
    %398 = tpu.matmul %397, %386, %cst_122 {dimension_numbers = #tpu.dot_dimension_numbers<[1], [0], [0], [1], [0, 0, 1, 1], [], []>} : vector<32x128xbf16>, vector<128x32xbf16>, vector<32x32xf32> -> vector<32x32xf32>
    %399 = vector.extract_strided_slice %370 {offsets = [32, 0], sizes = [32, 32], strides = [1, 1]} : vector<128x32xf32> to vector<32x32xf32>
    %400 = arith.truncf %399 : vector<32x32xf32> to vector<32x32xbf16>
    %401 = vector.extract_strided_slice %372 {offsets = [32, 0], sizes = [32, 32], strides = [1, 1]} : vector<128x32xbf16> to vector<32x32xbf16>
    %402 = vector.extract_strided_slice %374 {offsets = [32, 0], sizes = [32, 32], strides = [1, 1]} : vector<128x32xbf16> to vector<32x32xbf16>
    %cst_123 = arith.constant dense<0.000000e+00> : vector<128x32xf32>
    %403 = tpu.matmul %1, %401, %cst_123 {dimension_numbers = #tpu.dot_dimension_numbers<[0], [0], [1], [1], [0, 1, 1, 1], [], []>} : vector<32x128xbf16>, vector<32x32xbf16>, vector<128x32xf32> -> vector<128x32xf32>
    %404 = arith.extf %2 : vector<128x32xbf16> to vector<128x32xf32>
    %405 = arith.mulf %403, %404 : vector<128x32xf32>
    %406 = arith.truncf %405 : vector<128x32xf32> to vector<128x32xbf16>
    %cst_124 = arith.constant dense<0.000000e+00> : vector<128x32xf32>
    %407 = tpu.matmul %1, %402, %cst_124 {dimension_numbers = #tpu.dot_dimension_numbers<[0], [0], [1], [1], [0, 1, 1, 1], [], []>} : vector<32x128xbf16>, vector<32x32xbf16>, vector<128x32xf32> -> vector<128x32xf32>
    %408 = arith.extf %2 : vector<128x32xbf16> to vector<128x32xf32>
    %409 = arith.mulf %407, %408 : vector<128x32xf32>
    %410 = arith.truncf %409 : vector<128x32xf32> to vector<128x32xbf16>
    %cst_125 = arith.constant dense<0.000000e+00> : vector<32x128xf32>
    %411 = tpu.matmul %400, %406, %cst_125 {dimension_numbers = #tpu.dot_dimension_numbers<[1], [1], [0], [0], [0, 0, 1, 0], [], []>} : vector<32x32xbf16>, vector<128x32xbf16>, vector<32x128xf32> -> vector<32x128xf32>
    %cst_126 = arith.constant dense<0xFF800000> : vector<32xf32>
    %412 = vector.multi_reduction <maximumf>, %411, %cst_126 [1] : vector<32x128xf32> to vector<32xf32>
    %413 = vector.shape_cast %412 : vector<32xf32> to vector<32x1xf32>
    %414 = vector.broadcast %413 : vector<32x1xf32> to vector<32x128xf32>
    %415 = arith.subf %411, %414 : vector<32x128xf32>
    %416 = math.exp %415 : vector<32x128xf32>
    %417 = arith.truncf %416 : vector<32x128xf32> to vector<32x128xbf16>
    %cst_127 = arith.constant dense<0.000000e+00> : vector<32x128xf32>
    %418 = tpu.matmul %417, %3, %cst_127 {dimension_numbers = #tpu.dot_dimension_numbers<[1], [0], [0], [1], [0, 0, 1, 1], [], []>} : vector<32x128xbf16>, vector<128x128xbf16>, vector<32x128xf32> -> vector<32x128xf32>
    %419 = tpu.reciprocal %418 {approx = true} : vector<32x128xf32> -> vector<32x128xf32>
    %420 = arith.mulf %416, %419 : vector<32x128xf32>
    %421 = arith.truncf %420 : vector<32x128xf32> to vector<32x128xbf16>
    %cst_128 = arith.constant dense<0.000000e+00> : vector<32x32xf32>
    %422 = tpu.matmul %421, %410, %cst_128 {dimension_numbers = #tpu.dot_dimension_numbers<[1], [0], [0], [1], [0, 0, 1, 1], [], []>} : vector<32x128xbf16>, vector<128x32xbf16>, vector<32x32xf32> -> vector<32x32xf32>
    %423 = vector.extract_strided_slice %370 {offsets = [64, 0], sizes = [32, 32], strides = [1, 1]} : vector<128x32xf32> to vector<32x32xf32>
    %424 = arith.truncf %423 : vector<32x32xf32> to vector<32x32xbf16>
    %425 = vector.extract_strided_slice %372 {offsets = [64, 0], sizes = [32, 32], strides = [1, 1]} : vector<128x32xbf16> to vector<32x32xbf16>
    %426 = vector.extract_strided_slice %374 {offsets = [64, 0], sizes = [32, 32], strides = [1, 1]} : vector<128x32xbf16> to vector<32x32xbf16>
    %cst_129 = arith.constant dense<0.000000e+00> : vector<128x32xf32>
    %427 = tpu.matmul %1, %425, %cst_129 {dimension_numbers = #tpu.dot_dimension_numbers<[0], [0], [1], [1], [0, 1, 1, 1], [], []>} : vector<32x128xbf16>, vector<32x32xbf16>, vector<128x32xf32> -> vector<128x32xf32>
    %428 = arith.extf %2 : vector<128x32xbf16> to vector<128x32xf32>
    %429 = arith.mulf %427, %428 : vector<128x32xf32>
    %430 = arith.truncf %429 : vector<128x32xf32> to vector<128x32xbf16>
    %cst_130 = arith.constant dense<0.000000e+00> : vector<128x32xf32>
    %431 = tpu.matmul %1, %426, %cst_130 {dimension_numbers = #tpu.dot_dimension_numbers<[0], [0], [1], [1], [0, 1, 1, 1], [], []>} : vector<32x128xbf16>, vector<32x32xbf16>, vector<128x32xf32> -> vector<128x32xf32>
    %432 = arith.extf %2 : vector<128x32xbf16> to vector<128x32xf32>
    %433 = arith.mulf %431, %432 : vector<128x32xf32>
    %434 = arith.truncf %433 : vector<128x32xf32> to vector<128x32xbf16>
    %cst_131 = arith.constant dense<0.000000e+00> : vector<32x128xf32>
    %435 = tpu.matmul %424, %430, %cst_131 {dimension_numbers = #tpu.dot_dimension_numbers<[1], [1], [0], [0], [0, 0, 1, 0], [], []>} : vector<32x32xbf16>, vector<128x32xbf16>, vector<32x128xf32> -> vector<32x128xf32>
    %cst_132 = arith.constant dense<0xFF800000> : vector<32xf32>
    %436 = vector.multi_reduction <maximumf>, %435, %cst_132 [1] : vector<32x128xf32> to vector<32xf32>
    %437 = vector.shape_cast %436 : vector<32xf32> to vector<32x1xf32>
    %438 = vector.broadcast %437 : vector<32x1xf32> to vector<32x128xf32>
    %439 = arith.subf %435, %438 : vector<32x128xf32>
    %440 = math.exp %439 : vector<32x128xf32>
    %441 = arith.truncf %440 : vector<32x128xf32> to vector<32x128xbf16>
    %cst_133 = arith.constant dense<0.000000e+00> : vector<32x128xf32>
    %442 = tpu.matmul %441, %3, %cst_133 {dimension_numbers = #tpu.dot_dimension_numbers<[1], [0], [0], [1], [0, 0, 1, 1], [], []>} : vector<32x128xbf16>, vector<128x128xbf16>, vector<32x128xf32> -> vector<32x128xf32>
    %443 = tpu.reciprocal %442 {approx = true} : vector<32x128xf32> -> vector<32x128xf32>
    %444 = arith.mulf %440, %443 : vector<32x128xf32>
    %445 = arith.truncf %444 : vector<32x128xf32> to vector<32x128xbf16>
    %cst_134 = arith.constant dense<0.000000e+00> : vector<32x32xf32>
    %446 = tpu.matmul %445, %434, %cst_134 {dimension_numbers = #tpu.dot_dimension_numbers<[1], [0], [0], [1], [0, 0, 1, 1], [], []>} : vector<32x128xbf16>, vector<128x32xbf16>, vector<32x32xf32> -> vector<32x32xf32>
    %447 = vector.extract_strided_slice %370 {offsets = [96, 0], sizes = [32, 32], strides = [1, 1]} : vector<128x32xf32> to vector<32x32xf32>
    %448 = arith.truncf %447 : vector<32x32xf32> to vector<32x32xbf16>
    %449 = vector.extract_strided_slice %372 {offsets = [96, 0], sizes = [32, 32], strides = [1, 1]} : vector<128x32xbf16> to vector<32x32xbf16>
    %450 = vector.extract_strided_slice %374 {offsets = [96, 0], sizes = [32, 32], strides = [1, 1]} : vector<128x32xbf16> to vector<32x32xbf16>
    %cst_135 = arith.constant dense<0.000000e+00> : vector<128x32xf32>
    %451 = tpu.matmul %1, %449, %cst_135 {dimension_numbers = #tpu.dot_dimension_numbers<[0], [0], [1], [1], [0, 1, 1, 1], [], []>} : vector<32x128xbf16>, vector<32x32xbf16>, vector<128x32xf32> -> vector<128x32xf32>
    %452 = arith.extf %2 : vector<128x32xbf16> to vector<128x32xf32>
    %453 = arith.mulf %451, %452 : vector<128x32xf32>
    %454 = arith.truncf %453 : vector<128x32xf32> to vector<128x32xbf16>
    %cst_136 = arith.constant dense<0.000000e+00> : vector<128x32xf32>
    %455 = tpu.matmul %1, %450, %cst_136 {dimension_numbers = #tpu.dot_dimension_numbers<[0], [0], [1], [1], [0, 1, 1, 1], [], []>} : vector<32x128xbf16>, vector<32x32xbf16>, vector<128x32xf32> -> vector<128x32xf32>
    %456 = arith.extf %2 : vector<128x32xbf16> to vector<128x32xf32>
    %457 = arith.mulf %455, %456 : vector<128x32xf32>
    %458 = arith.truncf %457 : vector<128x32xf32> to vector<128x32xbf16>
    %cst_137 = arith.constant dense<0.000000e+00> : vector<32x128xf32>
    %459 = tpu.matmul %448, %454, %cst_137 {dimension_numbers = #tpu.dot_dimension_numbers<[1], [1], [0], [0], [0, 0, 1, 0], [], []>} : vector<32x32xbf16>, vector<128x32xbf16>, vector<32x128xf32> -> vector<32x128xf32>
    %cst_138 = arith.constant dense<0xFF800000> : vector<32xf32>
    %460 = vector.multi_reduction <maximumf>, %459, %cst_138 [1] : vector<32x128xf32> to vector<32xf32>
    %461 = vector.shape_cast %460 : vector<32xf32> to vector<32x1xf32>
    %462 = vector.broadcast %461 : vector<32x1xf32> to vector<32x128xf32>
    %463 = arith.subf %459, %462 : vector<32x128xf32>
    %464 = math.exp %463 : vector<32x128xf32>
    %465 = arith.truncf %464 : vector<32x128xf32> to vector<32x128xbf16>
    %cst_139 = arith.constant dense<0.000000e+00> : vector<32x128xf32>
    %466 = tpu.matmul %465, %3, %cst_139 {dimension_numbers = #tpu.dot_dimension_numbers<[1], [0], [0], [1], [0, 0, 1, 1], [], []>} : vector<32x128xbf16>, vector<128x128xbf16>, vector<32x128xf32> -> vector<32x128xf32>
    %467 = tpu.reciprocal %466 {approx = true} : vector<32x128xf32> -> vector<32x128xf32>
    %468 = arith.mulf %464, %467 : vector<32x128xf32>
    %469 = arith.truncf %468 : vector<32x128xf32> to vector<32x128xbf16>
    %cst_140 = arith.constant dense<0.000000e+00> : vector<32x32xf32>
    %470 = tpu.matmul %469, %458, %cst_140 {dimension_numbers = #tpu.dot_dimension_numbers<[1], [0], [0], [1], [0, 0, 1, 1], [], []>} : vector<32x128xbf16>, vector<128x32xbf16>, vector<32x32xf32> -> vector<32x32xf32>
    %471 = tpu.concatenate %398, %422, %446, %470 in 0 : vector<32x32xf32>, vector<32x32xf32>, vector<32x32xf32>, vector<32x32xf32> -> vector<128x32xf32>
    %472 = arith.truncf %471 : vector<128x32xf32> to vector<128x32xbf16>
    %c1_141 = arith.constant 1 : index
    %c0_142 = arith.constant 0 : index
    %c0_143 = arith.constant 0 : index
    %473 = vector.load %arg6[%c1_141, %c0_142, %c0_143] : memref<2x32x32xbf16, #tpu.memory_space<vmem>>, vector<1x32x32xbf16>
    %474 = vector.shape_cast %473 : vector<1x32x32xbf16> to vector<32x32xbf16>
    %cst_144 = arith.constant dense<0.000000e+00> : vector<128x32xf32>
    %475 = tpu.matmul %472, %474, %cst_144 {dimension_numbers = #tpu.dot_dimension_numbers<[1], [0], [0], [1], [0, 0, 1, 1], [], []>} : vector<128x32xbf16>, vector<32x32xbf16>, vector<128x32xf32> -> vector<128x32xf32>
    %476 = vector.extract_strided_slice %360 {offsets = [1, 0], sizes = [1, 32], strides = [1, 1]} : vector<8x128xf32> to vector<1x32xf32>
    %477 = vector.broadcast %476 : vector<1x32xf32> to vector<128x32xf32>
    %478 = arith.addf %475, %477 : vector<128x32xf32>
    %479 = arith.addf %358, %478 : vector<128x32xf32>
    %480 = vector.extract_strided_slice %360 {offsets = [2, 0], sizes = [1, 32], strides = [1, 1]} : vector<8x128xf32> to vector<1x32xf32>
    %481 = vector.extract_strided_slice %360 {offsets = [3, 0], sizes = [1, 32], strides = [1, 1]} : vector<8x128xf32> to vector<1x32xf32>
    %cst_145 = arith.constant dense<0.000000e+00> : vector<128xf32>
    %482 = vector.multi_reduction <add>, %479, %cst_145 [1] : vector<128x32xf32> to vector<128xf32>
    %483 = vector.shape_cast %482 : vector<128xf32> to vector<128x1xf32>
    %cst_146 = arith.constant 3.200000e+01 : f32
    %484 = vector.broadcast %cst_146 : f32 to vector<128x1xf32>
    %485 = arith.divf %483, %484 : vector<128x1xf32>
    %486 = vector.broadcast %485 : vector<128x1xf32> to vector<128x32xf32>
    %487 = arith.subf %479, %486 : vector<128x32xf32>
    %488 = arith.mulf %487, %487 : vector<128x32xf32>
    %cst_147 = arith.constant dense<0.000000e+00> : vector<128xf32>
    %489 = vector.multi_reduction <add>, %488, %cst_147 [1] : vector<128x32xf32> to vector<128xf32>
    %490 = vector.shape_cast %489 : vector<128xf32> to vector<128x1xf32>
    %cst_148 = arith.constant 3.200000e+01 : f32
    %491 = vector.broadcast %cst_148 : f32 to vector<128x1xf32>
    %492 = arith.divf %490, %491 : vector<128x1xf32>
    %493 = vector.broadcast %485 : vector<128x1xf32> to vector<128x32xf32>
    %494 = arith.subf %479, %493 : vector<128x32xf32>
    %cst_149 = arith.constant 9.99999974E-6 : f32
    %495 = vector.broadcast %cst_149 : f32 to vector<128x1xf32>
    %496 = arith.addf %492, %495 : vector<128x1xf32>
    %497 = math.rsqrt %496 : vector<128x1xf32>
    %498 = vector.broadcast %497 : vector<128x1xf32> to vector<128x32xf32>
    %499 = arith.mulf %494, %498 : vector<128x32xf32>
    %500 = vector.broadcast %480 : vector<1x32xf32> to vector<128x32xf32>
    %501 = arith.mulf %499, %500 : vector<128x32xf32>
    %502 = vector.broadcast %481 : vector<1x32xf32> to vector<128x32xf32>
    %503 = arith.addf %501, %502 : vector<128x32xf32>
    %504 = arith.truncf %503 : vector<128x32xf32> to vector<128x32xbf16>
    %c1_150 = arith.constant 1 : index
    %c0_151 = arith.constant 0 : index
    %c0_152 = arith.constant 0 : index
    %505 = vector.load %arg7[%c1_150, %c0_151, %c0_152] : memref<2x32x64xbf16, #tpu.memory_space<vmem>>, vector<1x32x64xbf16>
    %506 = vector.shape_cast %505 : vector<1x32x64xbf16> to vector<32x64xbf16>
    %cst_153 = arith.constant dense<0.000000e+00> : vector<128x64xf32>
    %507 = tpu.matmul %504, %506, %cst_153 {dimension_numbers = #tpu.dot_dimension_numbers<[1], [0], [0], [1], [0, 0, 1, 1], [], []>} : vector<128x32xbf16>, vector<32x64xbf16>, vector<128x64xf32> -> vector<128x64xf32>
    %508 = vector.extract_strided_slice %360 {offsets = [4, 0], sizes = [1, 64], strides = [1, 1]} : vector<8x128xf32> to vector<1x64xf32>
    %509 = vector.broadcast %508 : vector<1x64xf32> to vector<128x64xf32>
    %510 = arith.addf %507, %509 : vector<128x64xf32>
    %511 = arith.mulf %510, %510 : vector<128x64xf32>
    %512 = arith.mulf %510, %511 : vector<128x64xf32>
    %cst_154 = arith.constant 4.471500e-02 : f32
    %513 = vector.broadcast %cst_154 : f32 to vector<128x64xf32>
    %514 = arith.mulf %513, %512 : vector<128x64xf32>
    %515 = arith.addf %510, %514 : vector<128x64xf32>
    %cst_155 = arith.constant 0.797884583 : f32
    %516 = vector.broadcast %cst_155 : f32 to vector<128x64xf32>
    %517 = arith.mulf %516, %515 : vector<128x64xf32>
    %518 = math.tanh %517 : vector<128x64xf32>
    %cst_156 = arith.constant 1.000000e+00 : f32
    %519 = vector.broadcast %cst_156 : f32 to vector<128x64xf32>
    %520 = arith.addf %519, %518 : vector<128x64xf32>
    %cst_157 = arith.constant 5.000000e-01 : f32
    %521 = vector.broadcast %cst_157 : f32 to vector<128x64xf32>
    %522 = arith.mulf %521, %520 : vector<128x64xf32>
    %523 = arith.mulf %510, %522 : vector<128x64xf32>
    %524 = arith.truncf %523 : vector<128x64xf32> to vector<128x64xbf16>
    %c1_158 = arith.constant 1 : index
    %c0_159 = arith.constant 0 : index
    %c0_160 = arith.constant 0 : index
    %525 = vector.load %arg8[%c1_158, %c0_159, %c0_160] : memref<2x64x32xbf16, #tpu.memory_space<vmem>>, vector<1x64x32xbf16>
    %526 = vector.shape_cast %525 : vector<1x64x32xbf16> to vector<64x32xbf16>
    %cst_161 = arith.constant dense<0.000000e+00> : vector<128x32xf32>
    %527 = tpu.matmul %524, %526, %cst_161 {dimension_numbers = #tpu.dot_dimension_numbers<[1], [0], [0], [1], [0, 0, 1, 1], [], []>} : vector<128x64xbf16>, vector<64x32xbf16>, vector<128x32xf32> -> vector<128x32xf32>
    %528 = vector.extract_strided_slice %360 {offsets = [5, 0], sizes = [1, 32], strides = [1, 1]} : vector<8x128xf32> to vector<1x32xf32>
    %529 = vector.broadcast %528 : vector<1x32xf32> to vector<128x32xf32>
    %530 = arith.addf %527, %529 : vector<128x32xf32>
    %531 = arith.addf %503, %530 : vector<128x32xf32>
    %532 = vector.extract_strided_slice %360 {offsets = [6, 0], sizes = [1, 32], strides = [1, 1]} : vector<8x128xf32> to vector<1x32xf32>
    %533 = vector.extract_strided_slice %360 {offsets = [7, 0], sizes = [1, 32], strides = [1, 1]} : vector<8x128xf32> to vector<1x32xf32>
    %cst_162 = arith.constant dense<0.000000e+00> : vector<128xf32>
    %534 = vector.multi_reduction <add>, %531, %cst_162 [1] : vector<128x32xf32> to vector<128xf32>
    %535 = vector.shape_cast %534 : vector<128xf32> to vector<128x1xf32>
    %cst_163 = arith.constant 3.200000e+01 : f32
    %536 = vector.broadcast %cst_163 : f32 to vector<128x1xf32>
    %537 = arith.divf %535, %536 : vector<128x1xf32>
    %538 = vector.broadcast %537 : vector<128x1xf32> to vector<128x32xf32>
    %539 = arith.subf %531, %538 : vector<128x32xf32>
    %540 = arith.mulf %539, %539 : vector<128x32xf32>
    %cst_164 = arith.constant dense<0.000000e+00> : vector<128xf32>
    %541 = vector.multi_reduction <add>, %540, %cst_164 [1] : vector<128x32xf32> to vector<128xf32>
    %542 = vector.shape_cast %541 : vector<128xf32> to vector<128x1xf32>
    %cst_165 = arith.constant 3.200000e+01 : f32
    %543 = vector.broadcast %cst_165 : f32 to vector<128x1xf32>
    %544 = arith.divf %542, %543 : vector<128x1xf32>
    %545 = vector.broadcast %537 : vector<128x1xf32> to vector<128x32xf32>
    %546 = arith.subf %531, %545 : vector<128x32xf32>
    %cst_166 = arith.constant 9.99999974E-6 : f32
    %547 = vector.broadcast %cst_166 : f32 to vector<128x1xf32>
    %548 = arith.addf %544, %547 : vector<128x1xf32>
    %549 = math.rsqrt %548 : vector<128x1xf32>
    %550 = vector.broadcast %549 : vector<128x1xf32> to vector<128x32xf32>
    %551 = arith.mulf %546, %550 : vector<128x32xf32>
    %552 = vector.broadcast %532 : vector<1x32xf32> to vector<128x32xf32>
    %553 = arith.mulf %551, %552 : vector<128x32xf32>
    %554 = vector.broadcast %533 : vector<1x32xf32> to vector<128x32xf32>
    %555 = arith.addf %553, %554 : vector<128x32xf32>
    %556 = vector.shape_cast %555 : vector<128x32xf32> to vector<4x32x32xf32>
    %cst_167 = arith.constant dense<0.000000e+00> : vector<4x32xf32>
    %557 = vector.multi_reduction <add>, %556, %cst_167 [1] : vector<4x32x32xf32> to vector<4x32xf32>
    %cst_168 = arith.constant 3.200000e+01 : f32
    %558 = vector.broadcast %cst_168 : f32 to vector<4x32xf32>
    %559 = arith.divf %557, %558 : vector<4x32xf32>
    %c0_169 = arith.constant 0 : index
    %c0_170 = arith.constant 0 : index
    %c0_171 = arith.constant 0 : index
    %560 = vector.load %arg14[%c0_169, %c0_170, %c0_171] : memref<1x4x32xf32, #tpu.memory_space<vmem>>, vector<1x4x32xf32>
    %561 = vector.shape_cast %560 : vector<1x4x32xf32> to vector<4x32xf32>
    %562 = vector.shape_cast %559 : vector<4x32xf32> to vector<1x4x32xf32>
    tpu.vector_store %arg14[%c0_169, %c0_170, %c0_171], %562 {strides = array<i32>} : memref<1x4x32xf32, #tpu.memory_space<vmem>>, vector<1x4x32xf32>,
    return
  }
  func.func @transform_0(%arg0: i32) -> (i32, i32, i32) {
    %c0_i32 = arith.constant 0 : i32
    %c0_i32_0 = arith.constant 0 : i32
    %c0_i32_1 = arith.constant 0 : i32
    return %arg0, %c0_i32, %c0_i32_0 : i32, i32, i32
  }
  func.func @transform_1(%arg0: i32) -> (i32, i32) {
    %c0_i32 = arith.constant 0 : i32
    %c0_i32_0 = arith.constant 0 : i32
    %c0_i32_1 = arith.constant 0 : i32
    return %c0_i32, %c0_i32_0 : i32, i32
  }
  func.func @transform_2(%arg0: i32) -> (i32, i32, i32) {
    %c0_i32 = arith.constant 0 : i32
    %c0_i32_0 = arith.constant 0 : i32
    %c0_i32_1 = arith.constant 0 : i32
    %c0_i32_2 = arith.constant 0 : i32
    return %c0_i32, %c0_i32_0, %c0_i32_1 : i32, i32, i32
  }
  func.func @transform_3(%arg0: i32) -> (i32, i32) {
    %c0_i32 = arith.constant 0 : i32
    %c0_i32_0 = arith.constant 0 : i32
    %c0_i32_1 = arith.constant 0 : i32
    return %c0_i32, %c0_i32_0 : i32, i32
  }
  func.func @transform_4(%arg0: i32) -> (i32, i32, i32) {
    %c0_i32 = arith.constant 0 : i32
    %c0_i32_0 = arith.constant 0 : i32
    %c0_i32_1 = arith.constant 0 : i32
    %c0_i32_2 = arith.constant 0 : i32
    return %c0_i32, %c0_i32_0, %c0_i32_1 : i32, i32, i32
  }
  func.func @transform_5(%arg0: i32) -> (i32, i32, i32) {
    %c0_i32 = arith.constant 0 : i32
    %c0_i32_0 = arith.constant 0 : i32
    %c0_i32_1 = arith.constant 0 : i32
    %c0_i32_2 = arith.constant 0 : i32
    return %c0_i32, %c0_i32_0, %c0_i32_1 : i32, i32, i32
  }
  func.func @transform_6(%arg0: i32) -> (i32, i32, i32) {
    %c0_i32 = arith.constant 0 : i32
    %c0_i32_0 = arith.constant 0 : i32
    %c0_i32_1 = arith.constant 0 : i32
    %c0_i32_2 = arith.constant 0 : i32
    return %c0_i32, %c0_i32_0, %c0_i32_1 : i32, i32, i32
  }
  func.func @transform_7(%arg0: i32) -> (i32, i32, i32) {
    %c0_i32 = arith.constant 0 : i32
    %c0_i32_0 = arith.constant 0 : i32
    %c0_i32_1 = arith.constant 0 : i32
    %c0_i32_2 = arith.constant 0 : i32
    return %c0_i32, %c0_i32_0, %c0_i32_1 : i32, i32, i32
  }
  func.func @transform_8(%arg0: i32) -> (i32, i32) {
    %c0_i32 = arith.constant 0 : i32
    %c0_i32_0 = arith.constant 0 : i32
    %c0_i32_1 = arith.constant 0 : i32
    return %c0_i32, %c0_i32_0 : i32, i32
  }
  func.func @transform_9(%arg0: i32) -> (i32, i32, i32) {
    %c0_i32 = arith.constant 0 : i32
    %c0_i32_0 = arith.constant 0 : i32
    %c0_i32_1 = arith.constant 0 : i32
    %c0_i32_2 = arith.constant 0 : i32
    return %c0_i32, %c0_i32_0, %c0_i32_1 : i32, i32, i32
  }
  func.func @transform_10(%arg0: i32) -> (i32, i32) {
    %c0_i32 = arith.constant 0 : i32
    %c0_i32_0 = arith.constant 0 : i32
    %c0_i32_1 = arith.constant 0 : i32
    return %c0_i32, %c0_i32_0 : i32, i32
  }
  func.func @transform_11(%arg0: i32) -> (i32, i32) {
    %c0_i32 = arith.constant 0 : i32
    %c0_i32_0 = arith.constant 0 : i32
    %c0_i32_1 = arith.constant 0 : i32
    return %c0_i32, %c0_i32_0 : i32, i32
  }
  func.func @transform_12(%arg0: i32) -> (i32, i32) {
    %c0_i32 = arith.constant 0 : i32
    %c0_i32_0 = arith.constant 0 : i32
    %c0_i32_1 = arith.constant 0 : i32
    return %c0_i32, %c0_i32_0 : i32, i32
  }
  func.func @transform_13(%arg0: i32) -> (i32, i32, i32) {
    %c0_i32 = arith.constant 0 : i32
    %c0_i32_0 = arith.constant 0 : i32
    %c0_i32_1 = arith.constant 0 : i32
    return %arg0, %c0_i32, %c0_i32_0 : i32, i32, i32
  }
}

</mosaic_0001>

<llo_original>
// kernel: wav2vec2_pooled_forward.1
$region0: #{wav2vec2_pooled_forward.1}
  #allocation0 [shape = 'u32[]', space=smem, size = 0x4, offset = 0x4, fixed_abs, tag = 'smem constant byte address 0x4 - core index']
  #allocation1 [shape = 'u32[144,128]{1,0:T(1,128)}', space=vmem, size = 0x12000, scoped, tag = 'internal scratch']
  %s0 = inlined_call_operand.vmem [shape: f32[2,256,10], index: 0, kind: input, shape index: {}]
  %s1 = inlined_call_operand.vmem [shape: bf16[10,16], index: 1, kind: input, shape index: {}]
  %s2 = inlined_call_operand.vmem [shape: bf16[2,16,16], index: 2, kind: input, shape index: {}]
  %s3 = inlined_call_operand.vmem [shape: bf16[16,32], index: 3, kind: input, shape index: {}]
  %s4 = inlined_call_operand.vmem [shape: bf16[2,32,96], index: 4, kind: input, shape index: {}]
  %s5 = inlined_call_operand.vmem [shape: bf16[2,32,32], index: 5, kind: input, shape index: {}]
  %s6 = inlined_call_operand.vmem [shape: bf16[2,32,64], index: 6, kind: input, shape index: {}]
  %s7 = inlined_call_operand.vmem [shape: bf16[2,64,32], index: 7, kind: input, shape index: {}]
  %s8 = inlined_call_operand.vmem [shape: f32[9,128], index: 8, kind: input, shape index: {}]
  %s9 = inlined_call_operand.vmem [shape: f32[2,8,128], index: 9, kind: input, shape index: {}]
  %s10 = inlined_call_operand.vmem [shape: bf16[32,128], index: 10, kind: input, shape index: {}]
  %s11 = inlined_call_operand.vmem [shape: bf16[128,32], index: 11, kind: input, shape index: {}]
  %s12 = inlined_call_operand.vmem [shape: bf16[128,128], index: 12, kind: input, shape index: {}]
  %s13 = inlined_call_operand.hbm [shape: f32[2,4,32], index: 13, kind: output, shape index: {}]
  %s14 = sld [smem:[#allocation0]]
  $region85: #{wav2vec2_pooled_forward.1} parent=0
    _
  %s16 = ssub.s32 1, %s14
  %s17 = scalar_select 0, %s16, %s14
  $region1: #{wav2vec2_pooled_forward.1} parent=0
    #allocation2 [shape = 'u8[4096]{0}', space=vmem, size = 0x1000, scoped, tag = 'output window, operand 0']
    #allocation3 [shape = 's32[2]{0}', space=sflag, size = 0x8, scoped, tag = 'scoped memory for wav2vec2_pooled_forward.1']
    %18 = vsyncpa [#allocation3], 0
    %s19 = scalar_lea.sflag [#allocation3], 1
    %20 = vsyncpa %s19, 0
    loop: start=0, step=1, limit=4
    $region2: #{wav2vec2_pooled_forward.1} parent=1 // loop_pre_header
      _
    $region3: #{wav2vec2_pooled_forward.1} parent=1 // loop_header
      %s22 = sphi 0, %s26
      %p23 = scmp.ge.s32.totalorder %s22, 4
      %s32 = sphi 0, %s34
      %s35 = sphi 0, %s32
      %s36 = sphi 0, %s35
      %s52 = sphi 0, %s36
      %s56 = sphi 0, %s56
      %s58 = sphi 0, %s56
      %s59 = sphi 0, %s58
      %s73 = sphi 0, %s59
      %s77 = sphi 0, %s77
      %s79 = sphi 0, %s77
      %s80 = sphi 0, %s79
      %s94 = sphi 0, %s80
      %s98 = sphi 0, %s98
      %s100 = sphi 0, %s98
      %s101 = sphi 0, %s100
      %s115 = sphi 0, %s101
      %s119 = sphi 0, %s119
      %s121 = sphi 0, %s119
      %s122 = sphi 0, %s121
      %s136 = sphi 0, %s122
      %s140 = sphi 0, %s140
      %s142 = sphi 0, %s140
      %s143 = sphi 0, %s142
      %s157 = sphi 0, %s143
      %s161 = sphi 0, %s161
      %s163 = sphi 0, %s161
      %s164 = sphi 0, %s163
      %s178 = sphi 0, %s164
      %s182 = sphi 0, %s182
      %s184 = sphi 0, %s182
      %s185 = sphi 0, %s184
      %s199 = sphi 0, %s185
      %s203 = sphi 0, %s203
      %s205 = sphi 0, %s203
      %s206 = sphi 0, %s205
      %s220 = sphi 0, %s206
      %s224 = sphi 0, %s224
      %s226 = sphi 0, %s224
      %s227 = sphi 0, %s226
      %s241 = sphi 0, %s227
      %s245 = sphi 0, %s245
      %s247 = sphi 0, %s245
      %s248 = sphi 0, %s247
      %s262 = sphi 0, %s248
      %s266 = sphi 0, %s266
      %s268 = sphi 0, %s266
      %s269 = sphi 0, %s268
      %s283 = sphi 0, %s269
      %s287 = sphi 0, %s287
      %s289 = sphi 0, %s287
      %s290 = sphi 0, %s289
      %s304 = sphi 0, %s290
      %s310 = sphi 0, %s312
      %s313 = sphi 0, %s310
      %s314 = sphi 0, %s313
      %s330 = sphi 0, %s314
    $region4: #{wav2vec2_pooled_forward.1} parent=1 // loop_header_branch
      %25 = sbr.rel (%p23) target = $region8
    $region5: #{wav2vec2_pooled_forward.1} parent=1 // loop_body
      %s27 = ssub.s32 %s22, 1
      %s28 = ssub.s32 %s22, 2
      %s29 = sadd.s32 %s22, 1
      %s30 = ssub.s32 %s22, %s29
      %p31 = scmp.eq.s32.totalorder %s30, 0
      %s33 = sadd.s32 %s32, 1
      %s34 = scalar_select %p31, %s32, %s33
      %p37 = pneg %p31
      %p38 = scmp.eq.s32.totalorder %s22, 1
      %p39 = por %p37, %p38
      %p40 = scmp.ne.s32.totalorder %s32, %s35
      %p41 = scmp.eq.s32.totalorder %s22, 0
      %p42 = por %p40, %p41
      %p43 = scmp.ne.s32.totalorder %s32, %s35
      %p44 = scmp.eq.s32.totalorder %s27, 1
      %p45 = por %p43, %p44
      %p46 = scmp.ne.s32.totalorder %s35, %s36
      %p47 = scmp.eq.s32.totalorder %s27, 0
      %p48 = por %p46, %p47
      %p49 = scmp.ne.s32.totalorder %s35, %s36
      %p50 = scmp.eq.s32.totalorder %s28, 1
      %p51 = por %p49, %p50
      %p53 = scmp.ne.s32.totalorder %s36, %s52
      %p54 = scmp.eq.s32.totalorder %s28, 0
      %p55 = por %p53, %p54
      %s57 = sadd.s32 %s56, 1
      %p60 = scmp.eq.s32.totalorder %s22, 1
      %p61 = scmp.ne.s32.totalorder %s56, %s58
      %p62 = scmp.eq.s32.totalorder %s22, 0
      %p63 = por %p61, %p62
      %p64 = scmp.ne.s32.totalorder %s56, %s58
      %p65 = scmp.eq.s32.totalorder %s27, 1
      %p66 = por %p64, %p65
      %p67 = scmp.ne.s32.totalorder %s58, %s59
      %p68 = scmp.eq.s32.totalorder %s27, 0
      %p69 = por %p67, %p68
      %p70 = scmp.ne.s32.totalorder %s58, %s59
      %p71 = scmp.eq.s32.totalorder %s28, 1
      %p72 = por %p70, %p71
      %p74 = scmp.ne.s32.totalorder %s59, %s73
      %p75 = scmp.eq.s32.totalorder %s28, 0
      %p76 = por %p74, %p75
      %s78 = sadd.s32 %s77, 1
      %p81 = scmp.eq.s32.totalorder %s22, 1
      %p82 = scmp.ne.s32.totalorder %s77, %s79
      %p83 = scmp.eq.s32.totalorder %s22, 0
      %p84 = por %p82, %p83
      %p85 = scmp.ne.s32.totalorder %s77, %s79
      %p86 = scmp.eq.s32.totalorder %s27, 1
      %p87 = por %p85, %p86
      %p88 = scmp.ne.s32.totalorder %s79, %s80
      %p89 = scmp.eq.s32.totalorder %s27, 0
      %p90 = por %p88, %p89
      %p91 = scmp.ne.s32.totalorder %s79, %s80
      %p92 = scmp.eq.s32.totalorder %s28, 1
      %p93 = por %p91, %p92
      %p95 = scmp.ne.s32.totalorder %s80, %s94
      %p96 = scmp.eq.s32.totalorder %s28, 0
      %p97 = por %p95, %p96
      %s99 = sadd.s32 %s98, 1
      %p102 = scmp.eq.s32.totalorder %s22, 1
      %p103 = scmp.ne.s32.totalorder %s98, %s100
      %p104 = scmp.eq.s32.totalorder %s22, 0
      %p105 = por %p103, %p104
      %p106 = scmp.ne.s32.totalorder %s98, %s100
      %p107 = scmp.eq.s32.totalorder %s27, 1
      %p108 = por %p106, %p107
      %p109 = scmp.ne.s32.totalorder %s100, %s101
      %p110 = scmp.eq.s32.totalorder %s27, 0
      %p111 = por %p109, %p110
      %p112 = scmp.ne.s32.totalorder %s100, %s101
      %p113 = scmp.eq.s32.totalorder %s28, 1
      %p114 = por %p112, %p113
      %p116 = scmp.ne.s32.totalorder %s101, %s115
      %p117 = scmp.eq.s32.totalorder %s28, 0
      %p118 = por %p116, %p117
      %s120 = sadd.s32 %s119, 1
      %p123 = scmp.eq.s32.totalorder %s22, 1
      %p124 = scmp.ne.s32.totalorder %s119, %s121
      %p125 = scmp.eq.s32.totalorder %s22, 0
      %p126 = por %p124, %p125
      %p127 = scmp.ne.s32.totalorder %s119, %s121
      %p128 = scmp.eq.s32.totalorder %s27, 1
      %p129 = por %p127, %p128
      %p130 = scmp.ne.s32.totalorder %s121, %s122
      %p131 = scmp.eq.s32.totalorder %s27, 0
      %p132 = por %p130, %p131
      %p133 = scmp.ne.s32.totalorder %s121, %s122
      %p134 = scmp.eq.s32.totalorder %s28, 1
      %p135 = por %p133, %p134
      %p137 = scmp.ne.s32.totalorder %s122, %s136
      %p138 = scmp.eq.s32.totalorder %s28, 0
      %p139 = por %p137, %p138
      %s141 = sadd.s32 %s140, 1
      %p144 = scmp.eq.s32.totalorder %s22, 1
      %p145 = scmp.ne.s32.totalorder %s140, %s142
      %p146 = scmp.eq.s32.totalorder %s22, 0
      %p147 = por %p145, %p146
      %p148 = scmp.ne.s32.totalorder %s140, %s142
      %p149 = scmp.eq.s32.totalorder %s27, 1
      %p150 = por %p148, %p149
      %p151 = scmp.ne.s32.totalorder %s142, %s143
      %p152 = scmp.eq.s32.totalorder %s27, 0
      %p153 = por %p151, %p152
      %p154 = scmp.ne.s32.totalorder %s142, %s143
      %p155 = scmp.eq.s32.totalorder %s28, 1
      %p156 = por %p154, %p155
      %p158 = scmp.ne.s32.totalorder %s143, %s157
      %p159 = scmp.eq.s32.totalorder %s28, 0
      %p160 = por %p158, %p159
      %s162 = sadd.s32 %s161, 1
      %p165 = scmp.eq.s32.totalorder %s22, 1
      %p166 = scmp.ne.s32.totalorder %s161, %s163
      %p167 = scmp.eq.s32.totalorder %s22, 0
      %p168 = por %p166, %p167
      %p169 = scmp.ne.s32.totalorder %s161, %s163
      %p170 = scmp.eq.s32.totalorder %s27, 1
      %p171 = por %p169, %p170
      %p172 = scmp.ne.s32.totalorder %s163, %s164
      %p173 = scmp.eq.s32.totalorder %s27, 0
      %p174 = por %p172, %p173
      %p175 = scmp.ne.s32.totalorder %s163, %s164
      %p176 = scmp.eq.s32.totalorder %s28, 1
      %p177 = por %p175, %p176
      %p179 = scmp.ne.s32.totalorder %s164, %s178
      %p180 = scmp.eq.s32.totalorder %s28, 0
      %p181 = por %p179, %p180
      %s183 = sadd.s32 %s182, 1
      %p186 = scmp.eq.s32.totalorder %s22, 1
      %p187 = scmp.ne.s32.totalorder %s182, %s184
      %p188 = scmp.eq.s32.totalorder %s22, 0
      %p189 = por %p187, %p188
      %p190 = scmp.ne.s32.totalorder %s182, %s184
      %p191 = scmp.eq.s32.totalorder %s27, 1
      %p192 = por %p190, %p191
      %p193 = scmp.ne.s32.totalorder %s184, %s185
      %p194 = scmp.eq.s32.totalorder %s27, 0
      %p195 = por %p193, %p194
      %p196 = scmp.ne.s32.totalorder %s184, %s185
      %p197 = scmp.eq.s32.totalorder %s28, 1
      %p198 = por %p196, %p197
      %p200 = scmp.ne.s32.totalorder %s185, %s199
      %p201 = scmp.eq.s32.totalorder %s28, 0
      %p202 = por %p200, %p201
      %s204 = sadd.s32 %s203, 1
      %p207 = scmp.eq.s32.totalorder %s22, 1
      %p208 = scmp.ne.s32.totalorder %s203, %s205
      %p209 = scmp.eq.s32.totalorder %s22, 0
      %p210 = por %p208, %p209
      %p211 = scmp.ne.s32.totalorder %s203, %s205
      %p212 = scmp.eq.s32.totalorder %s27, 1
      %p213 = por %p211, %p212
      %p214 = scmp.ne.s32.totalorder %s205, %s206
      %p215 = scmp.eq.s32.totalorder %s27, 0
      %p216 = por %p214, %p215
      %p217 = scmp.ne.s32.totalorder %s205, %s206
      %p218 = scmp.eq.s32.totalorder %s28, 1
      %p219 = por %p217, %p218
      %p221 = scmp.ne.s32.totalorder %s206, %s220
      %p222 = scmp.eq.s32.totalorder %s28, 0
      %p223 = por %p221, %p222
      %s225 = sadd.s32 %s224, 1
      %p228 = scmp.eq.s32.totalorder %s22, 1
      %p229 = scmp.ne.s32.totalorder %s224, %s226
      %p230 = scmp.eq.s32.totalorder %s22, 0
      %p231 = por %p229, %p230
      %p232 = scmp.ne.s32.totalorder %s224, %s226
      %p233 = scmp.eq.s32.totalorder %s27, 1
      %p234 = por %p232, %p233
      %p235 = scmp.ne.s32.totalorder %s226, %s227
      %p236 = scmp.eq.s32.totalorder %s27, 0
      %p237 = por %p235, %p236
      %p238 = scmp.ne.s32.totalorder %s226, %s227
      %p239 = scmp.eq.s32.totalorder %s28, 1
      %p240 = por %p238, %p239
      %p242 = scmp.ne.s32.totalorder %s227, %s241
      %p243 = scmp.eq.s32.totalorder %s28, 0
      %p244 = por %p242, %p243
      %s246 = sadd.s32 %s245, 1
      %p249 = scmp.eq.s32.totalorder %s22, 1
      %p250 = scmp.ne.s32.totalorder %s245, %s247
      %p251 = scmp.eq.s32.totalorder %s22, 0
      %p252 = por %p250, %p251
      %p253 = scmp.ne.s32.totalorder %s245, %s247
      %p254 = scmp.eq.s32.totalorder %s27, 1
      %p255 = por %p253, %p254
      %p256 = scmp.ne.s32.totalorder %s247, %s248
      %p257 = scmp.eq.s32.totalorder %s27, 0
      %p258 = por %p256, %p257
      %p259 = scmp.ne.s32.totalorder %s247, %s248
      %p260 = scmp.eq.s32.totalorder %s28, 1
      %p261 = por %p259, %p260
      %p263 = scmp.ne.s32.totalorder %s248, %s262
      %p264 = scmp.eq.s32.totalorder %s28, 0
      %p265 = por %p263, %p264
      %s267 = sadd.s32 %s266, 1
      %p270 = scmp.eq.s32.totalorder %s22, 1
      %p271 = scmp.ne.s32.totalorder %s266, %s268
      %p272 = scmp.eq.s32.totalorder %s22, 0
      %p273 = por %p271, %p272
      %p274 = scmp.ne.s32.totalorder %s266, %s268
      %p275 = scmp.eq.s32.totalorder %s27, 1
      %p276 = por %p274, %p275
      %p277 = scmp.ne.s32.totalorder %s268, %s269
      %p278 = scmp.eq.s32.totalorder %s27, 0
      %p279 = por %p277, %p278
      %p280 = scmp.ne.s32.totalorder %s268, %s269
      %p281 = scmp.eq.s32.totalorder %s28, 1
      %p282 = por %p280, %p281
      %p284 = scmp.ne.s32.totalorder %s269, %s283
      %p285 = scmp.eq.s32.totalorder %s28, 0
      %p286 = por %p284, %p285
      %s288 = sadd.s32 %s287, 1
      %p291 = scmp.eq.s32.totalorder %s22, 1
      %p292 = scmp.ne.s32.totalorder %s287, %s289
      %p293 = scmp.eq.s32.totalorder %s22, 0
      %p294 = por %p292, %p293
      %p295 = scmp.ne.s32.totalorder %s287, %s289
      %p296 = scmp.eq.s32.totalorder %s27, 1
      %p297 = por %p295, %p296
      %p298 = scmp.ne.s32.totalorder %s289, %s290
      %p299 = scmp.eq.s32.totalorder %s27, 0
      %p300 = por %p298, %p299
      %p301 = scmp.ne.s32.totalorder %s289, %s290
      %p302 = scmp.eq.s32.totalorder %s28, 1
      %p303 = por %p301, %p302
      %p305 = scmp.ne.s32.totalorder %s290, %s304
      %p306 = scmp.eq.s32.totalorder %s28, 0
      %p307 = por %p305, %p306
      %s308 = ssub.s32 %s22, %s29
      %p309 = scmp.eq.s32.totalorder %s308, 0
      %s311 = sadd.s32 %s310, 1
      %s312 = scalar_select %p309, %s310, %s311
      %p315 = pneg %p309
      %p316 = scmp.eq.s32.totalorder %s22, 1
      %p317 = por %p315, %p316
      %p318 = scmp.ne.s32.totalorder %s310, %s313
      %p319 = scmp.eq.s32.totalorder %s22, 0
      %p320 = por %p318, %p319
      %p321 = scmp.ne.s32.totalorder %s310, %s313
      %p322 = scmp.eq.s32.totalorder %s27, 1
      %p323 = por %p321, %p322
      %p324 = scmp.ne.s32.totalorder %s313, %s314
      %p325 = scmp.eq.s32.totalorder %s27, 0
      %p326 = por %p324, %p325
      %p327 = scmp.ne.s32.totalorder %s313, %s314
      %p328 = scmp.eq.s32.totalorder %s28, 1
      %p329 = por %p327, %p328
      %p331 = scmp.ne.s32.totalorder %s314, %s330
      %p332 = scmp.eq.s32.totalorder %s28, 0
      %p333 = por %p331, %p332
      %p334 = scmp.le.s32.totalorder 1, %s22
      %p335 = scmp.lt.s32.totalorder %s22, 3
      %p336 = pnand %p334, %p335
      %p337 = pneg %p336
      // Predicated region
      $region9: #{wav2vec2_pooled_forward.1} parent=5 // pred_check
        _
      $region10: #{wav2vec2_pooled_forward.1} parent=5 // pred_check_branch
        %339 = sbr.rel (%p336) target = $region12
      $region11: #{wav2vec2_pooled_forward.1} parent=5 // pred_region
        %s340 = ssub.s32 %s22, 1
        // Predicated region
        $region13: #{wav2vec2_pooled_forward.1} parent=11 // pred_check
          %p341 = pneg %p69
        $region14: #{wav2vec2_pooled_forward.1} parent=11 // pred_check_branch
          %343 = sbr.rel (%p341) target = $region16
        $region15: #{wav2vec2_pooled_forward.1} parent=11 // pred_region
          _
        $region16: #{wav2vec2_pooled_forward.1} parent=11 // pred_fallthru
          _
        // Predicated region
        $region17: #{wav2vec2_pooled_forward.1} parent=11 // pred_check
          %p344 = pneg %p90
        $region18: #{wav2vec2_pooled_forward.1} parent=11 // pred_check_branch
          %346 = sbr.rel (%p344) target = $region20
        $region19: #{wav2vec2_pooled_forward.1} parent=11 // pred_region
          _
        $region20: #{wav2vec2_pooled_forward.1} parent=11 // pred_fallthru
          _
        // Predicated region
        $region21: #{wav2vec2_pooled_forward.1} parent=11 // pred_check
          %p347 = pneg %p111
        $region22: #{wav2vec2_pooled_forward.1} parent=11 // pred_check_branch
          %349 = sbr.rel (%p347) target = $region24
        $region23: #{wav2vec2_pooled_forward.1} parent=11 // pred_region
          _
        $region24: #{wav2vec2_pooled_forward.1} parent=11 // pred_fallthru
          _
        // Predicated region
        $region25: #{wav2vec2_pooled_forward.1} parent=11 // pred_check
          %p350 = pneg %p132
        $region26: #{wav2vec2_pooled_forward.1} parent=11 // pred_check_branch
          %352 = sbr.rel (%p350) target = $region28
        $region27: #{wav2vec2_pooled_forward.1} parent=11 // pred_region
          _
        $region28: #{wav2vec2_pooled_forward.1} parent=11 // pred_fallthru
          _
        // Predicated region
        $region29: #{wav2vec2_pooled_forward.1} parent=11 // pred_check
          %p353 = pneg %p153
        $region30: #{wav2vec2_pooled_forward.1} parent=11 // pred_check_branch
          %355 = sbr.rel (%p353) target = $region32
        $region31: #{wav2vec2_pooled_forward.1} parent=11 // pred_region
          _
        $region32: #{wav2vec2_pooled_forward.1} parent=11 // pred_fallthru
          _
        // Predicated region
        $region33: #{wav2vec2_pooled_forward.1} parent=11 // pred_check
          %p356 = pneg %p174
        $region34: #{wav2vec2_pooled_forward.1} parent=11 // pred_check_branch
          %358 = sbr.rel (%p356) target = $region36
        $region35: #{wav2vec2_pooled_forward.1} parent=11 // pred_region
          _
        $region36: #{wav2vec2_pooled_forward.1} parent=11 // pred_fallthru
          _
        // Predicated region
        $region37: #{wav2vec2_pooled_forward.1} parent=11 // pred_check
          %p359 = pneg %p195
        $region38: #{wav2vec2_pooled_forward.1} parent=11 // pred_check_branch
          %361 = sbr.rel (%p359) target = $region40
        $region39: #{wav2vec2_pooled_forward.1} parent=11 // pred_region
          _
        $region40: #{wav2vec2_pooled_forward.1} parent=11 // pred_fallthru
          _
        // Predicated region
        $region41: #{wav2vec2_pooled_forward.1} parent=11 // pred_check
          %p362 = pneg %p216
        $region42: #{wav2vec2_pooled_forward.1} parent=11 // pred_check_branch
          %364 = sbr.rel (%p362) target = $region44
        $region43: #{wav2vec2_pooled_forward.1} parent=11 // pred_region
          _
        $region44: #{wav2vec2_pooled_forward.1} parent=11 // pred_fallthru
          _
        // Predicated region
        $region45: #{wav2vec2_pooled_forward.1} parent=11 // pred_check
          %p365 = pneg %p237
        $region46: #{wav2vec2_pooled_forward.1} parent=11 // pred_check_branch
          %367 = sbr.rel (%p365) target = $region48
        $region47: #{wav2vec2_pooled_forward.1} parent=11 // pred_region
          _
        $region48: #{wav2vec2_pooled_forward.1} parent=11 // pred_fallthru
          _
        // Predicated region
        $region49: #{wav2vec2_pooled_forward.1} parent=11 // pred_check
          %p368 = pneg %p258
        $region50: #{wav2vec2_pooled_forward.1} parent=11 // pred_check_branch
          %370 = sbr.rel (%p368) target = $region52
        $region51: #{wav2vec2_pooled_forward.1} parent=11 // pred_region
          _
        $region52: #{wav2vec2_pooled_forward.1} parent=11 // pred_fallthru
          _
        // Predicated region
        $region53: #{wav2vec2_pooled_forward.1} parent=11 // pred_check
          %p371 = pneg %p279
        $region54: #{wav2vec2_pooled_forward.1} parent=11 // pred_check_branch
          %373 = sbr.rel (%p371) target = $region56
        $region55: #{wav2vec2_pooled_forward.1} parent=11 // pred_region
          _
        $region56: #{wav2vec2_pooled_forward.1} parent=11 // pred_fallthru
          _
        // Predicated region
        $region57: #{wav2vec2_pooled_forward.1} parent=11 // pred_check
          %p374 = pneg %p300
        $region58: #{wav2vec2_pooled_forward.1} parent=11 // pred_check_branch
          %376 = sbr.rel (%p374) target = $region60
        $region59: #{wav2vec2_pooled_forward.1} parent=11 // pred_region
          _
        $region60: #{wav2vec2_pooled_forward.1} parent=11 // pred_fallthru
          _
      $region12: #{wav2vec2_pooled_forward.1} parent=5 // pred_fallthru
        _
      %p377 = scmp.lt.s32.totalorder %s22, 2
      // Predicated region
      $region61: #{wav2vec2_pooled_forward.1} parent=5 // pred_check
        %p378 = pneg %p377
      $region62: #{wav2vec2_pooled_forward.1} parent=5 // pred_check_branch
        %380 = sbr.rel (%p378) target = $region64
      $region63: #{wav2vec2_pooled_forward.1} parent=5 // pred_region
        // Predicated region
        $region65: #{wav2vec2_pooled_forward.1} parent=63 // pred_check
          %p381 = pneg %p42
        $region66: #{wav2vec2_pooled_forward.1} parent=63 // pred_check_branch
          %383 = sbr.rel (%p381) target = $region68
        $region67: #{wav2vec2_pooled_forward.1} parent=63 // pred_region
          %p384 = scmp.lt.s32.totalorder %s22, 1
          %s385 = scalar_select %p384, %s22, 1
          %s386 = smul.addr %s385, 32
          %s387 = smul.addr %s386, 8
          %s388 = scalar_lea.vmem %s0, %s387
        $region68: #{wav2vec2_pooled_forward.1} parent=63 // pred_fallthru
          _
      $region64: #{wav2vec2_pooled_forward.1} parent=5 // pred_fallthru
        _
      %p389 = scmp.le.s32.totalorder 1, %s22
      %p390 = scmp.lt.s32.totalorder %s22, 3
      %p391 = pnand %p389, %p390
      %p392 = pneg %p391
      // Predicated region
      $region69: #{wav2vec2_pooled_forward.1} parent=5 // pred_check
        _
      $region70: #{wav2vec2_pooled_forward.1} parent=5 // pred_check_branch
        %394 = sbr.rel (%p391) target = $region72
      $region71: #{wav2vec2_pooled_forward.1} parent=5 // pred_region
        %s395 = ssub.s32 %s22, 1
        %p396 = scmp.lt.s32.totalorder %s27, 1
        %s397 = scalar_select %p396, %s27, 1
        %s398 = smul.addr %s397, 32
        %s399 = smul.addr %s398, 8
        %s400 = scalar_lea.vmem %s0, %s399
        %p401 = pneg %p48
        %p402 = pneg %p45
        %p403 = pneg %p69
        %p404 = pneg %p66
        %p405 = pneg %p90
        %p406 = pneg %p87
        %p407 = pneg %p111
        %p408 = pneg %p108
        %p409 = pneg %p132
        %p410 = pneg %p129
        %p411 = pneg %p153
        %p412 = pneg %p150
        %p413 = pneg %p174
        %p414 = pneg %p171
        %p415 = pneg %p195
        %p416 = pneg %p192
        %p417 = pneg %p216
        %p418 = pneg %p213
        %p419 = pneg %p237
        %p420 = pneg %p234
        %p421 = pneg %p258
        %p422 = pneg %p255
        %p423 = pneg %p279
        %p424 = pneg %p276
        %p425 = pneg %p300
        %p426 = pneg %p297
        %p427 = pneg %p326
        %p428 = pneg %p323
        %s429 = sand.u32 %s313, 1
        %s430 = scalar_lea.sflag [#allocation3], %s429
        %s431 = sand.u32 %s313, 1
        %s432 = smul.addr %s431, 4
        %s433 = scalar_lea.vmem [#allocation2], %s432
        %p434 = scmp.lt.s32.totalorder %s27, 1
        %s435 = scalar_select %p434, %s27, 1
        %s436 = smul.addr %s435, 32
        %s437 = smul.addr %s436, 8
        %s438 = scalar_lea.vmem %s0, %s437
        %v440 = vld [vmem:[%s8] sm:$0xff]
        %v441 = vld [vmem:[%s8 + $0x8] sm:$0x1]
        %v442 = vld [vmem:[%s10] sm:$0xf]
        %v443 = vld [vmem:[%s10 + $0x4] sm:$0xf]
        %v444 = vld [vmem:[%s10 + $0x8] sm:$0xf]
        %v445 = vld [vmem:[%s10 + $0xc] sm:$0xf]
        %v446 = vld [vmem:[%s11] sm:$0xf]
        %v447 = vld [vmem:[%s11 + $0x4] sm:$0xf]
        %v448 = vld [vmem:[%s11 + $0x8] sm:$0xf]
        %v449 = vld [vmem:[%s11 + $0xc] sm:$0xf]
        %v450 = vld [vmem:[%s11 + $0x10] sm:$0xf]
        %v451 = vld [vmem:[%s11 + $0x14] sm:$0xf]
        %v452 = vld [vmem:[%s11 + $0x18] sm:$0xf]
        %v453 = vld [vmem:[%s11 + $0x1c] sm:$0xf]
        %v454 = vld [vmem:[%s11 + $0x20] sm:$0xf]
        %v455 = vld [vmem:[%s11 + $0x24] sm:$0xf]
        %v456 = vld [vmem:[%s11 + $0x28] sm:$0xf]
        %v457 = vld [vmem:[%s11 + $0x2c] sm:$0xf]
        %v458 = vld [vmem:[%s11 + $0x30] sm:$0xf]
        %v459 = vld [vmem:[%s11 + $0x34] sm:$0xf]
        %v460 = vld [vmem:[%s11 + $0x38] sm:$0xf]
        %v461 = vld [vmem:[%s11 + $0x3c] sm:$0xf]
        %v462 = vld [vmem:[%s12] sm:$0xf]
        %v463 = vld [vmem:[%s12 + $0x4] sm:$0xf]
        %v464 = vld [vmem:[%s12 + $0x8] sm:$0xf]
        %v465 = vld [vmem:[%s12 + $0xc] sm:$0xf]
        %v466 = vld [vmem:[%s12 + $0x10] sm:$0xf]
        %v467 = vld [vmem:[%s12 + $0x14] sm:$0xf]
        %v468 = vld [vmem:[%s12 + $0x18] sm:$0xf]
        %v469 = vld [vmem:[%s12 + $0x1c] sm:$0xf]
        %v470 = vld [vmem:[%s12 + $0x20] sm:$0xf]
        %v471 = vld [vmem:[%s12 + $0x24] sm:$0xf]
        %v472 = vld [vmem:[%s12 + $0x28] sm:$0xf]
        %v473 = vld [vmem:[%s12 + $0x2c] sm:$0xf]
        %v474 = vld [vmem:[%s12 + $0x30] sm:$0xf]
        %v475 = vld [vmem:[%s12 + $0x34] sm:$0xf]
        %v476 = vld [vmem:[%s12 + $0x38] sm:$0xf]
        %v477 = vld [vmem:[%s12 + $0x3c] sm:$0xf]
        %v478 = vld [vmem:[%s438] sm:$0xff]
        %v479 = vld [vmem:[%s438 + $0x8] sm:$0xff]
        %v480 = vld [vmem:[%s438 + $0x10] sm:$0xff]
        %v481 = vld [vmem:[%s438 + $0x18] sm:$0xff]
        %v482 = vld [vmem:[%s438 + $0x20] sm:$0xff]
        %v483 = vld [vmem:[%s438 + $0x28] sm:$0xff]
        %v484 = vld [vmem:[%s438 + $0x30] sm:$0xff]
        %v485 = vld [vmem:[%s438 + $0x38] sm:$0xff]
        %v486 = vld [vmem:[%s438 + $0x40] sm:$0xff]
        %v487 = vld [vmem:[%s438 + $0x48] sm:$0xff]
        %v488 = vld [vmem:[%s438 + $0x50] sm:$0xff]
        %v489 = vld [vmem:[%s438 + $0x58] sm:$0xff]
        %v490 = vld [vmem:[%s438 + $0x60] sm:$0xff]
        %v491 = vld [vmem:[%s438 + $0x68] sm:$0xff]
        %v492 = vld [vmem:[%s438 + $0x70] sm:$0xff]
        %v493 = vld [vmem:[%s438 + $0x78] sm:$0xff]
        %v494 = vld [vmem:[%s438 + $0x80] sm:$0xff]
        %v495 = vld [vmem:[%s438 + $0x88] sm:$0xff]
        %v496 = vld [vmem:[%s438 + $0x90] sm:$0xff]
        %v497 = vld [vmem:[%s438 + $0x98] sm:$0xff]
        %v498 = vld [vmem:[%s438 + $0xa0] sm:$0xff]
        %v499 = vld [vmem:[%s438 + $0xa8] sm:$0xff]
        %v500 = vld [vmem:[%s438 + $0xb0] sm:$0xff]
        %v501 = vld [vmem:[%s438 + $0xb8] sm:$0xff]
        %v502 = vld [vmem:[%s438 + $0xc0] sm:$0xff]
        %v503 = vld [vmem:[%s438 + $0xc8] sm:$0xff]
        %v504 = vld [vmem:[%s438 + $0xd0] sm:$0xff]
        %v505 = vld [vmem:[%s438 + $0xd8] sm:$0xff]
        %v506 = vld [vmem:[%s438 + $0xe0] sm:$0xff]
        %v507 = vld [vmem:[%s438 + $0xe8] sm:$0xff]
        %v508 = vld [vmem:[%s438 + $0xf0] sm:$0xff]
        %v509 = vld [vmem:[%s438 + $0xf8] sm:$0xff]
        %v510 = vpack.c.bf16 %v479, %v478
        %v511 = vpack.c.bf16 %v481, %v480
        %v512 = vpack.c.bf16 %v483, %v482
        %v513 = vpack.c.bf16 %v485, %v484
        %v514 = vpack.c.bf16 %v487, %v486
        %v515 = vpack.c.bf16 %v489, %v488
        %v516 = vpack.c.bf16 %v491, %v490
        %v517 = vpack.c.bf16 %v493, %v492
        %v518 = vpack.c.bf16 %v495, %v494
        %v519 = vpack.c.bf16 %v497, %v496
        %v520 = vpack.c.bf16 %v499, %v498
        %v521 = vpack.c.bf16 %v501, %v500
        %v522 = vpack.c.bf16 %v503, %v502
        %v523 = vpack.c.bf16 %v505, %v504
        %v524 = vpack.c.bf16 %v507, %v506
        %v525 = vpack.c.bf16 %v509, %v508
        %v526 = vld [vmem:[%s1] sm:$0xf]
        %v527 = vld [vmem:[%s1 + $0x4] sm:$0x1]
        %v528 = vlaneseq
        %v529 = vshrl.u32 %v528, 7
        %v530 = vsub.s32 0, %v529
        %v531 = vrot.slane %v440, %v530
        %v534 = vunpack.c.l.b16 %v526
        %v535 = vunpack.c.l.b16 %v527
        %v536 = vpack.c.b16 %v535, %v534
        %vm537 = vcmask 80896
        %v539 = vsel %vm537, %v510, 0
        %v542 = vsel %vm537, %v511, 0
        %v545 = vsel %vm537, %v512, 0
        %v548 = vsel %vm537, %v513, 0
        %v551 = vsel %vm537, %v514, 0
        %v554 = vsel %vm537, %v515, 0
        %v557 = vsel %vm537, %v516, 0
        %v560 = vsel %vm537, %v517, 0
        %v563 = vsel %vm537, %v518, 0
        %v566 = vsel %vm537, %v519, 0
        %v569 = vsel %vm537, %v520, 0
        %v572 = vsel %vm537, %v521, 0
        %v575 = vsel %vm537, %v522, 0
        %v578 = vsel %vm537, %v523, 0
        %v581 = vsel %vm537, %v524, 0
        %v584 = vsel %vm537, %v525, 0
        %vm586 = vcmask 1044480
        %v588 = vsel %vm586, %v536, 0
        %590 = vmatprep.subr.bf16.mxu0 0
        %591 = vmatpush1.bf16.msra.mxu0 %v588
        %592 = vmatprep.subr.bf16.mxu0 0
        %593 = vmatpush1.bf16.msra.mxu0 0
        %594 = vmatprep.subr.bf16.mxu0 0
        %595 = vmatpush1.bf16.msra.mxu0 0
        %596 = vmatprep.subr.bf16.mxu0 0
        %597 = vmatpush1.bf16.msra.mxu0 0
        %598 = vmatprep.subr.bf16.mxu0 0
        %599 = vmatpush1.bf16.msra.mxu0 0
        %600 = vmatprep.subr.bf16.mxu0 0
        %601 = vmatpush1.bf16.msra.mxu0 0
        %602 = vmatprep.subr.bf16.mxu0 0
        %603 = vmatpush1.bf16.msra.mxu0 0
        %604 = vmatprep.subr.bf16.mxu0 0
        %605 = vmatpush1.bf16.msra.mxu0 0
        %606 = vmatprep.subr.bf16.mxu0 0
        %607 = vmatpush1.bf16.msra.mxu0 0
        %608 = vmatprep.subr.bf16.mxu0 0
        %609 = vmatpush1.bf16.msra.mxu0 0
        %610 = vmatprep.subr.bf16.mxu0 0
        %611 = vmatpush1.bf16.msra.mxu0 0
        %612 = vmatprep.subr.bf16.mxu0 0
        %613 = vmatpush1.bf16.msra.mxu0 0
        %614 = vmatprep.subr.bf16.mxu0 0
        %615 = vmatpush1.bf16.msra.mxu0 0
        %616 = vmatprep.subr.bf16.mxu0 0
        %617 = vmatpush1.bf16.msra.mxu0 0
        %618 = vmatprep.subr.bf16.mxu0 0
        %619 = vmatpush1.bf16.msra.mxu0 0
        %620 = vmatprep.subr.bf16.mxu0 0
        %621 = vmatpush1.bf16.msra.mxu0 0
        %622 = vmatprep.mubr.bf16.mxu0 0
        %623 = vmatmul.mubr.bf16.gmra.mrb[0].mxu0 %v539
        %v624 = vpop.f32.mrb[0].mxu0
        %v625 = vadd.f32 %v531, %v624
        %v626 = vpop.f32.mrb[0].mxu0
        %v627 = vpop.f32.mrb[0].mxu0
        %v628 = vadd.f32 %v531, %v627
        %v629 = vpop.f32.mrb[0].mxu0
        %630 = vmatprep.mubr.bf16.mxu0 0
        %631 = vmatmul.mubr.bf16.gmra.mrb[0].mxu0 %v542
        %v632 = vpop.f32.mrb[0].mxu0
        %v633 = vadd.f32 %v531, %v632
        %v634 = vpop.f32.mrb[0].mxu0
        %v635 = vpop.f32.mrb[0].mxu0
        %v636 = vadd.f32 %v531, %v635
        %v637 = vpop.f32.mrb[0].mxu0
        %638 = vmatprep.mubr.bf16.mxu0 0
        %639 = vmatmul.mubr.bf16.gmra.mrb[0].mxu0 %v545
        %v640 = vpop.f32.mrb[0].mxu0
        %v641 = vadd.f32 %v531, %v640
        %v642 = vpop.f32.mrb[0].mxu0
        %v643 = vpop.f32.mrb[0].mxu0
        %v644 = vadd.f32 %v531, %v643
        %v645 = vpop.f32.mrb[0].mxu0
        %646 = vmatprep.mubr.bf16.mxu0 0
        %647 = vmatmul.mubr.bf16.gmra.mrb[0].mxu0 %v548
        %v648 = vpop.f32.mrb[0].mxu0
        %v649 = vadd.f32 %v531, %v648
        %v650 = vpop.f32.mrb[0].mxu0
        %v651 = vpop.f32.mrb[0].mxu0
        %v652 = vadd.f32 %v531, %v651
        %v653 = vpop.f32.mrb[0].mxu0
        %654 = vmatprep.mubr.bf16.mxu0 0
        %655 = vmatmul.mubr.bf16.gmra.mrb[0].mxu0 %v551
        %v656 = vpop.f32.mrb[0].mxu0
        %v657 = vadd.f32 %v531, %v656
        %v658 = vpop.f32.mrb[0].mxu0
        %v659 = vpop.f32.mrb[0].mxu0
        %v660 = vadd.f32 %v531, %v659
        %v661 = vpop.f32.mrb[0].mxu0
        %662 = vmatprep.mubr.bf16.mxu0 0
        %663 = vmatmul.mubr.bf16.gmra.mrb[0].mxu0 %v554
        %v664 = vpop.f32.mrb[0].mxu0
        %v665 = vadd.f32 %v531, %v664
        %v666 = vpop.f32.mrb[0].mxu0
        %v667 = vpop.f32.mrb[0].mxu0
        %v668 = vadd.f32 %v531, %v667
        %v669 = vpop.f32.mrb[0].mxu0
        %670 = vmatprep.mubr.bf16.mxu0 0
        %671 = vmatmul.mubr.bf16.gmra.mrb[0].mxu0 %v557
        %v672 = vpop.f32.mrb[0].mxu0
        %v673 = vadd.f32 %v531, %v672
        %v674 = vpop.f32.mrb[0].mxu0
        %v675 = vpop.f32.mrb[0].mxu0
        %v676 = vadd.f32 %v531, %v675
        %v677 = vpop.f32.mrb[0].mxu0
        %678 = vmatprep.mubr.bf16.mxu0 0
        %679 = vmatmul.mubr.bf16.gmra.mrb[0].mxu0 %v560
        %v680 = vpop.f32.mrb[0].mxu0
        %v681 = vadd.f32 %v531, %v680
        %v682 = vpop.f32.mrb[0].mxu0
        %v683 = vpop.f32.mrb[0].mxu0
        %v684 = vadd.f32 %v531, %v683
        %v685 = vpop.f32.mrb[0].mxu0
        %686 = vmatprep.mubr.bf16.mxu0 0
        %687 = vmatmul.mubr.bf16.gmra.mrb[0].mxu0 %v563
        %v688 = vpop.f32.mrb[0].mxu0
        %v689 = vadd.f32 %v531, %v688
        %v690 = vpop.f32.mrb[0].mxu0
        %v691 = vpop.f32.mrb[0].mxu0
        %v692 = vadd.f32 %v531, %v691
        %v693 = vpop.f32.mrb[0].mxu0
        %694 = vmatprep.mubr.bf16.mxu0 0
        %695 = vmatmul.mubr.bf16.gmra.mrb[0].mxu0 %v566
        %v696 = vpop.f32.mrb[0].mxu0
        %v697 = vadd.f32 %v531, %v696
        %v698 = vpop.f32.mrb[0].mxu0
        %v699 = vpop.f32.mrb[0].mxu0
        %v700 = vadd.f32 %v531, %v699
        %v701 = vpop.f32.mrb[0].mxu0
        %702 = vmatprep.mubr.bf16.mxu0 0
        %703 = vmatmul.mubr.bf16.gmra.mrb[0].mxu0 %v569
        %v704 = vpop.f32.mrb[0].mxu0
        %v705 = vadd.f32 %v531, %v704
        %v706 = vpop.f32.mrb[0].mxu0
        %v707 = vpop.f32.mrb[0].mxu0
        %v708 = vadd.f32 %v531, %v707
        %v709 = vpop.f32.mrb[0].mxu0
        %710 = vmatprep.mubr.bf16.mxu0 0
        %711 = vmatmul.mubr.bf16.gmra.mrb[0].mxu0 %v572
        %v712 = vpop.f32.mrb[0].mxu0
        %v713 = vadd.f32 %v531, %v712
        %v714 = vpop.f32.mrb[0].mxu0
        %v715 = vpop.f32.mrb[0].mxu0
        %v716 = vadd.f32 %v531, %v715
        %v717 = vpop.f32.mrb[0].mxu0
        %718 = vmatprep.mubr.bf16.mxu0 0
        %719 = vmatmul.mubr.bf16.gmra.mrb[0].mxu0 %v575
        %v720 = vpop.f32.mrb[0].mxu0
        %v721 = vadd.f32 %v531, %v720
        %v722 = vpop.f32.mrb[0].mxu0
        %v723 = vpop.f32.mrb[0].mxu0
        %v724 = vadd.f32 %v531, %v723
        %v725 = vpop.f32.mrb[0].mxu0
        %726 = vmatprep.mubr.bf16.mxu0 0
        %727 = vmatmul.mubr.bf16.gmra.mrb[0].mxu0 %v578
        %v728 = vpop.f32.mrb[0].mxu0
        %v729 = vadd.f32 %v531, %v728
        %v730 = vpop.f32.mrb[0].mxu0
        %v731 = vpop.f32.mrb[0].mxu0
        %v732 = vadd.f32 %v531, %v731
        %v733 = vpop.f32.mrb[0].mxu0
        %734 = vmatprep.mubr.bf16.mxu0 0
        %735 = vmatmul.mubr.bf16.gmra.mrb[0].mxu0 %v581
        %v736 = vpop.f32.mrb[0].mxu0
        %v737 = vadd.f32 %v531, %v736
        %v738 = vpop.f32.mrb[0].mxu0
        %v739 = vpop.f32.mrb[0].mxu0
        %v740 = vadd.f32 %v531, %v739
        %v741 = vpop.f32.mrb[0].mxu0
        %742 = vmatprep.mubr.bf16.mxu0 0
        %743 = vmatmul.mubr.bf16.gmra.mrb[0].mxu0 %v584
        %v744 = vpop.f32.mrb[0].mxu0
        %v745 = vadd.f32 %v531, %v744
        %v746 = vpop.f32.mrb[0].mxu0
        %v747 = vpop.f32.mrb[0].mxu0
        %v748 = vadd.f32 %v531, %v747
        %v749 = vpop.f32.mrb[0].mxu0
        %750 = vdwg.mxu0
        %vm751 = vcmask 130048
        %v752 = vsel %vm751, %v625, 0.0
        %v753 = vsel %vm751, %v628, 0.0
        %v754 = vadd.f32 %v752, %v753
        %v755 = vsel %vm751, %v633, 0.0
        %v756 = vadd.f32 %v754, %v755
        %v757 = vsel %vm751, %v636, 0.0
        %v758 = vadd.f32 %v756, %v757
        %v759 = vrot.slane %v758, 4
        %v760 = vadd.f32 %v758, %v759
        %v761 = vrot.slane %v760, 2
        %v762 = vadd.f32 %v760, %v761
        %v763 = vrot.slane %v762, 1
        %v764 = vadd.f32 %v762, %v763
        %v765 = vsel %vm751, %v641, 0.0
        %v766 = vsel %vm751, %v644, 0.0
        %v767 = vadd.f32 %v765, %v766
        %v768 = vsel %vm751, %v649, 0.0
        %v769 = vadd.f32 %v767, %v768
        %v770 = vsel %vm751, %v652, 0.0
        %v771 = vadd.f32 %v769, %v770
        %v772 = vrot.slane %v771, 4
        %v773 = vadd.f32 %v771, %v772
        %v774 = vrot.slane %v773, 2
        %v775 = vadd.f32 %v773, %v774
        %v776 = vrot.slane %v775, 1
        %v777 = vadd.f32 %v775, %v776
        %v778 = vsel %vm751, %v657, 0.0
        %v779 = vsel %vm751, %v660, 0.0
        %v780 = vadd.f32 %v778, %v779
        %v781 = vsel %vm751, %v665, 0.0
        %v782 = vadd.f32 %v780, %v781
        %v783 = vsel %vm751, %v668, 0.0
        %v784 = vadd.f32 %v782, %v783
        %v785 = vrot.slane %v784, 4
        %v786 = vadd.f32 %v784, %v785
        %v787 = vrot.slane %v786, 2
        %v788 = vadd.f32 %v786, %v787
        %v789 = vrot.slane %v788, 1
        %v790 = vadd.f32 %v788, %v789
        %v791 = vsel %vm751, %v673, 0.0
        %v792 = vsel %vm751, %v676, 0.0
        %v793 = vadd.f32 %v791, %v792
        %v794 = vsel %vm751, %v681, 0.0
        %v795 = vadd.f32 %v793, %v794
        %v796 = vsel %vm751, %v684, 0.0
        %v797 = vadd.f32 %v795, %v796
        %v798 = vrot.slane %v797, 4
        %v799 = vadd.f32 %v797, %v798
        %v800 = vrot.slane %v799, 2
        %v801 = vadd.f32 %v799, %v800
        %v802 = vrot.slane %v801, 1
        %v803 = vadd.f32 %v801, %v802
        %v804 = vsel %vm751, %v689, 0.0
        %v805 = vsel %vm751, %v692, 0.0
        %v806 = vadd.f32 %v804, %v805
        %v807 = vsel %vm751, %v697, 0.0
        %v808 = vadd.f32 %v806, %v807
        %v809 = vsel %vm751, %v700, 0.0
        %v810 = vadd.f32 %v808, %v809
        %v811 = vrot.slane %v810, 4
        %v812 = vadd.f32 %v810, %v811
        %v813 = vrot.slane %v812, 2
        %v814 = vadd.f32 %v812, %v813
        %v815 = vrot.slane %v814, 1
        %v816 = vadd.f32 %v814, %v815
        %v817 = vsel %vm751, %v705, 0.0
        %v818 = vsel %vm751, %v708, 0.0
        %v819 = vadd.f32 %v817, %v818
        %v820 = vsel %vm751, %v713, 0.0
        %v821 = vadd.f32 %v819, %v820
        %v822 = vsel %vm751, %v716, 0.0
        %v823 = vadd.f32 %v821, %v822
        %v824 = vrot.slane %v823, 4
        %v825 = vadd.f32 %v823, %v824
        %v826 = vrot.slane %v825, 2
        %v827 = vadd.f32 %v825, %v826
        %v828 = vrot.slane %v827, 1
        %v829 = vadd.f32 %v827, %v828
        %v830 = vsel %vm751, %v721, 0.0
        %v831 = vsel %vm751, %v724, 0.0
        %v832 = vadd.f32 %v830, %v831
        %v833 = vsel %vm751, %v729, 0.0
        %v834 = vadd.f32 %v832, %v833
        %v835 = vsel %vm751, %v732, 0.0
        %v836 = vadd.f32 %v834, %v835
        %v837 = vrot.slane %v836, 4
        %v838 = vadd.f32 %v836, %v837
        %v839 = vrot.slane %v838, 2
        %v840 = vadd.f32 %v838, %v839
        %v841 = vrot.slane %v840, 1
        %v842 = vadd.f32 %v840, %v841
        %v843 = vsel %vm751, %v737, 0.0
        %v844 = vsel %vm751, %v740, 0.0
        %v845 = vadd.f32 %v843, %v844
        %v846 = vsel %vm751, %v745, 0.0
        %v847 = vadd.f32 %v845, %v846
        %v848 = vsel %vm751, %v748, 0.0
        %v849 = vadd.f32 %v847, %v848
        %v850 = vrot.slane %v849, 4
        %v851 = vadd.f32 %v849, %v850
        %v852 = vrot.slane %v851, 2
        %v853 = vadd.f32 %v851, %v852
        %v854 = vrot.slane %v853, 1
        %v855 = vadd.f32 %v853, %v854
        %v856 = vadd.f32 %v764, %v816
        %v857 = vadd.f32 %v777, %v829
        %v858 = vadd.f32 %v790, %v842
        %v859 = vadd.f32 %v803, %v855
        %v860 = vmul.f32 %v625, %v625
        %v861 = vmul.f32 %v628, %v628
        %v862 = vmul.f32 %v633, %v633
        %v863 = vmul.f32 %v636, %v636
        %v864 = vmul.f32 %v641, %v641
        %v865 = vmul.f32 %v644, %v644
        %v866 = vmul.f32 %v649, %v649
        %v867 = vmul.f32 %v652, %v652
        %v868 = vmul.f32 %v657, %v657
        %v869 = vmul.f32 %v660, %v660
        %v870 = vmul.f32 %v665, %v665
        %v871 = vmul.f32 %v668, %v668
        %v872 = vmul.f32 %v673, %v673
        %v873 = vmul.f32 %v676, %v676
        %v874 = vmul.f32 %v681, %v681
        %v875 = vmul.f32 %v684, %v684
        %v876 = vsel %vm751, %v860, 0.0
        %v877 = vsel %vm751, %v861, 0.0
        %v878 = vadd.f32 %v876, %v877
        %v879 = vsel %vm751, %v862, 0.0
        %v880 = vadd.f32 %v878, %v879
        %v881 = vsel %vm751, %v863, 0.0
        %v882 = vadd.f32 %v880, %v881
        %v883 = vrot.slane %v882, 4
        %v884 = vadd.f32 %v882, %v883
        %v885 = vrot.slane %v884, 2
        %v886 = vadd.f32 %v884, %v885
        %v887 = vrot.slane %v886, 1
        %v888 = vadd.f32 %v886, %v887
        %v889 = vsel %vm751, %v864, 0.0
        %v890 = vsel %vm751, %v865, 0.0
        %v891 = vadd.f32 %v889, %v890
        %v892 = vsel %vm751, %v866, 0.0
        %v893 = vadd.f32 %v891, %v892
        %v894 = vsel %vm751, %v867, 0.0
        %v895 = vadd.f32 %v893, %v894
        %v896 = vrot.slane %v895, 4
        %v897 = vadd.f32 %v895, %v896
        %v898 = vrot.slane %v897, 2
        %v899 = vadd.f32 %v897, %v898
        %v900 = vrot.slane %v899, 1
        %v901 = vadd.f32 %v899, %v900
        %v902 = vsel %vm751, %v868, 0.0
        %v903 = vsel %vm751, %v869, 0.0
        %v904 = vadd.f32 %v902, %v903
        %v905 = vsel %vm751, %v870, 0.0
        %v906 = vadd.f32 %v904, %v905
        %v907 = vsel %vm751, %v871, 0.0
        %v908 = vadd.f32 %v906, %v907
        %v909 = vrot.slane %v908, 4
        %v910 = vadd.f32 %v908, %v909
        %v911 = vrot.slane %v910, 2
        %v912 = vadd.f32 %v910, %v911
        %v913 = vrot.slane %v912, 1
        %v914 = vadd.f32 %v912, %v913
        %v915 = vsel %vm751, %v872, 0.0
        %v916 = vsel %vm751, %v873, 0.0
        %v917 = vadd.f32 %v915, %v916
        %v918 = vsel %vm751, %v874, 0.0
        %v919 = vadd.f32 %v917, %v918
        %v920 = vsel %vm751, %v875, 0.0
        %v921 = vadd.f32 %v919, %v920
        %v922 = vrot.slane %v921, 4
        %v923 = vadd.f32 %v921, %v922
        %v924 = vrot.slane %v923, 2
        %v925 = vadd.f32 %v923, %v924
        %v926 = vrot.slane %v925, 1
        %v927 = vadd.f32 %v925, %v926
        %v928 = vmul.f32 %v689, %v689
        %v929 = vmul.f32 %v692, %v692
        %v930 = vmul.f32 %v697, %v697
        %v931 = vmul.f32 %v700, %v700
        %v932 = vmul.f32 %v705, %v705
        %v933 = vmul.f32 %v708, %v708
        %v934 = vmul.f32 %v713, %v713
        %v935 = vmul.f32 %v716, %v716
        %v936 = vmul.f32 %v721, %v721
        %v937 = vmul.f32 %v724, %v724
        %v938 = vmul.f32 %v729, %v729
        %v939 = vmul.f32 %v732, %v732
        %v940 = vmul.f32 %v737, %v737
        %v941 = vmul.f32 %v740, %v740
        %v942 = vmul.f32 %v745, %v745
        %v943 = vmul.f32 %v748, %v748
        %v944 = vsel %vm751, %v928, 0.0
        %v945 = vsel %vm751, %v929, 0.0
        %v946 = vadd.f32 %v944, %v945
        %v947 = vsel %vm751, %v930, 0.0
        %v948 = vadd.f32 %v946, %v947
        %v949 = vsel %vm751, %v931, 0.0
        %v950 = vadd.f32 %v948, %v949
        %v951 = vrot.slane %v950, 4
        %v952 = vadd.f32 %v950, %v951
        %v953 = vrot.slane %v952, 2
        %v954 = vadd.f32 %v952, %v953
        %v955 = vrot.slane %v954, 1
        %v956 = vadd.f32 %v954, %v955
        %v957 = vsel %vm751, %v932, 0.0
        %v958 = vsel %vm751, %v933, 0.0
        %v959 = vadd.f32 %v957, %v958
        %v960 = vsel %vm751, %v934, 0.0
        %v961 = vadd.f32 %v959, %v960
        %v962 = vsel %vm751, %v935, 0.0
        %v963 = vadd.f32 %v961, %v962
        %v964 = vrot.slane %v963, 4
        %v965 = vadd.f32 %v963, %v964
        %v966 = vrot.slane %v965, 2
        %v967 = vadd.f32 %v965, %v966
        %v968 = vrot.slane %v967, 1
        %v969 = vadd.f32 %v967, %v968
        %v970 = vsel %vm751, %v936, 0.0
        %v971 = vsel %vm751, %v937, 0.0
        %v972 = vadd.f32 %v970, %v971
        %v973 = vsel %vm751, %v938, 0.0
        %v974 = vadd.f32 %v972, %v973
        %v975 = vsel %vm751, %v939, 0.0
        %v976 = vadd.f32 %v974, %v975
        %v977 = vrot.slane %v976, 4
        %v978 = vadd.f32 %v976, %v977
        %v979 = vrot.slane %v978, 2
        %v980 = vadd.f32 %v978, %v979
        %v981 = vrot.slane %v980, 1
        %v982 = vadd.f32 %v980, %v981
        %v983 = vsel %vm751, %v940, 0.0
        %v984 = vsel %vm751, %v941, 0.0
        %v985 = vadd.f32 %v983, %v984
        %v986 = vsel %vm751, %v942, 0.0
        %v987 = vadd.f32 %v985, %v986
        %v988 = vsel %vm751, %v943, 0.0
        %v989 = vadd.f32 %v987, %v988
        %v990 = vrot.slane %v989, 4
        %v991 = vadd.f32 %v989, %v990
        %v992 = vrot.slane %v991, 2
        %v993 = vadd.f32 %v991, %v992
        %v994 = vrot.slane %v993, 1
        %v995 = vadd.f32 %v993, %v994
        %v996 = vadd.f32 %v888, %v956
        %v997 = vadd.f32 %v901, %v969
        %v998 = vadd.f32 %v914, %v982
        %v999 = vadd.f32 %v927, %v995
        %v1000 = vmul.f32 %v856, 0.015625
        %v1001 = vmul.f32 %v857, 0.015625
        %v1002 = vmul.f32 %v858, 0.015625
        %v1003 = vmul.f32 %v859, 0.015625
        %v1004 = vmul.f32 %v996, 0.015625
        %v1005 = vmul.f32 %v997, 0.015625
        %v1006 = vmul.f32 %v998, 0.015625
        %v1007 = vmul.f32 %v999, 0.015625
        %v1008 = vmul.f32 %v1000, %v1000
        %v1009 = vmul.f32 %v1001, %v1001
        %v1010 = vmul.f32 %v1002, %v1002
        %v1011 = vmul.f32 %v1003, %v1003
        %v1012 = vsub.f32 %v1004, %v1008
        %v1013 = vsub.f32 %v1005, %v1009
        %v1014 = vsub.f32 %v1006, %v1010
        %v1015 = vsub.f32 %v1007, %v1011
        %v1016 = vadd.f32 %v1012, 1e-05
        %v1017 = vadd.f32 %v1013, 1e-05
        %v1018 = vadd.f32 %v1014, 1e-05
        %v1019 = vadd.f32 %v1015, 1e-05
        %v1020 = vrsqrt.pop %v1016
        %v1021 = vrsqrt.pop %v1017
        %v1022 = vrsqrt.pop %v1018
        %v1023 = vrsqrt.pop %v1019
        %v1024 = vsub.f32 %v625, %v1000
        %v1025 = vsub.f32 %v628, %v1000
        %v1026 = vsub.f32 %v633, %v1000
        %v1027 = vsub.f32 %v636, %v1000
        %v1028 = vsub.f32 %v641, %v1001
        %v1029 = vsub.f32 %v644, %v1001
        %v1030 = vsub.f32 %v649, %v1001
        %v1031 = vsub.f32 %v652, %v1001
        %v1032 = vsub.f32 %v657, %v1002
        %v1033 = vsub.f32 %v660, %v1002
        %v1034 = vsub.f32 %v665, %v1002
        %v1035 = vsub.f32 %v668, %v1002
        %v1036 = vsub.f32 %v673, %v1003
        %v1037 = vsub.f32 %v676, %v1003
        %v1038 = vsub.f32 %v681, %v1003
        %v1039 = vsub.f32 %v684, %v1003
        %v1040 = vmul.f32 %v1024, %v1020
        %v1041 = vmul.f32 %v1025, %v1020
        %v1042 = vmul.f32 %v1026, %v1020
        %v1043 = vmul.f32 %v1027, %v1020
        %v1044 = vmul.f32 %v1028, %v1021
        %v1045 = vmul.f32 %v1029, %v1021
        %v1046 = vmul.f32 %v1030, %v1021
        %v1047 = vmul.f32 %v1031, %v1021
        %v1048 = vmul.f32 %v1032, %v1022
        %v1049 = vmul.f32 %v1033, %v1022
        %v1050 = vmul.f32 %v1034, %v1022
        %v1051 = vmul.f32 %v1035, %v1022
        %v1052 = vmul.f32 %v1036, %v1023
        %v1053 = vmul.f32 %v1037, %v1023
        %v1054 = vmul.f32 %v1038, %v1023
        %v1055 = vmul.f32 %v1039, %v1023
        %v1056 = vlaneseq
        %v1057 = vshrl.u32 %v1056, 7
        %v1058 = vsub.s32 1, %v1057
        %v1059 = vrot.slane %v440, %v1058
        %v1060 = vmul.f32 %v1040, %v1059
        %v1061 = vmul.f32 %v1041, %v1059
        %v1062 = vmul.f32 %v1042, %v1059
        %v1063 = vmul.f32 %v1043, %v1059
        %v1064 = vmul.f32 %v1044, %v1059
        %v1065 = vmul.f32 %v1045, %v1059
        %v1066 = vmul.f32 %v1046, %v1059
        %v1067 = vmul.f32 %v1047, %v1059
        %v1068 = vmul.f32 %v1048, %v1059
        %v1069 = vmul.f32 %v1049, %v1059
        %v1070 = vmul.f32 %v1050, %v1059
        %v1071 = vmul.f32 %v1051, %v1059
        %v1072 = vmul.f32 %v1052, %v1059
        %v1073 = vmul.f32 %v1053, %v1059
        %v1074 = vmul.f32 %v1054, %v1059
        %v1075 = vmul.f32 %v1055, %v1059
        %v1076 = vlaneseq
        %v1077 = vshrl.u32 %v1076, 7
        %v1078 = vsub.s32 2, %v1077
        %v1079 = vrot.slane %v440, %v1078
        %v1080 = vadd.f32 %v1060, %v1079
        %v1081 = vadd.f32 %v1061, %v1079
        %v1082 = vadd.f32 %v1062, %v1079
        %v1083 = vadd.f32 %v1063, %v1079
        %v1084 = vadd.f32 %v1064, %v1079
        %v1085 = vadd.f32 %v1065, %v1079
        %v1086 = vadd.f32 %v1066, %v1079
        %v1087 = vadd.f32 %v1067, %v1079
        %v1088 = vadd.f32 %v1068, %v1079
        %v1089 = vadd.f32 %v1069, %v1079
        %v1090 = vadd.f32 %v1070, %v1079
        %v1091 = vadd.f32 %v1071, %v1079
        %v1092 = vadd.f32 %v1072, %v1079
        %v1093 = vadd.f32 %v1073, %v1079
        %v1094 = vadd.f32 %v1074, %v1079
        %v1095 = vadd.f32 %v1075, %v1079
        %v1096 = vmul.f32 %v1080, %v1080
        %v1097 = vmul.f32 %v1081, %v1081
        %v1098 = vmul.f32 %v1082, %v1082
        %v1099 = vmul.f32 %v1083, %v1083
        %v1100 = vmul.f32 %v1084, %v1084
        %v1101 = vmul.f32 %v1085, %v1085
        %v1102 = vmul.f32 %v1086, %v1086
        %v1103 = vmul.f32 %v1087, %v1087
        %v1104 = vmul.f32 %v1088, %v1088
        %v1105 = vmul.f32 %v1089, %v1089
        %v1106 = vmul.f32 %v1090, %v1090
        %v1107 = vmul.f32 %v1091, %v1091
        %v1108 = vmul.f32 %v1092, %v1092
        %v1109 = vmul.f32 %v1093, %v1093
        %v1110 = vmul.f32 %v1094, %v1094
        %v1111 = vmul.f32 %v1095, %v1095
        %v1112 = vmul.f32 %v1080, %v1096
        %v1113 = vmul.f32 %v1081, %v1097
        %v1114 = vmul.f32 %v1082, %v1098
        %v1115 = vmul.f32 %v1083, %v1099
        %v1116 = vmul.f32 %v1084, %v1100
        %v1117 = vmul.f32 %v1085, %v1101
        %v1118 = vmul.f32 %v1086, %v1102
        %v1119 = vmul.f32 %v1087, %v1103
        %v1120 = vmul.f32 %v1088, %v1104
        %v1121 = vmul.f32 %v1089, %v1105
        %v1122 = vmul.f32 %v1090, %v1106
        %v1123 = vmul.f32 %v1091, %v1107
        %v1124 = vmul.f32 %v1092, %v1108
        %v1125 = vmul.f32 %v1093, %v1109
        %v1126 = vmul.f32 %v1094, %v1110
        %v1127 = vmul.f32 %v1095, %v1111
        %v1128 = vmul.f32 %v1112, 0.044715
        %v1129 = vmul.f32 %v1113, 0.044715
        %v1130 = vmul.f32 %v1114, 0.044715
        %v1131 = vmul.f32 %v1115, 0.044715
        %v1132 = vmul.f32 %v1116, 0.044715
        %v1133 = vmul.f32 %v1117, 0.044715
        %v1134 = vmul.f32 %v1118, 0.044715
        %v1135 = vmul.f32 %v1119, 0.044715
        %v1136 = vmul.f32 %v1120, 0.044715
        %v1137 = vmul.f32 %v1121, 0.044715
        %v1138 = vmul.f32 %v1122, 0.044715
        %v1139 = vmul.f32 %v1123, 0.044715
        %v1140 = vmul.f32 %v1124, 0.044715
        %v1141 = vmul.f32 %v1125, 0.044715
        %v1142 = vmul.f32 %v1126, 0.044715
        %v1143 = vmul.f32 %v1127, 0.044715
        %v1144 = vadd.f32 %v1080, %v1128
        %v1145 = vadd.f32 %v1081, %v1129
        %v1146 = vadd.f32 %v1082, %v1130
        %v1147 = vadd.f32 %v1083, %v1131
        %v1148 = vadd.f32 %v1084, %v1132
        %v1149 = vadd.f32 %v1085, %v1133
        %v1150 = vadd.f32 %v1086, %v1134
        %v1151 = vadd.f32 %v1087, %v1135
        %v1152 = vadd.f32 %v1088, %v1136
        %v1153 = vadd.f32 %v1089, %v1137
        %v1154 = vadd.f32 %v1090, %v1138
        %v1155 = vadd.f32 %v1091, %v1139
        %v1156 = vadd.f32 %v1092, %v1140
        %v1157 = vadd.f32 %v1093, %v1141
        %v1158 = vadd.f32 %v1094, %v1142
        %v1159 = vadd.f32 %v1095, %v1143
        %v1160 = vmul.f32 %v1144, 0.7978846
        %v1161 = vmul.f32 %v1145, 0.7978846
        %v1162 = vmul.f32 %v1146, 0.7978846
        %v1163 = vmul.f32 %v1147, 0.7978846
        %v1164 = vmul.f32 %v1148, 0.7978846
        %v1165 = vmul.f32 %v1149, 0.7978846
        %v1166 = vmul.f32 %v1150, 0.7978846
        %v1167 = vmul.f32 %v1151, 0.7978846
        %v1168 = vmul.f32 %v1152, 0.7978846
        %v1169 = vmul.f32 %v1153, 0.7978846
        %v1170 = vmul.f32 %v1154, 0.7978846
        %v1171 = vmul.f32 %v1155, 0.7978846
        %v1172 = vmul.f32 %v1156, 0.7978846
        %v1173 = vmul.f32 %v1157, 0.7978846
        %v1174 = vmul.f32 %v1158, 0.7978846
        %v1175 = vmul.f32 %v1159, 0.7978846
        %v1176 = vtanh.pop %v1160
        %v1177 = vtanh.pop %v1161
        %v1178 = vtanh.pop %v1162
        %v1179 = vtanh.pop %v1163
        %v1180 = vtanh.pop %v1164
        %v1181 = vtanh.pop %v1165
        %v1182 = vtanh.pop %v1166
        %v1183 = vtanh.pop %v1167
        %v1184 = vtanh.pop %v1168
        %v1185 = vtanh.pop %v1169
        %v1186 = vtanh.pop %v1170
        %v1187 = vtanh.pop %v1171
        %v1188 = vtanh.pop %v1172
        %v1189 = vtanh.pop %v1173
        %v1190 = vtanh.pop %v1174
        %v1191 = vtanh.pop %v1175
        %v1192 = vadd.f32 %v1176, 1.0
        %v1193 = vadd.f32 %v1177, 1.0
        %v1194 = vadd.f32 %v1178, 1.0
        %v1195 = vadd.f32 %v1179, 1.0
        %v1196 = vadd.f32 %v1180, 1.0
        %v1197 = vadd.f32 %v1181, 1.0
        %v1198 = vadd.f32 %v1182, 1.0
        %v1199 = vadd.f32 %v1183, 1.0
        %v1200 = vadd.f32 %v1184, 1.0
        %v1201 = vadd.f32 %v1185, 1.0
        %v1202 = vadd.f32 %v1186, 1.0
        %v1203 = vadd.f32 %v1187, 1.0
        %v1204 = vadd.f32 %v1188, 1.0
        %v1205 = vadd.f32 %v1189, 1.0
        %v1206 = vadd.f32 %v1190, 1.0
        %v1207 = vadd.f32 %v1191, 1.0
        %v1208 = vmul.f32 %v1192, 0.5
        %v1209 = vmul.f32 %v1193, 0.5
        %v1210 = vmul.f32 %v1194, 0.5
        %v1211 = vmul.f32 %v1195, 0.5
        %v1212 = vmul.f32 %v1196, 0.5
        %v1213 = vmul.f32 %v1197, 0.5
        %v1214 = vmul.f32 %v1198, 0.5
        %v1215 = vmul.f32 %v1199, 0.5
        %v1216 = vmul.f32 %v1200, 0.5
        %v1217 = vmul.f32 %v1201, 0.5
        %v1218 = vmul.f32 %v1202, 0.5
        %v1219 = vmul.f32 %v1203, 0.5
        %v1220 = vmul.f32 %v1204, 0.5
        %v1221 = vmul.f32 %v1205, 0.5
        %v1222 = vmul.f32 %v1206, 0.5
        %v1223 = vmul.f32 %v1207, 0.5
        %v1224 = vmul.f32 %v1080, %v1208
        %v1225 = vmul.f32 %v1081, %v1209
        %v1226 = vmul.f32 %v1082, %v1210
        %v1227 = vmul.f32 %v1083, %v1211
        %v1228 = vmul.f32 %v1084, %v1212
        %v1229 = vmul.f32 %v1085, %v1213
        %v1230 = vmul.f32 %v1086, %v1214
        %v1231 = vmul.f32 %v1087, %v1215
        %v1232 = vmul.f32 %v1088, %v1216
        %v1233 = vmul.f32 %v1089, %v1217
        %v1234 = vmul.f32 %v1090, %v1218
        %v1235 = vmul.f32 %v1091, %v1219
        %v1236 = vmul.f32 %v1092, %v1220
        %v1237 = vmul.f32 %v1093, %v1221
        %v1238 = vmul.f32 %v1094, %v1222
        %v1239 = vmul.f32 %v1095, %v1223
        %v1240 = vsub.f32 %v689, %v1000
        %v1241 = vsub.f32 %v692, %v1000
        %v1242 = vsub.f32 %v697, %v1000
        %v1243 = vsub.f32 %v700, %v1000
        %v1244 = vsub.f32 %v705, %v1001
        %v1245 = vsub.f32 %v708, %v1001
        %v1246 = vsub.f32 %v713, %v1001
        %v1247 = vsub.f32 %v716, %v1001
        %v1248 = vsub.f32 %v721, %v1002
        %v1249 = vsub.f32 %v724, %v1002
        %v1250 = vsub.f32 %v729, %v1002
        %v1251 = vsub.f32 %v732, %v1002
        %v1252 = vsub.f32 %v737, %v1003
        %v1253 = vsub.f32 %v740, %v1003
        %v1254 = vsub.f32 %v745, %v1003
        %v1255 = vsub.f32 %v748, %v1003
        %v1256 = vmul.f32 %v1240, %v1020
        %v1257 = vmul.f32 %v1241, %v1020
        %v1258 = vmul.f32 %v1242, %v1020
        %v1259 = vmul.f32 %v1243, %v1020
        %v1260 = vmul.f32 %v1244, %v1021
        %v1261 = vmul.f32 %v1245, %v1021
        %v1262 = vmul.f32 %v1246, %v1021
        %v1263 = vmul.f32 %v1247, %v1021
        %v1264 = vmul.f32 %v1248, %v1022
        %v1265 = vmul.f32 %v1249, %v1022
        %v1266 = vmul.f32 %v1250, %v1022
        %v1267 = vmul.f32 %v1251, %v1022
        %v1268 = vmul.f32 %v1252, %v1023
        %v1269 = vmul.f32 %v1253, %v1023
        %v1270 = vmul.f32 %v1254, %v1023
        %v1271 = vmul.f32 %v1255, %v1023
        %v1272 = vmul.f32 %v1256, %v1059
        %v1273 = vmul.f32 %v1257, %v1059
        %v1274 = vmul.f32 %v1258, %v1059
        %v1275 = vmul.f32 %v1259, %v1059
        %v1276 = vmul.f32 %v1260, %v1059
        %v1277 = vmul.f32 %v1261, %v1059
        %v1278 = vmul.f32 %v1262, %v1059
        %v1279 = vmul.f32 %v1263, %v1059
        %v1280 = vmul.f32 %v1264, %v1059
        %v1281 = vmul.f32 %v1265, %v1059
        %v1282 = vmul.f32 %v1266, %v1059
        %v1283 = vmul.f32 %v1267, %v1059
        %v1284 = vmul.f32 %v1268, %v1059
        %v1285 = vmul.f32 %v1269, %v1059
        %v1286 = vmul.f32 %v1270, %v1059
        %v1287 = vmul.f32 %v1271, %v1059
        %v1288 = vadd.f32 %v1272, %v1079
        %v1289 = vadd.f32 %v1273, %v1079
        %v1290 = vadd.f32 %v1274, %v1079
        %v1291 = vadd.f32 %v1275, %v1079
        %v1292 = vadd.f32 %v1276, %v1079
        %v1293 = vadd.f32 %v1277, %v1079
        %v1294 = vadd.f32 %v1278, %v1079
        %v1295 = vadd.f32 %v1279, %v1079
        %v1296 = vadd.f32 %v1280, %v1079
        %v1297 = vadd.f32 %v1281, %v1079
        %v1298 = vadd.f32 %v1282, %v1079
        %v1299 = vadd.f32 %v1283, %v1079
        %v1300 = vadd.f32 %v1284, %v1079
        %v1301 = vadd.f32 %v1285, %v1079
        %v1302 = vadd.f32 %v1286, %v1079
        %v1303 = vadd.f32 %v1287, %v1079
        %v1304 = vmul.f32 %v1288, %v1288
        %v1305 = vmul.f32 %v1289, %v1289
        %v1306 = vmul.f32 %v1290, %v1290
        %v1307 = vmul.f32 %v1291, %v1291
        %v1308 = vmul.f32 %v1292, %v1292
        %v1309 = vmul.f32 %v1293, %v1293
        %v1310 = vmul.f32 %v1294, %v1294
        %v1311 = vmul.f32 %v1295, %v1295
        %v1312 = vmul.f32 %v1296, %v1296
        %v1313 = vmul.f32 %v1297, %v1297
        %v1314 = vmul.f32 %v1298, %v1298
        %v1315 = vmul.f32 %v1299, %v1299
        %v1316 = vmul.f32 %v1300, %v1300
        %v1317 = vmul.f32 %v1301, %v1301
        %v1318 = vmul.f32 %v1302, %v1302
        %v1319 = vmul.f32 %v1303, %v1303
        %v1320 = vmul.f32 %v1288, %v1304
        %v1321 = vmul.f32 %v1289, %v1305
        %v1322 = vmul.f32 %v1290, %v1306
        %v1323 = vmul.f32 %v1291, %v1307
        %v1324 = vmul.f32 %v1292, %v1308
        %v1325 = vmul.f32 %v1293, %v1309
        %v1326 = vmul.f32 %v1294, %v1310
        %v1327 = vmul.f32 %v1295, %v1311
        %v1328 = vmul.f32 %v1296, %v1312
        %v1329 = vmul.f32 %v1297, %v1313
        %v1330 = vmul.f32 %v1298, %v1314
        %v1331 = vmul.f32 %v1299, %v1315
        %v1332 = vmul.f32 %v1300, %v1316
        %v1333 = vmul.f32 %v1301, %v1317
        %v1334 = vmul.f32 %v1302, %v1318
        %v1335 = vmul.f32 %v1303, %v1319
        %v1336 = vmul.f32 %v1320, 0.044715
        %v1337 = vmul.f32 %v1321, 0.044715
        %v1338 = vmul.f32 %v1322, 0.044715
        %v1339 = vmul.f32 %v1323, 0.044715
        %v1340 = vmul.f32 %v1324, 0.044715
        %v1341 = vmul.f32 %v1325, 0.044715
        %v1342 = vmul.f32 %v1326, 0.044715
        %v1343 = vmul.f32 %v1327, 0.044715
        %v1344 = vmul.f32 %v1328, 0.044715
        %v1345 = vmul.f32 %v1329, 0.044715
        %v1346 = vmul.f32 %v1330, 0.044715
        %v1347 = vmul.f32 %v1331, 0.044715
        %v1348 = vmul.f32 %v1332, 0.044715
        %v1349 = vmul.f32 %v1333, 0.044715
        %v1350 = vmul.f32 %v1334, 0.044715
        %v1351 = vmul.f32 %v1335, 0.044715
        %v1352 = vadd.f32 %v1288, %v1336
        %v1353 = vadd.f32 %v1289, %v1337
        %v1354 = vadd.f32 %v1290, %v1338
        %v1355 = vadd.f32 %v1291, %v1339
        %v1356 = vadd.f32 %v1292, %v1340
        %v1357 = vadd.f32 %v1293, %v1341
        %v1358 = vadd.f32 %v1294, %v1342
        %v1359 = vadd.f32 %v1295, %v1343
        %v1360 = vadd.f32 %v1296, %v1344
        %v1361 = vadd.f32 %v1297, %v1345
        %v1362 = vadd.f32 %v1298, %v1346
        %v1363 = vadd.f32 %v1299, %v1347
        %v1364 = vadd.f32 %v1300, %v1348
        %v1365 = vadd.f32 %v1301, %v1349
        %v1366 = vadd.f32 %v1302, %v1350
        %v1367 = vadd.f32 %v1303, %v1351
        %v1368 = vmul.f32 %v1352, 0.7978846
        %v1369 = vmul.f32 %v1353, 0.7978846
        %v1370 = vmul.f32 %v1354, 0.7978846
        %v1371 = vmul.f32 %v1355, 0.7978846
        %v1372 = vmul.f32 %v1356, 0.7978846
        %v1373 = vmul.f32 %v1357, 0.7978846
        %v1374 = vmul.f32 %v1358, 0.7978846
        %v1375 = vmul.f32 %v1359, 0.7978846
        %v1376 = vmul.f32 %v1360, 0.7978846
        %v1377 = vmul.f32 %v1361, 0.7978846
        %v1378 = vmul.f32 %v1362, 0.7978846
        %v1379 = vmul.f32 %v1363, 0.7978846
        %v1380 = vmul.f32 %v1364, 0.7978846
        %v1381 = vmul.f32 %v1365, 0.7978846
        %v1382 = vmul.f32 %v1366, 0.7978846
        %v1383 = vmul.f32 %v1367, 0.7978846
        %v1384 = vtanh.pop %v1368
        %v1385 = vtanh.pop %v1369
        %v1386 = vtanh.pop %v1370
        %v1387 = vtanh.pop %v1371
        %v1388 = vtanh.pop %v1372
        %v1389 = vtanh.pop %v1373
        %v1390 = vtanh.pop %v1374
        %v1391 = vtanh.pop %v1375
        %v1392 = vtanh.pop %v1376
        %v1393 = vtanh.pop %v1377
        %v1394 = vtanh.pop %v1378
        %v1395 = vtanh.pop %v1379
        %v1396 = vtanh.pop %v1380
        %v1397 = vtanh.pop %v1381
        %v1398 = vtanh.pop %v1382
        %v1399 = vtanh.pop %v1383
        %v1400 = vadd.f32 %v1384, 1.0
        %v1401 = vadd.f32 %v1385, 1.0
        %v1402 = vadd.f32 %v1386, 1.0
        %v1403 = vadd.f32 %v1387, 1.0
        %v1404 = vadd.f32 %v1388, 1.0
        %v1405 = vadd.f32 %v1389, 1.0
        %v1406 = vadd.f32 %v1390, 1.0
        %v1407 = vadd.f32 %v1391, 1.0
        %v1408 = vadd.f32 %v1392, 1.0
        %v1409 = vadd.f32 %v1393, 1.0
        %v1410 = vadd.f32 %v1394, 1.0
        %v1411 = vadd.f32 %v1395, 1.0
        %v1412 = vadd.f32 %v1396, 1.0
        %v1413 = vadd.f32 %v1397, 1.0
        %v1414 = vadd.f32 %v1398, 1.0
        %v1415 = vadd.f32 %v1399, 1.0
        %v1416 = vmul.f32 %v1400, 0.5
        %v1417 = vmul.f32 %v1401, 0.5
        %v1418 = vmul.f32 %v1402, 0.5
        %v1419 = vmul.f32 %v1403, 0.5
        %v1420 = vmul.f32 %v1404, 0.5
        %v1421 = vmul.f32 %v1405, 0.5
        %v1422 = vmul.f32 %v1406, 0.5
        %v1423 = vmul.f32 %v1407, 0.5
        %v1424 = vmul.f32 %v1408, 0.5
        %v1425 = vmul.f32 %v1409, 0.5
        %v1426 = vmul.f32 %v1410, 0.5
        %v1427 = vmul.f32 %v1411, 0.5
        %v1428 = vmul.f32 %v1412, 0.5
        %v1429 = vmul.f32 %v1413, 0.5
        %v1430 = vmul.f32 %v1414, 0.5
        %v1431 = vmul.f32 %v1415, 0.5
        %v1432 = vmul.f32 %v1288, %v1416
        %v1433 = vmul.f32 %v1289, %v1417
        %v1434 = vmul.f32 %v1290, %v1418
        %v1435 = vmul.f32 %v1291, %v1419
        %v1436 = vmul.f32 %v1292, %v1420
        %v1437 = vmul.f32 %v1293, %v1421
        %v1438 = vmul.f32 %v1294, %v1422
        %v1439 = vmul.f32 %v1295, %v1423
        %v1440 = vmul.f32 %v1296, %v1424
        %v1441 = vmul.f32 %v1297, %v1425
        %v1442 = vmul.f32 %v1298, %v1426
        %v1443 = vmul.f32 %v1299, %v1427
        %v1444 = vmul.f32 %v1300, %v1428
        %v1445 = vmul.f32 %v1301, %v1429
        %v1446 = vmul.f32 %v1302, %v1430
        %v1447 = vmul.f32 %v1303, %v1431
        %v1448 = vpack.c.bf16 %v1225, %v1224
        %v1449 = vpack.c.bf16 %v1227, %v1226
        %v1450 = vpack.c.bf16 %v1229, %v1228
        %v1451 = vpack.c.bf16 %v1231, %v1230
        %v1452 = vpack.c.bf16 %v1233, %v1232
        %v1453 = vpack.c.bf16 %v1235, %v1234
        %v1454 = vpack.c.bf16 %v1237, %v1236
        %v1455 = vpack.c.bf16 %v1239, %v1238
        %v1456 = vld [vmem:[%s2] sm:$0xf]
        %v1457 = vld [vmem:[%s2 + $0x4] sm:$0xf]
        %v1458 = vpack.c.bf16 %v1433, %v1432
        %v1459 = vpack.c.bf16 %v1435, %v1434
        %v1460 = vpack.c.bf16 %v1437, %v1436
        %v1461 = vpack.c.bf16 %v1439, %v1438
        %v1462 = vpack.c.bf16 %v1441, %v1440
        %v1463 = vpack.c.bf16 %v1443, %v1442
        %v1464 = vpack.c.bf16 %v1445, %v1444
        %v1465 = vpack.c.bf16 %v1447, %v1446
        %s1466 = scalar_lea.vmem %s2, 8
        %v1467 = vld [vmem:[%s1466] sm:$0xf]
        %v1468 = vld [vmem:[%s1466 + $0x4] sm:$0xf]
        %v1471 = vunpack.c.l.b16 %v1467
        %v1472 = vunpack.c.l.b16 %v1468
        %v1473 = vpack.c.b16 %v1472, %v1471
        %v1476 = vsel %vm751, %v1458, 0
        %v1479 = vsel %vm751, %v1459, 0
        %v1482 = vsel %vm751, %v1460, 0
        %v1485 = vsel %vm751, %v1461, 0
        %v1488 = vsel %vm751, %v1462, 0
        %v1491 = vsel %vm751, %v1463, 0
        %v1494 = vsel %vm751, %v1464, 0
        %v1497 = vsel %vm751, %v1465, 0
        %1499 = vmatprep.subr.bf16.mxu0 0
        %1500 = vmatpush1.bf16.msra.mxu0 %v1473
        %1501 = vmatprep.subr.bf16.mxu0 0
        %1502 = vmatpush1.bf16.msra.mxu0 0
        %1503 = vmatprep.subr.bf16.mxu0 0
        %1504 = vmatpush1.bf16.msra.mxu0 0
        %1505 = vmatprep.subr.bf16.mxu0 0
        %1506 = vmatpush1.bf16.msra.mxu0 0
        %1507 = vmatprep.subr.bf16.mxu0 0
        %1508 = vmatpush1.bf16.msra.mxu0 0
        %1509 = vmatprep.subr.bf16.mxu0 0
        %1510 = vmatpush1.bf16.msra.mxu0 0
        %1511 = vmatprep.subr.bf16.mxu0 0
        %1512 = vmatpush1.bf16.msra.mxu0 0
        %1513 = vmatprep.subr.bf16.mxu0 0
        %1514 = vmatpush1.bf16.msra.mxu0 0
        %1515 = vmatprep.subr.bf16.mxu0 0
        %1516 = vmatpush1.bf16.msra.mxu0 0
        %1517 = vmatprep.subr.bf16.mxu0 0
        %1518 = vmatpush1.bf16.msra.mxu0 0
        %1519 = vmatprep.subr.bf16.mxu0 0
        %1520 = vmatpush1.bf16.msra.mxu0 0
        %1521 = vmatprep.subr.bf16.mxu0 0
        %1522 = vmatpush1.bf16.msra.mxu0 0
        %1523 = vmatprep.subr.bf16.mxu0 0
        %1524 = vmatpush1.bf16.msra.mxu0 0
        %1525 = vmatprep.subr.bf16.mxu0 0
        %1526 = vmatpush1.bf16.msra.mxu0 0
        %1527 = vmatprep.subr.bf16.mxu0 0
        %1528 = vmatpush1.bf16.msra.mxu0 0
        %1529 = vmatprep.subr.bf16.mxu0 0
        %1530 = vmatpush1.bf16.msra.mxu0 0
        %1531 = vmatprep.mubr.bf16.mxu0 0
        %1532 = vmatmul.mubr.bf16.gmra.mrb[0].mxu0 %v1476
        %v1533 = vpop.f32.mrb[0].mxu0
        %v1534 = vadd.f32 0.0, %v1533
        %v1535 = vpop.f32.mrb[0].mxu0
        %v1536 = vpop.f32.mrb[0].mxu0
        %v1537 = vadd.f32 0.0, %v1536
        %v1538 = vpop.f32.mrb[0].mxu0
        %1539 = vmatprep.mubr.bf16.mxu0 0
        %1540 = vmatmul.mubr.bf16.gmra.mrb[0].mxu0 %v1479
        %v1541 = vpop.f32.mrb[0].mxu0
        %v1542 = vadd.f32 0.0, %v1541
        %v1543 = vpop.f32.mrb[0].mxu0
        %v1544 = vpop.f32.mrb[0].mxu0
        %v1545 = vadd.f32 0.0, %v1544
        %v1546 = vpop.f32.mrb[0].mxu0
        %1547 = vmatprep.mubr.bf16.mxu0 0
        %1548 = vmatmul.mubr.bf16.gmra.mrb[0].mxu0 %v1482
        %v1549 = vpop.f32.mrb[0].mxu0
        %v1550 = vadd.f32 0.0, %v1549
        %v1551 = vpop.f32.mrb[0].mxu0
        %v1552 = vpop.f32.mrb[0].mxu0
        %v1553 = vadd.f32 0.0, %v1552
        %v1554 = vpop.f32.mrb[0].mxu0
        %1555 = vmatprep.mubr.bf16.mxu0 0
        %1556 = vmatmul.mubr.bf16.gmra.mrb[0].mxu0 %v1485
        %v1557 = vpop.f32.mrb[0].mxu0
        %v1558 = vadd.f32 0.0, %v1557
        %v1559 = vpop.f32.mrb[0].mxu0
        %v1560 = vpop.f32.mrb[0].mxu0
        %v1561 = vadd.f32 0.0, %v1560
        %v1562 = vpop.f32.mrb[0].mxu0
        %1563 = vmatprep.mubr.bf16.mxu0 0
        %1564 = vmatmul.mubr.bf16.gmra.mrb[0].mxu0 %v1488
        %v1565 = vpop.f32.mrb[0].mxu0
        %v1566 = vadd.f32 0.0, %v1565
        %v1567 = vpop.f32.mrb[0].mxu0
        %v1568 = vpop.f32.mrb[0].mxu0
        %v1569 = vadd.f32 0.0, %v1568
        %v1570 = vpop.f32.mrb[0].mxu0
        %1571 = vmatprep.mubr.bf16.mxu0 0
        %1572 = vmatmul.mubr.bf16.gmra.mrb[0].mxu0 %v1491
        %v1573 = vpop.f32.mrb[0].mxu0
        %v1574 = vadd.f32 0.0, %v1573
        %v1575 = vpop.f32.mrb[0].mxu0
        %v1576 = vpop.f32.mrb[0].mxu0
        %v1577 = vadd.f32 0.0, %v1576
        %v1578 = vpop.f32.mrb[0].mxu0
        %1579 = vmatprep.mubr.bf16.mxu0 0
        %1580 = vmatmul.mubr.bf16.gmra.mrb[0].mxu0 %v1494
        %v1581 = vpop.f32.mrb[0].mxu0
        %v1582 = vadd.f32 0.0, %v1581
        %v1583 = vpop.f32.mrb[0].mxu0
        %v1584 = vpop.f32.mrb[0].mxu0
        %v1585 = vadd.f32 0.0, %v1584
        %v1586 = vpop.f32.mrb[0].mxu0
        %1587 = vmatprep.mubr.bf16.mxu0 0
        %1588 = vmatmul.mubr.bf16.gmra.mrb[0].mxu0 %v1497
        %v1589 = vpop.f32.mrb[0].mxu0
        %v1590 = vadd.f32 0.0, %v1589
        %v1591 = vpop.f32.mrb[0].mxu0
        %v1592 = vpop.f32.mrb[0].mxu0
        %v1593 = vadd.f32 0.0, %v1592
        %v1594 = vpop.f32.mrb[0].mxu0
        %1595 = vdwg.mxu0
        %v1598 = vunpack.c.l.b16 %v1456
        %v1599 = vunpack.c.l.b16 %v1457
        %v1600 = vpack.c.b16 %v1599, %v1598
        %v1603 = vsel %vm751, %v1448, 0
        %v1606 = vsel %vm751, %v1449, 0
        %v1609 = vsel %vm751, %v1450, 0
        %v1612 = vsel %vm751, %v1451, 0
        %v1615 = vsel %vm751, %v1452, 0
        %v1618 = vsel %vm751, %v1453, 0
        %v1621 = vsel %vm751, %v1454, 0
        %v1624 = vsel %vm751, %v1455, 0
        %1626 = vmatprep.subr.bf16.mxu0 0
        %1627 = vmatpush1.bf16.msra.mxu0 %v1600
        %1628 = vmatprep.subr.bf16.mxu0 0
        %1629 = vmatpush1.bf16.msra.mxu0 0
        %1630 = vmatprep.subr.bf16.mxu0 0
        %1631 = vmatpush1.bf16.msra.mxu0 0
        %1632 = vmatprep.subr.bf16.mxu0 0
        %1633 = vmatpush1.bf16.msra.mxu0 0
        %1634 = vmatprep.subr.bf16.mxu0 0
        %1635 = vmatpush1.bf16.msra.mxu0 0
        %1636 = vmatprep.subr.bf16.mxu0 0
        %1637 = vmatpush1.bf16.msra.mxu0 0
        %1638 = vmatprep.subr.bf16.mxu0 0
        %1639 = vmatpush1.bf16.msra.mxu0 0
        %1640 = vmatprep.subr.bf16.mxu0 0
        %1641 = vmatpush1.bf16.msra.mxu0 0
        %1642 = vmatprep.subr.bf16.mxu0 0
        %1643 = vmatpush1.bf16.msra.mxu0 0
        %1644 = vmatprep.subr.bf16.mxu0 0
        %1645 = vmatpush1.bf16.msra.mxu0 0
        %1646 = vmatprep.subr.bf16.mxu0 0
        %1647 = vmatpush1.bf16.msra.mxu0 0
        %1648 = vmatprep.subr.bf16.mxu0 0
        %1649 = vmatpush1.bf16.msra.mxu0 0
        %1650 = vmatprep.subr.bf16.mxu0 0
        %1651 = vmatpush1.bf16.msra.mxu0 0
        %1652 = vmatprep.subr.bf16.mxu0 0
        %1653 = vmatpush1.bf16.msra.mxu0 0
        %1654 = vmatprep.subr.bf16.mxu0 0
        %1655 = vmatpush1.bf16.msra.mxu0 0
        %1656 = vmatprep.subr.bf16.mxu0 0
        %1657 = vmatpush1.bf16.msra.mxu0 0
        %1658 = vmatprep.mubr.bf16.mxu0 0
        %1659 = vmatmul.mubr.bf16.gmra.mrb[0].mxu0 %v1603
        %v1660 = vpop.f32.mrb[0].mxu0
        %v1661 = vadd.f32 %v1534, %v1660
        %v1662 = vpop.f32.mrb[0].mxu0
        %v1663 = vpop.f32.mrb[0].mxu0
        %v1664 = vadd.f32 %v1537, %v1663
        %v1665 = vpop.f32.mrb[0].mxu0
        %1666 = vmatprep.mubr.bf16.mxu0 0
        %1667 = vmatmul.mubr.bf16.gmra.mrb[0].mxu0 %v1606
        %v1668 = vpop.f32.mrb[0].mxu0
        %v1669 = vadd.f32 %v1542, %v1668
        %v1670 = vpop.f32.mrb[0].mxu0
        %v1671 = vpop.f32.mrb[0].mxu0
        %v1672 = vadd.f32 %v1545, %v1671
        %v1673 = vpop.f32.mrb[0].mxu0
        %1674 = vmatprep.mubr.bf16.mxu0 0
        %1675 = vmatmul.mubr.bf16.gmra.mrb[0].mxu0 %v1609
        %v1676 = vpop.f32.mrb[0].mxu0
        %v1677 = vadd.f32 %v1550, %v1676
        %v1678 = vpop.f32.mrb[0].mxu0
        %v1679 = vpop.f32.mrb[0].mxu0
        %v1680 = vadd.f32 %v1553, %v1679
        %v1681 = vpop.f32.mrb[0].mxu0
        %1682 = vmatprep.mubr.bf16.mxu0 0
        %1683 = vmatmul.mubr.bf16.gmra.mrb[0].mxu0 %v1612
        %v1684 = vpop.f32.mrb[0].mxu0
        %v1685 = vadd.f32 %v1558, %v1684
        %v1686 = vpop.f32.mrb[0].mxu0
        %v1687 = vpop.f32.mrb[0].mxu0
        %v1688 = vadd.f32 %v1561, %v1687
        %v1689 = vpop.f32.mrb[0].mxu0
        %1690 = vmatprep.mubr.bf16.mxu0 0
        %1691 = vmatmul.mubr.bf16.gmra.mrb[0].mxu0 %v1615
        %v1692 = vpop.f32.mrb[0].mxu0
        %v1693 = vadd.f32 %v1566, %v1692
        %v1694 = vpop.f32.mrb[0].mxu0
        %v1695 = vpop.f32.mrb[0].mxu0
        %v1696 = vadd.f32 %v1569, %v1695
        %v1697 = vpop.f32.mrb[0].mxu0
        %1698 = vmatprep.mubr.bf16.mxu0 0
        %1699 = vmatmul.mubr.bf16.gmra.mrb[0].mxu0 %v1618
        %v1700 = vpop.f32.mrb[0].mxu0
        %v1701 = vadd.f32 %v1574, %v1700
        %v1702 = vpop.f32.mrb[0].mxu0
        %v1703 = vpop.f32.mrb[0].mxu0
        %v1704 = vadd.f32 %v1577, %v1703
        %v1705 = vpop.f32.mrb[0].mxu0
        %1706 = vmatprep.mubr.bf16.mxu0 0
        %1707 = vmatmul.mubr.bf16.gmra.mrb[0].mxu0 %v1621
        %v1708 = vpop.f32.mrb[0].mxu0
        %v1709 = vadd.f32 %v1582, %v1708
        %v1710 = vpop.f32.mrb[0].mxu0
        %v1711 = vpop.f32.mrb[0].mxu0
        %v1712 = vadd.f32 %v1585, %v1711
        %v1713 = vpop.f32.mrb[0].mxu0
        %1714 = vmatprep.mubr.bf16.mxu0 0
        %1715 = vmatmul.mubr.bf16.gmra.mrb[0].mxu0 %v1624
        %v1716 = vpop.f32.mrb[0].mxu0
        %v1717 = vadd.f32 %v1590, %v1716
        %v1718 = vpop.f32.mrb[0].mxu0
        %v1719 = vpop.f32.mrb[0].mxu0
        %v1720 = vadd.f32 %v1593, %v1719
        %v1721 = vpop.f32.mrb[0].mxu0
        %1722 = vdwg.mxu0
        %v1723 = vlaneseq
        %v1724 = vshrl.u32 %v1723, 7
        %v1725 = vsub.s32 3, %v1724
        %v1726 = vrot.slane %v440, %v1725
        %v1727 = vadd.f32 %v1661, %v1726
        %v1728 = vadd.f32 %v1664, %v1726
        %v1729 = vadd.f32 %v1669, %v1726
        %v1730 = vadd.f32 %v1672, %v1726
        %v1731 = vadd.f32 %v1677, %v1726
        %v1732 = vadd.f32 %v1680, %v1726
        %v1733 = vadd.f32 %v1685, %v1726
        %v1734 = vadd.f32 %v1688, %v1726
        %v1735 = vadd.f32 %v1693, %v1726
        %v1736 = vadd.f32 %v1696, %v1726
        %v1737 = vadd.f32 %v1701, %v1726
        %v1738 = vadd.f32 %v1704, %v1726
        %v1739 = vadd.f32 %v1709, %v1726
        %v1740 = vadd.f32 %v1712, %v1726
        %v1741 = vadd.f32 %v1717, %v1726
        %v1742 = vadd.f32 %v1720, %v1726
        %v1743 = vmul.f32 %v1727, %v1727
        %v1744 = vmul.f32 %v1728, %v1728
        %v1745 = vmul.f32 %v1729, %v1729
        %v1746 = vmul.f32 %v1730, %v1730
        %v1747 = vmul.f32 %v1731, %v1731
        %v1748 = vmul.f32 %v1732, %v1732
        %v1749 = vmul.f32 %v1733, %v1733
        %v1750 = vmul.f32 %v1734, %v1734
        %v1751 = vmul.f32 %v1735, %v1735
        %v1752 = vmul.f32 %v1736, %v1736
        %v1753 = vmul.f32 %v1737, %v1737
        %v1754 = vmul.f32 %v1738, %v1738
        %v1755 = vmul.f32 %v1739, %v1739
        %v1756 = vmul.f32 %v1740, %v1740
        %v1757 = vmul.f32 %v1741, %v1741
        %v1758 = vmul.f32 %v1742, %v1742
        %v1759 = vmul.f32 %v1727, %v1743
        %v1760 = vmul.f32 %v1728, %v1744
        %v1761 = vmul.f32 %v1729, %v1745
        %v1762 = vmul.f32 %v1730, %v1746
        %v1763 = vmul.f32 %v1731, %v1747
        %v1764 = vmul.f32 %v1732, %v1748
        %v1765 = vmul.f32 %v1733, %v1749
        %v1766 = vmul.f32 %v1734, %v1750
        %v1767 = vmul.f32 %v1735, %v1751
        %v1768 = vmul.f32 %v1736, %v1752
        %v1769 = vmul.f32 %v1737, %v1753
        %v1770 = vmul.f32 %v1738, %v1754
        %v1771 = vmul.f32 %v1739, %v1755
        %v1772 = vmul.f32 %v1740, %v1756
        %v1773 = vmul.f32 %v1741, %v1757
        %v1774 = vmul.f32 %v1742, %v1758
        %v1775 = vmul.f32 %v1759, 0.044715
        %v1776 = vmul.f32 %v1760, 0.044715
        %v1777 = vmul.f32 %v1761, 0.044715
        %v1778 = vmul.f32 %v1762, 0.044715
        %v1779 = vmul.f32 %v1763, 0.044715
        %v1780 = vmul.f32 %v1764, 0.044715
        %v1781 = vmul.f32 %v1765, 0.044715
        %v1782 = vmul.f32 %v1766, 0.044715
        %v1783 = vmul.f32 %v1767, 0.044715
        %v1784 = vmul.f32 %v1768, 0.044715
        %v1785 = vmul.f32 %v1769, 0.044715
        %v1786 = vmul.f32 %v1770, 0.044715
        %v1787 = vmul.f32 %v1771, 0.044715
        %v1788 = vmul.f32 %v1772, 0.044715
        %v1789 = vmul.f32 %v1773, 0.044715
        %v1790 = vmul.f32 %v1774, 0.044715
        %v1791 = vadd.f32 %v1727, %v1775
        %v1792 = vadd.f32 %v1728, %v1776
        %v1793 = vadd.f32 %v1729, %v1777
        %v1794 = vadd.f32 %v1730, %v1778
        %v1795 = vadd.f32 %v1731, %v1779
        %v1796 = vadd.f32 %v1732, %v1780
        %v1797 = vadd.f32 %v1733, %v1781
        %v1798 = vadd.f32 %v1734, %v1782
        %v1799 = vadd.f32 %v1735, %v1783
        %v1800 = vadd.f32 %v1736, %v1784
        %v1801 = vadd.f32 %v1737, %v1785
        %v1802 = vadd.f32 %v1738, %v1786
        %v1803 = vadd.f32 %v1739, %v1787
        %v1804 = vadd.f32 %v1740, %v1788
        %v1805 = vadd.f32 %v1741, %v1789
        %v1806 = vadd.f32 %v1742, %v1790
        %v1807 = vmul.f32 %v1791, 0.7978846
        %v1808 = vmul.f32 %v1792, 0.7978846
        %v1809 = vmul.f32 %v1793, 0.7978846
        %v1810 = vmul.f32 %v1794, 0.7978846
        %v1811 = vmul.f32 %v1795, 0.7978846
        %v1812 = vmul.f32 %v1796, 0.7978846
        %v1813 = vmul.f32 %v1797, 0.7978846
        %v1814 = vmul.f32 %v1798, 0.7978846
        %v1815 = vmul.f32 %v1799, 0.7978846
        %v1816 = vmul.f32 %v1800, 0.7978846
        %v1817 = vmul.f32 %v1801, 0.7978846
        %v1818 = vmul.f32 %v1802, 0.7978846
        %v1819 = vmul.f32 %v1803, 0.7978846
        %v1820 = vmul.f32 %v1804, 0.7978846
        %v1821 = vmul.f32 %v1805, 0.7978846
        %v1822 = vmul.f32 %v1806, 0.7978846
        %v1823 = vtanh.pop %v1807
        %v1824 = vtanh.pop %v1808
        %v1825 = vtanh.pop %v1809
        %v1826 = vtanh.pop %v1810
        %v1827 = vtanh.pop %v1811
        %v1828 = vtanh.pop %v1812
        %v1829 = vtanh.pop %v1813
        %v1830 = vtanh.pop %v1814
        %v1831 = vtanh.pop %v1815
        %v1832 = vtanh.pop %v1816
        %v1833 = vtanh.pop %v1817
        %v1834 = vtanh.pop %v1818
        %v1835 = vtanh.pop %v1819
        %v1836 = vtanh.pop %v1820
        %v1837 = vtanh.pop %v1821
        %v1838 = vtanh.pop %v1822
        %v1839 = vadd.f32 %v1823, 1.0
        %v1840 = vadd.f32 %v1824, 1.0
        %v1841 = vadd.f32 %v1825, 1.0
        %v1842 = vadd.f32 %v1826, 1.0
        %v1843 = vadd.f32 %v1827, 1.0
        %v1844 = vadd.f32 %v1828, 1.0
        %v1845 = vadd.f32 %v1829, 1.0
        %v1846 = vadd.f32 %v1830, 1.0
        %v1847 = vadd.f32 %v1831, 1.0
        %v1848 = vadd.f32 %v1832, 1.0
        %v1849 = vadd.f32 %v1833, 1.0
        %v1850 = vadd.f32 %v1834, 1.0
        %v1851 = vadd.f32 %v1835, 1.0
        %v1852 = vadd.f32 %v1836, 1.0
        %v1853 = vadd.f32 %v1837, 1.0
        %v1854 = vadd.f32 %v1838, 1.0
        %v1855 = vmul.f32 %v1839, 0.5
        %v1856 = vmul.f32 %v1840, 0.5
        %v1857 = vmul.f32 %v1841, 0.5
        %v1858 = vmul.f32 %v1842, 0.5
        %v1859 = vmul.f32 %v1843, 0.5
        %v1860 = vmul.f32 %v1844, 0.5
        %v1861 = vmul.f32 %v1845, 0.5
        %v1862 = vmul.f32 %v1846, 0.5
        %v1863 = vmul.f32 %v1847, 0.5
        %v1864 = vmul.f32 %v1848, 0.5
        %v1865 = vmul.f32 %v1849, 0.5
        %v1866 = vmul.f32 %v1850, 0.5
        %v1867 = vmul.f32 %v1851, 0.5
        %v1868 = vmul.f32 %v1852, 0.5
        %v1869 = vmul.f32 %v1853, 0.5
        %v1870 = vmul.f32 %v1854, 0.5
        %v1871 = vmul.f32 %v1727, %v1855
        %v1872 = vmul.f32 %v1728, %v1856
        %v1873 = vmul.f32 %v1729, %v1857
        %v1874 = vmul.f32 %v1730, %v1858
        %v1875 = vmul.f32 %v1731, %v1859
        %v1876 = vmul.f32 %v1732, %v1860
        %v1877 = vmul.f32 %v1733, %v1861
        %v1878 = vmul.f32 %v1734, %v1862
        %v1879 = vmul.f32 %v1735, %v1863
        %v1880 = vmul.f32 %v1736, %v1864
        %v1881 = vmul.f32 %v1737, %v1865
        %v1882 = vmul.f32 %v1738, %v1866
        %v1883 = vmul.f32 %v1739, %v1867
        %v1884 = vmul.f32 %v1740, %v1868
        %v1885 = vmul.f32 %v1741, %v1869
        %v1886 = vmul.f32 %v1742, %v1870
        %v1887 = vsel %vm751, %v1871, 0.0
        %1888 = vadd.xlane.f32.xlu0 %v1887
        %v1889 = vpop.xlane.xlu0 %1888
        %v1890 = vsel %vm751, %v1872, 0.0
        %1891 = vadd.xlane.f32.xlu0 %v1890
        %v1892 = vpop.xlane.xlu0 %1891
        %v1893 = vsel %vm751, %v1873, 0.0
        %1894 = vadd.xlane.f32.xlu0 %v1893
        %v1895 = vpop.xlane.xlu0 %1894
        %v1896 = vsel %vm751, %v1874, 0.0
        %1897 = vadd.xlane.f32.xlu0 %v1896
        %v1898 = vpop.xlane.xlu0 %1897
        %v1899 = vsel %vm751, %v1875, 0.0
        %1900 = vadd.xlane.f32.xlu0 %v1899
        %v1901 = vpop.xlane.xlu0 %1900
        %v1902 = vsel %vm751, %v1876, 0.0
        %1903 = vadd.xlane.f32.xlu0 %v1902
        %v1904 = vpop.xlane.xlu0 %1903
        %v1905 = vsel %vm751, %v1877, 0.0
        %1906 = vadd.xlane.f32.xlu0 %v1905
        %v1907 = vpop.xlane.xlu0 %1906
        %v1908 = vsel %vm751, %v1878, 0.0
        %1909 = vadd.xlane.f32.xlu0 %v1908
        %v1910 = vpop.xlane.xlu0 %1909
        %v1911 = vsel %vm751, %v1879, 0.0
        %1912 = vadd.xlane.f32.xlu0 %v1911
        %v1913 = vpop.xlane.xlu0 %1912
        %v1914 = vsel %vm751, %v1880, 0.0
        %1915 = vadd.xlane.f32.xlu0 %v1914
        %v1916 = vpop.xlane.xlu0 %1915
        %v1917 = vsel %vm751, %v1881, 0.0
        %1918 = vadd.xlane.f32.xlu0 %v1917
        %v1919 = vpop.xlane.xlu0 %1918
        %v1920 = vsel %vm751, %v1882, 0.0
        %1921 = vadd.xlane.f32.xlu0 %v1920
        %v1922 = vpop.xlane.xlu0 %1921
        %v1923 = vsel %vm751, %v1883, 0.0
        %1924 = vadd.xlane.f32.xlu0 %v1923
        %v1925 = vpop.xlane.xlu0 %1924
        %v1926 = vsel %vm751, %v1884, 0.0
        %1927 = vadd.xlane.f32.xlu0 %v1926
        %v1928 = vpop.xlane.xlu0 %1927
        %v1929 = vsel %vm751, %v1885, 0.0
        %1930 = vadd.xlane.f32.xlu0 %v1929
        %v1931 = vpop.xlane.xlu0 %1930
        %v1932 = vsel %vm751, %v1886, 0.0
        %1933 = vadd.xlane.f32.xlu0 %v1932
        %v1934 = vpop.xlane.xlu0 %1933
        %v1935 = vrcp.pop 16.0
        %v1936 = vmul.f32 %v1889, %v1935
        %v1937 = vmul.f32 %v1892, %v1935
        %v1938 = vmul.f32 %v1895, %v1935
        %v1939 = vmul.f32 %v1898, %v1935
        %v1940 = vmul.f32 %v1901, %v1935
        %v1941 = vmul.f32 %v1904, %v1935
        %v1942 = vmul.f32 %v1907, %v1935
        %v1943 = vmul.f32 %v1910, %v1935
        %v1944 = vmul.f32 %v1913, %v1935
        %v1945 = vmul.f32 %v1916, %v1935
        %v1946 = vmul.f32 %v1919, %v1935
        %v1947 = vmul.f32 %v1922, %v1935
        %v1948 = vmul.f32 %v1925, %v1935
        %v1949 = vmul.f32 %v1928, %v1935
        %v1950 = vmul.f32 %v1931, %v1935
        %v1951 = vmul.f32 %v1934, %v1935
        %v1952 = vsub.f32 %v1871, %v1936
        %v1953 = vsub.f32 %v1872, %v1937
        %v1954 = vsub.f32 %v1873, %v1938
        %v1955 = vsub.f32 %v1874, %v1939
        %v1956 = vsub.f32 %v1875, %v1940
        %v1957 = vsub.f32 %v1876, %v1941
        %v1958 = vsub.f32 %v1877, %v1942
        %v1959 = vsub.f32 %v1878, %v1943
        %v1960 = vsub.f32 %v1879, %v1944
        %v1961 = vsub.f32 %v1880, %v1945
        %v1962 = vsub.f32 %v1881, %v1946
        %v1963 = vsub.f32 %v1882, %v1947
        %v1964 = vsub.f32 %v1883, %v1948
        %v1965 = vsub.f32 %v1884, %v1949
        %v1966 = vsub.f32 %v1885, %v1950
        %v1967 = vsub.f32 %v1886, %v1951
        %v1968 = vmul.f32 %v1952, %v1952
        %v1969 = vmul.f32 %v1953, %v1953
        %v1970 = vmul.f32 %v1954, %v1954
        %v1971 = vmul.f32 %v1955, %v1955
        %v1972 = vmul.f32 %v1956, %v1956
        %v1973 = vmul.f32 %v1957, %v1957
        %v1974 = vmul.f32 %v1958, %v1958
        %v1975 = vmul.f32 %v1959, %v1959
        %v1976 = vmul.f32 %v1960, %v1960
        %v1977 = vmul.f32 %v1961, %v1961
        %v1978 = vmul.f32 %v1962, %v1962
        %v1979 = vmul.f32 %v1963, %v1963
        %v1980 = vmul.f32 %v1964, %v1964
        %v1981 = vmul.f32 %v1965, %v1965
        %v1982 = vmul.f32 %v1966, %v1966
        %v1983 = vmul.f32 %v1967, %v1967
        %v1984 = vsel %vm751, %v1968, 0.0
        %1985 = vadd.xlane.f32.xlu0 %v1984
        %v1986 = vpop.xlane.xlu0 %1985
        %v1987 = vsel %vm751, %v1969, 0.0
        %1988 = vadd.xlane.f32.xlu0 %v1987
        %v1989 = vpop.xlane.xlu0 %1988
        %v1990 = vsel %vm751, %v1970, 0.0
        %1991 = vadd.xlane.f32.xlu0 %v1990
        %v1992 = vpop.xlane.xlu0 %1991
        %v1993 = vsel %vm751, %v1971, 0.0
        %1994 = vadd.xlane.f32.xlu0 %v1993
        %v1995 = vpop.xlane.xlu0 %1994
        %v1996 = vsel %vm751, %v1972, 0.0
        %1997 = vadd.xlane.f32.xlu0 %v1996
        %v1998 = vpop.xlane.xlu0 %1997
        %v1999 = vsel %vm751, %v1973, 0.0
        %2000 = vadd.xlane.f32.xlu0 %v1999
        %v2001 = vpop.xlane.xlu0 %2000
        %v2002 = vsel %vm751, %v1974, 0.0
        %2003 = vadd.xlane.f32.xlu0 %v2002
        %v2004 = vpop.xlane.xlu0 %2003
        %v2005 = vsel %vm751, %v1975, 0.0
        %2006 = vadd.xlane.f32.xlu0 %v2005
        %v2007 = vpop.xlane.xlu0 %2006
        %v2008 = vsel %vm751, %v1976, 0.0
        %2009 = vadd.xlane.f32.xlu0 %v2008
        %v2010 = vpop.xlane.xlu0 %2009
        %v2011 = vsel %vm751, %v1977, 0.0
        %2012 = vadd.xlane.f32.xlu0 %v2011
        %v2013 = vpop.xlane.xlu0 %2012
        %v2014 = vsel %vm751, %v1978, 0.0
        %2015 = vadd.xlane.f32.xlu0 %v2014
        %v2016 = vpop.xlane.xlu0 %2015
        %v2017 = vsel %vm751, %v1979, 0.0
        %2018 = vadd.xlane.f32.xlu0 %v2017
        %v2019 = vpop.xlane.xlu0 %2018
        %v2020 = vsel %vm751, %v1980, 0.0
        %2021 = vadd.xlane.f32.xlu0 %v2020
        %v2022 = vpop.xlane.xlu0 %2021
        %v2023 = vsel %vm751, %v1981, 0.0
        %2024 = vadd.xlane.f32.xlu0 %v2023
        %v2025 = vpop.xlane.xlu0 %2024
        %v2026 = vsel %vm751, %v1982, 0.0
        %2027 = vadd.xlane.f32.xlu0 %v2026
        %v2028 = vpop.xlane.xlu0 %2027
        %v2029 = vsel %vm751, %v1983, 0.0
        %2030 = vadd.xlane.f32.xlu0 %v2029
        %v2031 = vpop.xlane.xlu0 %2030
        %v2032 = vmul.f32 %v1986, %v1935
        %v2033 = vmul.f32 %v1989, %v1935
        %v2034 = vmul.f32 %v1992, %v1935
        %v2035 = vmul.f32 %v1995, %v1935
        %v2036 = vmul.f32 %v1998, %v1935
        %v2037 = vmul.f32 %v2001, %v1935
        %v2038 = vmul.f32 %v2004, %v1935
        %v2039 = vmul.f32 %v2007, %v1935
        %v2040 = vmul.f32 %v2010, %v1935
        %v2041 = vmul.f32 %v2013, %v1935
        %v2042 = vmul.f32 %v2016, %v1935
        %v2043 = vmul.f32 %v2019, %v1935
        %v2044 = vmul.f32 %v2022, %v1935
        %v2045 = vmul.f32 %v2025, %v1935
        %v2046 = vmul.f32 %v2028, %v1935
        %v2047 = vmul.f32 %v2031, %v1935
        %v2048 = vadd.f32 %v2032, 1e-05
        %v2049 = vadd.f32 %v2033, 1e-05
        %v2050 = vadd.f32 %v2034, 1e-05
        %v2051 = vadd.f32 %v2035, 1e-05
        %v2052 = vadd.f32 %v2036, 1e-05
        %v2053 = vadd.f32 %v2037, 1e-05
        %v2054 = vadd.f32 %v2038, 1e-05
        %v2055 = vadd.f32 %v2039, 1e-05
        %v2056 = vadd.f32 %v2040, 1e-05
        %v2057 = vadd.f32 %v2041, 1e-05
        %v2058 = vadd.f32 %v2042, 1e-05
        %v2059 = vadd.f32 %v2043, 1e-05
        %v2060 = vadd.f32 %v2044, 1e-05
        %v2061 = vadd.f32 %v2045, 1e-05
        %v2062 = vadd.f32 %v2046, 1e-05
        %v2063 = vadd.f32 %v2047, 1e-05
        %v2064 = vrsqrt.pop %v2048
        %v2065 = vrsqrt.pop %v2049
        %v2066 = vrsqrt.pop %v2050
        %v2067 = vrsqrt.pop %v2051
        %v2068 = vrsqrt.pop %v2052
        %v2069 = vrsqrt.pop %v2053
        %v2070 = vrsqrt.pop %v2054
        %v2071 = vrsqrt.pop %v2055
        %v2072 = vrsqrt.pop %v2056
        %v2073 = vrsqrt.pop %v2057
        %v2074 = vrsqrt.pop %v2058
        %v2075 = vrsqrt.pop %v2059
        %v2076 = vrsqrt.pop %v2060
        %v2077 = vrsqrt.pop %v2061
        %v2078 = vrsqrt.pop %v2062
        %v2079 = vrsqrt.pop %v2063
        %v2080 = vmul.f32 %v1952, %v2064
        %v2081 = vmul.f32 %v1953, %v2065
        %v2082 = vmul.f32 %v1954, %v2066
        %v2083 = vmul.f32 %v1955, %v2067
        %v2084 = vmul.f32 %v1956, %v2068
        %v2085 = vmul.f32 %v1957, %v2069
        %v2086 = vmul.f32 %v1958, %v2070
        %v2087 = vmul.f32 %v1959, %v2071
        %v2088 = vmul.f32 %v1960, %v2072
        %v2089 = vmul.f32 %v1961, %v2073
        %v2090 = vmul.f32 %v1962, %v2074
        %v2091 = vmul.f32 %v1963, %v2075
        %v2092 = vmul.f32 %v1964, %v2076
        %v2093 = vmul.f32 %v1965, %v2077
        %v2094 = vmul.f32 %v1966, %v2078
        %v2095 = vmul.f32 %v1967, %v2079
        %v2096 = vlaneseq
        %v2097 = vshrl.u32 %v2096, 7
        %v2098 = vsub.s32 4, %v2097
        %v2099 = vrot.slane %v440, %v2098
        %v2100 = vmul.f32 %v2080, %v2099
        %v2101 = vmul.f32 %v2081, %v2099
        %v2102 = vmul.f32 %v2082, %v2099
        %v2103 = vmul.f32 %v2083, %v2099
        %v2104 = vmul.f32 %v2084, %v2099
        %v2105 = vmul.f32 %v2085, %v2099
        %v2106 = vmul.f32 %v2086, %v2099
        %v2107 = vmul.f32 %v2087, %v2099
        %v2108 = vmul.f32 %v2088, %v2099
        %v2109 = vmul.f32 %v2089, %v2099
        %v2110 = vmul.f32 %v2090, %v2099
        %v2111 = vmul.f32 %v2091, %v2099
        %v2112 = vmul.f32 %v2092, %v2099
        %v2113 = vmul.f32 %v2093, %v2099
        %v2114 = vmul.f32 %v2094, %v2099
        %v2115 = vmul.f32 %v2095, %v2099
        %v2116 = vlaneseq
        %v2117 = vshrl.u32 %v2116, 7
        %v2118 = vsub.s32 5, %v2117
        %v2119 = vrot.slane %v440, %v2118
        %v2120 = vadd.f32 %v2100, %v2119
        %v2121 = vadd.f32 %v2101, %v2119
        %v2122 = vadd.f32 %v2102, %v2119
        %v2123 = vadd.f32 %v2103, %v2119
        %v2124 = vadd.f32 %v2104, %v2119
        %v2125 = vadd.f32 %v2105, %v2119
        %v2126 = vadd.f32 %v2106, %v2119
        %v2127 = vadd.f32 %v2107, %v2119
        %v2128 = vadd.f32 %v2108, %v2119
        %v2129 = vadd.f32 %v2109, %v2119
        %v2130 = vadd.f32 %v2110, %v2119
        %v2131 = vadd.f32 %v2111, %v2119
        %v2132 = vadd.f32 %v2112, %v2119
        %v2133 = vadd.f32 %v2113, %v2119
        %v2134 = vadd.f32 %v2114, %v2119
        %v2135 = vadd.f32 %v2115, %v2119
        %v2136 = vpack.c.bf16 %v2121, %v2120
        %v2137 = vpack.c.bf16 %v2123, %v2122
        %v2138 = vpack.c.bf16 %v2125, %v2124
        %v2139 = vpack.c.bf16 %v2127, %v2126
        %v2140 = vpack.c.bf16 %v2129, %v2128
        %v2141 = vpack.c.bf16 %v2131, %v2130
        %v2142 = vpack.c.bf16 %v2133, %v2132
        %v2143 = vpack.c.bf16 %v2135, %v2134
        %v2144 = vld [vmem:[%s3] sm:$0xf]
        %v2145 = vld [vmem:[%s3 + $0x4] sm:$0xf]
        %v2146 = vlaneseq
        %v2147 = vshrl.u32 %v2146, 7
        %v2148 = vsub.s32 6, %v2147
        %v2149 = vrot.slane %v440, %v2148
        %v2152 = vunpack.c.l.b16 %v2144
        %v2153 = vunpack.c.l.b16 %v2145
        %v2154 = vpack.c.b16 %v2153, %v2152
        %v2157 = vsel %vm751, %v2136, 0
        %v2160 = vsel %vm751, %v2137, 0
        %v2163 = vsel %vm751, %v2138, 0
        %v2166 = vsel %vm751, %v2139, 0
        %v2169 = vsel %vm751, %v2140, 0
        %v2172 = vsel %vm751, %v2141, 0
        %v2175 = vsel %vm751, %v2142, 0
        %v2178 = vsel %vm751, %v2143, 0
        %2180 = vmatprep.subr.bf16.mxu0 0
        %2181 = vmatpush1.bf16.msra.mxu0 %v2154
        %2182 = vmatprep.subr.bf16.mxu0 0
        %2183 = vmatpush1.bf16.msra.mxu0 0
        %2184 = vmatprep.subr.bf16.mxu0 0
        %2185 = vmatpush1.bf16.msra.mxu0 0
        %2186 = vmatprep.subr.bf16.mxu0 0
        %2187 = vmatpush1.bf16.msra.mxu0 0
        %2188 = vmatprep.subr.bf16.mxu0 0
        %2189 = vmatpush1.bf16.msra.mxu0 0
        %2190 = vmatprep.subr.bf16.mxu0 0
        %2191 = vmatpush1.bf16.msra.mxu0 0
        %2192 = vmatprep.subr.bf16.mxu0 0
        %2193 = vmatpush1.bf16.msra.mxu0 0
        %2194 = vmatprep.subr.bf16.mxu0 0
        %2195 = vmatpush1.bf16.msra.mxu0 0
        %2196 = vmatprep.subr.bf16.mxu0 0
        %2197 = vmatpush1.bf16.msra.mxu0 0
        %2198 = vmatprep.subr.bf16.mxu0 0
        %2199 = vmatpush1.bf16.msra.mxu0 0
        %2200 = vmatprep.subr.bf16.mxu0 0
        %2201 = vmatpush1.bf16.msra.mxu0 0
        %2202 = vmatprep.subr.bf16.mxu0 0
        %2203 = vmatpush1.bf16.msra.mxu0 0
        %2204 = vmatprep.subr.bf16.mxu0 0
        %2205 = vmatpush1.bf16.msra.mxu0 0
        %2206 = vmatprep.subr.bf16.mxu0 0
        %2207 = vmatpush1.bf16.msra.mxu0 0
        %2208 = vmatprep.subr.bf16.mxu0 0
        %2209 = vmatpush1.bf16.msra.mxu0 0
        %2210 = vmatprep.subr.bf16.mxu0 0
        %2211 = vmatpush1.bf16.msra.mxu0 0
        %2212 = vmatprep.mubr.bf16.mxu0 0
        %2213 = vmatmul.mubr.bf16.gmra.mrb[0].mxu0 %v2157
        %v2214 = vpop.f32.mrb[0].mxu0
        %v2215 = vadd.f32 %v2149, %v2214
        %v2216 = vpop.f32.mrb[0].mxu0
        %v2217 = vpop.f32.mrb[0].mxu0
        %v2218 = vadd.f32 %v2149, %v2217
        %v2219 = vpop.f32.mrb[0].mxu0
        %2220 = vmatprep.mubr.bf16.mxu0 0
        %2221 = vmatmul.mubr.bf16.gmra.mrb[0].mxu0 %v2160
        %v2222 = vpop.f32.mrb[0].mxu0
        %v2223 = vadd.f32 %v2149, %v2222
        %v2224 = vpop.f32.mrb[0].mxu0
        %v2225 = vpop.f32.mrb[0].mxu0
        %v2226 = vadd.f32 %v2149, %v2225
        %v2227 = vpop.f32.mrb[0].mxu0
        %2228 = vmatprep.mubr.bf16.mxu0 0
        %2229 = vmatmul.mubr.bf16.gmra.mrb[0].mxu0 %v2163
        %v2230 = vpop.f32.mrb[0].mxu0
        %v2231 = vadd.f32 %v2149, %v2230
        %v2232 = vpop.f32.mrb[0].mxu0
        %v2233 = vpop.f32.mrb[0].mxu0
        %v2234 = vadd.f32 %v2149, %v2233
        %v2235 = vpop.f32.mrb[0].mxu0
        %2236 = vmatprep.mubr.bf16.mxu0 0
        %2237 = vmatmul.mubr.bf16.gmra.mrb[0].mxu0 %v2166
        %v2238 = vpop.f32.mrb[0].mxu0
        %v2239 = vadd.f32 %v2149, %v2238
        %v2240 = vpop.f32.mrb[0].mxu0
        %v2241 = vpop.f32.mrb[0].mxu0
        %v2242 = vadd.f32 %v2149, %v2241
        %v2243 = vpop.f32.mrb[0].mxu0
        %2244 = vmatprep.mubr.bf16.mxu0 0
        %2245 = vmatmul.mubr.bf16.gmra.mrb[0].mxu0 %v2169
        %v2246 = vpop.f32.mrb[0].mxu0
        %v2247 = vadd.f32 %v2149, %v2246
        %v2248 = vpop.f32.mrb[0].mxu0
        %v2249 = vpop.f32.mrb[0].mxu0
        %v2250 = vadd.f32 %v2149, %v2249
        %v2251 = vpop.f32.mrb[0].mxu0
        %2252 = vmatprep.mubr.bf16.mxu0 0
        %2253 = vmatmul.mubr.bf16.gmra.mrb[0].mxu0 %v2172
        %v2254 = vpop.f32.mrb[0].mxu0
        %v2255 = vadd.f32 %v2149, %v2254
        %v2256 = vpop.f32.mrb[0].mxu0
        %v2257 = vpop.f32.mrb[0].mxu0
        %v2258 = vadd.f32 %v2149, %v2257
        %v2259 = vpop.f32.mrb[0].mxu0
        %2260 = vmatprep.mubr.bf16.mxu0 0
        %2261 = vmatmul.mubr.bf16.gmra.mrb[0].mxu0 %v2175
        %v2262 = vpop.f32.mrb[0].mxu0
        %v2263 = vadd.f32 %v2149, %v2262
        %v2264 = vpop.f32.mrb[0].mxu0
        %v2265 = vpop.f32.mrb[0].mxu0
        %v2266 = vadd.f32 %v2149, %v2265
        %v2267 = vpop.f32.mrb[0].mxu0
        %2268 = vmatprep.mubr.bf16.mxu0 0
        %2269 = vmatmul.mubr.bf16.gmra.mrb[0].mxu0 %v2178
        %v2270 = vpop.f32.mrb[0].mxu0
        %v2271 = vadd.f32 %v2149, %v2270
        %v2272 = vpop.f32.mrb[0].mxu0
        %v2273 = vpop.f32.mrb[0].mxu0
        %v2274 = vadd.f32 %v2149, %v2273
        %v2275 = vpop.f32.mrb[0].mxu0
        %2276 = vdwg.mxu0
        %vm2277 = vcmask 261120
        %v2278 = vsel %vm2277, %v2215, 0.0
        %2279 = vadd.xlane.f32.xlu0 %v2278
        %v2280 = vpop.xlane.xlu0 %2279
        %v2281 = vsel %vm2277, %v2218, 0.0
        %2282 = vadd.xlane.f32.xlu0 %v2281
        %v2283 = vpop.xlane.xlu0 %2282
        %v2284 = vsel %vm2277, %v2223, 0.0
        %2285 = vadd.xlane.f32.xlu0 %v2284
        %v2286 = vpop.xlane.xlu0 %2285
        %v2287 = vsel %vm2277, %v2226, 0.0
        %2288 = vadd.xlane.f32.xlu0 %v2287
        %v2289 = vpop.xlane.xlu0 %2288
        %v2290 = vsel %vm2277, %v2231, 0.0
        %2291 = vadd.xlane.f32.xlu0 %v2290
        %v2292 = vpop.xlane.xlu0 %2291
        %v2293 = vsel %vm2277, %v2234, 0.0
        %2294 = vadd.xlane.f32.xlu0 %v2293
        %v2295 = vpop.xlane.xlu0 %2294
        %v2296 = vsel %vm2277, %v2239, 0.0
        %2297 = vadd.xlane.f32.xlu0 %v2296
        %v2298 = vpop.xlane.xlu0 %2297
        %v2299 = vsel %vm2277, %v2242, 0.0
        %2300 = vadd.xlane.f32.xlu0 %v2299
        %v2301 = vpop.xlane.xlu0 %2300
        %v2302 = vsel %vm2277, %v2247, 0.0
        %2303 = vadd.xlane.f32.xlu0 %v2302
        %v2304 = vpop.xlane.xlu0 %2303
        %v2305 = vsel %vm2277, %v2250, 0.0
        %2306 = vadd.xlane.f32.xlu0 %v2305
        %v2307 = vpop.xlane.xlu0 %2306
        %v2308 = vsel %vm2277, %v2255, 0.0
        %2309 = vadd.xlane.f32.xlu0 %v2308
        %v2310 = vpop.xlane.xlu0 %2309
        %v2311 = vsel %vm2277, %v2258, 0.0
        %2312 = vadd.xlane.f32.xlu0 %v2311
        %v2313 = vpop.xlane.xlu0 %2312
        %v2314 = vsel %vm2277, %v2263, 0.0
        %2315 = vadd.xlane.f32.xlu0 %v2314
        %v2316 = vpop.xlane.xlu0 %2315
        %v2317 = vsel %vm2277, %v2266, 0.0
        %2318 = vadd.xlane.f32.xlu0 %v2317
        %v2319 = vpop.xlane.xlu0 %2318
        %v2320 = vsel %vm2277, %v2271, 0.0
        %2321 = vadd.xlane.f32.xlu0 %v2320
        %v2322 = vpop.xlane.xlu0 %2321
        %v2323 = vsel %vm2277, %v2274, 0.0
        %2324 = vadd.xlane.f32.xlu0 %v2323
        %v2325 = vpop.xlane.xlu0 %2324
        %v2326 = vrcp.pop 32.0
        %v2327 = vmul.f32 %v2280, %v2326
        %v2328 = vmul.f32 %v2283, %v2326
        %v2329 = vmul.f32 %v2286, %v2326
        %v2330 = vmul.f32 %v2289, %v2326
        %v2331 = vmul.f32 %v2292, %v2326
        %v2332 = vmul.f32 %v2295, %v2326
        %v2333 = vmul.f32 %v2298, %v2326
        %v2334 = vmul.f32 %v2301, %v2326
        %v2335 = vmul.f32 %v2304, %v2326
        %v2336 = vmul.f32 %v2307, %v2326
        %v2337 = vmul.f32 %v2310, %v2326
        %v2338 = vmul.f32 %v2313, %v2326
        %v2339 = vmul.f32 %v2316, %v2326
        %v2340 = vmul.f32 %v2319, %v2326
        %v2341 = vmul.f32 %v2322, %v2326
        %v2342 = vmul.f32 %v2325, %v2326
        %v2343 = vsub.f32 %v2215, %v2327
        %v2344 = vsub.f32 %v2218, %v2328
        %v2345 = vsub.f32 %v2223, %v2329
        %v2346 = vsub.f32 %v2226, %v2330
        %v2347 = vsub.f32 %v2231, %v2331
        %v2348 = vsub.f32 %v2234, %v2332
        %v2349 = vsub.f32 %v2239, %v2333
        %v2350 = vsub.f32 %v2242, %v2334
        %v2351 = vsub.f32 %v2247, %v2335
        %v2352 = vsub.f32 %v2250, %v2336
        %v2353 = vsub.f32 %v2255, %v2337
        %v2354 = vsub.f32 %v2258, %v2338
        %v2355 = vsub.f32 %v2263, %v2339
        %v2356 = vsub.f32 %v2266, %v2340
        %v2357 = vsub.f32 %v2271, %v2341
        %v2358 = vsub.f32 %v2274, %v2342
        %v2359 = vmul.f32 %v2343, %v2343
        %v2360 = vmul.f32 %v2344, %v2344
        %v2361 = vmul.f32 %v2345, %v2345
        %v2362 = vmul.f32 %v2346, %v2346
        %v2363 = vmul.f32 %v2347, %v2347
        %v2364 = vmul.f32 %v2348, %v2348
        %v2365 = vmul.f32 %v2349, %v2349
        %v2366 = vmul.f32 %v2350, %v2350
        %v2367 = vmul.f32 %v2351, %v2351
        %v2368 = vmul.f32 %v2352, %v2352
        %v2369 = vmul.f32 %v2353, %v2353
        %v2370 = vmul.f32 %v2354, %v2354
        %v2371 = vmul.f32 %v2355, %v2355
        %v2372 = vmul.f32 %v2356, %v2356
        %v2373 = vmul.f32 %v2357, %v2357
        %v2374 = vmul.f32 %v2358, %v2358
        %v2375 = vsel %vm2277, %v2359, 0.0
        %2376 = vadd.xlane.f32.xlu0 %v2375
        %v2377 = vpop.xlane.xlu0 %2376
        %v2378 = vsel %vm2277, %v2360, 0.0
        %2379 = vadd.xlane.f32.xlu0 %v2378
        %v2380 = vpop.xlane.xlu0 %2379
        %v2381 = vsel %vm2277, %v2361, 0.0
        %2382 = vadd.xlane.f32.xlu0 %v2381
        %v2383 = vpop.xlane.xlu0 %2382
        %v2384 = vsel %vm2277, %v2362, 0.0
        %2385 = vadd.xlane.f32.xlu0 %v2384
        %v2386 = vpop.xlane.xlu0 %2385
        %v2387 = vsel %vm2277, %v2363, 0.0
        %2388 = vadd.xlane.f32.xlu0 %v2387
        %v2389 = vpop.xlane.xlu0 %2388
        %v2390 = vsel %vm2277, %v2364, 0.0
        %2391 = vadd.xlane.f32.xlu0 %v2390
        %v2392 = vpop.xlane.xlu0 %2391
        %v2393 = vsel %vm2277, %v2365, 0.0
        %2394 = vadd.xlane.f32.xlu0 %v2393
        %v2395 = vpop.xlane.xlu0 %2394
        %v2396 = vsel %vm2277, %v2366, 0.0
        %2397 = vadd.xlane.f32.xlu0 %v2396
        %v2398 = vpop.xlane.xlu0 %2397
        %v2399 = vsel %vm2277, %v2367, 0.0
        %2400 = vadd.xlane.f32.xlu0 %v2399
        %v2401 = vpop.xlane.xlu0 %2400
        %v2402 = vsel %vm2277, %v2368, 0.0
        %2403 = vadd.xlane.f32.xlu0 %v2402
        %v2404 = vpop.xlane.xlu0 %2403
        %v2405 = vsel %vm2277, %v2369, 0.0
        %2406 = vadd.xlane.f32.xlu0 %v2405
        %v2407 = vpop.xlane.xlu0 %2406
        %v2408 = vsel %vm2277, %v2370, 0.0
        %2409 = vadd.xlane.f32.xlu0 %v2408
        %v2410 = vpop.xlane.xlu0 %2409
        %v2411 = vsel %vm2277, %v2371, 0.0
        %2412 = vadd.xlane.f32.xlu0 %v2411
        %v2413 = vpop.xlane.xlu0 %2412
        %v2414 = vsel %vm2277, %v2372, 0.0
        %2415 = vadd.xlane.f32.xlu0 %v2414
        %v2416 = vpop.xlane.xlu0 %2415
        %v2417 = vsel %vm2277, %v2373, 0.0
        %2418 = vadd.xlane.f32.xlu0 %v2417
        %v2419 = vpop.xlane.xlu0 %2418
        %v2420 = vsel %vm2277, %v2374, 0.0
        %2421 = vadd.xlane.f32.xlu0 %v2420
        %v2422 = vpop.xlane.xlu0 %2421
        %v2423 = vmul.f32 %v2377, %v2326
        %v2424 = vmul.f32 %v2380, %v2326
        %v2425 = vmul.f32 %v2383, %v2326
        %v2426 = vmul.f32 %v2386, %v2326
        %v2427 = vmul.f32 %v2389, %v2326
        %v2428 = vmul.f32 %v2392, %v2326
        %v2429 = vmul.f32 %v2395, %v2326
        %v2430 = vmul.f32 %v2398, %v2326
        %v2431 = vmul.f32 %v2401, %v2326
        %v2432 = vmul.f32 %v2404, %v2326
        %v2433 = vmul.f32 %v2407, %v2326
        %v2434 = vmul.f32 %v2410, %v2326
        %v2435 = vmul.f32 %v2413, %v2326
        %v2436 = vmul.f32 %v2416, %v2326
        %v2437 = vmul.f32 %v2419, %v2326
        %v2438 = vmul.f32 %v2422, %v2326
        %v2439 = vadd.f32 %v2423, 1e-05
        %v2440 = vadd.f32 %v2424, 1e-05
        %v2441 = vadd.f32 %v2425, 1e-05
        %v2442 = vadd.f32 %v2426, 1e-05
        %v2443 = vadd.f32 %v2427, 1e-05
        %v2444 = vadd.f32 %v2428, 1e-05
        %v2445 = vadd.f32 %v2429, 1e-05
        %v2446 = vadd.f32 %v2430, 1e-05
        %v2447 = vadd.f32 %v2431, 1e-05
        %v2448 = vadd.f32 %v2432, 1e-05
        %v2449 = vadd.f32 %v2433, 1e-05
        %v2450 = vadd.f32 %v2434, 1e-05
        %v2451 = vadd.f32 %v2435, 1e-05
        %v2452 = vadd.f32 %v2436, 1e-05
        %v2453 = vadd.f32 %v2437, 1e-05
        %v2454 = vadd.f32 %v2438, 1e-05
        %v2455 = vrsqrt.pop %v2439
        %v2456 = vrsqrt.pop %v2440
        %v2457 = vrsqrt.pop %v2441
        %v2458 = vrsqrt.pop %v2442
        %v2459 = vrsqrt.pop %v2443
        %v2460 = vrsqrt.pop %v2444
        %v2461 = vrsqrt.pop %v2445
        %v2462 = vrsqrt.pop %v2446
        %v2463 = vrsqrt.pop %v2447
        %v2464 = vrsqrt.pop %v2448
        %v2465 = vrsqrt.pop %v2449
        %v2466 = vrsqrt.pop %v2450
        %v2467 = vrsqrt.pop %v2451
        %v2468 = vrsqrt.pop %v2452
        %v2469 = vrsqrt.pop %v2453
        %v2470 = vrsqrt.pop %v2454
        %v2471 = vmul.f32 %v2343, %v2455
        %v2472 = vmul.f32 %v2344, %v2456
        %v2473 = vmul.f32 %v2345, %v2457
        %v2474 = vmul.f32 %v2346, %v2458
        %v2475 = vmul.f32 %v2347, %v2459
        %v2476 = vmul.f32 %v2348, %v2460
        %v2477 = vmul.f32 %v2349, %v2461
        %v2478 = vmul.f32 %v2350, %v2462
        %v2479 = vmul.f32 %v2351, %v2463
        %v2480 = vmul.f32 %v2352, %v2464
        %v2481 = vmul.f32 %v2353, %v2465
        %v2482 = vmul.f32 %v2354, %v2466
        %v2483 = vmul.f32 %v2355, %v2467
        %v2484 = vmul.f32 %v2356, %v2468
        %v2485 = vmul.f32 %v2357, %v2469
        %v2486 = vmul.f32 %v2358, %v2470
        %v2487 = vlaneseq
        %v2488 = vshrl.u32 %v2487, 7
        %v2489 = vsub.s32 7, %v2488
        %v2490 = vrot.slane %v440, %v2489
        %v2491 = vmul.f32 %v2471, %v2490
        %v2492 = vmul.f32 %v2472, %v2490
        %v2493 = vmul.f32 %v2473, %v2490
        %v2494 = vmul.f32 %v2474, %v2490
        %v2495 = vmul.f32 %v2475, %v2490
        %v2496 = vmul.f32 %v2476, %v2490
        %v2497 = vmul.f32 %v2477, %v2490
        %v2498 = vmul.f32 %v2478, %v2490
        %v2499 = vmul.f32 %v2479, %v2490
        %v2500 = vmul.f32 %v2480, %v2490
        %v2501 = vmul.f32 %v2481, %v2490
        %v2502 = vmul.f32 %v2482, %v2490
        %v2503 = vmul.f32 %v2483, %v2490
        %v2504 = vmul.f32 %v2484, %v2490
        %v2505 = vmul.f32 %v2485, %v2490
        %v2506 = vmul.f32 %v2486, %v2490
        %v2507 = vlaneseq
        %v2508 = vshrl.u32 %v2507, 7
        %v2509 = vsub.s32 0, %v2508
        %v2510 = vrot.slane %v441, %v2509
        %v2511 = vadd.f32 %v2491, %v2510
        %v2512 = vadd.f32 %v2492, %v2510
        %v2513 = vadd.f32 %v2493, %v2510
        %v2514 = vadd.f32 %v2494, %v2510
        %v2515 = vadd.f32 %v2495, %v2510
        %v2516 = vadd.f32 %v2496, %v2510
        %v2517 = vadd.f32 %v2497, %v2510
        %v2518 = vadd.f32 %v2498, %v2510
        %v2519 = vadd.f32 %v2499, %v2510
        %v2520 = vadd.f32 %v2500, %v2510
        %v2521 = vadd.f32 %v2501, %v2510
        %v2522 = vadd.f32 %v2502, %v2510
        %v2523 = vadd.f32 %v2503, %v2510
        %v2524 = vadd.f32 %v2504, %v2510
        %v2525 = vadd.f32 %v2505, %v2510
        %v2526 = vadd.f32 %v2506, %v2510
        %v2527 = vld [vmem:[%s9] sm:$0xff]
        %v2528 = vpack.c.bf16 %v2512, %v2511
        %v2529 = vpack.c.bf16 %v2514, %v2513
        %v2530 = vpack.c.bf16 %v2516, %v2515
        %v2531 = vpack.c.bf16 %v2518, %v2517
        %v2532 = vpack.c.bf16 %v2520, %v2519
        %v2533 = vpack.c.bf16 %v2522, %v2521
        %v2534 = vpack.c.bf16 %v2524, %v2523
        %v2535 = vpack.c.bf16 %v2526, %v2525
        %v2536 = vld [vmem:[%s4] sm:$0xf]
        %v2537 = vld [vmem:[%s4 + $0x4] sm:$0xf]
        %v2538 = vld [vmem:[%s4 + $0x8] sm:$0xf]
        %v2539 = vld [vmem:[%s4 + $0xc] sm:$0xf]
        %v2540 = vlaneseq
        %v2541 = vshrl.u32 %v2540, 7
        %v2542 = vsub.s32 0, %v2541
        %v2543 = vrot.slane %v2527, %v2542
        %v2548 = vunpack.c.l.b16 %v2536
        %v2549 = vunpack.c.l.b16 %v2537
        %v2550 = vunpack.c.l.b16 %v2538
        %v2551 = vunpack.c.l.b16 %v2539
        %v2552 = vpack.c.b16 %v2549, %v2548
        %v2553 = vpack.c.b16 %v2551, %v2550
        %v2557 = vsel %vm2277, %v2528, 0
        %v2560 = vsel %vm2277, %v2529, 0
        %v2563 = vsel %vm2277, %v2530, 0
        %v2566 = vsel %vm2277, %v2531, 0
        %v2569 = vsel %vm2277, %v2532, 0
        %v2572 = vsel %vm2277, %v2533, 0
        %v2575 = vsel %vm2277, %v2534, 0
        %v2578 = vsel %vm2277, %v2535, 0
        %2580 = vmatprep.subr.bf16.mxu0 0
        %2581 = vmatpush1.bf16.msra.mxu0 %v2552
        %2582 = vmatprep.subr.bf16.mxu0 0
        %2583 = vmatpush1.bf16.msra.mxu0 %v2553
        %2584 = vmatprep.subr.bf16.mxu0 0
        %2585 = vmatpush1.bf16.msra.mxu0 0
        %2586 = vmatprep.subr.bf16.mxu0 0
        %2587 = vmatpush1.bf16.msra.mxu0 0
        %2588 = vmatprep.subr.bf16.mxu0 0
        %2589 = vmatpush1.bf16.msra.mxu0 0
        %2590 = vmatprep.subr.bf16.mxu0 0
        %2591 = vmatpush1.bf16.msra.mxu0 0
        %2592 = vmatprep.subr.bf16.mxu0 0
        %2593 = vmatpush1.bf16.msra.mxu0 0
        %2594 = vmatprep.subr.bf16.mxu0 0
        %2595 = vmatpush1.bf16.msra.mxu0 0
        %2596 = vmatprep.subr.bf16.mxu0 0
        %2597 = vmatpush1.bf16.msra.mxu0 0
        %2598 = vmatprep.subr.bf16.mxu0 0
        %2599 = vmatpush1.bf16.msra.mxu0 0
        %2600 = vmatprep.subr.bf16.mxu0 0
        %2601 = vmatpush1.bf16.msra.mxu0 0
        %2602 = vmatprep.subr.bf16.mxu0 0
        %2603 = vmatpush1.bf16.msra.mxu0 0
        %2604 = vmatprep.subr.bf16.mxu0 0
        %2605 = vmatpush1.bf16.msra.mxu0 0
        %2606 = vmatprep.subr.bf16.mxu0 0
        %2607 = vmatpush1.bf16.msra.mxu0 0
        %2608 = vmatprep.subr.bf16.mxu0 0
        %2609 = vmatpush1.bf16.msra.mxu0 0
        %2610 = vmatprep.subr.bf16.mxu0 0
        %2611 = vmatpush1.bf16.msra.mxu0 0
        %2612 = vmatprep.mubr.bf16.mxu0 0
        %2613 = vmatmul.mubr.bf16.gmra.mrb[0].mxu0 %v2557
        %v2614 = vpop.f32.mrb[0].mxu0
        %v2615 = vadd.f32 %v2543, %v2614
        %v2616 = vpop.f32.mrb[0].mxu0
        %v2617 = vpop.f32.mrb[0].mxu0
        %v2618 = vadd.f32 %v2543, %v2617
        %v2619 = vpop.f32.mrb[0].mxu0
        %2620 = vmatprep.mubr.bf16.mxu0 0
        %2621 = vmatmul.mubr.bf16.gmra.mrb[0].mxu0 %v2560
        %v2622 = vpop.f32.mrb[0].mxu0
        %v2623 = vadd.f32 %v2543, %v2622
        %v2624 = vpop.f32.mrb[0].mxu0
        %v2625 = vpop.f32.mrb[0].mxu0
        %v2626 = vadd.f32 %v2543, %v2625
        %v2627 = vpop.f32.mrb[0].mxu0
        %2628 = vmatprep.mubr.bf16.mxu0 0
        %2629 = vmatmul.mubr.bf16.gmra.mrb[0].mxu0 %v2563
        %v2630 = vpop.f32.mrb[0].mxu0
        %v2631 = vadd.f32 %v2543, %v2630
        %v2632 = vpop.f32.mrb[0].mxu0
        %v2633 = vpop.f32.mrb[0].mxu0
        %v2634 = vadd.f32 %v2543, %v2633
        %v2635 = vpop.f32.mrb[0].mxu0
        %2636 = vmatprep.mubr.bf16.mxu0 0
        %2637 = vmatmul.mubr.bf16.gmra.mrb[0].mxu0 %v2566
        %v2638 = vpop.f32.mrb[0].mxu0
        %v2639 = vadd.f32 %v2543, %v2638
        %v2640 = vpop.f32.mrb[0].mxu0
        %v2641 = vpop.f32.mrb[0].mxu0
        %v2642 = vadd.f32 %v2543, %v2641
        %v2643 = vpop.f32.mrb[0].mxu0
        %2644 = vmatprep.mubr.bf16.mxu0 0
        %2645 = vmatmul.mubr.bf16.gmra.mrb[0].mxu0 %v2569
        %v2646 = vpop.f32.mrb[0].mxu0
        %v2647 = vadd.f32 %v2543, %v2646
        %v2648 = vpop.f32.mrb[0].mxu0
        %v2649 = vpop.f32.mrb[0].mxu0
        %v2650 = vadd.f32 %v2543, %v2649
        %v2651 = vpop.f32.mrb[0].mxu0
        %2652 = vmatprep.mubr.bf16.mxu0 0
        %2653 = vmatmul.mubr.bf16.gmra.mrb[0].mxu0 %v2572
        %v2654 = vpop.f32.mrb[0].mxu0
        %v2655 = vadd.f32 %v2543, %v2654
        %v2656 = vpop.f32.mrb[0].mxu0
        %v2657 = vpop.f32.mrb[0].mxu0
        %v2658 = vadd.f32 %v2543, %v2657
        %v2659 = vpop.f32.mrb[0].mxu0
        %2660 = vmatprep.mubr.bf16.mxu0 0
        %2661 = vmatmul.mubr.bf16.gmra.mrb[0].mxu0 %v2575
        %v2662 = vpop.f32.mrb[0].mxu0
        %v2663 = vadd.f32 %v2543, %v2662
        %v2664 = vpop.f32.mrb[0].mxu0
        %v2665 = vpop.f32.mrb[0].mxu0
        %v2666 = vadd.f32 %v2543, %v2665
        %v2667 = vpop.f32.mrb[0].mxu0
        %2668 = vmatprep.mubr.bf16.mxu0 0
        %2669 = vmatmul.mubr.bf16.gmra.mrb[0].mxu0 %v2578
        %v2670 = vpop.f32.mrb[0].mxu0
        %v2671 = vadd.f32 %v2543, %v2670
        %v2672 = vpop.f32.mrb[0].mxu0
        %v2673 = vpop.f32.mrb[0].mxu0
        %v2674 = vadd.f32 %v2543, %v2673
        %v2675 = vpop.f32.mrb[0].mxu0
        %2676 = vdwg.mxu0
        %v2677 = vmul.f32 %v2615, 0.35355338
        %v2678 = vmul.f32 %v2618, 0.35355338
        %v2679 = vmul.f32 %v2623, 0.35355338
        %v2680 = vmul.f32 %v2626, 0.35355338
        %v2681 = vmul.f32 %v2631, 0.35355338
        %v2682 = vmul.f32 %v2634, 0.35355338
        %v2683 = vmul.f32 %v2639, 0.35355338
        %v2684 = vmul.f32 %v2642, 0.35355338
        %v2685 = vmul.f32 %v2647, 0.35355338
        %v2686 = vmul.f32 %v2650, 0.35355338
        %v2687 = vmul.f32 %v2655, 0.35355338
        %v2688 = vmul.f32 %v2658, 0.35355338
        %v2689 = vmul.f32 %v2663, 0.35355338
        %v2690 = vmul.f32 %v2666, 0.35355338
        %v2691 = vmul.f32 %v2671, 0.35355338
        %v2692 = vmul.f32 %v2674, 0.35355338
        %v2693 = vpack.c.bf16 %v2618, %v2615
        %v2694 = vpack.c.bf16 %v2626, %v2623
        %v2695 = vpack.c.bf16 %v2634, %v2631
        %v2696 = vpack.c.bf16 %v2642, %v2639
        %v2697 = vpack.c.bf16 %v2650, %v2647
        %v2698 = vpack.c.bf16 %v2658, %v2655
        %v2699 = vpack.c.bf16 %v2666, %v2663
        %v2700 = vpack.c.bf16 %v2674, %v2671
        %v2701 = vpack.c.bf16 %v2678, %v2677
        %v2702 = vpack.c.bf16 %v2680, %v2679
        %v2707 = vunpack.c.l.b16 %v442
        %v2708 = vunpack.c.l.b16 %v443
        %v2709 = vunpack.c.l.b16 %v444
        %v2710 = vunpack.c.l.b16 %v445
        %v2711 = vpack.c.b16 %v2708, %v2707
        %v2712 = vpack.c.b16 %v2710, %v2709
        %2715 = vxpose.xlu0.c.b16.start [1/8] %v2711, 128
        %2716 = vxpose.xlu0.c.b16.cont [2/8] %v2712, 128
        %2717 = vxpose.xlu0.c.b16.cont [3/8] 0, 128
        %2718 = vxpose.xlu0.c.b16.cont [4/8] 0, 128
        %2719 = vxpose.xlu0.c.b16.cont [5/8] 0, 128
        %2720 = vxpose.xlu0.c.b16.cont [6/8] 0, 128
        %2721 = vxpose.xlu0.c.b16.cont [7/8] 0, 128
        %2722 = vxpose.xlu0.c.b16.end [8/8] 0, 128
        %v2723 = vpop.trf.xlu0
        %v2724 = vpop.trf.xlu0
        %v2725 = vpop.trf.xlu0
        %v2726 = vpop.trf.xlu0
        %v2727 = vpop.trf.xlu0
        %v2728 = vpop.trf.xlu0
        %v2729 = vpop.trf.xlu0
        %v2730 = vpop.trf.xlu0
        %2733 = vrot.lane.b32.xlu0 %v2693, 96
        %v2734 = vpop.permute.xlu0 %2733
        %2735 = vrot.lane.b32.xlu0 %v2694, 96
        %v2736 = vpop.permute.xlu0 %2735
        %v2740 = vsel %vm2277, %v2723, 0
        %v2743 = vsel %vm2277, %v2724, 0
        %v2746 = vsel %vm2277, %v2725, 0
        %v2749 = vsel %vm2277, %v2726, 0
        %v2752 = vsel %vm2277, %v2727, 0
        %v2755 = vsel %vm2277, %v2728, 0
        %v2758 = vsel %vm2277, %v2729, 0
        %v2761 = vsel %vm2277, %v2730, 0
        %2763 = vmatprep.subr.bf16.mxu0 0
        %2764 = vmatpush1.bf16.msra.mxu0 %v2734
        %2765 = vmatprep.subr.bf16.mxu0 0
        %2766 = vmatpush1.bf16.msra.mxu0 %v2736
        %2767 = vmatprep.subr.bf16.mxu0 0
        %2768 = vmatpush1.bf16.msra.mxu0 0
        %2769 = vmatprep.subr.bf16.mxu0 0
        %2770 = vmatpush1.bf16.msra.mxu0 0
        %2771 = vmatprep.subr.bf16.mxu0 0
        %2772 = vmatpush1.bf16.msra.mxu0 0
        %2773 = vmatprep.subr.bf16.mxu0 0
        %2774 = vmatpush1.bf16.msra.mxu0 0
        %2775 = vmatprep.subr.bf16.mxu0 0
        %2776 = vmatpush1.bf16.msra.mxu0 0
        %2777 = vmatprep.subr.bf16.mxu0 0
        %2778 = vmatpush1.bf16.msra.mxu0 0
        %2779 = vmatprep.subr.bf16.mxu0 0
        %2780 = vmatpush1.bf16.msra.mxu0 0
        %2781 = vmatprep.subr.bf16.mxu0 0
        %2782 = vmatpush1.bf16.msra.mxu0 0
        %2783 = vmatprep.subr.bf16.mxu0 0
        %2784 = vmatpush1.bf16.msra.mxu0 0
        %2785 = vmatprep.subr.bf16.mxu0 0
        %2786 = vmatpush1.bf16.msra.mxu0 0
        %2787 = vmatprep.subr.bf16.mxu0 0
        %2788 = vmatpush1.bf16.msra.mxu0 0
        %2789 = vmatprep.subr.bf16.mxu0 0
        %2790 = vmatpush1.bf16.msra.mxu0 0
        %2791 = vmatprep.subr.bf16.mxu0 0
        %2792 = vmatpush1.bf16.msra.mxu0 0
        %2793 = vmatprep.subr.bf16.mxu0 0
        %2794 = vmatpush1.bf16.msra.mxu0 0
        %2795 = vmatprep.mubr.bf16.mxu0 0
        %2796 = vmatmul.mubr.bf16.gmra.mrb[0].mxu0 %v2740
        %v2797 = vpop.f32.mrb[0].mxu0
        %v2798 = vadd.f32 0.0, %v2797
        %v2799 = vpop.f32.mrb[0].mxu0
        %v2800 = vpop.f32.mrb[0].mxu0
        %v2801 = vadd.f32 0.0, %v2800
        %v2802 = vpop.f32.mrb[0].mxu0
        %2803 = vmatprep.mubr.bf16.mxu0 0
        %2804 = vmatmul.mubr.bf16.gmra.mrb[0].mxu0 %v2743
        %v2805 = vpop.f32.mrb[0].mxu0
        %v2806 = vadd.f32 0.0, %v2805
        %v2807 = vpop.f32.mrb[0].mxu0
        %v2808 = vpop.f32.mrb[0].mxu0
        %v2809 = vadd.f32 0.0, %v2808
        %v2810 = vpop.f32.mrb[0].mxu0
        %2811 = vmatprep.mubr.bf16.mxu0 0
        %2812 = vmatmul.mubr.bf16.gmra.mrb[0].mxu0 %v2746
        %v2813 = vpop.f32.mrb[0].mxu0
        %v2814 = vadd.f32 0.0, %v2813
        %v2815 = vpop.f32.mrb[0].mxu0
        %v2816 = vpop.f32.mrb[0].mxu0
        %v2817 = vadd.f32 0.0, %v2816
        %v2818 = vpop.f32.mrb[0].mxu0
        %2819 = vmatprep.mubr.bf16.mxu0 0
        %2820 = vmatmul.mubr.bf16.gmra.mrb[0].mxu0 %v2749
        %v2821 = vpop.f32.mrb[0].mxu0
        %v2822 = vadd.f32 0.0, %v2821
        %v2823 = vpop.f32.mrb[0].mxu0
        %v2824 = vpop.f32.mrb[0].mxu0
        %v2825 = vadd.f32 0.0, %v2824
        %v2826 = vpop.f32.mrb[0].mxu0
        %2827 = vmatprep.mubr.bf16.mxu0 0
        %2828 = vmatmul.mubr.bf16.gmra.mrb[0].mxu0 %v2752
        %v2829 = vpop.f32.mrb[0].mxu0
        %v2830 = vadd.f32 0.0, %v2829
        %v2831 = vpop.f32.mrb[0].mxu0
        %v2832 = vpop.f32.mrb[0].mxu0
        %v2833 = vadd.f32 0.0, %v2832
        %v2834 = vpop.f32.mrb[0].mxu0
        %2835 = vmatprep.mubr.bf16.mxu0 0
        %2836 = vmatmul.mubr.bf16.gmra.mrb[0].mxu0 %v2755
        %v2837 = vpop.f32.mrb[0].mxu0
        %v2838 = vadd.f32 0.0, %v2837
        %v2839 = vpop.f32.mrb[0].mxu0
        %v2840 = vpop.f32.mrb[0].mxu0
        %v2841 = vadd.f32 0.0, %v2840
        %v2842 = vpop.f32.mrb[0].mxu0
        %2843 = vmatprep.mubr.bf16.mxu0 0
        %2844 = vmatmul.mubr.bf16.gmra.mrb[0].mxu0 %v2758
        %v2845 = vpop.f32.mrb[0].mxu0
        %v2846 = vadd.f32 0.0, %v2845
        %v2847 = vpop.f32.mrb[0].mxu0
        %v2848 = vpop.f32.mrb[0].mxu0
        %v2849 = vadd.f32 0.0, %v2848
        %v2850 = vpop.f32.mrb[0].mxu0
        %2851 = vmatprep.mubr.bf16.mxu0 0
        %2852 = vmatmul.mubr.bf16.gmra.mrb[0].mxu0 %v2761
        %v2853 = vpop.f32.mrb[0].mxu0
        %v2854 = vadd.f32 0.0, %v2853
        %v2855 = vpop.f32.mrb[0].mxu0
        %v2856 = vpop.f32.mrb[0].mxu0
        %v2857 = vadd.f32 0.0, %v2856
        %v2858 = vpop.f32.mrb[0].mxu0
        %2859 = vdwg.mxu0
        %v2860 = vunpack.c.l.bf16 %v446
        %v2861 = vunpack.c.l.bf16 %v447
        %v2862 = vunpack.c.l.bf16 %v448
        %v2863 = vunpack.c.l.bf16 %v449
        %v2864 = vunpack.c.l.bf16 %v450
        %v2865 = vunpack.c.l.bf16 %v451
        %v2866 = vunpack.c.l.bf16 %v452
        %v2867 = vunpack.c.l.bf16 %v453
        %v2868 = vunpack.c.l.bf16 %v454
        %v2869 = vunpack.c.l.bf16 %v455
        %v2870 = vunpack.c.l.bf16 %v456
        %v2871 = vunpack.c.l.bf16 %v457
        %v2872 = vunpack.c.l.bf16 %v458
        %v2873 = vunpack.c.l.bf16 %v459
        %v2874 = vunpack.c.l.bf16 %v460
        %v2875 = vunpack.c.l.bf16 %v461
        %v2876 = vmul.f32 %v2798, %v2860
        %v2877 = vmul.f32 %v2801, %v2861
        %v2878 = vmul.f32 %v2806, %v2862
        %v2879 = vmul.f32 %v2809, %v2863
        %v2880 = vmul.f32 %v2814, %v2864
        %v2881 = vmul.f32 %v2817, %v2865
        %v2882 = vmul.f32 %v2822, %v2866
        %v2883 = vmul.f32 %v2825, %v2867
        %v2884 = vmul.f32 %v2830, %v2868
        %v2885 = vmul.f32 %v2833, %v2869
        %v2886 = vmul.f32 %v2838, %v2870
        %v2887 = vmul.f32 %v2841, %v2871
        %v2888 = vmul.f32 %v2846, %v2872
        %v2889 = vmul.f32 %v2849, %v2873
        %v2890 = vmul.f32 %v2854, %v2874
        %v2891 = vmul.f32 %v2857, %v2875
        %v2892 = vpack.c.bf16 %v2877, %v2876
        %v2893 = vpack.c.bf16 %v2879, %v2878
        %v2894 = vpack.c.bf16 %v2881, %v2880
        %v2895 = vpack.c.bf16 %v2883, %v2882
        %v2896 = vpack.c.bf16 %v2885, %v2884
        %v2897 = vpack.c.bf16 %v2887, %v2886
        %v2898 = vpack.c.bf16 %v2889, %v2888
        %v2899 = vpack.c.bf16 %v2891, %v2890
        %2900 = vrot.lane.b32.xlu0 %v2693, 64
        %v2901 = vpop.permute.xlu0 %2900
        %2902 = vrot.lane.b32.xlu0 %v2694, 64
        %v2903 = vpop.permute.xlu0 %2902
        %2906 = vmatprep.subr.bf16.mxu0 0
        %2907 = vmatpush1.bf16.msra.mxu0 %v2901
        %2908 = vmatprep.subr.bf16.mxu0 0
        %2909 = vmatpush1.bf16.msra.mxu0 %v2903
        %2910 = vmatprep.subr.bf16.mxu0 0
        %2911 = vmatpush1.bf16.msra.mxu0 0
        %2912 = vmatprep.subr.bf16.mxu0 0
        %2913 = vmatpush1.bf16.msra.mxu0 0
        %2914 = vmatprep.subr.bf16.mxu0 0
        %2915 = vmatpush1.bf16.msra.mxu0 0
        %2916 = vmatprep.subr.bf16.mxu0 0
        %2917 = vmatpush1.bf16.msra.mxu0 0
        %2918 = vmatprep.subr.bf16.mxu0 0
        %2919 = vmatpush1.bf16.msra.mxu0 0
        %2920 = vmatprep.subr.bf16.mxu0 0
        %2921 = vmatpush1.bf16.msra.mxu0 0
        %2922 = vmatprep.subr.bf16.mxu0 0
        %2923 = vmatpush1.bf16.msra.mxu0 0
        %2924 = vmatprep.subr.bf16.mxu0 0
        %2925 = vmatpush1.bf16.msra.mxu0 0
        %2926 = vmatprep.subr.bf16.mxu0 0
        %2927 = vmatpush1.bf16.msra.mxu0 0
        %2928 = vmatprep.subr.bf16.mxu0 0
        %2929 = vmatpush1.bf16.msra.mxu0 0
        %2930 = vmatprep.subr.bf16.mxu0 0
        %2931 = vmatpush1.bf16.msra.mxu0 0
        %2932 = vmatprep.subr.bf16.mxu0 0
        %2933 = vmatpush1.bf16.msra.mxu0 0
        %2934 = vmatprep.subr.bf16.mxu0 0
        %2935 = vmatpush1.bf16.msra.mxu0 0
        %2936 = vmatprep.subr.bf16.mxu0 0
        %2937 = vmatpush1.bf16.msra.mxu0 0
        %2938 = vmatprep.mubr.bf16.mxu0 0
        %2939 = vmatmul.mubr.bf16.gmra.mrb[0].mxu0 %v2740
        %v2940 = vpop.f32.mrb[0].mxu0
        %v2941 = vadd.f32 0.0, %v2940
        %v2942 = vpop.f32.mrb[0].mxu0
        %v2943 = vpop.f32.mrb[0].mxu0
        %v2944 = vadd.f32 0.0, %v2943
        %v2945 = vpop.f32.mrb[0].mxu0
        %2946 = vmatprep.mubr.bf16.mxu0 0
        %2947 = vmatmul.mubr.bf16.gmra.mrb[0].mxu0 %v2743
        %v2948 = vpop.f32.mrb[0].mxu0
        %v2949 = vadd.f32 0.0, %v2948
        %v2950 = vpop.f32.mrb[0].mxu0
        %v2951 = vpop.f32.mrb[0].mxu0
        %v2952 = vadd.f32 0.0, %v2951
        %v2953 = vpop.f32.mrb[0].mxu0
        %2954 = vmatprep.mubr.bf16.mxu0 0
        %2955 = vmatmul.mubr.bf16.gmra.mrb[0].mxu0 %v2746
        %v2956 = vpop.f32.mrb[0].mxu0
        %v2957 = vadd.f32 0.0, %v2956
        %v2958 = vpop.f32.mrb[0].mxu0
        %v2959 = vpop.f32.mrb[0].mxu0
        %v2960 = vadd.f32 0.0, %v2959
        %v2961 = vpop.f32.mrb[0].mxu0
        %2962 = vmatprep.mubr.bf16.mxu0 0
        %2963 = vmatmul.mubr.bf16.gmra.mrb[0].mxu0 %v2749
        %v2964 = vpop.f32.mrb[0].mxu0
        %v2965 = vadd.f32 0.0, %v2964
        %v2966 = vpop.f32.mrb[0].mxu0
        %v2967 = vpop.f32.mrb[0].mxu0
        %v2968 = vadd.f32 0.0, %v2967
        %v2969 = vpop.f32.mrb[0].mxu0
        %2970 = vmatprep.mubr.bf16.mxu0 0
        %2971 = vmatmul.mubr.bf16.gmra.mrb[0].mxu0 %v2752
        %v2972 = vpop.f32.mrb[0].mxu0
        %v2973 = vadd.f32 0.0, %v2972
        %v2974 = vpop.f32.mrb[0].mxu0
        %v2975 = vpop.f32.mrb[0].mxu0
        %v2976 = vadd.f32 0.0, %v2975
        %v2977 = vpop.f32.mrb[0].mxu0
        %2978 = vmatprep.mubr.bf16.mxu0 0
        %2979 = vmatmul.mubr.bf16.gmra.mrb[0].mxu0 %v2755
        %v2980 = vpop.f32.mrb[0].mxu0
        %v2981 = vadd.f32 0.0, %v2980
        %v2982 = vpop.f32.mrb[0].mxu0
        %v2983 = vpop.f32.mrb[0].mxu0
        %v2984 = vadd.f32 0.0, %v2983
        %v2985 = vpop.f32.mrb[0].mxu0
        %2986 = vmatprep.mubr.bf16.mxu0 0
        %2987 = vmatmul.mubr.bf16.gmra.mrb[0].mxu0 %v2758
        %v2988 = vpop.f32.mrb[0].mxu0
        %v2989 = vadd.f32 0.0, %v2988
        %v2990 = vpop.f32.mrb[0].mxu0
        %v2991 = vpop.f32.mrb[0].mxu0
        %v2992 = vadd.f32 0.0, %v2991
        %v2993 = vpop.f32.mrb[0].mxu0
        %2994 = vmatprep.mubr.bf16.mxu0 0
        %2995 = vmatmul.mubr.bf16.gmra.mrb[0].mxu0 %v2761
        %v2996 = vpop.f32.mrb[0].mxu0
        %v2997 = vadd.f32 0.0, %v2996
        %v2998 = vpop.f32.mrb[0].mxu0
        %v2999 = vpop.f32.mrb[0].mxu0
        %v3000 = vadd.f32 0.0, %v2999
        %v3001 = vpop.f32.mrb[0].mxu0
        %3002 = vdwg.mxu0
        %v3003 = vmul.f32 %v2941, %v2860
        %v3004 = vmul.f32 %v2944, %v2861
        %v3005 = vmul.f32 %v2949, %v2862
        %v3006 = vmul.f32 %v2952, %v2863
        %v3007 = vmul.f32 %v2957, %v2864
        %v3008 = vmul.f32 %v2960, %v2865
        %v3009 = vmul.f32 %v2965, %v2866
        %v3010 = vmul.f32 %v2968, %v2867
        %v3011 = vmul.f32 %v2973, %v2868
        %v3012 = vmul.f32 %v2976, %v2869
        %v3013 = vmul.f32 %v2981, %v2870
        %v3014 = vmul.f32 %v2984, %v2871
        %v3015 = vmul.f32 %v2989, %v2872
        %v3016 = vmul.f32 %v2992, %v2873
        %v3017 = vmul.f32 %v2997, %v2874
        %v3018 = vmul.f32 %v3000, %v2875
        %v3019 = vpack.c.bf16 %v3004, %v3003
        %v3020 = vpack.c.bf16 %v3006, %v3005
        %v3021 = vpack.c.bf16 %v3008, %v3007
        %v3022 = vpack.c.bf16 %v3010, %v3009
        %v3023 = vpack.c.bf16 %v3012, %v3011
        %v3024 = vpack.c.bf16 %v3014, %v3013
        %v3025 = vpack.c.bf16 %v3016, %v3015
        %v3026 = vpack.c.bf16 %v3018, %v3017
        %v3028 = vsel %vm2277, %v2701, 0
        %v3031 = vsel %vm2277, %v2702, 0
        %v3034 = vsel %vm2277, %v2892, 0
        %v3037 = vsel %vm2277, %v2893, 0
        %v3040 = vsel %vm2277, %v2894, 0
        %v3043 = vsel %vm2277, %v2895, 0
        %v3046 = vsel %vm2277, %v2896, 0
        %v3049 = vsel %vm2277, %v2897, 0
        %v3052 = vsel %vm2277, %v2898, 0
        %v3055 = vsel %vm2277, %v2899, 0
        %3057 = vmatprep.subr.bf16.mxu0 0
        %3058 = vmatpush1.bf16.xpose.msra.mxu0 %v3034
        %3059 = vmatprep.subr.bf16.mxu0 0
        %3060 = vmatpush1.bf16.xpose.msra.mxu0 %v3037
        %3061 = vmatprep.subr.bf16.mxu0 0
        %3062 = vmatpush1.bf16.xpose.msra.mxu0 %v3040
        %3063 = vmatprep.subr.bf16.mxu0 0
        %3064 = vmatpush1.bf16.xpose.msra.mxu0 %v3043
        %3065 = vmatprep.subr.bf16.mxu0 0
        %3066 = vmatpush1.bf16.xpose.msra.mxu0 %v3046
        %3067 = vmatprep.subr.bf16.mxu0 0
        %3068 = vmatpush1.bf16.xpose.msra.mxu0 %v3049
        %3069 = vmatprep.subr.bf16.mxu0 0
        %3070 = vmatpush1.bf16.xpose.msra.mxu0 %v3052
        %3071 = vmatprep.subr.bf16.mxu0 0
        %3072 = vmatpush1.bf16.xpose.msra.mxu0 %v3055
        %3073 = vmatprep.subr.bf16.mxu0 0
        %3074 = vmatpush1.bf16.xpose.msra.mxu0 0
        %3075 = vmatprep.subr.bf16.mxu0 0
        %3076 = vmatpush1.bf16.xpose.msra.mxu0 0
        %3077 = vmatprep.subr.bf16.mxu0 0
        %3078 = vmatpush1.bf16.xpose.msra.mxu0 0
        %3079 = vmatprep.subr.bf16.mxu0 0
        %3080 = vmatpush1.bf16.xpose.msra.mxu0 0
        %3081 = vmatprep.subr.bf16.mxu0 0
        %3082 = vmatpush1.bf16.xpose.msra.mxu0 0
        %3083 = vmatprep.subr.bf16.mxu0 0
        %3084 = vmatpush1.bf16.xpose.msra.mxu0 0
        %3085 = vmatprep.subr.bf16.mxu0 0
        %3086 = vmatpush1.bf16.xpose.msra.mxu0 0
        %3087 = vmatprep.subr.bf16.mxu0 0
        %3088 = vmatpush1.bf16.xpose.msra.mxu0 0
        %3089 = vmatprep.mubr.bf16.mxu0 0
        %3090 = vmatmul.mubr.bf16.gmra.mrb[0].mxu0 %v3028
        %v3091 = vpop.f32.mrb[0].mxu0
        %v3092 = vadd.f32 0.0, %v3091
        %v3093 = vpop.f32.mrb[0].mxu0
        %v3094 = vpop.f32.mrb[0].mxu0
        %v3095 = vadd.f32 0.0, %v3094
        %v3096 = vpop.f32.mrb[0].mxu0
        %3097 = vmatprep.mubr.bf16.mxu0 0
        %3098 = vmatmul.mubr.bf16.gmra.mrb[0].mxu0 %v3031
        %v3099 = vpop.f32.mrb[0].mxu0
        %v3100 = vadd.f32 0.0, %v3099
        %v3101 = vpop.f32.mrb[0].mxu0
        %v3102 = vpop.f32.mrb[0].mxu0
        %v3103 = vadd.f32 0.0, %v3102
        %v3104 = vpop.f32.mrb[0].mxu0
        %3105 = vdwg.mxu0
        %3106 = vmax.xlane.f32.xlu0 %v3092
        %v3107 = vpop.xlane.xlu0 %3106
        %3108 = vmax.xlane.f32.xlu0 %v3095
        %v3109 = vpop.xlane.xlu0 %3108
        %3110 = vmax.xlane.f32.xlu0 %v3100
        %v3111 = vpop.xlane.xlu0 %3110
        %3112 = vmax.xlane.f32.xlu0 %v3103
        %v3113 = vpop.xlane.xlu0 %3112
        %v3114 = vsub.f32 %v3092, %v3107
        %v3115 = vsub.f32 %v3095, %v3109
        %v3116 = vsub.f32 %v3100, %v3111
        %v3117 = vsub.f32 %v3103, %v3113
        %v3118 = vmul.f32 %v3114, 1.442695
        %v3119 = vpow.pop %v3118
        %v3120 = vmul.f32 %v3115, 1.442695
        %v3121 = vpow.pop %v3120
        %v3122 = vmul.f32 %v3116, 1.442695
        %v3123 = vpow.pop %v3122
        %v3124 = vmul.f32 %v3117, 1.442695
        %v3125 = vpow.pop %v3124
        %v3126 = vpack.c.bf16 %v3121, %v3119
        %v3127 = vpack.c.bf16 %v3125, %v3123
        %v3144 = vunpack.c.l.b16 %v462
        %v3145 = vunpack.c.l.b16 %v463
        %v3146 = vunpack.c.l.b16 %v464
        %v3147 = vunpack.c.l.b16 %v465
        %v3148 = vunpack.c.l.b16 %v466
        %v3149 = vunpack.c.l.b16 %v467
        %v3150 = vunpack.c.l.b16 %v468
        %v3151 = vunpack.c.l.b16 %v469
        %v3152 = vunpack.c.l.b16 %v470
        %v3153 = vunpack.c.l.b16 %v471
        %v3154 = vunpack.c.l.b16 %v472
        %v3155 = vunpack.c.l.b16 %v473
        %v3156 = vunpack.c.l.b16 %v474
        %v3157 = vunpack.c.l.b16 %v475
        %v3158 = vunpack.c.l.b16 %v476
        %v3159 = vunpack.c.l.b16 %v477
        %v3160 = vpack.c.b16 %v3145, %v3144
        %v3161 = vpack.c.b16 %v3147, %v3146
        %v3162 = vpack.c.b16 %v3149, %v3148
        %v3163 = vpack.c.b16 %v3151, %v3150
        %v3164 = vpack.c.b16 %v3153, %v3152
        %v3165 = vpack.c.b16 %v3155, %v3154
        %v3166 = vpack.c.b16 %v3157, %v3156
        %v3167 = vpack.c.b16 %v3159, %v3158
        %3176 = vmatprep.subr.bf16.mxu0 0
        %3177 = vmatpush1.bf16.msra.mxu0 %v3160
        %3178 = vmatprep.subr.bf16.mxu0 0
        %3179 = vmatpush1.bf16.msra.mxu0 %v3161
        %3180 = vmatprep.subr.bf16.mxu0 0
        %3181 = vmatpush1.bf16.msra.mxu0 %v3162
        %3182 = vmatprep.subr.bf16.mxu0 0
        %3183 = vmatpush1.bf16.msra.mxu0 %v3163
        %3184 = vmatprep.subr.bf16.mxu0 0
        %3185 = vmatpush1.bf16.msra.mxu0 %v3164
        %3186 = vmatprep.subr.bf16.mxu0 0
        %3187 = vmatpush1.bf16.msra.mxu0 %v3165
        %3188 = vmatprep.subr.bf16.mxu0 0
        %3189 = vmatpush1.bf16.msra.mxu0 %v3166
        %3190 = vmatprep.subr.bf16.mxu0 0
        %3191 = vmatpush1.bf16.msra.mxu0 %v3167
        %3192 = vmatprep.subr.bf16.mxu0 0
        %3193 = vmatpush1.bf16.msra.mxu0 0
        %3194 = vmatprep.subr.bf16.mxu0 0
        %3195 = vmatpush1.bf16.msra.mxu0 0
        %3196 = vmatprep.subr.bf16.mxu0 0
        %3197 = vmatpush1.bf16.msra.mxu0 0
        %3198 = vmatprep.subr.bf16.mxu0 0
        %3199 = vmatpush1.bf16.msra.mxu0 0
        %3200 = vmatprep.subr.bf16.mxu0 0
        %3201 = vmatpush1.bf16.msra.mxu0 0
        %3202 = vmatprep.subr.bf16.mxu0 0
        %3203 = vmatpush1.bf16.msra.mxu0 0
        %3204 = vmatprep.subr.bf16.mxu0 0
        %3205 = vmatpush1.bf16.msra.mxu0 0
        %3206 = vmatprep.subr.bf16.mxu0 0
        %3207 = vmatpush1.bf16.msra.mxu0 0
        %3208 = vmatprep.mubr.bf16.mxu0 0
        %3209 = vmatmul.mubr.bf16.gmra.mrb[0].mxu0 %v3126
        %v3210 = vpop.f32.mrb[0].mxu0
        %v3211 = vadd.f32 0.0, %v3210
        %v3212 = vpop.f32.mrb[0].mxu0
        %v3213 = vpop.f32.mrb[0].mxu0
        %v3214 = vadd.f32 0.0, %v3213
        %v3215 = vpop.f32.mrb[0].mxu0
        %3216 = vmatprep.mubr.bf16.mxu0 0
        %3217 = vmatmul.mubr.bf16.gmra.mrb[0].mxu0 %v3127
        %v3218 = vpop.f32.mrb[0].mxu0
        %v3219 = vadd.f32 0.0, %v3218
        %v3220 = vpop.f32.mrb[0].mxu0
        %v3221 = vpop.f32.mrb[0].mxu0
        %v3222 = vadd.f32 0.0, %v3221
        %v3223 = vpop.f32.mrb[0].mxu0
        %3224 = vdwg.mxu0
        %v3225 = vrcp.pop %v3211
        %v3226 = vrcp.pop %v3214
        %v3227 = vrcp.pop %v3219
        %v3228 = vrcp.pop %v3222
        %v3229 = vmul.f32 %v3119, %v3225
        %v3230 = vmul.f32 %v3121, %v3226
        %v3231 = vmul.f32 %v3123, %v3227
        %v3232 = vmul.f32 %v3125, %v3228
        %v3233 = vpack.c.bf16 %v3230, %v3229
        %v3234 = vpack.c.bf16 %v3232, %v3231
        %3235 = vmatprep.subr.bf16.mxu0 0
        %3236 = vmatpush1.bf16.msra.mxu0 %v3019
        %3237 = vmatprep.subr.bf16.mxu0 0
        %3238 = vmatpush1.bf16.msra.mxu0 %v3020
        %3239 = vmatprep.subr.bf16.mxu0 0
        %3240 = vmatpush1.bf16.msra.mxu0 %v3021
        %3241 = vmatprep.subr.bf16.mxu0 0
        %3242 = vmatpush1.bf16.msra.mxu0 %v3022
        %3243 = vmatprep.subr.bf16.mxu0 0
        %3244 = vmatpush1.bf16.msra.mxu0 %v3023
        %3245 = vmatprep.subr.bf16.mxu0 0
        %3246 = vmatpush1.bf16.msra.mxu0 %v3024
        %3247 = vmatprep.subr.bf16.mxu0 0
        %3248 = vmatpush1.bf16.msra.mxu0 %v3025
        %3249 = vmatprep.subr.bf16.mxu0 0
        %3250 = vmatpush1.bf16.msra.mxu0 %v3026
        %3251 = vmatprep.subr.bf16.mxu0 0
        %3252 = vmatpush1.bf16.msra.mxu0 0
        %3253 = vmatprep.subr.bf16.mxu0 0
        %3254 = vmatpush1.bf16.msra.mxu0 0
        %3255 = vmatprep.subr.bf16.mxu0 0
        %3256 = vmatpush1.bf16.msra.mxu0 0
        %3257 = vmatprep.subr.bf16.mxu0 0
        %3258 = vmatpush1.bf16.msra.mxu0 0
        %3259 = vmatprep.subr.bf16.mxu0 0
        %3260 = vmatpush1.bf16.msra.mxu0 0
        %3261 = vmatprep.subr.bf16.mxu0 0
        %3262 = vmatpush1.bf16.msra.mxu0 0
        %3263 = vmatprep.subr.bf16.mxu0 0
        %3264 = vmatpush1.bf16.msra.mxu0 0
        %3265 = vmatprep.subr.bf16.mxu0 0
        %3266 = vmatpush1.bf16.msra.mxu0 0
        %3267 = vmatprep.mubr.bf16.mxu0 0
        %3268 = vmatmul.mubr.bf16.gmra.mrb[0].mxu0 %v3233
        %v3269 = vpop.f32.mrb[0].mxu0
        %v3270 = vadd.f32 0.0, %v3269
        %v3271 = vpop.f32.mrb[0].mxu0
        %v3272 = vpop.f32.mrb[0].mxu0
        %v3273 = vadd.f32 0.0, %v3272
        %v3274 = vpop.f32.mrb[0].mxu0
        %3275 = vmatprep.mubr.bf16.mxu0 0
        %3276 = vmatmul.mubr.bf16.gmra.mrb[0].mxu0 %v3234
        %v3277 = vpop.f32.mrb[0].mxu0
        %v3278 = vadd.f32 0.0, %v3277
        %v3279 = vpop.f32.mrb[0].mxu0
        %v3280 = vpop.f32.mrb[0].mxu0
        %v3281 = vadd.f32 0.0, %v3280
        %v3282 = vpop.f32.mrb[0].mxu0
        %3283 = vdwg.mxu0
        %v3284 = vpack.c.bf16 %v2682, %v2681
        %v3285 = vpack.c.bf16 %v2684, %v2683
        %3288 = vrot.lane.b32.xlu0 %v2695, 96
        %v3289 = vpop.permute.xlu0 %3288
        %3290 = vrot.lane.b32.xlu0 %v2696, 96
        %v3291 = vpop.permute.xlu0 %3290
        %3294 = vmatprep.subr.bf16.mxu0 0
        %3295 = vmatpush1.bf16.msra.mxu0 %v3289
        %3296 = vmatprep.subr.bf16.mxu0 0
        %3297 = vmatpush1.bf16.msra.mxu0 %v3291
        %3298 = vmatprep.subr.bf16.mxu0 0
        %3299 = vmatpush1.bf16.msra.mxu0 0
        %3300 = vmatprep.subr.bf16.mxu0 0
        %3301 = vmatpush1.bf16.msra.mxu0 0
        %3302 = vmatprep.subr.bf16.mxu0 0
        %3303 = vmatpush1.bf16.msra.mxu0 0
        %3304 = vmatprep.subr.bf16.mxu0 0
        %3305 = vmatpush1.bf16.msra.mxu0 0
        %3306 = vmatprep.subr.bf16.mxu0 0
        %3307 = vmatpush1.bf16.msra.mxu0 0
        %3308 = vmatprep.subr.bf16.mxu0 0
        %3309 = vmatpush1.bf16.msra.mxu0 0
        %3310 = vmatprep.subr.bf16.mxu0 0
        %3311 = vmatpush1.bf16.msra.mxu0 0
        %3312 = vmatprep.subr.bf16.mxu0 0
        %3313 = vmatpush1.bf16.msra.mxu0 0
        %3314 = vmatprep.subr.bf16.mxu0 0
        %3315 = vmatpush1.bf16.msra.mxu0 0
        %3316 = vmatprep.subr.bf16.mxu0 0
        %3317 = vmatpush1.bf16.msra.mxu0 0
        %3318 = vmatprep.subr.bf16.mxu0 0
        %3319 = vmatpush1.bf16.msra.mxu0 0
        %3320 = vmatprep.subr.bf16.mxu0 0
        %3321 = vmatpush1.bf16.msra.mxu0 0
        %3322 = vmatprep.subr.bf16.mxu0 0
        %3323 = vmatpush1.bf16.msra.mxu0 0
        %3324 = vmatprep.subr.bf16.mxu0 0
        %3325 = vmatpush1.bf16.msra.mxu0 0
        %3326 = vmatprep.mubr.bf16.mxu0 0
        %3327 = vmatmul.mubr.bf16.gmra.mrb[0].mxu0 %v2740
        %v3328 = vpop.f32.mrb[0].mxu0
        %v3329 = vadd.f32 0.0, %v3328
        %v3330 = vpop.f32.mrb[0].mxu0
        %v3331 = vpop.f32.mrb[0].mxu0
        %v3332 = vadd.f32 0.0, %v3331
        %v3333 = vpop.f32.mrb[0].mxu0
        %3334 = vmatprep.mubr.bf16.mxu0 0
        %3335 = vmatmul.mubr.bf16.gmra.mrb[0].mxu0 %v2743
        %v3336 = vpop.f32.mrb[0].mxu0
        %v3337 = vadd.f32 0.0, %v3336
        %v3338 = vpop.f32.mrb[0].mxu0
        %v3339 = vpop.f32.mrb[0].mxu0
        %v3340 = vadd.f32 0.0, %v3339
        %v3341 = vpop.f32.mrb[0].mxu0
        %3342 = vmatprep.mubr.bf16.mxu0 0
        %3343 = vmatmul.mubr.bf16.gmra.mrb[0].mxu0 %v2746
        %v3344 = vpop.f32.mrb[0].mxu0
        %v3345 = vadd.f32 0.0, %v3344
        %v3346 = vpop.f32.mrb[0].mxu0
        %v3347 = vpop.f32.mrb[0].mxu0
        %v3348 = vadd.f32 0.0, %v3347
        %v3349 = vpop.f32.mrb[0].mxu0
        %3350 = vmatprep.mubr.bf16.mxu0 0
        %3351 = vmatmul.mubr.bf16.gmra.mrb[0].mxu0 %v2749
        %v3352 = vpop.f32.mrb[0].mxu0
        %v3353 = vadd.f32 0.0, %v3352
        %v3354 = vpop.f32.mrb[0].mxu0
        %v3355 = vpop.f32.mrb[0].mxu0
        %v3356 = vadd.f32 0.0, %v3355
        %v3357 = vpop.f32.mrb[0].mxu0
        %3358 = vmatprep.mubr.bf16.mxu0 0
        %3359 = vmatmul.mubr.bf16.gmra.mrb[0].mxu0 %v2752
        %v3360 = vpop.f32.mrb[0].mxu0
        %v3361 = vadd.f32 0.0, %v3360
        %v3362 = vpop.f32.mrb[0].mxu0
        %v3363 = vpop.f32.mrb[0].mxu0
        %v3364 = vadd.f32 0.0, %v3363
        %v3365 = vpop.f32.mrb[0].mxu0
        %3366 = vmatprep.mubr.bf16.mxu0 0
        %3367 = vmatmul.mubr.bf16.gmra.mrb[0].mxu0 %v2755
        %v3368 = vpop.f32.mrb[0].mxu0
        %v3369 = vadd.f32 0.0, %v3368
        %v3370 = vpop.f32.mrb[0].mxu0
        %v3371 = vpop.f32.mrb[0].mxu0
        %v3372 = vadd.f32 0.0, %v3371
        %v3373 = vpop.f32.mrb[0].mxu0
        %3374 = vmatprep.mubr.bf16.mxu0 0
        %3375 = vmatmul.mubr.bf16.gmra.mrb[0].mxu0 %v2758
        %v3376 = vpop.f32.mrb[0].mxu0
        %v3377 = vadd.f32 0.0, %v3376
        %v3378 = vpop.f32.mrb[0].mxu0
        %v3379 = vpop.f32.mrb[0].mxu0
        %v3380 = vadd.f32 0.0, %v3379
        %v3381 = vpop.f32.mrb[0].mxu0
        %3382 = vmatprep.mubr.bf16.mxu0 0
        %3383 = vmatmul.mubr.bf16.gmra.mrb[0].mxu0 %v2761
        %v3384 = vpop.f32.mrb[0].mxu0
        %v3385 = vadd.f32 0.0, %v3384
        %v3386 = vpop.f32.mrb[0].mxu0
        %v3387 = vpop.f32.mrb[0].mxu0
        %v3388 = vadd.f32 0.0, %v3387
        %v3389 = vpop.f32.mrb[0].mxu0
        %3390 = vdwg.mxu0
        %v3391 = vmul.f32 %v3329, %v2860
        %v3392 = vmul.f32 %v3332, %v2861
        %v3393 = vmul.f32 %v3337, %v2862
        %v3394 = vmul.f32 %v3340, %v2863
        %v3395 = vmul.f32 %v3345, %v2864
        %v3396 = vmul.f32 %v3348, %v2865
        %v3397 = vmul.f32 %v3353, %v2866
        %v3398 = vmul.f32 %v3356, %v2867
        %v3399 = vmul.f32 %v3361, %v2868
        %v3400 = vmul.f32 %v3364, %v2869
        %v3401 = vmul.f32 %v3369, %v2870
        %v3402 = vmul.f32 %v3372, %v2871
        %v3403 = vmul.f32 %v3377, %v2872
        %v3404 = vmul.f32 %v3380, %v2873
        %v3405 = vmul.f32 %v3385, %v2874
        %v3406 = vmul.f32 %v3388, %v2875
        %v3407 = vpack.c.bf16 %v3392, %v3391
        %v3408 = vpack.c.bf16 %v3394, %v3393
        %v3409 = vpack.c.bf16 %v3396, %v3395
        %v3410 = vpack.c.bf16 %v3398, %v3397
        %v3411 = vpack.c.bf16 %v3400, %v3399
        %v3412 = vpack.c.bf16 %v3402, %v3401
        %v3413 = vpack.c.bf16 %v3404, %v3403
        %v3414 = vpack.c.bf16 %v3406, %v3405
        %3415 = vrot.lane.b32.xlu0 %v2695, 64
        %v3416 = vpop.permute.xlu0 %3415
        %3417 = vrot.lane.b32.xlu0 %v2696, 64
        %v3418 = vpop.permute.xlu0 %3417
        %3421 = vmatprep.subr.bf16.mxu0 0
        %3422 = vmatpush1.bf16.msra.mxu0 %v3416
        %3423 = vmatprep.subr.bf16.mxu0 0
        %3424 = vmatpush1.bf16.msra.mxu0 %v3418
        %3425 = vmatprep.subr.bf16.mxu0 0
        %3426 = vmatpush1.bf16.msra.mxu0 0
        %3427 = vmatprep.subr.bf16.mxu0 0
        %3428 = vmatpush1.bf16.msra.mxu0 0
        %3429 = vmatprep.subr.bf16.mxu0 0
        %3430 = vmatpush1.bf16.msra.mxu0 0
        %3431 = vmatprep.subr.bf16.mxu0 0
        %3432 = vmatpush1.bf16.msra.mxu0 0
        %3433 = vmatprep.subr.bf16.mxu0 0
        %3434 = vmatpush1.bf16.msra.mxu0 0
        %3435 = vmatprep.subr.bf16.mxu0 0
        %3436 = vmatpush1.bf16.msra.mxu0 0
        %3437 = vmatprep.subr.bf16.mxu0 0
        %3438 = vmatpush1.bf16.msra.mxu0 0
        %3439 = vmatprep.subr.bf16.mxu0 0
        %3440 = vmatpush1.bf16.msra.mxu0 0
        %3441 = vmatprep.subr.bf16.mxu0 0
        %3442 = vmatpush1.bf16.msra.mxu0 0
        %3443 = vmatprep.subr.bf16.mxu0 0
        %3444 = vmatpush1.bf16.msra.mxu0 0
        %3445 = vmatprep.subr.bf16.mxu0 0
        %3446 = vmatpush1.bf16.msra.mxu0 0
        %3447 = vmatprep.subr.bf16.mxu0 0
        %3448 = vmatpush1.bf16.msra.mxu0 0
        %3449 = vmatprep.subr.bf16.mxu0 0
        %3450 = vmatpush1.bf16.msra.mxu0 0
        %3451 = vmatprep.subr.bf16.mxu0 0
        %3452 = vmatpush1.bf16.msra.mxu0 0
        %3453 = vmatprep.mubr.bf16.mxu0 0
        %3454 = vmatmul.mubr.bf16.gmra.mrb[0].mxu0 %v2740
        %v3455 = vpop.f32.mrb[0].mxu0
        %v3456 = vadd.f32 0.0, %v3455
        %v3457 = vpop.f32.mrb[0].mxu0
        %v3458 = vpop.f32.mrb[0].mxu0
        %v3459 = vadd.f32 0.0, %v3458
        %v3460 = vpop.f32.mrb[0].mxu0
        %3461 = vmatprep.mubr.bf16.mxu0 0
        %3462 = vmatmul.mubr.bf16.gmra.mrb[0].mxu0 %v2743
        %v3463 = vpop.f32.mrb[0].mxu0
        %v3464 = vadd.f32 0.0, %v3463
        %v3465 = vpop.f32.mrb[0].mxu0
        %v3466 = vpop.f32.mrb[0].mxu0
        %v3467 = vadd.f32 0.0, %v3466
        %v3468 = vpop.f32.mrb[0].mxu0
        %3469 = vmatprep.mubr.bf16.mxu0 0
        %3470 = vmatmul.mubr.bf16.gmra.mrb[0].mxu0 %v2746
        %v3471 = vpop.f32.mrb[0].mxu0
        %v3472 = vadd.f32 0.0, %v3471
        %v3473 = vpop.f32.mrb[0].mxu0
        %v3474 = vpop.f32.mrb[0].mxu0
        %v3475 = vadd.f32 0.0, %v3474
        %v3476 = vpop.f32.mrb[0].mxu0
        %3477 = vmatprep.mubr.bf16.mxu0 0
        %3478 = vmatmul.mubr.bf16.gmra.mrb[0].mxu0 %v2749
        %v3479 = vpop.f32.mrb[0].mxu0
        %v3480 = vadd.f32 0.0, %v3479
        %v3481 = vpop.f32.mrb[0].mxu0
        %v3482 = vpop.f32.mrb[0].mxu0
        %v3483 = vadd.f32 0.0, %v3482
        %v3484 = vpop.f32.mrb[0].mxu0
        %3485 = vmatprep.mubr.bf16.mxu0 0
        %3486 = vmatmul.mubr.bf16.gmra.mrb[0].mxu0 %v2752
        %v3487 = vpop.f32.mrb[0].mxu0
        %v3488 = vadd.f32 0.0, %v3487
        %v3489 = vpop.f32.mrb[0].mxu0
        %v3490 = vpop.f32.mrb[0].mxu0
        %v3491 = vadd.f32 0.0, %v3490
        %v3492 = vpop.f32.mrb[0].mxu0
        %3493 = vmatprep.mubr.bf16.mxu0 0
        %3494 = vmatmul.mubr.bf16.gmra.mrb[0].mxu0 %v2755
        %v3495 = vpop.f32.mrb[0].mxu0
        %v3496 = vadd.f32 0.0, %v3495
        %v3497 = vpop.f32.mrb[0].mxu0
        %v3498 = vpop.f32.mrb[0].mxu0
        %v3499 = vadd.f32 0.0, %v3498
        %v3500 = vpop.f32.mrb[0].mxu0
        %3501 = vmatprep.mubr.bf16.mxu0 0
        %3502 = vmatmul.mubr.bf16.gmra.mrb[0].mxu0 %v2758
        %v3503 = vpop.f32.mrb[0].mxu0
        %v3504 = vadd.f32 0.0, %v3503
        %v3505 = vpop.f32.mrb[0].mxu0
        %v3506 = vpop.f32.mrb[0].mxu0
        %v3507 = vadd.f32 0.0, %v3506
        %v3508 = vpop.f32.mrb[0].mxu0
        %3509 = vmatprep.mubr.bf16.mxu0 0
        %3510 = vmatmul.mubr.bf16.gmra.mrb[0].mxu0 %v2761
        %v3511 = vpop.f32.mrb[0].mxu0
        %v3512 = vadd.f32 0.0, %v3511
        %v3513 = vpop.f32.mrb[0].mxu0
        %v3514 = vpop.f32.mrb[0].mxu0
        %v3515 = vadd.f32 0.0, %v3514
        %v3516 = vpop.f32.mrb[0].mxu0
        %3517 = vdwg.mxu0
        %v3518 = vmul.f32 %v3456, %v2860
        %v3519 = vmul.f32 %v3459, %v2861
        %v3520 = vmul.f32 %v3464, %v2862
        %v3521 = vmul.f32 %v3467, %v2863
        %v3522 = vmul.f32 %v3472, %v2864
        %v3523 = vmul.f32 %v3475, %v2865
        %v3524 = vmul.f32 %v3480, %v2866
        %v3525 = vmul.f32 %v3483, %v2867
        %v3526 = vmul.f32 %v3488, %v2868
        %v3527 = vmul.f32 %v3491, %v2869
        %v3528 = vmul.f32 %v3496, %v2870
        %v3529 = vmul.f32 %v3499, %v2871
        %v3530 = vmul.f32 %v3504, %v2872
        %v3531 = vmul.f32 %v3507, %v2873
        %v3532 = vmul.f32 %v3512, %v2874
        %v3533 = vmul.f32 %v3515, %v2875
        %v3534 = vpack.c.bf16 %v3519, %v3518
        %v3535 = vpack.c.bf16 %v3521, %v3520
        %v3536 = vpack.c.bf16 %v3523, %v3522
        %v3537 = vpack.c.bf16 %v3525, %v3524
        %v3538 = vpack.c.bf16 %v3527, %v3526
        %v3539 = vpack.c.bf16 %v3529, %v3528
        %v3540 = vpack.c.bf16 %v3531, %v3530
        %v3541 = vpack.c.bf16 %v3533, %v3532
        %v3543 = vsel %vm2277, %v3284, 0
        %v3546 = vsel %vm2277, %v3285, 0
        %v3549 = vsel %vm2277, %v3407, 0
        %v3552 = vsel %vm2277, %v3408, 0
        %v3555 = vsel %vm2277, %v3409, 0
        %v3558 = vsel %vm2277, %v3410, 0
        %v3561 = vsel %vm2277, %v3411, 0
        %v3564 = vsel %vm2277, %v3412, 0
        %v3567 = vsel %vm2277, %v3413, 0
        %v3570 = vsel %vm2277, %v3414, 0
        %3572 = vmatprep.subr.bf16.mxu0 0
        %3573 = vmatpush1.bf16.xpose.msra.mxu0 %v3549
        %3574 = vmatprep.subr.bf16.mxu0 0
        %3575 = vmatpush1.bf16.xpose.msra.mxu0 %v3552
        %3576 = vmatprep.subr.bf16.mxu0 0
        %3577 = vmatpush1.bf16.xpose.msra.mxu0 %v3555
        %3578 = vmatprep.subr.bf16.mxu0 0
        %3579 = vmatpush1.bf16.xpose.msra.mxu0 %v3558
        %3580 = vmatprep.subr.bf16.mxu0 0
        %3581 = vmatpush1.bf16.xpose.msra.mxu0 %v3561
        %3582 = vmatprep.subr.bf16.mxu0 0
        %3583 = vmatpush1.bf16.xpose.msra.mxu0 %v3564
        %3584 = vmatprep.subr.bf16.mxu0 0
        %3585 = vmatpush1.bf16.xpose.msra.mxu0 %v3567
        %3586 = vmatprep.subr.bf16.mxu0 0
        %3587 = vmatpush1.bf16.xpose.msra.mxu0 %v3570
        %3588 = vmatprep.subr.bf16.mxu0 0
        %3589 = vmatpush1.bf16.xpose.msra.mxu0 0
        %3590 = vmatprep.subr.bf16.mxu0 0
        %3591 = vmatpush1.bf16.xpose.msra.mxu0 0
        %3592 = vmatprep.subr.bf16.mxu0 0
        %3593 = vmatpush1.bf16.xpose.msra.mxu0 0
        %3594 = vmatprep.subr.bf16.mxu0 0
        %3595 = vmatpush1.bf16.xpose.msra.mxu0 0
        %3596 = vmatprep.subr.bf16.mxu0 0
        %3597 = vmatpush1.bf16.xpose.msra.mxu0 0
        %3598 = vmatprep.subr.bf16.mxu0 0
        %3599 = vmatpush1.bf16.xpose.msra.mxu0 0
        %3600 = vmatprep.subr.bf16.mxu0 0
        %3601 = vmatpush1.bf16.xpose.msra.mxu0 0
        %3602 = vmatprep.subr.bf16.mxu0 0
        %3603 = vmatpush1.bf16.xpose.msra.mxu0 0
        %3604 = vmatprep.mubr.bf16.mxu0 0
        %3605 = vmatmul.mubr.bf16.gmra.mrb[0].mxu0 %v3543
        %v3606 = vpop.f32.mrb[0].mxu0
        %v3607 = vadd.f32 0.0, %v3606
        %v3608 = vpop.f32.mrb[0].mxu0
        %v3609 = vpop.f32.mrb[0].mxu0
        %v3610 = vadd.f32 0.0, %v3609
        %v3611 = vpop.f32.mrb[0].mxu0
        %3612 = vmatprep.mubr.bf16.mxu0 0
        %3613 = vmatmul.mubr.bf16.gmra.mrb[0].mxu0 %v3546
        %v3614 = vpop.f32.mrb[0].mxu0
        %v3615 = vadd.f32 0.0, %v3614
        %v3616 = vpop.f32.mrb[0].mxu0
        %v3617 = vpop.f32.mrb[0].mxu0
        %v3618 = vadd.f32 0.0, %v3617
        %v3619 = vpop.f32.mrb[0].mxu0
        %3620 = vdwg.mxu0
        %3621 = vmax.xlane.f32.xlu0 %v3607
        %v3622 = vpop.xlane.xlu0 %3621
        %3623 = vmax.xlane.f32.xlu0 %v3610
        %v3624 = vpop.xlane.xlu0 %3623
        %3625 = vmax.xlane.f32.xlu0 %v3615
        %v3626 = vpop.xlane.xlu0 %3625
        %3627 = vmax.xlane.f32.xlu0 %v3618
        %v3628 = vpop.xlane.xlu0 %3627
        %v3629 = vsub.f32 %v3607, %v3622
        %v3630 = vsub.f32 %v3610, %v3624
        %v3631 = vsub.f32 %v3615, %v3626
        %v3632 = vsub.f32 %v3618, %v3628
        %v3633 = vmul.f32 %v3629, 1.442695
        %v3634 = vpow.pop %v3633
        %v3635 = vmul.f32 %v3630, 1.442695
        %v3636 = vpow.pop %v3635
        %v3637 = vmul.f32 %v3631, 1.442695
        %v3638 = vpow.pop %v3637
        %v3639 = vmul.f32 %v3632, 1.442695
        %v3640 = vpow.pop %v3639
        %v3641 = vpack.c.bf16 %v3636, %v3634
        %v3642 = vpack.c.bf16 %v3640, %v3638
        %3643 = vmatprep.subr.bf16.mxu0 0
        %3644 = vmatpush1.bf16.msra.mxu0 %v3160
        %3645 = vmatprep.subr.bf16.mxu0 0
        %3646 = vmatpush1.bf16.msra.mxu0 %v3161
        %3647 = vmatprep.subr.bf16.mxu0 0
        %3648 = vmatpush1.bf16.msra.mxu0 %v3162
        %3649 = vmatprep.subr.bf16.mxu0 0
        %3650 = vmatpush1.bf16.msra.mxu0 %v3163
        %3651 = vmatprep.subr.bf16.mxu0 0
        %3652 = vmatpush1.bf16.msra.mxu0 %v3164
        %3653 = vmatprep.subr.bf16.mxu0 0
        %3654 = vmatpush1.bf16.msra.mxu0 %v3165
        %3655 = vmatprep.subr.bf16.mxu0 0
        %3656 = vmatpush1.bf16.msra.mxu0 %v3166
        %3657 = vmatprep.subr.bf16.mxu0 0
        %3658 = vmatpush1.bf16.msra.mxu0 %v3167
        %3659 = vmatprep.subr.bf16.mxu0 0
        %3660 = vmatpush1.bf16.msra.mxu0 0
        %3661 = vmatprep.subr.bf16.mxu0 0
        %3662 = vmatpush1.bf16.msra.mxu0 0
        %3663 = vmatprep.subr.bf16.mxu0 0
        %3664 = vmatpush1.bf16.msra.mxu0 0
        %3665 = vmatprep.subr.bf16.mxu0 0
        %3666 = vmatpush1.bf16.msra.mxu0 0
        %3667 = vmatprep.subr.bf16.mxu0 0
        %3668 = vmatpush1.bf16.msra.mxu0 0
        %3669 = vmatprep.subr.bf16.mxu0 0
        %3670 = vmatpush1.bf16.msra.mxu0 0
        %3671 = vmatprep.subr.bf16.mxu0 0
        %3672 = vmatpush1.bf16.msra.mxu0 0
        %3673 = vmatprep.subr.bf16.mxu0 0
        %3674 = vmatpush1.bf16.msra.mxu0 0
        %3675 = vmatprep.mubr.bf16.mxu0 0
        %3676 = vmatmul.mubr.bf16.gmra.mrb[0].mxu0 %v3641
        %v3677 = vpop.f32.mrb[0].mxu0
        %v3678 = vadd.f32 0.0, %v3677
        %v3679 = vpop.f32.mrb[0].mxu0
        %v3680 = vpop.f32.mrb[0].mxu0
        %v3681 = vadd.f32 0.0, %v3680
        %v3682 = vpop.f32.mrb[0].mxu0
        %3683 = vmatprep.mubr.bf16.mxu0 0
        %3684 = vmatmul.mubr.bf16.gmra.mrb[0].mxu0 %v3642
        %v3685 = vpop.f32.mrb[0].mxu0
        %v3686 = vadd.f32 0.0, %v3685
        %v3687 = vpop.f32.mrb[0].mxu0
        %v3688 = vpop.f32.mrb[0].mxu0
        %v3689 = vadd.f32 0.0, %v3688
        %v3690 = vpop.f32.mrb[0].mxu0
        %3691 = vdwg.mxu0
        %v3692 = vrcp.pop %v3678
        %v3693 = vrcp.pop %v3681
        %v3694 = vrcp.pop %v3686
        %v3695 = vrcp.pop %v3689
        %v3696 = vmul.f32 %v3634, %v3692
        %v3697 = vmul.f32 %v3636, %v3693
        %v3698 = vmul.f32 %v3638, %v3694
        %v3699 = vmul.f32 %v3640, %v3695
        %v3700 = vpack.c.bf16 %v3697, %v3696
        %v3701 = vpack.c.bf16 %v3699, %v3698
        %3702 = vmatprep.subr.bf16.mxu0 0
        %3703 = vmatpush1.bf16.msra.mxu0 %v3534
        %3704 = vmatprep.subr.bf16.mxu0 0
        %3705 = vmatpush1.bf16.msra.mxu0 %v3535
        %3706 = vmatprep.subr.bf16.mxu0 0
        %3707 = vmatpush1.bf16.msra.mxu0 %v3536
        %3708 = vmatprep.subr.bf16.mxu0 0
        %3709 = vmatpush1.bf16.msra.mxu0 %v3537
        %3710 = vmatprep.subr.bf16.mxu0 0
        %3711 = vmatpush1.bf16.msra.mxu0 %v3538
        %3712 = vmatprep.subr.bf16.mxu0 0
        %3713 = vmatpush1.bf16.msra.mxu0 %v3539
        %3714 = vmatprep.subr.bf16.mxu0 0
        %3715 = vmatpush1.bf16.msra.mxu0 %v3540
        %3716 = vmatprep.subr.bf16.mxu0 0
        %3717 = vmatpush1.bf16.msra.mxu0 %v3541
        %3718 = vmatprep.subr.bf16.mxu0 0
        %3719 = vmatpush1.bf16.msra.mxu0 0
        %3720 = vmatprep.subr.bf16.mxu0 0
        %3721 = vmatpush1.bf16.msra.mxu0 0
        %3722 = vmatprep.subr.bf16.mxu0 0
        %3723 = vmatpush1.bf16.msra.mxu0 0
        %3724 = vmatprep.subr.bf16.mxu0 0
        %3725 = vmatpush1.bf16.msra.mxu0 0
        %3726 = vmatprep.subr.bf16.mxu0 0
        %3727 = vmatpush1.bf16.msra.mxu0 0
        %3728 = vmatprep.subr.bf16.mxu0 0
        %3729 = vmatpush1.bf16.msra.mxu0 0
        %3730 = vmatprep.subr.bf16.mxu0 0
        %3731 = vmatpush1.bf16.msra.mxu0 0
        %3732 = vmatprep.subr.bf16.mxu0 0
        %3733 = vmatpush1.bf16.msra.mxu0 0
        %3734 = vmatprep.mubr.bf16.mxu0 0
        %3735 = vmatmul.mubr.bf16.gmra.mrb[0].mxu0 %v3700
        %v3736 = vpop.f32.mrb[0].mxu0
        %v3737 = vadd.f32 0.0, %v3736
        %v3738 = vpop.f32.mrb[0].mxu0
        %v3739 = vpop.f32.mrb[0].mxu0
        %v3740 = vadd.f32 0.0, %v3739
        %v3741 = vpop.f32.mrb[0].mxu0
        %3742 = vmatprep.mubr.bf16.mxu0 0
        %3743 = vmatmul.mubr.bf16.gmra.mrb[0].mxu0 %v3701
        %v3744 = vpop.f32.mrb[0].mxu0
        %v3745 = vadd.f32 0.0, %v3744
        %v3746 = vpop.f32.mrb[0].mxu0
        %v3747 = vpop.f32.mrb[0].mxu0
        %v3748 = vadd.f32 0.0, %v3747
        %v3749 = vpop.f32.mrb[0].mxu0
        %3750 = vdwg.mxu0
        %v3751 = vpack.c.bf16 %v2686, %v2685
        %v3752 = vpack.c.bf16 %v2688, %v2687
        %3755 = vrot.lane.b32.xlu0 %v2697, 96
        %v3756 = vpop.permute.xlu0 %3755
        %3757 = vrot.lane.b32.xlu0 %v2698, 96
        %v3758 = vpop.permute.xlu0 %3757
        %3761 = vmatprep.subr.bf16.mxu0 0
        %3762 = vmatpush1.bf16.msra.mxu0 %v3756
        %3763 = vmatprep.subr.bf16.mxu0 0
        %3764 = vmatpush1.bf16.msra.mxu0 %v3758
        %3765 = vmatprep.subr.bf16.mxu0 0
        %3766 = vmatpush1.bf16.msra.mxu0 0
        %3767 = vmatprep.subr.bf16.mxu0 0
        %3768 = vmatpush1.bf16.msra.mxu0 0
        %3769 = vmatprep.subr.bf16.mxu0 0
        %3770 = vmatpush1.bf16.msra.mxu0 0
        %3771 = vmatprep.subr.bf16.mxu0 0
        %3772 = vmatpush1.bf16.msra.mxu0 0
        %3773 = vmatprep.subr.bf16.mxu0 0
        %3774 = vmatpush1.bf16.msra.mxu0 0
        %3775 = vmatprep.subr.bf16.mxu0 0
        %3776 = vmatpush1.bf16.msra.mxu0 0
        %3777 = vmatprep.subr.bf16.mxu0 0
        %3778 = vmatpush1.bf16.msra.mxu0 0
        %3779 = vmatprep.subr.bf16.mxu0 0
        %3780 = vmatpush1.bf16.msra.mxu0 0
        %3781 = vmatprep.subr.bf16.mxu0 0
        %3782 = vmatpush1.bf16.msra.mxu0 0
        %3783 = vmatprep.subr.bf16.mxu0 0
        %3784 = vmatpush1.bf16.msra.mxu0 0
        %3785 = vmatprep.subr.bf16.mxu0 0
        %3786 = vmatpush1.bf16.msra.mxu0 0
        %3787 = vmatprep.subr.bf16.mxu0 0
        %3788 = vmatpush1.bf16.msra.mxu0 0
        %3789 = vmatprep.subr.bf16.mxu0 0
        %3790 = vmatpush1.bf16.msra.mxu0 0
        %3791 = vmatprep.subr.bf16.mxu0 0
        %3792 = vmatpush1.bf16.msra.mxu0 0
        %3793 = vmatprep.mubr.bf16.mxu0 0
        %3794 = vmatmul.mubr.bf16.gmra.mrb[0].mxu0 %v2740
        %v3795 = vpop.f32.mrb[0].mxu0
        %v3796 = vadd.f32 0.0, %v3795
        %v3797 = vpop.f32.mrb[0].mxu0
        %v3798 = vpop.f32.mrb[0].mxu0
        %v3799 = vadd.f32 0.0, %v3798
        %v3800 = vpop.f32.mrb[0].mxu0
        %3801 = vmatprep.mubr.bf16.mxu0 0
        %3802 = vmatmul.mubr.bf16.gmra.mrb[0].mxu0 %v2743
        %v3803 = vpop.f32.mrb[0].mxu0
        %v3804 = vadd.f32 0.0, %v3803
        %v3805 = vpop.f32.mrb[0].mxu0
        %v3806 = vpop.f32.mrb[0].mxu0
        %v3807 = vadd.f32 0.0, %v3806
        %v3808 = vpop.f32.mrb[0].mxu0
        %3809 = vmatprep.mubr.bf16.mxu0 0
        %3810 = vmatmul.mubr.bf16.gmra.mrb[0].mxu0 %v2746
        %v3811 = vpop.f32.mrb[0].mxu0
        %v3812 = vadd.f32 0.0, %v3811
        %v3813 = vpop.f32.mrb[0].mxu0
        %v3814 = vpop.f32.mrb[0].mxu0
        %v3815 = vadd.f32 0.0, %v3814
        %v3816 = vpop.f32.mrb[0].mxu0
        %3817 = vmatprep.mubr.bf16.mxu0 0
        %3818 = vmatmul.mubr.bf16.gmra.mrb[0].mxu0 %v2749
        %v3819 = vpop.f32.mrb[0].mxu0
        %v3820 = vadd.f32 0.0, %v3819
        %v3821 = vpop.f32.mrb[0].mxu0
        %v3822 = vpop.f32.mrb[0].mxu0
        %v3823 = vadd.f32 0.0, %v3822
        %v3824 = vpop.f32.mrb[0].mxu0
        %3825 = vmatprep.mubr.bf16.mxu0 0
        %3826 = vmatmul.mubr.bf16.gmra.mrb[0].mxu0 %v2752
        %v3827 = vpop.f32.mrb[0].mxu0
        %v3828 = vadd.f32 0.0, %v3827
        %v3829 = vpop.f32.mrb[0].mxu0
        %v3830 = vpop.f32.mrb[0].mxu0
        %v3831 = vadd.f32 0.0, %v3830
        %v3832 = vpop.f32.mrb[0].mxu0
        %3833 = vmatprep.mubr.bf16.mxu0 0
        %3834 = vmatmul.mubr.bf16.gmra.mrb[0].mxu0 %v2755
        %v3835 = vpop.f32.mrb[0].mxu0
        %v3836 = vadd.f32 0.0, %v3835
        %v3837 = vpop.f32.mrb[0].mxu0
        %v3838 = vpop.f32.mrb[0].mxu0
        %v3839 = vadd.f32 0.0, %v3838
        %v3840 = vpop.f32.mrb[0].mxu0
        %3841 = vmatprep.mubr.bf16.mxu0 0
        %3842 = vmatmul.mubr.bf16.gmra.mrb[0].mxu0 %v2758
        %v3843 = vpop.f32.mrb[0].mxu0
        %v3844 = vadd.f32 0.0, %v3843
        %v3845 = vpop.f32.mrb[0].mxu0
        %v3846 = vpop.f32.mrb[0].mxu0
        %v3847 = vadd.f32 0.0, %v3846
        %v3848 = vpop.f32.mrb[0].mxu0
        %3849 = vmatprep.mubr.bf16.mxu0 0
        %3850 = vmatmul.mubr.bf16.gmra.mrb[0].mxu0 %v2761
        %v3851 = vpop.f32.mrb[0].mxu0
        %v3852 = vadd.f32 0.0, %v3851
        %v3853 = vpop.f32.mrb[0].mxu0
        %v3854 = vpop.f32.mrb[0].mxu0
        %v3855 = vadd.f32 0.0, %v3854
        %v3856 = vpop.f32.mrb[0].mxu0
        %3857 = vdwg.mxu0
        %v3858 = vmul.f32 %v3796, %v2860
        %v3859 = vmul.f32 %v3799, %v2861
        %v3860 = vmul.f32 %v3804, %v2862
        %v3861 = vmul.f32 %v3807, %v2863
        %v3862 = vmul.f32 %v3812, %v2864
        %v3863 = vmul.f32 %v3815, %v2865
        %v3864 = vmul.f32 %v3820, %v2866
        %v3865 = vmul.f32 %v3823, %v2867
        %v3866 = vmul.f32 %v3828, %v2868
        %v3867 = vmul.f32 %v3831, %v2869
        %v3868 = vmul.f32 %v3836, %v2870
        %v3869 = vmul.f32 %v3839, %v2871
        %v3870 = vmul.f32 %v3844, %v2872
        %v3871 = vmul.f32 %v3847, %v2873
        %v3872 = vmul.f32 %v3852, %v2874
        %v3873 = vmul.f32 %v3855, %v2875
        %v3874 = vpack.c.bf16 %v3859, %v3858
        %v3875 = vpack.c.bf16 %v3861, %v3860
        %v3876 = vpack.c.bf16 %v3863, %v3862
        %v3877 = vpack.c.bf16 %v3865, %v3864
        %v3878 = vpack.c.bf16 %v3867, %v3866
        %v3879 = vpack.c.bf16 %v3869, %v3868
        %v3880 = vpack.c.bf16 %v3871, %v3870
        %v3881 = vpack.c.bf16 %v3873, %v3872
        %3882 = vrot.lane.b32.xlu0 %v2697, 64
        %v3883 = vpop.permute.xlu0 %3882
        %3884 = vrot.lane.b32.xlu0 %v2698, 64
        %v3885 = vpop.permute.xlu0 %3884
        %3888 = vmatprep.subr.bf16.mxu0 0
        %3889 = vmatpush1.bf16.msra.mxu0 %v3883
        %3890 = vmatprep.subr.bf16.mxu0 0
        %3891 = vmatpush1.bf16.msra.mxu0 %v3885
        %3892 = vmatprep.subr.bf16.mxu0 0
        %3893 = vmatpush1.bf16.msra.mxu0 0
        %3894 = vmatprep.subr.bf16.mxu0 0
        %3895 = vmatpush1.bf16.msra.mxu0 0
        %3896 = vmatprep.subr.bf16.mxu0 0
        %3897 = vmatpush1.bf16.msra.mxu0 0
        %3898 = vmatprep.subr.bf16.mxu0 0
        %3899 = vmatpush1.bf16.msra.mxu0 0
        %3900 = vmatprep.subr.bf16.mxu0 0
        %3901 = vmatpush1.bf16.msra.mxu0 0
        %3902 = vmatprep.subr.bf16.mxu0 0
        %3903 = vmatpush1.bf16.msra.mxu0 0
        %3904 = vmatprep.subr.bf16.mxu0 0
        %3905 = vmatpush1.bf16.msra.mxu0 0
        %3906 = vmatprep.subr.bf16.mxu0 0
        %3907 = vmatpush1.bf16.msra.mxu0 0
        %3908 = vmatprep.subr.bf16.mxu0 0
        %3909 = vmatpush1.bf16.msra.mxu0 0
        %3910 = vmatprep.subr.bf16.mxu0 0
        %3911 = vmatpush1.bf16.msra.mxu0 0
        %3912 = vmatprep.subr.bf16.mxu0 0
        %3913 = vmatpush1.bf16.msra.mxu0 0
        %3914 = vmatprep.subr.bf16.mxu0 0
        %3915 = vmatpush1.bf16.msra.mxu0 0
        %3916 = vmatprep.subr.bf16.mxu0 0
        %3917 = vmatpush1.bf16.msra.mxu0 0
        %3918 = vmatprep.subr.bf16.mxu0 0
        %3919 = vmatpush1.bf16.msra.mxu0 0
        %3920 = vmatprep.mubr.bf16.mxu0 0
        %3921 = vmatmul.mubr.bf16.gmra.mrb[0].mxu0 %v2740
        %v3922 = vpop.f32.mrb[0].mxu0
        %v3923 = vadd.f32 0.0, %v3922
        %v3924 = vpop.f32.mrb[0].mxu0
        %v3925 = vpop.f32.mrb[0].mxu0
        %v3926 = vadd.f32 0.0, %v3925
        %v3927 = vpop.f32.mrb[0].mxu0
        %3928 = vmatprep.mubr.bf16.mxu0 0
        %3929 = vmatmul.mubr.bf16.gmra.mrb[0].mxu0 %v2743
        %v3930 = vpop.f32.mrb[0].mxu0
        %v3931 = vadd.f32 0.0, %v3930
        %v3932 = vpop.f32.mrb[0].mxu0
        %v3933 = vpop.f32.mrb[0].mxu0
        %v3934 = vadd.f32 0.0, %v3933
        %v3935 = vpop.f32.mrb[0].mxu0
        %3936 = vmatprep.mubr.bf16.mxu0 0
        %3937 = vmatmul.mubr.bf16.gmra.mrb[0].mxu0 %v2746
        %v3938 = vpop.f32.mrb[0].mxu0
        %v3939 = vadd.f32 0.0, %v3938
        %v3940 = vpop.f32.mrb[0].mxu0
        %v3941 = vpop.f32.mrb[0].mxu0
        %v3942 = vadd.f32 0.0, %v3941
        %v3943 = vpop.f32.mrb[0].mxu0
        %3944 = vmatprep.mubr.bf16.mxu0 0
        %3945 = vmatmul.mubr.bf16.gmra.mrb[0].mxu0 %v2749
        %v3946 = vpop.f32.mrb[0].mxu0
        %v3947 = vadd.f32 0.0, %v3946
        %v3948 = vpop.f32.mrb[0].mxu0
        %v3949 = vpop.f32.mrb[0].mxu0
        %v3950 = vadd.f32 0.0, %v3949
        %v3951 = vpop.f32.mrb[0].mxu0
        %3952 = vmatprep.mubr.bf16.mxu0 0
        %3953 = vmatmul.mubr.bf16.gmra.mrb[0].mxu0 %v2752
        %v3954 = vpop.f32.mrb[0].mxu0
        %v3955 = vadd.f32 0.0, %v3954
        %v3956 = vpop.f32.mrb[0].mxu0
        %v3957 = vpop.f32.mrb[0].mxu0
        %v3958 = vadd.f32 0.0, %v3957
        %v3959 = vpop.f32.mrb[0].mxu0
        %3960 = vmatprep.mubr.bf16.mxu0 0
        %3961 = vmatmul.mubr.bf16.gmra.mrb[0].mxu0 %v2755
        %v3962 = vpop.f32.mrb[0].mxu0
        %v3963 = vadd.f32 0.0, %v3962
        %v3964 = vpop.f32.mrb[0].mxu0
        %v3965 = vpop.f32.mrb[0].mxu0
        %v3966 = vadd.f32 0.0, %v3965
        %v3967 = vpop.f32.mrb[0].mxu0
        %3968 = vmatprep.mubr.bf16.mxu0 0
        %3969 = vmatmul.mubr.bf16.gmra.mrb[0].mxu0 %v2758
        %v3970 = vpop.f32.mrb[0].mxu0
        %v3971 = vadd.f32 0.0, %v3970
        %v3972 = vpop.f32.mrb[0].mxu0
        %v3973 = vpop.f32.mrb[0].mxu0
        %v3974 = vadd.f32 0.0, %v3973
        %v3975 = vpop.f32.mrb[0].mxu0
        %3976 = vmatprep.mubr.bf16.mxu0 0
        %3977 = vmatmul.mubr.bf16.gmra.mrb[0].mxu0 %v2761
        %v3978 = vpop.f32.mrb[0].mxu0
        %v3979 = vadd.f32 0.0, %v3978
        %v3980 = vpop.f32.mrb[0].mxu0
        %v3981 = vpop.f32.mrb[0].mxu0
        %v3982 = vadd.f32 0.0, %v3981
        %v3983 = vpop.f32.mrb[0].mxu0
        %3984 = vdwg.mxu0
        %v3985 = vmul.f32 %v3923, %v2860
        %v3986 = vmul.f32 %v3926, %v2861
        %v3987 = vmul.f32 %v3931, %v2862
        %v3988 = vmul.f32 %v3934, %v2863
        %v3989 = vmul.f32 %v3939, %v2864
        %v3990 = vmul.f32 %v3942, %v2865
        %v3991 = vmul.f32 %v3947, %v2866
        %v3992 = vmul.f32 %v3950, %v2867
        %v3993 = vmul.f32 %v3955, %v2868
        %v3994 = vmul.f32 %v3958, %v2869
        %v3995 = vmul.f32 %v3963, %v2870
        %v3996 = vmul.f32 %v3966, %v2871
        %v3997 = vmul.f32 %v3971, %v2872
        %v3998 = vmul.f32 %v3974, %v2873
        %v3999 = vmul.f32 %v3979, %v2874
        %v4000 = vmul.f32 %v3982, %v2875
        %v4001 = vpack.c.bf16 %v3986, %v3985
        %v4002 = vpack.c.bf16 %v3988, %v3987
        %v4003 = vpack.c.bf16 %v3990, %v3989
        %v4004 = vpack.c.bf16 %v3992, %v3991
        %v4005 = vpack.c.bf16 %v3994, %v3993
        %v4006 = vpack.c.bf16 %v3996, %v3995
        %v4007 = vpack.c.bf16 %v3998, %v3997
        %v4008 = vpack.c.bf16 %v4000, %v3999
        %v4010 = vsel %vm2277, %v3751, 0
        %v4013 = vsel %vm2277, %v3752, 0
        %v4016 = vsel %vm2277, %v3874, 0
        %v4019 = vsel %vm2277, %v3875, 0
        %v4022 = vsel %vm2277, %v3876, 0
        %v4025 = vsel %vm2277, %v3877, 0
        %v4028 = vsel %vm2277, %v3878, 0
        %v4031 = vsel %vm2277, %v3879, 0
        %v4034 = vsel %vm2277, %v3880, 0
        %v4037 = vsel %vm2277, %v3881, 0
        %4039 = vmatprep.subr.bf16.mxu0 0
        %4040 = vmatpush1.bf16.xpose.msra.mxu0 %v4016
        %4041 = vmatprep.subr.bf16.mxu0 0
        %4042 = vmatpush1.bf16.xpose.msra.mxu0 %v4019
        %4043 = vmatprep.subr.bf16.mxu0 0
        %4044 = vmatpush1.bf16.xpose.msra.mxu0 %v4022
        %4045 = vmatprep.subr.bf16.mxu0 0
        %4046 = vmatpush1.bf16.xpose.msra.mxu0 %v4025
        %4047 = vmatprep.subr.bf16.mxu0 0
        %4048 = vmatpush1.bf16.xpose.msra.mxu0 %v4028
        %4049 = vmatprep.subr.bf16.mxu0 0
        %4050 = vmatpush1.bf16.xpose.msra.mxu0 %v4031
        %4051 = vmatprep.subr.bf16.mxu0 0
        %4052 = vmatpush1.bf16.xpose.msra.mxu0 %v4034
        %4053 = vmatprep.subr.bf16.mxu0 0
        %4054 = vmatpush1.bf16.xpose.msra.mxu0 %v4037
        %4055 = vmatprep.subr.bf16.mxu0 0
        %4056 = vmatpush1.bf16.xpose.msra.mxu0 0
        %4057 = vmatprep.subr.bf16.mxu0 0
        %4058 = vmatpush1.bf16.xpose.msra.mxu0 0
        %4059 = vmatprep.subr.bf16.mxu0 0
        %4060 = vmatpush1.bf16.xpose.msra.mxu0 0
        %4061 = vmatprep.subr.bf16.mxu0 0
        %4062 = vmatpush1.bf16.xpose.msra.mxu0 0
        %4063 = vmatprep.subr.bf16.mxu0 0
        %4064 = vmatpush1.bf16.xpose.msra.mxu0 0
        %4065 = vmatprep.subr.bf16.mxu0 0
        %4066 = vmatpush1.bf16.xpose.msra.mxu0 0
        %4067 = vmatprep.subr.bf16.mxu0 0
        %4068 = vmatpush1.bf16.xpose.msra.mxu0 0
        %4069 = vmatprep.subr.bf16.mxu0 0
        %4070 = vmatpush1.bf16.xpose.msra.mxu0 0
        %4071 = vmatprep.mubr.bf16.mxu0 0
        %4072 = vmatmul.mubr.bf16.gmra.mrb[0].mxu0 %v4010
        %v4073 = vpop.f32.mrb[0].mxu0
        %v4074 = vadd.f32 0.0, %v4073
        %v4075 = vpop.f32.mrb[0].mxu0
        %v4076 = vpop.f32.mrb[0].mxu0
        %v4077 = vadd.f32 0.0, %v4076
        %v4078 = vpop.f32.mrb[0].mxu0
        %4079 = vmatprep.mubr.bf16.mxu0 0
        %4080 = vmatmul.mubr.bf16.gmra.mrb[0].mxu0 %v4013
        %v4081 = vpop.f32.mrb[0].mxu0
        %v4082 = vadd.f32 0.0, %v4081
        %v4083 = vpop.f32.mrb[0].mxu0
        %v4084 = vpop.f32.mrb[0].mxu0
        %v4085 = vadd.f32 0.0, %v4084
        %v4086 = vpop.f32.mrb[0].mxu0
        %4087 = vdwg.mxu0
        %4088 = vmax.xlane.f32.xlu0 %v4074
        %v4089 = vpop.xlane.xlu0 %4088
        %4090 = vmax.xlane.f32.xlu0 %v4077
        %v4091 = vpop.xlane.xlu0 %4090
        %4092 = vmax.xlane.f32.xlu0 %v4082
        %v4093 = vpop.xlane.xlu0 %4092
        %4094 = vmax.xlane.f32.xlu0 %v4085
        %v4095 = vpop.xlane.xlu0 %4094
        %v4096 = vsub.f32 %v4074, %v4089
        %v4097 = vsub.f32 %v4077, %v4091
        %v4098 = vsub.f32 %v4082, %v4093
        %v4099 = vsub.f32 %v4085, %v4095
        %v4100 = vmul.f32 %v4096, 1.442695
        %v4101 = vpow.pop %v4100
        %v4102 = vmul.f32 %v4097, 1.442695
        %v4103 = vpow.pop %v4102
        %v4104 = vmul.f32 %v4098, 1.442695
        %v4105 = vpow.pop %v4104
        %v4106 = vmul.f32 %v4099, 1.442695
        %v4107 = vpow.pop %v4106
        %v4108 = vpack.c.bf16 %v4103, %v4101
        %v4109 = vpack.c.bf16 %v4107, %v4105
        %4110 = vmatprep.subr.bf16.mxu0 0
        %4111 = vmatpush1.bf16.msra.mxu0 %v3160
        %4112 = vmatprep.subr.bf16.mxu0 0
        %4113 = vmatpush1.bf16.msra.mxu0 %v3161
        %4114 = vmatprep.subr.bf16.mxu0 0
        %4115 = vmatpush1.bf16.msra.mxu0 %v3162
        %4116 = vmatprep.subr.bf16.mxu0 0
        %4117 = vmatpush1.bf16.msra.mxu0 %v3163
        %4118 = vmatprep.subr.bf16.mxu0 0
        %4119 = vmatpush1.bf16.msra.mxu0 %v3164
        %4120 = vmatprep.subr.bf16.mxu0 0
        %4121 = vmatpush1.bf16.msra.mxu0 %v3165
        %4122 = vmatprep.subr.bf16.mxu0 0
        %4123 = vmatpush1.bf16.msra.mxu0 %v3166
        %4124 = vmatprep.subr.bf16.mxu0 0
        %4125 = vmatpush1.bf16.msra.mxu0 %v3167
        %4126 = vmatprep.subr.bf16.mxu0 0
        %4127 = vmatpush1.bf16.msra.mxu0 0
        %4128 = vmatprep.subr.bf16.mxu0 0
        %4129 = vmatpush1.bf16.msra.mxu0 0
        %4130 = vmatprep.subr.bf16.mxu0 0
        %4131 = vmatpush1.bf16.msra.mxu0 0
        %4132 = vmatprep.subr.bf16.mxu0 0
        %4133 = vmatpush1.bf16.msra.mxu0 0
        %4134 = vmatprep.subr.bf16.mxu0 0
        %4135 = vmatpush1.bf16.msra.mxu0 0
        %4136 = vmatprep.subr.bf16.mxu0 0
        %4137 = vmatpush1.bf16.msra.mxu0 0
        %4138 = vmatprep.subr.bf16.mxu0 0
        %4139 = vmatpush1.bf16.msra.mxu0 0
        %4140 = vmatprep.subr.bf16.mxu0 0
        %4141 = vmatpush1.bf16.msra.mxu0 0
        %4142 = vmatprep.mubr.bf16.mxu0 0
        %4143 = vmatmul.mubr.bf16.gmra.mrb[0].mxu0 %v4108
        %v4144 = vpop.f32.mrb[0].mxu0
        %v4145 = vadd.f32 0.0, %v4144
        %v4146 = vpop.f32.mrb[0].mxu0
        %v4147 = vpop.f32.mrb[0].mxu0
        %v4148 = vadd.f32 0.0, %v4147
        %v4149 = vpop.f32.mrb[0].mxu0
        %4150 = vmatprep.mubr.bf16.mxu0 0
        %4151 = vmatmul.mubr.bf16.gmra.mrb[0].mxu0 %v4109
        %v4152 = vpop.f32.mrb[0].mxu0
        %v4153 = vadd.f32 0.0, %v4152
        %v4154 = vpop.f32.mrb[0].mxu0
        %v4155 = vpop.f32.mrb[0].mxu0
        %v4156 = vadd.f32 0.0, %v4155
        %v4157 = vpop.f32.mrb[0].mxu0
        %4158 = vdwg.mxu0
        %v4159 = vrcp.pop %v4145
        %v4160 = vrcp.pop %v4148
        %v4161 = vrcp.pop %v4153
        %v4162 = vrcp.pop %v4156
        %v4163 = vmul.f32 %v4101, %v4159
        %v4164 = vmul.f32 %v4103, %v4160
        %v4165 = vmul.f32 %v4105, %v4161
        %v4166 = vmul.f32 %v4107, %v4162
        %v4167 = vpack.c.bf16 %v4164, %v4163
        %v4168 = vpack.c.bf16 %v4166, %v4165
        %4169 = vmatprep.subr.bf16.mxu0 0
        %4170 = vmatpush1.bf16.msra.mxu0 %v4001
        %4171 = vmatprep.subr.bf16.mxu0 0
        %4172 = vmatpush1.bf16.msra.mxu0 %v4002
        %4173 = vmatprep.subr.bf16.mxu0 0
        %4174 = vmatpush1.bf16.msra.mxu0 %v4003
        %4175 = vmatprep.subr.bf16.mxu0 0
        %4176 = vmatpush1.bf16.msra.mxu0 %v4004
        %4177 = vmatprep.subr.bf16.mxu0 0
        %4178 = vmatpush1.bf16.msra.mxu0 %v4005
        %4179 = vmatprep.subr.bf16.mxu0 0
        %4180 = vmatpush1.bf16.msra.mxu0 %v4006
        %4181 = vmatprep.subr.bf16.mxu0 0
        %4182 = vmatpush1.bf16.msra.mxu0 %v4007
        %4183 = vmatprep.subr.bf16.mxu0 0
        %4184 = vmatpush1.bf16.msra.mxu0 %v4008
        %4185 = vmatprep.subr.bf16.mxu0 0
        %4186 = vmatpush1.bf16.msra.mxu0 0
        %4187 = vmatprep.subr.bf16.mxu0 0
        %4188 = vmatpush1.bf16.msra.mxu0 0
        %4189 = vmatprep.subr.bf16.mxu0 0
        %4190 = vmatpush1.bf16.msra.mxu0 0
        %4191 = vmatprep.subr.bf16.mxu0 0
        %4192 = vmatpush1.bf16.msra.mxu0 0
        %4193 = vmatprep.subr.bf16.mxu0 0
        %4194 = vmatpush1.bf16.msra.mxu0 0
        %4195 = vmatprep.subr.bf16.mxu0 0
        %4196 = vmatpush1.bf16.msra.mxu0 0
        %4197 = vmatprep.subr.bf16.mxu0 0
        %4198 = vmatpush1.bf16.msra.mxu0 0
        %4199 = vmatprep.subr.bf16.mxu0 0
        %4200 = vmatpush1.bf16.msra.mxu0 0
        %4201 = vmatprep.mubr.bf16.mxu0 0
        %4202 = vmatmul.mubr.bf16.gmra.mrb[0].mxu0 %v4167
        %v4203 = vpop.f32.mrb[0].mxu0
        %v4204 = vadd.f32 0.0, %v4203
        %v4205 = vpop.f32.mrb[0].mxu0
        %v4206 = vpop.f32.mrb[0].mxu0
        %v4207 = vadd.f32 0.0, %v4206
        %v4208 = vpop.f32.mrb[0].mxu0
        %4209 = vmatprep.mubr.bf16.mxu0 0
        %4210 = vmatmul.mubr.bf16.gmra.mrb[0].mxu0 %v4168
        %v4211 = vpop.f32.mrb[0].mxu0
        %v4212 = vadd.f32 0.0, %v4211
        %v4213 = vpop.f32.mrb[0].mxu0
        %v4214 = vpop.f32.mrb[0].mxu0
        %v4215 = vadd.f32 0.0, %v4214
        %v4216 = vpop.f32.mrb[0].mxu0
        %4217 = vdwg.mxu0
        %v4218 = vpack.c.bf16 %v2690, %v2689
        %v4219 = vpack.c.bf16 %v2692, %v2691
        %4222 = vrot.lane.b32.xlu0 %v2699, 96
        %v4223 = vpop.permute.xlu0 %4222
        %4224 = vrot.lane.b32.xlu0 %v2700, 96
        %v4225 = vpop.permute.xlu0 %4224
        %4228 = vmatprep.subr.bf16.mxu0 0
        %4229 = vmatpush1.bf16.msra.mxu0 %v4223
        %4230 = vmatprep.subr.bf16.mxu0 0
        %4231 = vmatpush1.bf16.msra.mxu0 %v4225
        %4232 = vmatprep.subr.bf16.mxu0 0
        %4233 = vmatpush1.bf16.msra.mxu0 0
        %4234 = vmatprep.subr.bf16.mxu0 0
        %4235 = vmatpush1.bf16.msra.mxu0 0
        %4236 = vmatprep.subr.bf16.mxu0 0
        %4237 = vmatpush1.bf16.msra.mxu0 0
        %4238 = vmatprep.subr.bf16.mxu0 0
        %4239 = vmatpush1.bf16.msra.mxu0 0
        %4240 = vmatprep.subr.bf16.mxu0 0
        %4241 = vmatpush1.bf16.msra.mxu0 0
        %4242 = vmatprep.subr.bf16.mxu0 0
        %4243 = vmatpush1.bf16.msra.mxu0 0
        %4244 = vmatprep.subr.bf16.mxu0 0
        %4245 = vmatpush1.bf16.msra.mxu0 0
        %4246 = vmatprep.subr.bf16.mxu0 0
        %4247 = vmatpush1.bf16.msra.mxu0 0
        %4248 = vmatprep.subr.bf16.mxu0 0
        %4249 = vmatpush1.bf16.msra.mxu0 0
        %4250 = vmatprep.subr.bf16.mxu0 0
        %4251 = vmatpush1.bf16.msra.mxu0 0
        %4252 = vmatprep.subr.bf16.mxu0 0
        %4253 = vmatpush1.bf16.msra.mxu0 0
        %4254 = vmatprep.subr.bf16.mxu0 0
        %4255 = vmatpush1.bf16.msra.mxu0 0
        %4256 = vmatprep.subr.bf16.mxu0 0
        %4257 = vmatpush1.bf16.msra.mxu0 0
        %4258 = vmatprep.subr.bf16.mxu0 0
        %4259 = vmatpush1.bf16.msra.mxu0 0
        %4260 = vmatprep.mubr.bf16.mxu0 0
        %4261 = vmatmul.mubr.bf16.gmra.mrb[0].mxu0 %v2740
        %v4262 = vpop.f32.mrb[0].mxu0
        %v4263 = vadd.f32 0.0, %v4262
        %v4264 = vpop.f32.mrb[0].mxu0
        %v4265 = vpop.f32.mrb[0].mxu0
        %v4266 = vadd.f32 0.0, %v4265
        %v4267 = vpop.f32.mrb[0].mxu0
        %4268 = vmatprep.mubr.bf16.mxu0 0
        %4269 = vmatmul.mubr.bf16.gmra.mrb[0].mxu0 %v2743
        %v4270 = vpop.f32.mrb[0].mxu0
        %v4271 = vadd.f32 0.0, %v4270
        %v4272 = vpop.f32.mrb[0].mxu0
        %v4273 = vpop.f32.mrb[0].mxu0
        %v4274 = vadd.f32 0.0, %v4273
        %v4275 = vpop.f32.mrb[0].mxu0
        %4276 = vmatprep.mubr.bf16.mxu0 0
        %4277 = vmatmul.mubr.bf16.gmra.mrb[0].mxu0 %v2746
        %v4278 = vpop.f32.mrb[0].mxu0
        %v4279 = vadd.f32 0.0, %v4278
        %v4280 = vpop.f32.mrb[0].mxu0
        %v4281 = vpop.f32.mrb[0].mxu0
        %v4282 = vadd.f32 0.0, %v4281
        %v4283 = vpop.f32.mrb[0].mxu0
        %4284 = vmatprep.mubr.bf16.mxu0 0
        %4285 = vmatmul.mubr.bf16.gmra.mrb[0].mxu0 %v2749
        %v4286 = vpop.f32.mrb[0].mxu0
        %v4287 = vadd.f32 0.0, %v4286
        %v4288 = vpop.f32.mrb[0].mxu0
        %v4289 = vpop.f32.mrb[0].mxu0
        %v4290 = vadd.f32 0.0, %v4289
        %v4291 = vpop.f32.mrb[0].mxu0
        %4292 = vmatprep.mubr.bf16.mxu0 0
        %4293 = vmatmul.mubr.bf16.gmra.mrb[0].mxu0 %v2752
        %v4294 = vpop.f32.mrb[0].mxu0
        %v4295 = vadd.f32 0.0, %v4294
        %v4296 = vpop.f32.mrb[0].mxu0
        %v4297 = vpop.f32.mrb[0].mxu0
        %v4298 = vadd.f32 0.0, %v4297
        %v4299 = vpop.f32.mrb[0].mxu0
        %4300 = vmatprep.mubr.bf16.mxu0 0
        %4301 = vmatmul.mubr.bf16.gmra.mrb[0].mxu0 %v2755
        %v4302 = vpop.f32.mrb[0].mxu0
        %v4303 = vadd.f32 0.0, %v4302
        %v4304 = vpop.f32.mrb[0].mxu0
        %v4305 = vpop.f32.mrb[0].mxu0
        %v4306 = vadd.f32 0.0, %v4305
        %v4307 = vpop.f32.mrb[0].mxu0
        %4308 = vmatprep.mubr.bf16.mxu0 0
        %4309 = vmatmul.mubr.bf16.gmra.mrb[0].mxu0 %v2758
        %v4310 = vpop.f32.mrb[0].mxu0
        %v4311 = vadd.f32 0.0, %v4310
        %v4312 = vpop.f32.mrb[0].mxu0
        %v4313 = vpop.f32.mrb[0].mxu0
        %v4314 = vadd.f32 0.0, %v4313
        %v4315 = vpop.f32.mrb[0].mxu0
        %4316 = vmatprep.mubr.bf16.mxu0 0
        %4317 = vmatmul.mubr.bf16.gmra.mrb[0].mxu0 %v2761
        %v4318 = vpop.f32.mrb[0].mxu0
        %v4319 = vadd.f32 0.0, %v4318
        %v4320 = vpop.f32.mrb[0].mxu0
        %v4321 = vpop.f32.mrb[0].mxu0
        %v4322 = vadd.f32 0.0, %v4321
        %v4323 = vpop.f32.mrb[0].mxu0
        %4324 = vdwg.mxu0
        %v4325 = vmul.f32 %v4263, %v2860
        %v4326 = vmul.f32 %v4266, %v2861
        %v4327 = vmul.f32 %v4271, %v2862
        %v4328 = vmul.f32 %v4274, %v2863
        %v4329 = vmul.f32 %v4279, %v2864
        %v4330 = vmul.f32 %v4282, %v2865
        %v4331 = vmul.f32 %v4287, %v2866
        %v4332 = vmul.f32 %v4290, %v2867
        %v4333 = vmul.f32 %v4295, %v2868
        %v4334 = vmul.f32 %v4298, %v2869
        %v4335 = vmul.f32 %v4303, %v2870
        %v4336 = vmul.f32 %v4306, %v2871
        %v4337 = vmul.f32 %v4311, %v2872
        %v4338 = vmul.f32 %v4314, %v2873
        %v4339 = vmul.f32 %v4319, %v2874
        %v4340 = vmul.f32 %v4322, %v2875
        %v4341 = vpack.c.bf16 %v4326, %v4325
        %v4342 = vpack.c.bf16 %v4328, %v4327
        %v4343 = vpack.c.bf16 %v4330, %v4329
        %v4344 = vpack.c.bf16 %v4332, %v4331
        %v4345 = vpack.c.bf16 %v4334, %v4333
        %v4346 = vpack.c.bf16 %v4336, %v4335
        %v4347 = vpack.c.bf16 %v4338, %v4337
        %v4348 = vpack.c.bf16 %v4340, %v4339
        %4349 = vrot.lane.b32.xlu0 %v2699, 64
        %v4350 = vpop.permute.xlu0 %4349
        %4351 = vrot.lane.b32.xlu0 %v2700, 64
        %v4352 = vpop.permute.xlu0 %4351
        %4355 = vmatprep.subr.bf16.mxu0 0
        %4356 = vmatpush1.bf16.msra.mxu0 %v4350
        %4357 = vmatprep.subr.bf16.mxu0 0
        %4358 = vmatpush1.bf16.msra.mxu0 %v4352
        %4359 = vmatprep.subr.bf16.mxu0 0
        %4360 = vmatpush1.bf16.msra.mxu0 0
        %4361 = vmatprep.subr.bf16.mxu0 0
        %4362 = vmatpush1.bf16.msra.mxu0 0
        %4363 = vmatprep.subr.bf16.mxu0 0
        %4364 = vmatpush1.bf16.msra.mxu0 0
        %4365 = vmatprep.subr.bf16.mxu0 0
        %4366 = vmatpush1.bf16.msra.mxu0 0
        %4367 = vmatprep.subr.bf16.mxu0 0
        %4368 = vmatpush1.bf16.msra.mxu0 0
        %4369 = vmatprep.subr.bf16.mxu0 0
        %4370 = vmatpush1.bf16.msra.mxu0 0
        %4371 = vmatprep.subr.bf16.mxu0 0
        %4372 = vmatpush1.bf16.msra.mxu0 0
        %4373 = vmatprep.subr.bf16.mxu0 0
        %4374 = vmatpush1.bf16.msra.mxu0 0
        %4375 = vmatprep.subr.bf16.mxu0 0
        %4376 = vmatpush1.bf16.msra.mxu0 0
        %4377 = vmatprep.subr.bf16.mxu0 0
        %4378 = vmatpush1.bf16.msra.mxu0 0
        %4379 = vmatprep.subr.bf16.mxu0 0
        %4380 = vmatpush1.bf16.msra.mxu0 0
        %4381 = vmatprep.subr.bf16.mxu0 0
        %4382 = vmatpush1.bf16.msra.mxu0 0
        %4383 = vmatprep.subr.bf16.mxu0 0
        %4384 = vmatpush1.bf16.msra.mxu0 0
        %4385 = vmatprep.subr.bf16.mxu0 0
        %4386 = vmatpush1.bf16.msra.mxu0 0
        %4387 = vmatprep.mubr.bf16.mxu0 0
        %4388 = vmatmul.mubr.bf16.gmra.mrb[0].mxu0 %v2740
        %v4389 = vpop.f32.mrb[0].mxu0
        %v4390 = vadd.f32 0.0, %v4389
        %v4391 = vpop.f32.mrb[0].mxu0
        %v4392 = vpop.f32.mrb[0].mxu0
        %v4393 = vadd.f32 0.0, %v4392
        %v4394 = vpop.f32.mrb[0].mxu0
        %4395 = vmatprep.mubr.bf16.mxu0 0
        %4396 = vmatmul.mubr.bf16.gmra.mrb[0].mxu0 %v2743
        %v4397 = vpop.f32.mrb[0].mxu0
        %v4398 = vadd.f32 0.0, %v4397
        %v4399 = vpop.f32.mrb[0].mxu0
        %v4400 = vpop.f32.mrb[0].mxu0
        %v4401 = vadd.f32 0.0, %v4400
        %v4402 = vpop.f32.mrb[0].mxu0
        %4403 = vmatprep.mubr.bf16.mxu0 0
        %4404 = vmatmul.mubr.bf16.gmra.mrb[0].mxu0 %v2746
        %v4405 = vpop.f32.mrb[0].mxu0
        %v4406 = vadd.f32 0.0, %v4405
        %v4407 = vpop.f32.mrb[0].mxu0
        %v4408 = vpop.f32.mrb[0].mxu0
        %v4409 = vadd.f32 0.0, %v4408
        %v4410 = vpop.f32.mrb[0].mxu0
        %4411 = vmatprep.mubr.bf16.mxu0 0
        %4412 = vmatmul.mubr.bf16.gmra.mrb[0].mxu0 %v2749
        %v4413 = vpop.f32.mrb[0].mxu0
        %v4414 = vadd.f32 0.0, %v4413
        %v4415 = vpop.f32.mrb[0].mxu0
        %v4416 = vpop.f32.mrb[0].mxu0
        %v4417 = vadd.f32 0.0, %v4416
        %v4418 = vpop.f32.mrb[0].mxu0
        %4419 = vmatprep.mubr.bf16.mxu0 0
        %4420 = vmatmul.mubr.bf16.gmra.mrb[0].mxu0 %v2752
        %v4421 = vpop.f32.mrb[0].mxu0
        %v4422 = vadd.f32 0.0, %v4421
        %v4423 = vpop.f32.mrb[0].mxu0
        %v4424 = vpop.f32.mrb[0].mxu0
        %v4425 = vadd.f32 0.0, %v4424
        %v4426 = vpop.f32.mrb[0].mxu0
        %4427 = vmatprep.mubr.bf16.mxu0 0
        %4428 = vmatmul.mubr.bf16.gmra.mrb[0].mxu0 %v2755
        %v4429 = vpop.f32.mrb[0].mxu0
        %v4430 = vadd.f32 0.0, %v4429
        %v4431 = vpop.f32.mrb[0].mxu0
        %v4432 = vpop.f32.mrb[0].mxu0
        %v4433 = vadd.f32 0.0, %v4432
        %v4434 = vpop.f32.mrb[0].mxu0
        %4435 = vmatprep.mubr.bf16.mxu0 0
        %4436 = vmatmul.mubr.bf16.gmra.mrb[0].mxu0 %v2758
        %v4437 = vpop.f32.mrb[0].mxu0
        %v4438 = vadd.f32 0.0, %v4437
        %v4439 = vpop.f32.mrb[0].mxu0
        %v4440 = vpop.f32.mrb[0].mxu0
        %v4441 = vadd.f32 0.0, %v4440
        %v4442 = vpop.f32.mrb[0].mxu0
        %4443 = vmatprep.mubr.bf16.mxu0 0
        %4444 = vmatmul.mubr.bf16.gmra.mrb[0].mxu0 %v2761
        %v4445 = vpop.f32.mrb[0].mxu0
        %v4446 = vadd.f32 0.0, %v4445
        %v4447 = vpop.f32.mrb[0].mxu0
        %v4448 = vpop.f32.mrb[0].mxu0
        %v4449 = vadd.f32 0.0, %v4448
        %v4450 = vpop.f32.mrb[0].mxu0
        %4451 = vdwg.mxu0
        %v4452 = vmul.f32 %v4390, %v2860
        %v4453 = vmul.f32 %v4393, %v2861
        %v4454 = vmul.f32 %v4398, %v2862
        %v4455 = vmul.f32 %v4401, %v2863
        %v4456 = vmul.f32 %v4406, %v2864
        %v4457 = vmul.f32 %v4409, %v2865
        %v4458 = vmul.f32 %v4414, %v2866
        %v4459 = vmul.f32 %v4417, %v2867
        %v4460 = vmul.f32 %v4422, %v2868
        %v4461 = vmul.f32 %v4425, %v2869
        %v4462 = vmul.f32 %v4430, %v2870
        %v4463 = vmul.f32 %v4433, %v2871
        %v4464 = vmul.f32 %v4438, %v2872
        %v4465 = vmul.f32 %v4441, %v2873
        %v4466 = vmul.f32 %v4446, %v2874
        %v4467 = vmul.f32 %v4449, %v2875
        %v4468 = vpack.c.bf16 %v4453, %v4452
        %v4469 = vpack.c.bf16 %v4455, %v4454
        %v4470 = vpack.c.bf16 %v4457, %v4456
        %v4471 = vpack.c.bf16 %v4459, %v4458
        %v4472 = vpack.c.bf16 %v4461, %v4460
        %v4473 = vpack.c.bf16 %v4463, %v4462
        %v4474 = vpack.c.bf16 %v4465, %v4464
        %v4475 = vpack.c.bf16 %v4467, %v4466
        %v4477 = vsel %vm2277, %v4218, 0
        %v4480 = vsel %vm2277, %v4219, 0
        %v4483 = vsel %vm2277, %v4341, 0
        %v4486 = vsel %vm2277, %v4342, 0
        %v4489 = vsel %vm2277, %v4343, 0
        %v4492 = vsel %vm2277, %v4344, 0
        %v4495 = vsel %vm2277, %v4345, 0
        %v4498 = vsel %vm2277, %v4346, 0
        %v4501 = vsel %vm2277, %v4347, 0
        %v4504 = vsel %vm2277, %v4348, 0
        %4506 = vmatprep.subr.bf16.mxu0 0
        %4507 = vmatpush1.bf16.xpose.msra.mxu0 %v4483
        %4508 = vmatprep.subr.bf16.mxu0 0
        %4509 = vmatpush1.bf16.xpose.msra.mxu0 %v4486
        %4510 = vmatprep.subr.bf16.mxu0 0
        %4511 = vmatpush1.bf16.xpose.msra.mxu0 %v4489
        %4512 = vmatprep.subr.bf16.mxu0 0
        %4513 = vmatpush1.bf16.xpose.msra.mxu0 %v4492
        %4514 = vmatprep.subr.bf16.mxu0 0
        %4515 = vmatpush1.bf16.xpose.msra.mxu0 %v4495
        %4516 = vmatprep.subr.bf16.mxu0 0
        %4517 = vmatpush1.bf16.xpose.msra.mxu0 %v4498
        %4518 = vmatprep.subr.bf16.mxu0 0
        %4519 = vmatpush1.bf16.xpose.msra.mxu0 %v4501
        %4520 = vmatprep.subr.bf16.mxu0 0
        %4521 = vmatpush1.bf16.xpose.msra.mxu0 %v4504
        %4522 = vmatprep.subr.bf16.mxu0 0
        %4523 = vmatpush1.bf16.xpose.msra.mxu0 0
        %4524 = vmatprep.subr.bf16.mxu0 0
        %4525 = vmatpush1.bf16.xpose.msra.mxu0 0
        %4526 = vmatprep.subr.bf16.mxu0 0
        %4527 = vmatpush1.bf16.xpose.msra.mxu0 0
        %4528 = vmatprep.subr.bf16.mxu0 0
        %4529 = vmatpush1.bf16.xpose.msra.mxu0 0
        %4530 = vmatprep.subr.bf16.mxu0 0
        %4531 = vmatpush1.bf16.xpose.msra.mxu0 0
        %4532 = vmatprep.subr.bf16.mxu0 0
        %4533 = vmatpush1.bf16.xpose.msra.mxu0 0
        %4534 = vmatprep.subr.bf16.mxu0 0
        %4535 = vmatpush1.bf16.xpose.msra.mxu0 0
        %4536 = vmatprep.subr.bf16.mxu0 0
        %4537 = vmatpush1.bf16.xpose.msra.mxu0 0
        %4538 = vmatprep.mubr.bf16.mxu0 0
        %4539 = vmatmul.mubr.bf16.gmra.mrb[0].mxu0 %v4477
        %v4540 = vpop.f32.mrb[0].mxu0
        %v4541 = vadd.f32 0.0, %v4540
        %v4542 = vpop.f32.mrb[0].mxu0
        %v4543 = vpop.f32.mrb[0].mxu0
        %v4544 = vadd.f32 0.0, %v4543
        %v4545 = vpop.f32.mrb[0].mxu0
        %4546 = vmatprep.mubr.bf16.mxu0 0
        %4547 = vmatmul.mubr.bf16.gmra.mrb[0].mxu0 %v4480
        %v4548 = vpop.f32.mrb[0].mxu0
        %v4549 = vadd.f32 0.0, %v4548
        %v4550 = vpop.f32.mrb[0].mxu0
        %v4551 = vpop.f32.mrb[0].mxu0
        %v4552 = vadd.f32 0.0, %v4551
        %v4553 = vpop.f32.mrb[0].mxu0
        %4554 = vdwg.mxu0
        %4555 = vmax.xlane.f32.xlu0 %v4541
        %v4556 = vpop.xlane.xlu0 %4555
        %4557 = vmax.xlane.f32.xlu0 %v4544
        %v4558 = vpop.xlane.xlu0 %4557
        %4559 = vmax.xlane.f32.xlu0 %v4549
        %v4560 = vpop.xlane.xlu0 %4559
        %4561 = vmax.xlane.f32.xlu0 %v4552
        %v4562 = vpop.xlane.xlu0 %4561
        %v4563 = vsub.f32 %v4541, %v4556
        %v4564 = vsub.f32 %v4544, %v4558
        %v4565 = vsub.f32 %v4549, %v4560
        %v4566 = vsub.f32 %v4552, %v4562
        %v4567 = vmul.f32 %v4563, 1.442695
        %v4568 = vpow.pop %v4567
        %v4569 = vmul.f32 %v4564, 1.442695
        %v4570 = vpow.pop %v4569
        %v4571 = vmul.f32 %v4565, 1.442695
        %v4572 = vpow.pop %v4571
        %v4573 = vmul.f32 %v4566, 1.442695
        %v4574 = vpow.pop %v4573
        %v4575 = vpack.c.bf16 %v4570, %v4568
        %v4576 = vpack.c.bf16 %v4574, %v4572
        %4577 = vmatprep.subr.bf16.mxu0 0
        %4578 = vmatpush1.bf16.msra.mxu0 %v3160
        %4579 = vmatprep.subr.bf16.mxu0 0
        %4580 = vmatpush1.bf16.msra.mxu0 %v3161
        %4581 = vmatprep.subr.bf16.mxu0 0
        %4582 = vmatpush1.bf16.msra.mxu0 %v3162
        %4583 = vmatprep.subr.bf16.mxu0 0
        %4584 = vmatpush1.bf16.msra.mxu0 %v3163
        %4585 = vmatprep.subr.bf16.mxu0 0
        %4586 = vmatpush1.bf16.msra.mxu0 %v3164
        %4587 = vmatprep.subr.bf16.mxu0 0
        %4588 = vmatpush1.bf16.msra.mxu0 %v3165
        %4589 = vmatprep.subr.bf16.mxu0 0
        %4590 = vmatpush1.bf16.msra.mxu0 %v3166
        %4591 = vmatprep.subr.bf16.mxu0 0
        %4592 = vmatpush1.bf16.msra.mxu0 %v3167
        %4593 = vmatprep.subr.bf16.mxu0 0
        %4594 = vmatpush1.bf16.msra.mxu0 0
        %4595 = vmatprep.subr.bf16.mxu0 0
        %4596 = vmatpush1.bf16.msra.mxu0 0
        %4597 = vmatprep.subr.bf16.mxu0 0
        %4598 = vmatpush1.bf16.msra.mxu0 0
        %4599 = vmatprep.subr.bf16.mxu0 0
        %4600 = vmatpush1.bf16.msra.mxu0 0
        %4601 = vmatprep.subr.bf16.mxu0 0
        %4602 = vmatpush1.bf16.msra.mxu0 0
        %4603 = vmatprep.subr.bf16.mxu0 0
        %4604 = vmatpush1.bf16.msra.mxu0 0
        %4605 = vmatprep.subr.bf16.mxu0 0
        %4606 = vmatpush1.bf16.msra.mxu0 0
        %4607 = vmatprep.subr.bf16.mxu0 0
        %4608 = vmatpush1.bf16.msra.mxu0 0
        %4609 = vmatprep.mubr.bf16.mxu0 0
        %4610 = vmatmul.mubr.bf16.gmra.mrb[0].mxu0 %v4575
        %v4611 = vpop.f32.mrb[0].mxu0
        %v4612 = vadd.f32 0.0, %v4611
        %v4613 = vpop.f32.mrb[0].mxu0
        %v4614 = vpop.f32.mrb[0].mxu0
        %v4615 = vadd.f32 0.0, %v4614
        %v4616 = vpop.f32.mrb[0].mxu0
        %4617 = vmatprep.mubr.bf16.mxu0 0
        %4618 = vmatmul.mubr.bf16.gmra.mrb[0].mxu0 %v4576
        %v4619 = vpop.f32.mrb[0].mxu0
        %v4620 = vadd.f32 0.0, %v4619
        %v4621 = vpop.f32.mrb[0].mxu0
        %v4622 = vpop.f32.mrb[0].mxu0
        %v4623 = vadd.f32 0.0, %v4622
        %v4624 = vpop.f32.mrb[0].mxu0
        %4625 = vdwg.mxu0
        %v4626 = vrcp.pop %v4612
        %v4627 = vrcp.pop %v4615
        %v4628 = vrcp.pop %v4620
        %v4629 = vrcp.pop %v4623
        %v4630 = vmul.f32 %v4568, %v4626
        %v4631 = vmul.f32 %v4570, %v4627
        %v4632 = vmul.f32 %v4572, %v4628
        %v4633 = vmul.f32 %v4574, %v4629
        %v4634 = vpack.c.bf16 %v4631, %v4630
        %v4635 = vpack.c.bf16 %v4633, %v4632
        %4636 = vmatprep.subr.bf16.mxu0 0
        %4637 = vmatpush1.bf16.msra.mxu0 %v4468
        %4638 = vmatprep.subr.bf16.mxu0 0
        %4639 = vmatpush1.bf16.msra.mxu0 %v4469
        %4640 = vmatprep.subr.bf16.mxu0 0
        %4641 = vmatpush1.bf16.msra.mxu0 %v4470
        %4642 = vmatprep.subr.bf16.mxu0 0
        %4643 = vmatpush1.bf16.msra.mxu0 %v4471
        %4644 = vmatprep.subr.bf16.mxu0 0
        %4645 = vmatpush1.bf16.msra.mxu0 %v4472
        %4646 = vmatprep.subr.bf16.mxu0 0
        %4647 = vmatpush1.bf16.msra.mxu0 %v4473
        %4648 = vmatprep.subr.bf16.mxu0 0
        %4649 = vmatpush1.bf16.msra.mxu0 %v4474
        %4650 = vmatprep.subr.bf16.mxu0 0
        %4651 = vmatpush1.bf16.msra.mxu0 %v4475
        %4652 = vmatprep.subr.bf16.mxu0 0
        %4653 = vmatpush1.bf16.msra.mxu0 0
        %4654 = vmatprep.subr.bf16.mxu0 0
        %4655 = vmatpush1.bf16.msra.mxu0 0
        %4656 = vmatprep.subr.bf16.mxu0 0
        %4657 = vmatpush1.bf16.msra.mxu0 0
        %4658 = vmatprep.subr.bf16.mxu0 0
        %4659 = vmatpush1.bf16.msra.mxu0 0
        %4660 = vmatprep.subr.bf16.mxu0 0
        %4661 = vmatpush1.bf16.msra.mxu0 0
        %4662 = vmatprep.subr.bf16.mxu0 0
        %4663 = vmatpush1.bf16.msra.mxu0 0
        %4664 = vmatprep.subr.bf16.mxu0 0
        %4665 = vmatpush1.bf16.msra.mxu0 0
        %4666 = vmatprep.subr.bf16.mxu0 0
        %4667 = vmatpush1.bf16.msra.mxu0 0
        %4668 = vmatprep.mubr.bf16.mxu0 0
        %4669 = vmatmul.mubr.bf16.gmra.mrb[0].mxu0 %v4634
        %v4670 = vpop.f32.mrb[0].mxu0
        %v4671 = vadd.f32 0.0, %v4670
        %v4672 = vpop.f32.mrb[0].mxu0
        %v4673 = vpop.f32.mrb[0].mxu0
        %v4674 = vadd.f32 0.0, %v4673
        %v4675 = vpop.f32.mrb[0].mxu0
        %4676 = vmatprep.mubr.bf16.mxu0 0
        %4677 = vmatmul.mubr.bf16.gmra.mrb[0].mxu0 %v4635
        %v4678 = vpop.f32.mrb[0].mxu0
        %v4679 = vadd.f32 0.0, %v4678
        %v4680 = vpop.f32.mrb[0].mxu0
        %v4681 = vpop.f32.mrb[0].mxu0
        %v4682 = vadd.f32 0.0, %v4681
        %v4683 = vpop.f32.mrb[0].mxu0
        %4684 = vdwg.mxu0
        %v4685 = vpack.c.bf16 %v3273, %v3270
        %v4686 = vpack.c.bf16 %v3281, %v3278
        %v4687 = vpack.c.bf16 %v3740, %v3737
        %v4688 = vpack.c.bf16 %v3748, %v3745
        %v4689 = vpack.c.bf16 %v4207, %v4204
        %v4690 = vpack.c.bf16 %v4215, %v4212
        %v4691 = vpack.c.bf16 %v4674, %v4671
        %v4692 = vpack.c.bf16 %v4682, %v4679
        %v4693 = vld [vmem:[%s5] sm:$0xf]
        %v4694 = vld [vmem:[%s5 + $0x4] sm:$0xf]
        %v4695 = vld [vmem:[%s5 + $0x8] sm:$0xf]
        %v4696 = vld [vmem:[%s5 + $0xc] sm:$0xf]
        %v4697 = vlaneseq
        %v4698 = vshrl.u32 %v4697, 7
        %v4699 = vsub.s32 1, %v4698
        %v4700 = vrot.slane %v2527, %v4699
        %v4705 = vunpack.c.l.b16 %v4693
        %v4706 = vunpack.c.l.b16 %v4694
        %v4707 = vunpack.c.l.b16 %v4695
        %v4708 = vunpack.c.l.b16 %v4696
        %v4709 = vpack.c.b16 %v4706, %v4705
        %v4710 = vpack.c.b16 %v4708, %v4707
        %v4714 = vsel %vm2277, %v4685, 0
        %v4717 = vsel %vm2277, %v4686, 0
        %v4720 = vsel %vm2277, %v4687, 0
        %v4723 = vsel %vm2277, %v4688, 0
        %v4726 = vsel %vm2277, %v4689, 0
        %v4729 = vsel %vm2277, %v4690, 0
        %v4732 = vsel %vm2277, %v4691, 0
        %v4735 = vsel %vm2277, %v4692, 0
        %4737 = vmatprep.subr.bf16.mxu0 0
        %4738 = vmatpush1.bf16.msra.mxu0 %v4709
        %4739 = vmatprep.subr.bf16.mxu0 0
        %4740 = vmatpush1.bf16.msra.mxu0 %v4710
        %4741 = vmatprep.subr.bf16.mxu0 0
        %4742 = vmatpush1.bf16.msra.mxu0 0
        %4743 = vmatprep.subr.bf16.mxu0 0
        %4744 = vmatpush1.bf16.msra.mxu0 0
        %4745 = vmatprep.subr.bf16.mxu0 0
        %4746 = vmatpush1.bf16.msra.mxu0 0
        %4747 = vmatprep.subr.bf16.mxu0 0
        %4748 = vmatpush1.bf16.msra.mxu0 0
        %4749 = vmatprep.subr.bf16.mxu0 0
        %4750 = vmatpush1.bf16.msra.mxu0 0
        %4751 = vmatprep.subr.bf16.mxu0 0
        %4752 = vmatpush1.bf16.msra.mxu0 0
        %4753 = vmatprep.subr.bf16.mxu0 0
        %4754 = vmatpush1.bf16.msra.mxu0 0
        %4755 = vmatprep.subr.bf16.mxu0 0
        %4756 = vmatpush1.bf16.msra.mxu0 0
        %4757 = vmatprep.subr.bf16.mxu0 0
        %4758 = vmatpush1.bf16.msra.mxu0 0
        %4759 = vmatprep.subr.bf16.mxu0 0
        %4760 = vmatpush1.bf16.msra.mxu0 0
        %4761 = vmatprep.subr.bf16.mxu0 0
        %4762 = vmatpush1.bf16.msra.mxu0 0
        %4763 = vmatprep.subr.bf16.mxu0 0
        %4764 = vmatpush1.bf16.msra.mxu0 0
        %4765 = vmatprep.subr.bf16.mxu0 0
        %4766 = vmatpush1.bf16.msra.mxu0 0
        %4767 = vmatprep.subr.bf16.mxu0 0
        %4768 = vmatpush1.bf16.msra.mxu0 0
        %4769 = vmatprep.mubr.bf16.mxu0 0
        %4770 = vmatmul.mubr.bf16.gmra.mrb[0].mxu0 %v4714
        %v4771 = vpop.f32.mrb[0].mxu0
        %v4772 = vadd.f32 %v4700, %v4771
        %v4773 = vpop.f32.mrb[0].mxu0
        %v4774 = vpop.f32.mrb[0].mxu0
        %v4775 = vadd.f32 %v4700, %v4774
        %v4776 = vpop.f32.mrb[0].mxu0
        %4777 = vmatprep.mubr.bf16.mxu0 0
        %4778 = vmatmul.mubr.bf16.gmra.mrb[0].mxu0 %v4717
        %v4779 = vpop.f32.mrb[0].mxu0
        %v4780 = vadd.f32 %v4700, %v4779
        %v4781 = vpop.f32.mrb[0].mxu0
        %v4782 = vpop.f32.mrb[0].mxu0
        %v4783 = vadd.f32 %v4700, %v4782
        %v4784 = vpop.f32.mrb[0].mxu0
        %4785 = vmatprep.mubr.bf16.mxu0 0
        %4786 = vmatmul.mubr.bf16.gmra.mrb[0].mxu0 %v4720
        %v4787 = vpop.f32.mrb[0].mxu0
        %v4788 = vadd.f32 %v4700, %v4787
        %v4789 = vpop.f32.mrb[0].mxu0
        %v4790 = vpop.f32.mrb[0].mxu0
        %v4791 = vadd.f32 %v4700, %v4790
        %v4792 = vpop.f32.mrb[0].mxu0
        %4793 = vmatprep.mubr.bf16.mxu0 0
        %4794 = vmatmul.mubr.bf16.gmra.mrb[0].mxu0 %v4723
        %v4795 = vpop.f32.mrb[0].mxu0
        %v4796 = vadd.f32 %v4700, %v4795
        %v4797 = vpop.f32.mrb[0].mxu0
        %v4798 = vpop.f32.mrb[0].mxu0
        %v4799 = vadd.f32 %v4700, %v4798
        %v4800 = vpop.f32.mrb[0].mxu0
        %4801 = vmatprep.mubr.bf16.mxu0 0
        %4802 = vmatmul.mubr.bf16.gmra.mrb[0].mxu0 %v4726
        %v4803 = vpop.f32.mrb[0].mxu0
        %v4804 = vadd.f32 %v4700, %v4803
        %v4805 = vpop.f32.mrb[0].mxu0
        %v4806 = vpop.f32.mrb[0].mxu0
        %v4807 = vadd.f32 %v4700, %v4806
        %v4808 = vpop.f32.mrb[0].mxu0
        %4809 = vmatprep.mubr.bf16.mxu0 0
        %4810 = vmatmul.mubr.bf16.gmra.mrb[0].mxu0 %v4729
        %v4811 = vpop.f32.mrb[0].mxu0
        %v4812 = vadd.f32 %v4700, %v4811
        %v4813 = vpop.f32.mrb[0].mxu0
        %v4814 = vpop.f32.mrb[0].mxu0
        %v4815 = vadd.f32 %v4700, %v4814
        %v4816 = vpop.f32.mrb[0].mxu0
        %4817 = vmatprep.mubr.bf16.mxu0 0
        %4818 = vmatmul.mubr.bf16.gmra.mrb[0].mxu0 %v4732
        %v4819 = vpop.f32.mrb[0].mxu0
        %v4820 = vadd.f32 %v4700, %v4819
        %v4821 = vpop.f32.mrb[0].mxu0
        %v4822 = vpop.f32.mrb[0].mxu0
        %v4823 = vadd.f32 %v4700, %v4822
        %v4824 = vpop.f32.mrb[0].mxu0
        %4825 = vmatprep.mubr.bf16.mxu0 0
        %4826 = vmatmul.mubr.bf16.gmra.mrb[0].mxu0 %v4735
        %v4827 = vpop.f32.mrb[0].mxu0
        %v4828 = vadd.f32 %v4700, %v4827
        %v4829 = vpop.f32.mrb[0].mxu0
        %v4830 = vpop.f32.mrb[0].mxu0
        %v4831 = vadd.f32 %v4700, %v4830
        %v4832 = vpop.f32.mrb[0].mxu0
        %4833 = vdwg.mxu0
        %v4834 = vadd.f32 %v2511, %v4772
        %v4835 = vadd.f32 %v2512, %v4775
        %v4836 = vadd.f32 %v2513, %v4780
        %v4837 = vadd.f32 %v2514, %v4783
        %v4838 = vadd.f32 %v2515, %v4788
        %v4839 = vadd.f32 %v2516, %v4791
        %v4840 = vadd.f32 %v2517, %v4796
        %v4841 = vadd.f32 %v2518, %v4799
        %v4842 = vadd.f32 %v2519, %v4804
        %v4843 = vadd.f32 %v2520, %v4807
        %v4844 = vadd.f32 %v2521, %v4812
        %v4845 = vadd.f32 %v2522, %v4815
        %v4846 = vadd.f32 %v2523, %v4820
        %v4847 = vadd.f32 %v2524, %v4823
        %v4848 = vadd.f32 %v2525, %v4828
        %v4849 = vadd.f32 %v2526, %v4831
        %v4850 = vsel %vm2277, %v4834, 0.0
        %4851 = vadd.xlane.f32.xlu0 %v4850
        %v4852 = vpop.xlane.xlu0 %4851
        %v4853 = vsel %vm2277, %v4835, 0.0
        %4854 = vadd.xlane.f32.xlu0 %v4853
        %v4855 = vpop.xlane.xlu0 %4854
        %v4856 = vsel %vm2277, %v4836, 0.0
        %4857 = vadd.xlane.f32.xlu0 %v4856
        %v4858 = vpop.xlane.xlu0 %4857
        %v4859 = vsel %vm2277, %v4837, 0.0
        %4860 = vadd.xlane.f32.xlu0 %v4859
        %v4861 = vpop.xlane.xlu0 %4860
        %v4862 = vsel %vm2277, %v4838, 0.0
        %4863 = vadd.xlane.f32.xlu0 %v4862
        %v4864 = vpop.xlane.xlu0 %4863
        %v4865 = vsel %vm2277, %v4839, 0.0
        %4866 = vadd.xlane.f32.xlu0 %v4865
        %v4867 = vpop.xlane.xlu0 %4866
        %v4868 = vsel %vm2277, %v4840, 0.0
        %4869 = vadd.xlane.f32.xlu0 %v4868
        %v4870 = vpop.xlane.xlu0 %4869
        %v4871 = vsel %vm2277, %v4841, 0.0
        %4872 = vadd.xlane.f32.xlu0 %v4871
        %v4873 = vpop.xlane.xlu0 %4872
        %v4874 = vsel %vm2277, %v4842, 0.0
        %4875 = vadd.xlane.f32.xlu0 %v4874
        %v4876 = vpop.xlane.xlu0 %4875
        %v4877 = vsel %vm2277, %v4843, 0.0
        %4878 = vadd.xlane.f32.xlu0 %v4877
        %v4879 = vpop.xlane.xlu0 %4878
        %v4880 = vsel %vm2277, %v4844, 0.0
        %4881 = vadd.xlane.f32.xlu0 %v4880
        %v4882 = vpop.xlane.xlu0 %4881
        %v4883 = vsel %vm2277, %v4845, 0.0
        %4884 = vadd.xlane.f32.xlu0 %v4883
        %v4885 = vpop.xlane.xlu0 %4884
        %v4886 = vsel %vm2277, %v4846, 0.0
        %4887 = vadd.xlane.f32.xlu0 %v4886
        %v4888 = vpop.xlane.xlu0 %4887
        %v4889 = vsel %vm2277, %v4847, 0.0
        %4890 = vadd.xlane.f32.xlu0 %v4889
        %v4891 = vpop.xlane.xlu0 %4890
        %v4892 = vsel %vm2277, %v4848, 0.0
        %4893 = vadd.xlane.f32.xlu0 %v4892
        %v4894 = vpop.xlane.xlu0 %4893
        %v4895 = vsel %vm2277, %v4849, 0.0
        %4896 = vadd.xlane.f32.xlu0 %v4895
        %v4897 = vpop.xlane.xlu0 %4896
        %v4898 = vmul.f32 %v4852, %v2326
        %v4899 = vmul.f32 %v4855, %v2326
        %v4900 = vmul.f32 %v4858, %v2326
        %v4901 = vmul.f32 %v4861, %v2326
        %v4902 = vmul.f32 %v4864, %v2326
        %v4903 = vmul.f32 %v4867, %v2326
        %v4904 = vmul.f32 %v4870, %v2326
        %v4905 = vmul.f32 %v4873, %v2326
        %v4906 = vmul.f32 %v4876, %v2326
        %v4907 = vmul.f32 %v4879, %v2326
        %v4908 = vmul.f32 %v4882, %v2326
        %v4909 = vmul.f32 %v4885, %v2326
        %v4910 = vmul.f32 %v4888, %v2326
        %v4911 = vmul.f32 %v4891, %v2326
        %v4912 = vmul.f32 %v4894, %v2326
        %v4913 = vmul.f32 %v4897, %v2326
        %v4914 = vsub.f32 %v4834, %v4898
        %v4915 = vsub.f32 %v4835, %v4899
        %v4916 = vsub.f32 %v4836, %v4900
        %v4917 = vsub.f32 %v4837, %v4901
        %v4918 = vsub.f32 %v4838, %v4902
        %v4919 = vsub.f32 %v4839, %v4903
        %v4920 = vsub.f32 %v4840, %v4904
        %v4921 = vsub.f32 %v4841, %v4905
        %v4922 = vsub.f32 %v4842, %v4906
        %v4923 = vsub.f32 %v4843, %v4907
        %v4924 = vsub.f32 %v4844, %v4908
        %v4925 = vsub.f32 %v4845, %v4909
        %v4926 = vsub.f32 %v4846, %v4910
        %v4927 = vsub.f32 %v4847, %v4911
        %v4928 = vsub.f32 %v4848, %v4912
        %v4929 = vsub.f32 %v4849, %v4913
        %v4930 = vmul.f32 %v4914, %v4914
        %v4931 = vmul.f32 %v4915, %v4915
        %v4932 = vmul.f32 %v4916, %v4916
        %v4933 = vmul.f32 %v4917, %v4917
        %v4934 = vmul.f32 %v4918, %v4918
        %v4935 = vmul.f32 %v4919, %v4919
        %v4936 = vmul.f32 %v4920, %v4920
        %v4937 = vmul.f32 %v4921, %v4921
        %v4938 = vmul.f32 %v4922, %v4922
        %v4939 = vmul.f32 %v4923, %v4923
        %v4940 = vmul.f32 %v4924, %v4924
        %v4941 = vmul.f32 %v4925, %v4925
        %v4942 = vmul.f32 %v4926, %v4926
        %v4943 = vmul.f32 %v4927, %v4927
        %v4944 = vmul.f32 %v4928, %v4928
        %v4945 = vmul.f32 %v4929, %v4929
        %v4946 = vsel %vm2277, %v4930, 0.0
        %4947 = vadd.xlane.f32.xlu0 %v4946
        %v4948 = vpop.xlane.xlu0 %4947
        %v4949 = vsel %vm2277, %v4931, 0.0
        %4950 = vadd.xlane.f32.xlu0 %v4949
        %v4951 = vpop.xlane.xlu0 %4950
        %v4952 = vsel %vm2277, %v4932, 0.0
        %4953 = vadd.xlane.f32.xlu0 %v4952
        %v4954 = vpop.xlane.xlu0 %4953
        %v4955 = vsel %vm2277, %v4933, 0.0
        %4956 = vadd.xlane.f32.xlu0 %v4955
        %v4957 = vpop.xlane.xlu0 %4956
        %v4958 = vsel %vm2277, %v4934, 0.0
        %4959 = vadd.xlane.f32.xlu0 %v4958
        %v4960 = vpop.xlane.xlu0 %4959
        %v4961 = vsel %vm2277, %v4935, 0.0
        %4962 = vadd.xlane.f32.xlu0 %v4961
        %v4963 = vpop.xlane.xlu0 %4962
        %v4964 = vsel %vm2277, %v4936, 0.0
        %4965 = vadd.xlane.f32.xlu0 %v4964
        %v4966 = vpop.xlane.xlu0 %4965
        %v4967 = vsel %vm2277, %v4937, 0.0
        %4968 = vadd.xlane.f32.xlu0 %v4967
        %v4969 = vpop.xlane.xlu0 %4968
        %v4970 = vsel %vm2277, %v4938, 0.0
        %4971 = vadd.xlane.f32.xlu0 %v4970
        %v4972 = vpop.xlane.xlu0 %4971
        %v4973 = vsel %vm2277, %v4939, 0.0
        %4974 = vadd.xlane.f32.xlu0 %v4973
        %v4975 = vpop.xlane.xlu0 %4974
        %v4976 = vsel %vm2277, %v4940, 0.0
        %4977 = vadd.xlane.f32.xlu0 %v4976
        %v4978 = vpop.xlane.xlu0 %4977
        %v4979 = vsel %vm2277, %v4941, 0.0
        %4980 = vadd.xlane.f32.xlu0 %v4979
        %v4981 = vpop.xlane.xlu0 %4980
        %v4982 = vsel %vm2277, %v4942, 0.0
        %4983 = vadd.xlane.f32.xlu0 %v4982
        %v4984 = vpop.xlane.xlu0 %4983
        %v4985 = vsel %vm2277, %v4943, 0.0
        %4986 = vadd.xlane.f32.xlu0 %v4985
        %v4987 = vpop.xlane.xlu0 %4986
        %v4988 = vsel %vm2277, %v4944, 0.0
        %4989 = vadd.xlane.f32.xlu0 %v4988
        %v4990 = vpop.xlane.xlu0 %4989
        %v4991 = vsel %vm2277, %v4945, 0.0
        %4992 = vadd.xlane.f32.xlu0 %v4991
        %v4993 = vpop.xlane.xlu0 %4992
        %v4994 = vmul.f32 %v4948, %v2326
        %v4995 = vmul.f32 %v4951, %v2326
        %v4996 = vmul.f32 %v4954, %v2326
        %v4997 = vmul.f32 %v4957, %v2326
        %v4998 = vmul.f32 %v4960, %v2326
        %v4999 = vmul.f32 %v4963, %v2326
        %v5000 = vmul.f32 %v4966, %v2326
        %v5001 = vmul.f32 %v4969, %v2326
        %v5002 = vmul.f32 %v4972, %v2326
        %v5003 = vmul.f32 %v4975, %v2326
        %v5004 = vmul.f32 %v4978, %v2326
        %v5005 = vmul.f32 %v4981, %v2326
        %v5006 = vmul.f32 %v4984, %v2326
        %v5007 = vmul.f32 %v4987, %v2326
        %v5008 = vmul.f32 %v4990, %v2326
        %v5009 = vmul.f32 %v4993, %v2326
        %v5010 = vadd.f32 %v4994, 1e-05
        %v5011 = vadd.f32 %v4995, 1e-05
        %v5012 = vadd.f32 %v4996, 1e-05
        %v5013 = vadd.f32 %v4997, 1e-05
        %v5014 = vadd.f32 %v4998, 1e-05
        %v5015 = vadd.f32 %v4999, 1e-05
        %v5016 = vadd.f32 %v5000, 1e-05
        %v5017 = vadd.f32 %v5001, 1e-05
        %v5018 = vadd.f32 %v5002, 1e-05
        %v5019 = vadd.f32 %v5003, 1e-05
        %v5020 = vadd.f32 %v5004, 1e-05
        %v5021 = vadd.f32 %v5005, 1e-05
        %v5022 = vadd.f32 %v5006, 1e-05
        %v5023 = vadd.f32 %v5007, 1e-05
        %v5024 = vadd.f32 %v5008, 1e-05
        %v5025 = vadd.f32 %v5009, 1e-05
        %v5026 = vrsqrt.pop %v5010
        %v5027 = vrsqrt.pop %v5011
        %v5028 = vrsqrt.pop %v5012
        %v5029 = vrsqrt.pop %v5013
        %v5030 = vrsqrt.pop %v5014
        %v5031 = vrsqrt.pop %v5015
        %v5032 = vrsqrt.pop %v5016
        %v5033 = vrsqrt.pop %v5017
        %v5034 = vrsqrt.pop %v5018
        %v5035 = vrsqrt.pop %v5019
        %v5036 = vrsqrt.pop %v5020
        %v5037 = vrsqrt.pop %v5021
        %v5038 = vrsqrt.pop %v5022
        %v5039 = vrsqrt.pop %v5023
        %v5040 = vrsqrt.pop %v5024
        %v5041 = vrsqrt.pop %v5025
        %v5042 = vmul.f32 %v4914, %v5026
        %v5043 = vmul.f32 %v4915, %v5027
        %v5044 = vmul.f32 %v4916, %v5028
        %v5045 = vmul.f32 %v4917, %v5029
        %v5046 = vmul.f32 %v4918, %v5030
        %v5047 = vmul.f32 %v4919, %v5031
        %v5048 = vmul.f32 %v4920, %v5032
        %v5049 = vmul.f32 %v4921, %v5033
        %v5050 = vmul.f32 %v4922, %v5034
        %v5051 = vmul.f32 %v4923, %v5035
        %v5052 = vmul.f32 %v4924, %v5036
        %v5053 = vmul.f32 %v4925, %v5037
        %v5054 = vmul.f32 %v4926, %v5038
        %v5055 = vmul.f32 %v4927, %v5039
        %v5056 = vmul.f32 %v4928, %v5040
        %v5057 = vmul.f32 %v4929, %v5041
        %v5058 = vlaneseq
        %v5059 = vshrl.u32 %v5058, 7
        %v5060 = vsub.s32 2, %v5059
        %v5061 = vrot.slane %v2527, %v5060
        %v5062 = vmul.f32 %v5042, %v5061
        %v5063 = vmul.f32 %v5043, %v5061
        %v5064 = vmul.f32 %v5044, %v5061
        %v5065 = vmul.f32 %v5045, %v5061
        %v5066 = vmul.f32 %v5046, %v5061
        %v5067 = vmul.f32 %v5047, %v5061
        %v5068 = vmul.f32 %v5048, %v5061
        %v5069 = vmul.f32 %v5049, %v5061
        %v5070 = vmul.f32 %v5050, %v5061
        %v5071 = vmul.f32 %v5051, %v5061
        %v5072 = vmul.f32 %v5052, %v5061
        %v5073 = vmul.f32 %v5053, %v5061
        %v5074 = vmul.f32 %v5054, %v5061
        %v5075 = vmul.f32 %v5055, %v5061
        %v5076 = vmul.f32 %v5056, %v5061
        %v5077 = vmul.f32 %v5057, %v5061
        %v5078 = vlaneseq
        %v5079 = vshrl.u32 %v5078, 7
        %v5080 = vsub.s32 3, %v5079
        %v5081 = vrot.slane %v2527, %v5080
        %v5082 = vadd.f32 %v5062, %v5081
        %v5083 = vadd.f32 %v5063, %v5081
        %v5084 = vadd.f32 %v5064, %v5081
        %v5085 = vadd.f32 %v5065, %v5081
        %v5086 = vadd.f32 %v5066, %v5081
        %v5087 = vadd.f32 %v5067, %v5081
        %v5088 = vadd.f32 %v5068, %v5081
        %v5089 = vadd.f32 %v5069, %v5081
        %v5090 = vadd.f32 %v5070, %v5081
        %v5091 = vadd.f32 %v5071, %v5081
        %v5092 = vadd.f32 %v5072, %v5081
        %v5093 = vadd.f32 %v5073, %v5081
        %v5094 = vadd.f32 %v5074, %v5081
        %v5095 = vadd.f32 %v5075, %v5081
        %v5096 = vadd.f32 %v5076, %v5081
        %v5097 = vadd.f32 %v5077, %v5081
        %v5098 = vpack.c.bf16 %v5083, %v5082
        %v5099 = vpack.c.bf16 %v5085, %v5084
        %v5100 = vpack.c.bf16 %v5087, %v5086
        %v5101 = vpack.c.bf16 %v5089, %v5088
        %v5102 = vpack.c.bf16 %v5091, %v5090
        %v5103 = vpack.c.bf16 %v5093, %v5092
        %v5104 = vpack.c.bf16 %v5095, %v5094
        %v5105 = vpack.c.bf16 %v5097, %v5096
        %v5106 = vld [vmem:[%s6] sm:$0xf]
        %v5107 = vld [vmem:[%s6 + $0x4] sm:$0xf]
        %v5108 = vld [vmem:[%s6 + $0x8] sm:$0xf]
        %v5109 = vld [vmem:[%s6 + $0xc] sm:$0xf]
        %v5110 = vlaneseq
        %v5111 = vshrl.u32 %v5110, 7
        %v5112 = vsub.s32 4, %v5111
        %v5113 = vrot.slane %v2527, %v5112
        %v5118 = vunpack.c.l.b16 %v5106
        %v5119 = vunpack.c.l.b16 %v5107
        %v5120 = vunpack.c.l.b16 %v5108
        %v5121 = vunpack.c.l.b16 %v5109
        %v5122 = vpack.c.b16 %v5119, %v5118
        %v5123 = vpack.c.b16 %v5121, %v5120
        %v5127 = vsel %vm2277, %v5098, 0
        %v5130 = vsel %vm2277, %v5099, 0
        %v5133 = vsel %vm2277, %v5100, 0
        %v5136 = vsel %vm2277, %v5101, 0
        %v5139 = vsel %vm2277, %v5102, 0
        %v5142 = vsel %vm2277, %v5103, 0
        %v5145 = vsel %vm2277, %v5104, 0
        %v5148 = vsel %vm2277, %v5105, 0
        %5150 = vmatprep.subr.bf16.mxu0 0
        %5151 = vmatpush1.bf16.msra.mxu0 %v5122
        %5152 = vmatprep.subr.bf16.mxu0 0
        %5153 = vmatpush1.bf16.msra.mxu0 %v5123
        %5154 = vmatprep.subr.bf16.mxu0 0
        %5155 = vmatpush1.bf16.msra.mxu0 0
        %5156 = vmatprep.subr.bf16.mxu0 0
        %5157 = vmatpush1.bf16.msra.mxu0 0
        %5158 = vmatprep.subr.bf16.mxu0 0
        %5159 = vmatpush1.bf16.msra.mxu0 0
        %5160 = vmatprep.subr.bf16.mxu0 0
        %5161 = vmatpush1.bf16.msra.mxu0 0
        %5162 = vmatprep.subr.bf16.mxu0 0
        %5163 = vmatpush1.bf16.msra.mxu0 0
        %5164 = vmatprep.subr.bf16.mxu0 0
        %5165 = vmatpush1.bf16.msra.mxu0 0
        %5166 = vmatprep.subr.bf16.mxu0 0
        %5167 = vmatpush1.bf16.msra.mxu0 0
        %5168 = vmatprep.subr.bf16.mxu0 0
        %5169 = vmatpush1.bf16.msra.mxu0 0
        %5170 = vmatprep.subr.bf16.mxu0 0
        %5171 = vmatpush1.bf16.msra.mxu0 0
        %5172 = vmatprep.subr.bf16.mxu0 0
        %5173 = vmatpush1.bf16.msra.mxu0 0
        %5174 = vmatprep.subr.bf16.mxu0 0
        %5175 = vmatpush1.bf16.msra.mxu0 0
        %5176 = vmatprep.subr.bf16.mxu0 0
        %5177 = vmatpush1.bf16.msra.mxu0 0
        %5178 = vmatprep.subr.bf16.mxu0 0
        %5179 = vmatpush1.bf16.msra.mxu0 0
        %5180 = vmatprep.subr.bf16.mxu0 0
        %5181 = vmatpush1.bf16.msra.mxu0 0
        %5182 = vmatprep.mubr.bf16.mxu0 0
        %5183 = vmatmul.mubr.bf16.gmra.mrb[0].mxu0 %v5127
        %v5184 = vpop.f32.mrb[0].mxu0
        %v5185 = vadd.f32 %v5113, %v5184
        %v5186 = vpop.f32.mrb[0].mxu0
        %v5187 = vpop.f32.mrb[0].mxu0
        %v5188 = vadd.f32 %v5113, %v5187
        %v5189 = vpop.f32.mrb[0].mxu0
        %5190 = vmatprep.mubr.bf16.mxu0 0
        %5191 = vmatmul.mubr.bf16.gmra.mrb[0].mxu0 %v5130
        %v5192 = vpop.f32.mrb[0].mxu0
        %v5193 = vadd.f32 %v5113, %v5192
        %v5194 = vpop.f32.mrb[0].mxu0
        %v5195 = vpop.f32.mrb[0].mxu0
        %v5196 = vadd.f32 %v5113, %v5195
        %v5197 = vpop.f32.mrb[0].mxu0
        %5198 = vmatprep.mubr.bf16.mxu0 0
        %5199 = vmatmul.mubr.bf16.gmra.mrb[0].mxu0 %v5133
        %v5200 = vpop.f32.mrb[0].mxu0
        %v5201 = vadd.f32 %v5113, %v5200
        %v5202 = vpop.f32.mrb[0].mxu0
        %v5203 = vpop.f32.mrb[0].mxu0
        %v5204 = vadd.f32 %v5113, %v5203
        %v5205 = vpop.f32.mrb[0].mxu0
        %5206 = vmatprep.mubr.bf16.mxu0 0
        %5207 = vmatmul.mubr.bf16.gmra.mrb[0].mxu0 %v5136
        %v5208 = vpop.f32.mrb[0].mxu0
        %v5209 = vadd.f32 %v5113, %v5208
        %v5210 = vpop.f32.mrb[0].mxu0
        %v5211 = vpop.f32.mrb[0].mxu0
        %v5212 = vadd.f32 %v5113, %v5211
        %v5213 = vpop.f32.mrb[0].mxu0
        %5214 = vmatprep.mubr.bf16.mxu0 0
        %5215 = vmatmul.mubr.bf16.gmra.mrb[0].mxu0 %v5139
        %v5216 = vpop.f32.mrb[0].mxu0
        %v5217 = vadd.f32 %v5113, %v5216
        %v5218 = vpop.f32.mrb[0].mxu0
        %v5219 = vpop.f32.mrb[0].mxu0
        %v5220 = vadd.f32 %v5113, %v5219
        %v5221 = vpop.f32.mrb[0].mxu0
        %5222 = vmatprep.mubr.bf16.mxu0 0
        %5223 = vmatmul.mubr.bf16.gmra.mrb[0].mxu0 %v5142
        %v5224 = vpop.f32.mrb[0].mxu0
        %v5225 = vadd.f32 %v5113, %v5224
        %v5226 = vpop.f32.mrb[0].mxu0
        %v5227 = vpop.f32.mrb[0].mxu0
        %v5228 = vadd.f32 %v5113, %v5227
        %v5229 = vpop.f32.mrb[0].mxu0
        %5230 = vmatprep.mubr.bf16.mxu0 0
        %5231 = vmatmul.mubr.bf16.gmra.mrb[0].mxu0 %v5145
        %v5232 = vpop.f32.mrb[0].mxu0
        %v5233 = vadd.f32 %v5113, %v5232
        %v5234 = vpop.f32.mrb[0].mxu0
        %v5235 = vpop.f32.mrb[0].mxu0
        %v5236 = vadd.f32 %v5113, %v5235
        %v5237 = vpop.f32.mrb[0].mxu0
        %5238 = vmatprep.mubr.bf16.mxu0 0
        %5239 = vmatmul.mubr.bf16.gmra.mrb[0].mxu0 %v5148
        %v5240 = vpop.f32.mrb[0].mxu0
        %v5241 = vadd.f32 %v5113, %v5240
        %v5242 = vpop.f32.mrb[0].mxu0
        %v5243 = vpop.f32.mrb[0].mxu0
        %v5244 = vadd.f32 %v5113, %v5243
        %v5245 = vpop.f32.mrb[0].mxu0
        %5246 = vdwg.mxu0
        %v5247 = vmul.f32 %v5185, %v5185
        %v5248 = vmul.f32 %v5188, %v5188
        %v5249 = vmul.f32 %v5193, %v5193
        %v5250 = vmul.f32 %v5196, %v5196
        %v5251 = vmul.f32 %v5201, %v5201
        %v5252 = vmul.f32 %v5204, %v5204
        %v5253 = vmul.f32 %v5209, %v5209
        %v5254 = vmul.f32 %v5212, %v5212
        %v5255 = vmul.f32 %v5217, %v5217
        %v5256 = vmul.f32 %v5220, %v5220
        %v5257 = vmul.f32 %v5225, %v5225
        %v5258 = vmul.f32 %v5228, %v5228
        %v5259 = vmul.f32 %v5233, %v5233
        %v5260 = vmul.f32 %v5236, %v5236
        %v5261 = vmul.f32 %v5241, %v5241
        %v5262 = vmul.f32 %v5244, %v5244
        %v5263 = vmul.f32 %v5185, %v5247
        %v5264 = vmul.f32 %v5188, %v5248
        %v5265 = vmul.f32 %v5193, %v5249
        %v5266 = vmul.f32 %v5196, %v5250
        %v5267 = vmul.f32 %v5201, %v5251
        %v5268 = vmul.f32 %v5204, %v5252
        %v5269 = vmul.f32 %v5209, %v5253
        %v5270 = vmul.f32 %v5212, %v5254
        %v5271 = vmul.f32 %v5217, %v5255
        %v5272 = vmul.f32 %v5220, %v5256
        %v5273 = vmul.f32 %v5225, %v5257
        %v5274 = vmul.f32 %v5228, %v5258
        %v5275 = vmul.f32 %v5233, %v5259
        %v5276 = vmul.f32 %v5236, %v5260
        %v5277 = vmul.f32 %v5241, %v5261
        %v5278 = vmul.f32 %v5244, %v5262
        %v5279 = vmul.f32 %v5263, 0.044715
        %v5280 = vmul.f32 %v5264, 0.044715
        %v5281 = vmul.f32 %v5265, 0.044715
        %v5282 = vmul.f32 %v5266, 0.044715
        %v5283 = vmul.f32 %v5267, 0.044715
        %v5284 = vmul.f32 %v5268, 0.044715
        %v5285 = vmul.f32 %v5269, 0.044715
        %v5286 = vmul.f32 %v5270, 0.044715
        %v5287 = vmul.f32 %v5271, 0.044715
        %v5288 = vmul.f32 %v5272, 0.044715
        %v5289 = vmul.f32 %v5273, 0.044715
        %v5290 = vmul.f32 %v5274, 0.044715
        %v5291 = vmul.f32 %v5275, 0.044715
        %v5292 = vmul.f32 %v5276, 0.044715
        %v5293 = vmul.f32 %v5277, 0.044715
        %v5294 = vmul.f32 %v5278, 0.044715
        %v5295 = vadd.f32 %v5185, %v5279
        %v5296 = vadd.f32 %v5188, %v5280
        %v5297 = vadd.f32 %v5193, %v5281
        %v5298 = vadd.f32 %v5196, %v5282
        %v5299 = vadd.f32 %v5201, %v5283
        %v5300 = vadd.f32 %v5204, %v5284
        %v5301 = vadd.f32 %v5209, %v5285
        %v5302 = vadd.f32 %v5212, %v5286
        %v5303 = vadd.f32 %v5217, %v5287
        %v5304 = vadd.f32 %v5220, %v5288
        %v5305 = vadd.f32 %v5225, %v5289
        %v5306 = vadd.f32 %v5228, %v5290
        %v5307 = vadd.f32 %v5233, %v5291
        %v5308 = vadd.f32 %v5236, %v5292
        %v5309 = vadd.f32 %v5241, %v5293
        %v5310 = vadd.f32 %v5244, %v5294
        %v5311 = vmul.f32 %v5295, 0.7978846
        %v5312 = vmul.f32 %v5296, 0.7978846
        %v5313 = vmul.f32 %v5297, 0.7978846
        %v5314 = vmul.f32 %v5298, 0.7978846
        %v5315 = vmul.f32 %v5299, 0.7978846
        %v5316 = vmul.f32 %v5300, 0.7978846
        %v5317 = vmul.f32 %v5301, 0.7978846
        %v5318 = vmul.f32 %v5302, 0.7978846
        %v5319 = vmul.f32 %v5303, 0.7978846
        %v5320 = vmul.f32 %v5304, 0.7978846
        %v5321 = vmul.f32 %v5305, 0.7978846
        %v5322 = vmul.f32 %v5306, 0.7978846
        %v5323 = vmul.f32 %v5307, 0.7978846
        %v5324 = vmul.f32 %v5308, 0.7978846
        %v5325 = vmul.f32 %v5309, 0.7978846
        %v5326 = vmul.f32 %v5310, 0.7978846
        %v5327 = vtanh.pop %v5311
        %v5328 = vtanh.pop %v5312
        %v5329 = vtanh.pop %v5313
        %v5330 = vtanh.pop %v5314
        %v5331 = vtanh.pop %v5315
        %v5332 = vtanh.pop %v5316
        %v5333 = vtanh.pop %v5317
        %v5334 = vtanh.pop %v5318
        %v5335 = vtanh.pop %v5319
        %v5336 = vtanh.pop %v5320
        %v5337 = vtanh.pop %v5321
        %v5338 = vtanh.pop %v5322
        %v5339 = vtanh.pop %v5323
        %v5340 = vtanh.pop %v5324
        %v5341 = vtanh.pop %v5325
        %v5342 = vtanh.pop %v5326
        %v5343 = vadd.f32 %v5327, 1.0
        %v5344 = vadd.f32 %v5328, 1.0
        %v5345 = vadd.f32 %v5329, 1.0
        %v5346 = vadd.f32 %v5330, 1.0
        %v5347 = vadd.f32 %v5331, 1.0
        %v5348 = vadd.f32 %v5332, 1.0
        %v5349 = vadd.f32 %v5333, 1.0
        %v5350 = vadd.f32 %v5334, 1.0
        %v5351 = vadd.f32 %v5335, 1.0
        %v5352 = vadd.f32 %v5336, 1.0
        %v5353 = vadd.f32 %v5337, 1.0
        %v5354 = vadd.f32 %v5338, 1.0
        %v5355 = vadd.f32 %v5339, 1.0
        %v5356 = vadd.f32 %v5340, 1.0
        %v5357 = vadd.f32 %v5341, 1.0
        %v5358 = vadd.f32 %v5342, 1.0
        %v5359 = vmul.f32 %v5343, 0.5
        %v5360 = vmul.f32 %v5344, 0.5
        %v5361 = vmul.f32 %v5345, 0.5
        %v5362 = vmul.f32 %v5346, 0.5
        %v5363 = vmul.f32 %v5347, 0.5
        %v5364 = vmul.f32 %v5348, 0.5
        %v5365 = vmul.f32 %v5349, 0.5
        %v5366 = vmul.f32 %v5350, 0.5
        %v5367 = vmul.f32 %v5351, 0.5
        %v5368 = vmul.f32 %v5352, 0.5
        %v5369 = vmul.f32 %v5353, 0.5
        %v5370 = vmul.f32 %v5354, 0.5
        %v5371 = vmul.f32 %v5355, 0.5
        %v5372 = vmul.f32 %v5356, 0.5
        %v5373 = vmul.f32 %v5357, 0.5
        %v5374 = vmul.f32 %v5358, 0.5
        %v5375 = vmul.f32 %v5185, %v5359
        %v5376 = vmul.f32 %v5188, %v5360
        %v5377 = vmul.f32 %v5193, %v5361
        %v5378 = vmul.f32 %v5196, %v5362
        %v5379 = vmul.f32 %v5201, %v5363
        %v5380 = vmul.f32 %v5204, %v5364
        %v5381 = vmul.f32 %v5209, %v5365
        %v5382 = vmul.f32 %v5212, %v5366
        %v5383 = vmul.f32 %v5217, %v5367
        %v5384 = vmul.f32 %v5220, %v5368
        %v5385 = vmul.f32 %v5225, %v5369
        %v5386 = vmul.f32 %v5228, %v5370
        %v5387 = vmul.f32 %v5233, %v5371
        %v5388 = vmul.f32 %v5236, %v5372
        %v5389 = vmul.f32 %v5241, %v5373
        %v5390 = vmul.f32 %v5244, %v5374
        %v5391 = vpack.c.bf16 %v5376, %v5375
        %v5392 = vpack.c.bf16 %v5378, %v5377
        %v5393 = vpack.c.bf16 %v5380, %v5379
        %v5394 = vpack.c.bf16 %v5382, %v5381
        %v5395 = vpack.c.bf16 %v5384, %v5383
        %v5396 = vpack.c.bf16 %v5386, %v5385
        %v5397 = vpack.c.bf16 %v5388, %v5387
        %v5398 = vpack.c.bf16 %v5390, %v5389
        %v5399 = vld [vmem:[%s7] sm:$0xf]
        %v5400 = vld [vmem:[%s7 + $0x4] sm:$0xf]
        %v5401 = vld [vmem:[%s7 + $0x8] sm:$0xf]
        %v5402 = vld [vmem:[%s7 + $0xc] sm:$0xf]
        %v5403 = vld [vmem:[%s7 + $0x10] sm:$0xf]
        %v5404 = vld [vmem:[%s7 + $0x14] sm:$0xf]
        %v5405 = vld [vmem:[%s7 + $0x18] sm:$0xf]
        %v5406 = vld [vmem:[%s7 + $0x1c] sm:$0xf]
        %v5407 = vlaneseq
        %v5408 = vshrl.u32 %v5407, 7
        %v5409 = vsub.s32 5, %v5408
        %v5410 = vrot.slane %v2527, %v5409
        %v5419 = vunpack.c.l.b16 %v5399
        %v5420 = vunpack.c.l.b16 %v5400
        %v5421 = vunpack.c.l.b16 %v5401
        %v5422 = vunpack.c.l.b16 %v5402
        %v5423 = vunpack.c.l.b16 %v5403
        %v5424 = vunpack.c.l.b16 %v5404
        %v5425 = vunpack.c.l.b16 %v5405
        %v5426 = vunpack.c.l.b16 %v5406
        %v5427 = vpack.c.b16 %v5420, %v5419
        %v5428 = vpack.c.b16 %v5422, %v5421
        %v5429 = vpack.c.b16 %v5424, %v5423
        %v5430 = vpack.c.b16 %v5426, %v5425
        %vm5435 = vcmask 523264
        %v5437 = vsel %vm5435, %v5391, 0
        %v5440 = vsel %vm5435, %v5392, 0
        %v5443 = vsel %vm5435, %v5393, 0
        %v5446 = vsel %vm5435, %v5394, 0
        %v5449 = vsel %vm5435, %v5395, 0
        %v5452 = vsel %vm5435, %v5396, 0
        %v5455 = vsel %vm5435, %v5397, 0
        %v5458 = vsel %vm5435, %v5398, 0
        %5460 = vmatprep.subr.bf16.mxu0 0
        %5461 = vmatpush1.bf16.msra.mxu0 %v5427
        %5462 = vmatprep.subr.bf16.mxu0 0
        %5463 = vmatpush1.bf16.msra.mxu0 %v5428
        %5464 = vmatprep.subr.bf16.mxu0 0
        %5465 = vmatpush1.bf16.msra.mxu0 %v5429
        %5466 = vmatprep.subr.bf16.mxu0 0
        %5467 = vmatpush1.bf16.msra.mxu0 %v5430
        %5468 = vmatprep.subr.bf16.mxu0 0
        %5469 = vmatpush1.bf16.msra.mxu0 0
        %5470 = vmatprep.subr.bf16.mxu0 0
        %5471 = vmatpush1.bf16.msra.mxu0 0
        %5472 = vmatprep.subr.bf16.mxu0 0
        %5473 = vmatpush1.bf16.msra.mxu0 0
        %5474 = vmatprep.subr.bf16.mxu0 0
        %5475 = vmatpush1.bf16.msra.mxu0 0
        %5476 = vmatprep.subr.bf16.mxu0 0
        %5477 = vmatpush1.bf16.msra.mxu0 0
        %5478 = vmatprep.subr.bf16.mxu0 0
        %5479 = vmatpush1.bf16.msra.mxu0 0
        %5480 = vmatprep.subr.bf16.mxu0 0
        %5481 = vmatpush1.bf16.msra.mxu0 0
        %5482 = vmatprep.subr.bf16.mxu0 0
        %5483 = vmatpush1.bf16.msra.mxu0 0
        %5484 = vmatprep.subr.bf16.mxu0 0
        %5485 = vmatpush1.bf16.msra.mxu0 0
        %5486 = vmatprep.subr.bf16.mxu0 0
        %5487 = vmatpush1.bf16.msra.mxu0 0
        %5488 = vmatprep.subr.bf16.mxu0 0
        %5489 = vmatpush1.bf16.msra.mxu0 0
        %5490 = vmatprep.subr.bf16.mxu0 0
        %5491 = vmatpush1.bf16.msra.mxu0 0
        %5492 = vmatprep.mubr.bf16.mxu0 0
        %5493 = vmatmul.mubr.bf16.gmra.mrb[0].mxu0 %v5437
        %v5494 = vpop.f32.mrb[0].mxu0
        %v5495 = vadd.f32 %v5410, %v5494
        %v5496 = vpop.f32.mrb[0].mxu0
        %v5497 = vpop.f32.mrb[0].mxu0
        %v5498 = vadd.f32 %v5410, %v5497
        %v5499 = vpop.f32.mrb[0].mxu0
        %5500 = vmatprep.mubr.bf16.mxu0 0
        %5501 = vmatmul.mubr.bf16.gmra.mrb[0].mxu0 %v5440
        %v5502 = vpop.f32.mrb[0].mxu0
        %v5503 = vadd.f32 %v5410, %v5502
        %v5504 = vpop.f32.mrb[0].mxu0
        %v5505 = vpop.f32.mrb[0].mxu0
        %v5506 = vadd.f32 %v5410, %v5505
        %v5507 = vpop.f32.mrb[0].mxu0
        %5508 = vmatprep.mubr.bf16.mxu0 0
        %5509 = vmatmul.mubr.bf16.gmra.mrb[0].mxu0 %v5443
        %v5510 = vpop.f32.mrb[0].mxu0
        %v5511 = vadd.f32 %v5410, %v5510
        %v5512 = vpop.f32.mrb[0].mxu0
        %v5513 = vpop.f32.mrb[0].mxu0
        %v5514 = vadd.f32 %v5410, %v5513
        %v5515 = vpop.f32.mrb[0].mxu0
        %5516 = vmatprep.mubr.bf16.mxu0 0
        %5517 = vmatmul.mubr.bf16.gmra.mrb[0].mxu0 %v5446
        %v5518 = vpop.f32.mrb[0].mxu0
        %v5519 = vadd.f32 %v5410, %v5518
        %v5520 = vpop.f32.mrb[0].mxu0
        %v5521 = vpop.f32.mrb[0].mxu0
        %v5522 = vadd.f32 %v5410, %v5521
        %v5523 = vpop.f32.mrb[0].mxu0
        %5524 = vmatprep.mubr.bf16.mxu0 0
        %5525 = vmatmul.mubr.bf16.gmra.mrb[0].mxu0 %v5449
        %v5526 = vpop.f32.mrb[0].mxu0
        %v5527 = vadd.f32 %v5410, %v5526
        %v5528 = vpop.f32.mrb[0].mxu0
        %v5529 = vpop.f32.mrb[0].mxu0
        %v5530 = vadd.f32 %v5410, %v5529
        %v5531 = vpop.f32.mrb[0].mxu0
        %5532 = vmatprep.mubr.bf16.mxu0 0
        %5533 = vmatmul.mubr.bf16.gmra.mrb[0].mxu0 %v5452
        %v5534 = vpop.f32.mrb[0].mxu0
        %v5535 = vadd.f32 %v5410, %v5534
        %v5536 = vpop.f32.mrb[0].mxu0
        %v5537 = vpop.f32.mrb[0].mxu0
        %v5538 = vadd.f32 %v5410, %v5537
        %v5539 = vpop.f32.mrb[0].mxu0
        %5540 = vmatprep.mubr.bf16.mxu0 0
        %5541 = vmatmul.mubr.bf16.gmra.mrb[0].mxu0 %v5455
        %v5542 = vpop.f32.mrb[0].mxu0
        %v5543 = vadd.f32 %v5410, %v5542
        %v5544 = vpop.f32.mrb[0].mxu0
        %v5545 = vpop.f32.mrb[0].mxu0
        %v5546 = vadd.f32 %v5410, %v5545
        %v5547 = vpop.f32.mrb[0].mxu0
        %5548 = vmatprep.mubr.bf16.mxu0 0
        %5549 = vmatmul.mubr.bf16.gmra.mrb[0].mxu0 %v5458
        %v5550 = vpop.f32.mrb[0].mxu0
        %v5551 = vadd.f32 %v5410, %v5550
        %v5552 = vpop.f32.mrb[0].mxu0
        %v5553 = vpop.f32.mrb[0].mxu0
        %v5554 = vadd.f32 %v5410, %v5553
        %v5555 = vpop.f32.mrb[0].mxu0
        %5556 = vdwg.mxu0
        %v5557 = vadd.f32 %v5082, %v5495
        %v5558 = vadd.f32 %v5083, %v5498
        %v5559 = vadd.f32 %v5084, %v5503
        %v5560 = vadd.f32 %v5085, %v5506
        %v5561 = vadd.f32 %v5086, %v5511
        %v5562 = vadd.f32 %v5087, %v5514
        %v5563 = vadd.f32 %v5088, %v5519
        %v5564 = vadd.f32 %v5089, %v5522
        %v5565 = vadd.f32 %v5090, %v5527
        %v5566 = vadd.f32 %v5091, %v5530
        %v5567 = vadd.f32 %v5092, %v5535
        %v5568 = vadd.f32 %v5093, %v5538
        %v5569 = vadd.f32 %v5094, %v5543
        %v5570 = vadd.f32 %v5095, %v5546
        %v5571 = vadd.f32 %v5096, %v5551
        %v5572 = vadd.f32 %v5097, %v5554
        %v5573 = vsel %vm2277, %v5557, 0.0
        %5574 = vadd.xlane.f32.xlu0 %v5573
        %v5575 = vpop.xlane.xlu0 %5574
        %v5576 = vsel %vm2277, %v5558, 0.0
        %5577 = vadd.xlane.f32.xlu0 %v5576
        %v5578 = vpop.xlane.xlu0 %5577
        %v5579 = vsel %vm2277, %v5559, 0.0
        %5580 = vadd.xlane.f32.xlu0 %v5579
        %v5581 = vpop.xlane.xlu0 %5580
        %v5582 = vsel %vm2277, %v5560, 0.0
        %5583 = vadd.xlane.f32.xlu0 %v5582
        %v5584 = vpop.xlane.xlu0 %5583
        %v5585 = vsel %vm2277, %v5561, 0.0
        %5586 = vadd.xlane.f32.xlu0 %v5585
        %v5587 = vpop.xlane.xlu0 %5586
        %v5588 = vsel %vm2277, %v5562, 0.0
        %5589 = vadd.xlane.f32.xlu0 %v5588
        %v5590 = vpop.xlane.xlu0 %5589
        %v5591 = vsel %vm2277, %v5563, 0.0
        %5592 = vadd.xlane.f32.xlu0 %v5591
        %v5593 = vpop.xlane.xlu0 %5592
        %v5594 = vsel %vm2277, %v5564, 0.0
        %5595 = vadd.xlane.f32.xlu0 %v5594
        %v5596 = vpop.xlane.xlu0 %5595
        %v5597 = vsel %vm2277, %v5565, 0.0
        %5598 = vadd.xlane.f32.xlu0 %v5597
        %v5599 = vpop.xlane.xlu0 %5598
        %v5600 = vsel %vm2277, %v5566, 0.0
        %5601 = vadd.xlane.f32.xlu0 %v5600
        %v5602 = vpop.xlane.xlu0 %5601
        %v5603 = vsel %vm2277, %v5567, 0.0
        %5604 = vadd.xlane.f32.xlu0 %v5603
        %v5605 = vpop.xlane.xlu0 %5604
        %v5606 = vsel %vm2277, %v5568, 0.0
        %5607 = vadd.xlane.f32.xlu0 %v5606
        %v5608 = vpop.xlane.xlu0 %5607
        %v5609 = vsel %vm2277, %v5569, 0.0
        %5610 = vadd.xlane.f32.xlu0 %v5609
        %v5611 = vpop.xlane.xlu0 %5610
        %v5612 = vsel %vm2277, %v5570, 0.0
        %5613 = vadd.xlane.f32.xlu0 %v5612
        %v5614 = vpop.xlane.xlu0 %5613
        %v5615 = vsel %vm2277, %v5571, 0.0
        %5616 = vadd.xlane.f32.xlu0 %v5615
        %v5617 = vpop.xlane.xlu0 %5616
        %v5618 = vsel %vm2277, %v5572, 0.0
        %5619 = vadd.xlane.f32.xlu0 %v5618
        %v5620 = vpop.xlane.xlu0 %5619
        %v5621 = vmul.f32 %v5575, %v2326
        %v5622 = vmul.f32 %v5578, %v2326
        %v5623 = vmul.f32 %v5581, %v2326
        %v5624 = vmul.f32 %v5584, %v2326
        %v5625 = vmul.f32 %v5587, %v2326
        %v5626 = vmul.f32 %v5590, %v2326
        %v5627 = vmul.f32 %v5593, %v2326
        %v5628 = vmul.f32 %v5596, %v2326
        %v5629 = vmul.f32 %v5599, %v2326
        %v5630 = vmul.f32 %v5602, %v2326
        %v5631 = vmul.f32 %v5605, %v2326
        %v5632 = vmul.f32 %v5608, %v2326
        %v5633 = vmul.f32 %v5611, %v2326
        %v5634 = vmul.f32 %v5614, %v2326
        %v5635 = vmul.f32 %v5617, %v2326
        %v5636 = vmul.f32 %v5620, %v2326
        %v5637 = vsub.f32 %v5557, %v5621
        %v5638 = vsub.f32 %v5558, %v5622
        %v5639 = vsub.f32 %v5559, %v5623
        %v5640 = vsub.f32 %v5560, %v5624
        %v5641 = vsub.f32 %v5561, %v5625
        %v5642 = vsub.f32 %v5562, %v5626
        %v5643 = vsub.f32 %v5563, %v5627
        %v5644 = vsub.f32 %v5564, %v5628
        %v5645 = vsub.f32 %v5565, %v5629
        %v5646 = vsub.f32 %v5566, %v5630
        %v5647 = vsub.f32 %v5567, %v5631
        %v5648 = vsub.f32 %v5568, %v5632
        %v5649 = vsub.f32 %v5569, %v5633
        %v5650 = vsub.f32 %v5570, %v5634
        %v5651 = vsub.f32 %v5571, %v5635
        %v5652 = vsub.f32 %v5572, %v5636
        %v5653 = vmul.f32 %v5637, %v5637
        %v5654 = vmul.f32 %v5638, %v5638
        %v5655 = vmul.f32 %v5639, %v5639
        %v5656 = vmul.f32 %v5640, %v5640
        %v5657 = vmul.f32 %v5641, %v5641
        %v5658 = vmul.f32 %v5642, %v5642
        %v5659 = vmul.f32 %v5643, %v5643
        %v5660 = vmul.f32 %v5644, %v5644
        %v5661 = vmul.f32 %v5645, %v5645
        %v5662 = vmul.f32 %v5646, %v5646
        %v5663 = vmul.f32 %v5647, %v5647
        %v5664 = vmul.f32 %v5648, %v5648
        %v5665 = vmul.f32 %v5649, %v5649
        %v5666 = vmul.f32 %v5650, %v5650
        %v5667 = vmul.f32 %v5651, %v5651
        %v5668 = vmul.f32 %v5652, %v5652
        %v5669 = vsel %vm2277, %v5653, 0.0
        %5670 = vadd.xlane.f32.xlu0 %v5669
        %v5671 = vpop.xlane.xlu0 %5670
        %v5672 = vsel %vm2277, %v5654, 0.0
        %5673 = vadd.xlane.f32.xlu0 %v5672
        %v5674 = vpop.xlane.xlu0 %5673
        %v5675 = vsel %vm2277, %v5655, 0.0
        %5676 = vadd.xlane.f32.xlu0 %v5675
        %v5677 = vpop.xlane.xlu0 %5676
        %v5678 = vsel %vm2277, %v5656, 0.0
        %5679 = vadd.xlane.f32.xlu0 %v5678
        %v5680 = vpop.xlane.xlu0 %5679
        %v5681 = vsel %vm2277, %v5657, 0.0
        %5682 = vadd.xlane.f32.xlu0 %v5681
        %v5683 = vpop.xlane.xlu0 %5682
        %v5684 = vsel %vm2277, %v5658, 0.0
        %5685 = vadd.xlane.f32.xlu0 %v5684
        %v5686 = vpop.xlane.xlu0 %5685
        %v5687 = vsel %vm2277, %v5659, 0.0
        %5688 = vadd.xlane.f32.xlu0 %v5687
        %v5689 = vpop.xlane.xlu0 %5688
        %v5690 = vsel %vm2277, %v5660, 0.0
        %5691 = vadd.xlane.f32.xlu0 %v5690
        %v5692 = vpop.xlane.xlu0 %5691
        %v5693 = vsel %vm2277, %v5661, 0.0
        %5694 = vadd.xlane.f32.xlu0 %v5693
        %v5695 = vpop.xlane.xlu0 %5694
        %v5696 = vsel %vm2277, %v5662, 0.0
        %5697 = vadd.xlane.f32.xlu0 %v5696
        %v5698 = vpop.xlane.xlu0 %5697
        %v5699 = vsel %vm2277, %v5663, 0.0
        %5700 = vadd.xlane.f32.xlu0 %v5699
        %v5701 = vpop.xlane.xlu0 %5700
        %v5702 = vsel %vm2277, %v5664, 0.0
        %5703 = vadd.xlane.f32.xlu0 %v5702
        %v5704 = vpop.xlane.xlu0 %5703
        %v5705 = vsel %vm2277, %v5665, 0.0
        %5706 = vadd.xlane.f32.xlu0 %v5705
        %v5707 = vpop.xlane.xlu0 %5706
        %v5708 = vsel %vm2277, %v5666, 0.0
        %5709 = vadd.xlane.f32.xlu0 %v5708
        %v5710 = vpop.xlane.xlu0 %5709
        %v5711 = vsel %vm2277, %v5667, 0.0
        %5712 = vadd.xlane.f32.xlu0 %v5711
        %v5713 = vpop.xlane.xlu0 %5712
        %v5714 = vsel %vm2277, %v5668, 0.0
        %5715 = vadd.xlane.f32.xlu0 %v5714
        %v5716 = vpop.xlane.xlu0 %5715
        %v5717 = vmul.f32 %v5671, %v2326
        %v5718 = vmul.f32 %v5674, %v2326
        %v5719 = vmul.f32 %v5677, %v2326
        %v5720 = vmul.f32 %v5680, %v2326
        %v5721 = vmul.f32 %v5683, %v2326
        %v5722 = vmul.f32 %v5686, %v2326
        %v5723 = vmul.f32 %v5689, %v2326
        %v5724 = vmul.f32 %v5692, %v2326
        %v5725 = vmul.f32 %v5695, %v2326
        %v5726 = vmul.f32 %v5698, %v2326
        %v5727 = vmul.f32 %v5701, %v2326
        %v5728 = vmul.f32 %v5704, %v2326
        %v5729 = vmul.f32 %v5707, %v2326
        %v5730 = vmul.f32 %v5710, %v2326
        %v5731 = vmul.f32 %v5713, %v2326
        %v5732 = vmul.f32 %v5716, %v2326
        %v5733 = vadd.f32 %v5717, 1e-05
        %v5734 = vadd.f32 %v5718, 1e-05
        %v5735 = vadd.f32 %v5719, 1e-05
        %v5736 = vadd.f32 %v5720, 1e-05
        %v5737 = vadd.f32 %v5721, 1e-05
        %v5738 = vadd.f32 %v5722, 1e-05
        %v5739 = vadd.f32 %v5723, 1e-05
        %v5740 = vadd.f32 %v5724, 1e-05
        %v5741 = vadd.f32 %v5725, 1e-05
        %v5742 = vadd.f32 %v5726, 1e-05
        %v5743 = vadd.f32 %v5727, 1e-05
        %v5744 = vadd.f32 %v5728, 1e-05
        %v5745 = vadd.f32 %v5729, 1e-05
        %v5746 = vadd.f32 %v5730, 1e-05
        %v5747 = vadd.f32 %v5731, 1e-05
        %v5748 = vadd.f32 %v5732, 1e-05
        %v5749 = vrsqrt.pop %v5733
        %v5750 = vrsqrt.pop %v5734
        %v5751 = vrsqrt.pop %v5735
        %v5752 = vrsqrt.pop %v5736
        %v5753 = vrsqrt.pop %v5737
        %v5754 = vrsqrt.pop %v5738
        %v5755 = vrsqrt.pop %v5739
        %v5756 = vrsqrt.pop %v5740
        %v5757 = vrsqrt.pop %v5741
        %v5758 = vrsqrt.pop %v5742
        %v5759 = vrsqrt.pop %v5743
        %v5760 = vrsqrt.pop %v5744
        %v5761 = vrsqrt.pop %v5745
        %v5762 = vrsqrt.pop %v5746
        %v5763 = vrsqrt.pop %v5747
        %v5764 = vrsqrt.pop %v5748
        %v5765 = vmul.f32 %v5637, %v5749
        %v5766 = vmul.f32 %v5638, %v5750
        %v5767 = vmul.f32 %v5639, %v5751
        %v5768 = vmul.f32 %v5640, %v5752
        %v5769 = vmul.f32 %v5641, %v5753
        %v5770 = vmul.f32 %v5642, %v5754
        %v5771 = vmul.f32 %v5643, %v5755
        %v5772 = vmul.f32 %v5644, %v5756
        %v5773 = vmul.f32 %v5645, %v5757
        %v5774 = vmul.f32 %v5646, %v5758
        %v5775 = vmul.f32 %v5647, %v5759
        %v5776 = vmul.f32 %v5648, %v5760
        %v5777 = vmul.f32 %v5649, %v5761
        %v5778 = vmul.f32 %v5650, %v5762
        %v5779 = vmul.f32 %v5651, %v5763
        %v5780 = vmul.f32 %v5652, %v5764
        %v5781 = vlaneseq
        %v5782 = vshrl.u32 %v5781, 7
        %v5783 = vsub.s32 6, %v5782
        %v5784 = vrot.slane %v2527, %v5783
        %v5785 = vmul.f32 %v5765, %v5784
        %v5786 = vmul.f32 %v5766, %v5784
        %v5787 = vmul.f32 %v5767, %v5784
        %v5788 = vmul.f32 %v5768, %v5784
        %v5789 = vmul.f32 %v5769, %v5784
        %v5790 = vmul.f32 %v5770, %v5784
        %v5791 = vmul.f32 %v5771, %v5784
        %v5792 = vmul.f32 %v5772, %v5784
        %v5793 = vmul.f32 %v5773, %v5784
        %v5794 = vmul.f32 %v5774, %v5784
        %v5795 = vmul.f32 %v5775, %v5784
        %v5796 = vmul.f32 %v5776, %v5784
        %v5797 = vmul.f32 %v5777, %v5784
        %v5798 = vmul.f32 %v5778, %v5784
        %v5799 = vmul.f32 %v5779, %v5784
        %v5800 = vmul.f32 %v5780, %v5784
        %v5801 = vlaneseq
        %v5802 = vshrl.u32 %v5801, 7
        %v5803 = vsub.s32 7, %v5802
        %v5804 = vrot.slane %v2527, %v5803
        %v5805 = vadd.f32 %v5785, %v5804
        %v5806 = vadd.f32 %v5786, %v5804
        %v5807 = vadd.f32 %v5787, %v5804
        %v5808 = vadd.f32 %v5788, %v5804
        %v5809 = vadd.f32 %v5789, %v5804
        %v5810 = vadd.f32 %v5790, %v5804
        %v5811 = vadd.f32 %v5791, %v5804
        %v5812 = vadd.f32 %v5792, %v5804
        %v5813 = vadd.f32 %v5793, %v5804
        %v5814 = vadd.f32 %v5794, %v5804
        %v5815 = vadd.f32 %v5795, %v5804
        %v5816 = vadd.f32 %v5796, %v5804
        %v5817 = vadd.f32 %v5797, %v5804
        %v5818 = vadd.f32 %v5798, %v5804
        %v5819 = vadd.f32 %v5799, %v5804
        %v5820 = vadd.f32 %v5800, %v5804
        %s5821 = scalar_lea.vmem %s9, 8
        %v5822 = vld [vmem:[%s5821] sm:$0xff]
        %v5823 = vpack.c.bf16 %v5806, %v5805
        %v5824 = vpack.c.bf16 %v5808, %v5807
        %v5825 = vpack.c.bf16 %v5810, %v5809
        %v5826 = vpack.c.bf16 %v5812, %v5811
        %v5827 = vpack.c.bf16 %v5814, %v5813
        %v5828 = vpack.c.bf16 %v5816, %v5815
        %v5829 = vpack.c.bf16 %v5818, %v5817
        %v5830 = vpack.c.bf16 %v5820, %v5819
        %s5831 = scalar_lea.vmem %s4, 16
        %v5832 = vld [vmem:[%s5831] sm:$0xf]
        %v5833 = vld [vmem:[%s5831 + $0x4] sm:$0xf]
        %v5834 = vld [vmem:[%s5831 + $0x8] sm:$0xf]
        %v5835 = vld [vmem:[%s5831 + $0xc] sm:$0xf]
        %v5836 = vlaneseq
        %v5837 = vshrl.u32 %v5836, 7
        %v5838 = vsub.s32 0, %v5837
        %v5839 = vrot.slane %v5822, %v5838
        %v5844 = vunpack.c.l.b16 %v5832
        %v5845 = vunpack.c.l.b16 %v5833
        %v5846 = vunpack.c.l.b16 %v5834
        %v5847 = vunpack.c.l.b16 %v5835
        %v5848 = vpack.c.b16 %v5845, %v5844
        %v5849 = vpack.c.b16 %v5847, %v5846
        %v5853 = vsel %vm2277, %v5823, 0
        %v5856 = vsel %vm2277, %v5824, 0
        %v5859 = vsel %vm2277, %v5825, 0
        %v5862 = vsel %vm2277, %v5826, 0
        %v5865 = vsel %vm2277, %v5827, 0
        %v5868 = vsel %vm2277, %v5828, 0
        %v5871 = vsel %vm2277, %v5829, 0
        %v5874 = vsel %vm2277, %v5830, 0
        %5876 = vmatprep.subr.bf16.mxu0 0
        %5877 = vmatpush1.bf16.msra.mxu0 %v5848
        %5878 = vmatprep.subr.bf16.mxu0 0
        %5879 = vmatpush1.bf16.msra.mxu0 %v5849
        %5880 = vmatprep.subr.bf16.mxu0 0
        %5881 = vmatpush1.bf16.msra.mxu0 0
        %5882 = vmatprep.subr.bf16.mxu0 0
        %5883 = vmatpush1.bf16.msra.mxu0 0
        %5884 = vmatprep.subr.bf16.mxu0 0
        %5885 = vmatpush1.bf16.msra.mxu0 0
        %5886 = vmatprep.subr.bf16.mxu0 0
        %5887 = vmatpush1.bf16.msra.mxu0 0
        %5888 = vmatprep.subr.bf16.mxu0 0
        %5889 = vmatpush1.bf16.msra.mxu0 0
        %5890 = vmatprep.subr.bf16.mxu0 0
        %5891 = vmatpush1.bf16.msra.mxu0 0
        %5892 = vmatprep.subr.bf16.mxu0 0
        %5893 = vmatpush1.bf16.msra.mxu0 0
        %5894 = vmatprep.subr.bf16.mxu0 0
        %5895 = vmatpush1.bf16.msra.mxu0 0
        %5896 = vmatprep.subr.bf16.mxu0 0
        %5897 = vmatpush1.bf16.msra.mxu0 0
        %5898 = vmatprep.subr.bf16.mxu0 0
        %5899 = vmatpush1.bf16.msra.mxu0 0
        %5900 = vmatprep.subr.bf16.mxu0 0
        %5901 = vmatpush1.bf16.msra.mxu0 0
        %5902 = vmatprep.subr.bf16.mxu0 0
        %5903 = vmatpush1.bf16.msra.mxu0 0
        %5904 = vmatprep.subr.bf16.mxu0 0
        %5905 = vmatpush1.bf16.msra.mxu0 0
        %5906 = vmatprep.subr.bf16.mxu0 0
        %5907 = vmatpush1.bf16.msra.mxu0 0
        %5908 = vmatprep.mubr.bf16.mxu0 0
        %5909 = vmatmul.mubr.bf16.gmra.mrb[0].mxu0 %v5853
        %v5910 = vpop.f32.mrb[0].mxu0
        %v5911 = vadd.f32 %v5839, %v5910
        %v5912 = vpop.f32.mrb[0].mxu0
        %v5913 = vpop.f32.mrb[0].mxu0
        %v5914 = vadd.f32 %v5839, %v5913
        %v5915 = vpop.f32.mrb[0].mxu0
        %5916 = vmatprep.mubr.bf16.mxu0 0
        %5917 = vmatmul.mubr.bf16.gmra.mrb[0].mxu0 %v5856
        %v5918 = vpop.f32.mrb[0].mxu0
        %v5919 = vadd.f32 %v5839, %v5918
        %v5920 = vpop.f32.mrb[0].mxu0
        %v5921 = vpop.f32.mrb[0].mxu0
        %v5922 = vadd.f32 %v5839, %v5921
        %v5923 = vpop.f32.mrb[0].mxu0
        %5924 = vmatprep.mubr.bf16.mxu0 0
        %5925 = vmatmul.mubr.bf16.gmra.mrb[0].mxu0 %v5859
        %v5926 = vpop.f32.mrb[0].mxu0
        %v5927 = vadd.f32 %v5839, %v5926
        %v5928 = vpop.f32.mrb[0].mxu0
        %v5929 = vpop.f32.mrb[0].mxu0
        %v5930 = vadd.f32 %v5839, %v5929
        %v5931 = vpop.f32.mrb[0].mxu0
        %5932 = vmatprep.mubr.bf16.mxu0 0
        %5933 = vmatmul.mubr.bf16.gmra.mrb[0].mxu0 %v5862
        %v5934 = vpop.f32.mrb[0].mxu0
        %v5935 = vadd.f32 %v5839, %v5934
        %v5936 = vpop.f32.mrb[0].mxu0
        %v5937 = vpop.f32.mrb[0].mxu0
        %v5938 = vadd.f32 %v5839, %v5937
        %v5939 = vpop.f32.mrb[0].mxu0
        %5940 = vmatprep.mubr.bf16.mxu0 0
        %5941 = vmatmul.mubr.bf16.gmra.mrb[0].mxu0 %v5865
        %v5942 = vpop.f32.mrb[0].mxu0
        %v5943 = vadd.f32 %v5839, %v5942
        %v5944 = vpop.f32.mrb[0].mxu0
        %v5945 = vpop.f32.mrb[0].mxu0
        %v5946 = vadd.f32 %v5839, %v5945
        %v5947 = vpop.f32.mrb[0].mxu0
        %5948 = vmatprep.mubr.bf16.mxu0 0
        %5949 = vmatmul.mubr.bf16.gmra.mrb[0].mxu0 %v5868
        %v5950 = vpop.f32.mrb[0].mxu0
        %v5951 = vadd.f32 %v5839, %v5950
        %v5952 = vpop.f32.mrb[0].mxu0
        %v5953 = vpop.f32.mrb[0].mxu0
        %v5954 = vadd.f32 %v5839, %v5953
        %v5955 = vpop.f32.mrb[0].mxu0
        %5956 = vmatprep.mubr.bf16.mxu0 0
        %5957 = vmatmul.mubr.bf16.gmra.mrb[0].mxu0 %v5871
        %v5958 = vpop.f32.mrb[0].mxu0
        %v5959 = vadd.f32 %v5839, %v5958
        %v5960 = vpop.f32.mrb[0].mxu0
        %v5961 = vpop.f32.mrb[0].mxu0
        %v5962 = vadd.f32 %v5839, %v5961
        %v5963 = vpop.f32.mrb[0].mxu0
        %5964 = vmatprep.mubr.bf16.mxu0 0
        %5965 = vmatmul.mubr.bf16.gmra.mrb[0].mxu0 %v5874
        %v5966 = vpop.f32.mrb[0].mxu0
        %v5967 = vadd.f32 %v5839, %v5966
        %v5968 = vpop.f32.mrb[0].mxu0
        %v5969 = vpop.f32.mrb[0].mxu0
        %v5970 = vadd.f32 %v5839, %v5969
        %v5971 = vpop.f32.mrb[0].mxu0
        %5972 = vdwg.mxu0
        %v5973 = vmul.f32 %v5911, 0.35355338
        %v5974 = vmul.f32 %v5914, 0.35355338
        %v5975 = vmul.f32 %v5919, 0.35355338
        %v5976 = vmul.f32 %v5922, 0.35355338
        %v5977 = vmul.f32 %v5927, 0.35355338
        %v5978 = vmul.f32 %v5930, 0.35355338
        %v5979 = vmul.f32 %v5935, 0.35355338
        %v5980 = vmul.f32 %v5938, 0.35355338
        %v5981 = vmul.f32 %v5943, 0.35355338
        %v5982 = vmul.f32 %v5946, 0.35355338
        %v5983 = vmul.f32 %v5951, 0.35355338
        %v5984 = vmul.f32 %v5954, 0.35355338
        %v5985 = vmul.f32 %v5959, 0.35355338
        %v5986 = vmul.f32 %v5962, 0.35355338
        %v5987 = vmul.f32 %v5967, 0.35355338
        %v5988 = vmul.f32 %v5970, 0.35355338
        %v5989 = vpack.c.bf16 %v5914, %v5911
        %v5990 = vpack.c.bf16 %v5922, %v5919
        %v5991 = vpack.c.bf16 %v5930, %v5927
        %v5992 = vpack.c.bf16 %v5938, %v5935
        %v5993 = vpack.c.bf16 %v5946, %v5943
        %v5994 = vpack.c.bf16 %v5954, %v5951
        %v5995 = vpack.c.bf16 %v5962, %v5959
        %v5996 = vpack.c.bf16 %v5970, %v5967
        %v5997 = vpack.c.bf16 %v5974, %v5973
        %v5998 = vpack.c.bf16 %v5976, %v5975
        %6001 = vrot.lane.b32.xlu0 %v5989, 96
        %v6002 = vpop.permute.xlu0 %6001
        %6003 = vrot.lane.b32.xlu0 %v5990, 96
        %v6004 = vpop.permute.xlu0 %6003
        %6007 = vmatprep.subr.bf16.mxu0 0
        %6008 = vmatpush1.bf16.msra.mxu0 %v6002
        %6009 = vmatprep.subr.bf16.mxu0 0
        %6010 = vmatpush1.bf16.msra.mxu0 %v6004
        %6011 = vmatprep.subr.bf16.mxu0 0
        %6012 = vmatpush1.bf16.msra.mxu0 0
        %6013 = vmatprep.subr.bf16.mxu0 0
        %6014 = vmatpush1.bf16.msra.mxu0 0
        %6015 = vmatprep.subr.bf16.mxu0 0
        %6016 = vmatpush1.bf16.msra.mxu0 0
        %6017 = vmatprep.subr.bf16.mxu0 0
        %6018 = vmatpush1.bf16.msra.mxu0 0
        %6019 = vmatprep.subr.bf16.mxu0 0
        %6020 = vmatpush1.bf16.msra.mxu0 0
        %6021 = vmatprep.subr.bf16.mxu0 0
        %6022 = vmatpush1.bf16.msra.mxu0 0
        %6023 = vmatprep.subr.bf16.mxu0 0
        %6024 = vmatpush1.bf16.msra.mxu0 0
        %6025 = vmatprep.subr.bf16.mxu0 0
        %6026 = vmatpush1.bf16.msra.mxu0 0
        %6027 = vmatprep.subr.bf16.mxu0 0
        %6028 = vmatpush1.bf16.msra.mxu0 0
        %6029 = vmatprep.subr.bf16.mxu0 0
        %6030 = vmatpush1.bf16.msra.mxu0 0
        %6031 = vmatprep.subr.bf16.mxu0 0
        %6032 = vmatpush1.bf16.msra.mxu0 0
        %6033 = vmatprep.subr.bf16.mxu0 0
        %6034 = vmatpush1.bf16.msra.mxu0 0
        %6035 = vmatprep.subr.bf16.mxu0 0
        %6036 = vmatpush1.bf16.msra.mxu0 0
        %6037 = vmatprep.subr.bf16.mxu0 0
        %6038 = vmatpush1.bf16.msra.mxu0 0
        %6039 = vmatprep.mubr.bf16.mxu0 0
        %6040 = vmatmul.mubr.bf16.gmra.mrb[0].mxu0 %v2740
        %v6041 = vpop.f32.mrb[0].mxu0
        %v6042 = vadd.f32 0.0, %v6041
        %v6043 = vpop.f32.mrb[0].mxu0
        %v6044 = vpop.f32.mrb[0].mxu0
        %v6045 = vadd.f32 0.0, %v6044
        %v6046 = vpop.f32.mrb[0].mxu0
        %6047 = vmatprep.mubr.bf16.mxu0 0
        %6048 = vmatmul.mubr.bf16.gmra.mrb[0].mxu0 %v2743
        %v6049 = vpop.f32.mrb[0].mxu0
        %v6050 = vadd.f32 0.0, %v6049
        %v6051 = vpop.f32.mrb[0].mxu0
        %v6052 = vpop.f32.mrb[0].mxu0
        %v6053 = vadd.f32 0.0, %v6052
        %v6054 = vpop.f32.mrb[0].mxu0
        %6055 = vmatprep.mubr.bf16.mxu0 0
        %6056 = vmatmul.mubr.bf16.gmra.mrb[0].mxu0 %v2746
        %v6057 = vpop.f32.mrb[0].mxu0
        %v6058 = vadd.f32 0.0, %v6057
        %v6059 = vpop.f32.mrb[0].mxu0
        %v6060 = vpop.f32.mrb[0].mxu0
        %v6061 = vadd.f32 0.0, %v6060
        %v6062 = vpop.f32.mrb[0].mxu0
        %6063 = vmatprep.mubr.bf16.mxu0 0
        %6064 = vmatmul.mubr.bf16.gmra.mrb[0].mxu0 %v2749
        %v6065 = vpop.f32.mrb[0].mxu0
        %v6066 = vadd.f32 0.0, %v6065
        %v6067 = vpop.f32.mrb[0].mxu0
        %v6068 = vpop.f32.mrb[0].mxu0
        %v6069 = vadd.f32 0.0, %v6068
        %v6070 = vpop.f32.mrb[0].mxu0
        %6071 = vmatprep.mubr.bf16.mxu0 0
        %6072 = vmatmul.mubr.bf16.gmra.mrb[0].mxu0 %v2752
        %v6073 = vpop.f32.mrb[0].mxu0
        %v6074 = vadd.f32 0.0, %v6073
        %v6075 = vpop.f32.mrb[0].mxu0
        %v6076 = vpop.f32.mrb[0].mxu0
        %v6077 = vadd.f32 0.0, %v6076
        %v6078 = vpop.f32.mrb[0].mxu0
        %6079 = vmatprep.mubr.bf16.mxu0 0
        %6080 = vmatmul.mubr.bf16.gmra.mrb[0].mxu0 %v2755
        %v6081 = vpop.f32.mrb[0].mxu0
        %v6082 = vadd.f32 0.0, %v6081
        %v6083 = vpop.f32.mrb[0].mxu0
        %v6084 = vpop.f32.mrb[0].mxu0
        %v6085 = vadd.f32 0.0, %v6084
        %v6086 = vpop.f32.mrb[0].mxu0
        %6087 = vmatprep.mubr.bf16.mxu0 0
        %6088 = vmatmul.mubr.bf16.gmra.mrb[0].mxu0 %v2758
        %v6089 = vpop.f32.mrb[0].mxu0
        %v6090 = vadd.f32 0.0, %v6089
        %v6091 = vpop.f32.mrb[0].mxu0
        %v6092 = vpop.f32.mrb[0].mxu0
        %v6093 = vadd.f32 0.0, %v6092
        %v6094 = vpop.f32.mrb[0].mxu0
        %6095 = vmatprep.mubr.bf16.mxu0 0
        %6096 = vmatmul.mubr.bf16.gmra.mrb[0].mxu0 %v2761
        %v6097 = vpop.f32.mrb[0].mxu0
        %v6098 = vadd.f32 0.0, %v6097
        %v6099 = vpop.f32.mrb[0].mxu0
        %v6100 = vpop.f32.mrb[0].mxu0
        %v6101 = vadd.f32 0.0, %v6100
        %v6102 = vpop.f32.mrb[0].mxu0
        %6103 = vdwg.mxu0
        %v6104 = vmul.f32 %v6042, %v2860
        %v6105 = vmul.f32 %v6045, %v2861
        %v6106 = vmul.f32 %v6050, %v2862
        %v6107 = vmul.f32 %v6053, %v2863
        %v6108 = vmul.f32 %v6058, %v2864
        %v6109 = vmul.f32 %v6061, %v2865
        %v6110 = vmul.f32 %v6066, %v2866
        %v6111 = vmul.f32 %v6069, %v2867
        %v6112 = vmul.f32 %v6074, %v2868
        %v6113 = vmul.f32 %v6077, %v2869
        %v6114 = vmul.f32 %v6082, %v2870
        %v6115 = vmul.f32 %v6085, %v2871
        %v6116 = vmul.f32 %v6090, %v2872
        %v6117 = vmul.f32 %v6093, %v2873
        %v6118 = vmul.f32 %v6098, %v2874
        %v6119 = vmul.f32 %v6101, %v2875
        %v6120 = vpack.c.bf16 %v6105, %v6104
        %v6121 = vpack.c.bf16 %v6107, %v6106
        %v6122 = vpack.c.bf16 %v6109, %v6108
        %v6123 = vpack.c.bf16 %v6111, %v6110
        %v6124 = vpack.c.bf16 %v6113, %v6112
        %v6125 = vpack.c.bf16 %v6115, %v6114
        %v6126 = vpack.c.bf16 %v6117, %v6116
        %v6127 = vpack.c.bf16 %v6119, %v6118
        %6128 = vrot.lane.b32.xlu0 %v5989, 64
        %v6129 = vpop.permute.xlu0 %6128
        %6130 = vrot.lane.b32.xlu0 %v5990, 64
        %v6131 = vpop.permute.xlu0 %6130
        %6134 = vmatprep.subr.bf16.mxu0 0
        %6135 = vmatpush1.bf16.msra.mxu0 %v6129
        %6136 = vmatprep.subr.bf16.mxu0 0
        %6137 = vmatpush1.bf16.msra.mxu0 %v6131
        %6138 = vmatprep.subr.bf16.mxu0 0
        %6139 = vmatpush1.bf16.msra.mxu0 0
        %6140 = vmatprep.subr.bf16.mxu0 0
        %6141 = vmatpush1.bf16.msra.mxu0 0
        %6142 = vmatprep.subr.bf16.mxu0 0
        %6143 = vmatpush1.bf16.msra.mxu0 0
        %6144 = vmatprep.subr.bf16.mxu0 0
        %6145 = vmatpush1.bf16.msra.mxu0 0
        %6146 = vmatprep.subr.bf16.mxu0 0
        %6147 = vmatpush1.bf16.msra.mxu0 0
        %6148 = vmatprep.subr.bf16.mxu0 0
        %6149 = vmatpush1.bf16.msra.mxu0 0
        %6150 = vmatprep.subr.bf16.mxu0 0
        %6151 = vmatpush1.bf16.msra.mxu0 0
        %6152 = vmatprep.subr.bf16.mxu0 0
        %6153 = vmatpush1.bf16.msra.mxu0 0
        %6154 = vmatprep.subr.bf16.mxu0 0
        %6155 = vmatpush1.bf16.msra.mxu0 0
        %6156 = vmatprep.subr.bf16.mxu0 0
        %6157 = vmatpush1.bf16.msra.mxu0 0
        %6158 = vmatprep.subr.bf16.mxu0 0
        %6159 = vmatpush1.bf16.msra.mxu0 0
        %6160 = vmatprep.subr.bf16.mxu0 0
        %6161 = vmatpush1.bf16.msra.mxu0 0
        %6162 = vmatprep.subr.bf16.mxu0 0
        %6163 = vmatpush1.bf16.msra.mxu0 0
        %6164 = vmatprep.subr.bf16.mxu0 0
        %6165 = vmatpush1.bf16.msra.mxu0 0
        %6166 = vmatprep.mubr.bf16.mxu0 0
        %6167 = vmatmul.mubr.bf16.gmra.mrb[0].mxu0 %v2740
        %v6168 = vpop.f32.mrb[0].mxu0
        %v6169 = vadd.f32 0.0, %v6168
        %v6170 = vpop.f32.mrb[0].mxu0
        %v6171 = vpop.f32.mrb[0].mxu0
        %v6172 = vadd.f32 0.0, %v6171
        %v6173 = vpop.f32.mrb[0].mxu0
        %6174 = vmatprep.mubr.bf16.mxu0 0
        %6175 = vmatmul.mubr.bf16.gmra.mrb[0].mxu0 %v2743
        %v6176 = vpop.f32.mrb[0].mxu0
        %v6177 = vadd.f32 0.0, %v6176
        %v6178 = vpop.f32.mrb[0].mxu0
        %v6179 = vpop.f32.mrb[0].mxu0
        %v6180 = vadd.f32 0.0, %v6179
        %v6181 = vpop.f32.mrb[0].mxu0
        %6182 = vmatprep.mubr.bf16.mxu0 0
        %6183 = vmatmul.mubr.bf16.gmra.mrb[0].mxu0 %v2746
        %v6184 = vpop.f32.mrb[0].mxu0
        %v6185 = vadd.f32 0.0, %v6184
        %v6186 = vpop.f32.mrb[0].mxu0
        %v6187 = vpop.f32.mrb[0].mxu0
        %v6188 = vadd.f32 0.0, %v6187
        %v6189 = vpop.f32.mrb[0].mxu0
        %6190 = vmatprep.mubr.bf16.mxu0 0
        %6191 = vmatmul.mubr.bf16.gmra.mrb[0].mxu0 %v2749
        %v6192 = vpop.f32.mrb[0].mxu0
        %v6193 = vadd.f32 0.0, %v6192
        %v6194 = vpop.f32.mrb[0].mxu0
        %v6195 = vpop.f32.mrb[0].mxu0
        %v6196 = vadd.f32 0.0, %v6195
        %v6197 = vpop.f32.mrb[0].mxu0
        %6198 = vmatprep.mubr.bf16.mxu0 0
        %6199 = vmatmul.mubr.bf16.gmra.mrb[0].mxu0 %v2752
        %v6200 = vpop.f32.mrb[0].mxu0
        %v6201 = vadd.f32 0.0, %v6200
        %v6202 = vpop.f32.mrb[0].mxu0
        %v6203 = vpop.f32.mrb[0].mxu0
        %v6204 = vadd.f32 0.0, %v6203
        %v6205 = vpop.f32.mrb[0].mxu0
        %6206 = vmatprep.mubr.bf16.mxu0 0
        %6207 = vmatmul.mubr.bf16.gmra.mrb[0].mxu0 %v2755
        %v6208 = vpop.f32.mrb[0].mxu0
        %v6209 = vadd.f32 0.0, %v6208
        %v6210 = vpop.f32.mrb[0].mxu0
        %v6211 = vpop.f32.mrb[0].mxu0
        %v6212 = vadd.f32 0.0, %v6211
        %v6213 = vpop.f32.mrb[0].mxu0
        %6214 = vmatprep.mubr.bf16.mxu0 0
        %6215 = vmatmul.mubr.bf16.gmra.mrb[0].mxu0 %v2758
        %v6216 = vpop.f32.mrb[0].mxu0
        %v6217 = vadd.f32 0.0, %v6216
        %v6218 = vpop.f32.mrb[0].mxu0
        %v6219 = vpop.f32.mrb[0].mxu0
        %v6220 = vadd.f32 0.0, %v6219
        %v6221 = vpop.f32.mrb[0].mxu0
        %6222 = vmatprep.mubr.bf16.mxu0 0
        %6223 = vmatmul.mubr.bf16.gmra.mrb[0].mxu0 %v2761
        %v6224 = vpop.f32.mrb[0].mxu0
        %v6225 = vadd.f32 0.0, %v6224
        %v6226 = vpop.f32.mrb[0].mxu0
        %v6227 = vpop.f32.mrb[0].mxu0
        %v6228 = vadd.f32 0.0, %v6227
        %v6229 = vpop.f32.mrb[0].mxu0
        %6230 = vdwg.mxu0
        %v6231 = vmul.f32 %v6169, %v2860
        %v6232 = vmul.f32 %v6172, %v2861
        %v6233 = vmul.f32 %v6177, %v2862
        %v6234 = vmul.f32 %v6180, %v2863
        %v6235 = vmul.f32 %v6185, %v2864
        %v6236 = vmul.f32 %v6188, %v2865
        %v6237 = vmul.f32 %v6193, %v2866
        %v6238 = vmul.f32 %v6196, %v2867
        %v6239 = vmul.f32 %v6201, %v2868
        %v6240 = vmul.f32 %v6204, %v2869
        %v6241 = vmul.f32 %v6209, %v2870
        %v6242 = vmul.f32 %v6212, %v2871
        %v6243 = vmul.f32 %v6217, %v2872
        %v6244 = vmul.f32 %v6220, %v2873
        %v6245 = vmul.f32 %v6225, %v2874
        %v6246 = vmul.f32 %v6228, %v2875
        %v6247 = vpack.c.bf16 %v6232, %v6231
        %v6248 = vpack.c.bf16 %v6234, %v6233
        %v6249 = vpack.c.bf16 %v6236, %v6235
        %v6250 = vpack.c.bf16 %v6238, %v6237
        %v6251 = vpack.c.bf16 %v6240, %v6239
        %v6252 = vpack.c.bf16 %v6242, %v6241
        %v6253 = vpack.c.bf16 %v6244, %v6243
        %v6254 = vpack.c.bf16 %v6246, %v6245
        %v6256 = vsel %vm2277, %v5997, 0
        %v6259 = vsel %vm2277, %v5998, 0
        %v6262 = vsel %vm2277, %v6120, 0
        %v6265 = vsel %vm2277, %v6121, 0
        %v6268 = vsel %vm2277, %v6122, 0
        %v6271 = vsel %vm2277, %v6123, 0
        %v6274 = vsel %vm2277, %v6124, 0
        %v6277 = vsel %vm2277, %v6125, 0
        %v6280 = vsel %vm2277, %v6126, 0
        %v6283 = vsel %vm2277, %v6127, 0
        %6285 = vmatprep.subr.bf16.mxu0 0
        %6286 = vmatpush1.bf16.xpose.msra.mxu0 %v6262
        %6287 = vmatprep.subr.bf16.mxu0 0
        %6288 = vmatpush1.bf16.xpose.msra.mxu0 %v6265
        %6289 = vmatprep.subr.bf16.mxu0 0
        %6290 = vmatpush1.bf16.xpose.msra.mxu0 %v6268
        %6291 = vmatprep.subr.bf16.mxu0 0
        %6292 = vmatpush1.bf16.xpose.msra.mxu0 %v6271
        %6293 = vmatprep.subr.bf16.mxu0 0
        %6294 = vmatpush1.bf16.xpose.msra.mxu0 %v6274
        %6295 = vmatprep.subr.bf16.mxu0 0
        %6296 = vmatpush1.bf16.xpose.msra.mxu0 %v6277
        %6297 = vmatprep.subr.bf16.mxu0 0
        %6298 = vmatpush1.bf16.xpose.msra.mxu0 %v6280
        %6299 = vmatprep.subr.bf16.mxu0 0
        %6300 = vmatpush1.bf16.xpose.msra.mxu0 %v6283
        %6301 = vmatprep.subr.bf16.mxu0 0
        %6302 = vmatpush1.bf16.xpose.msra.mxu0 0
        %6303 = vmatprep.subr.bf16.mxu0 0
        %6304 = vmatpush1.bf16.xpose.msra.mxu0 0
        %6305 = vmatprep.subr.bf16.mxu0 0
        %6306 = vmatpush1.bf16.xpose.msra.mxu0 0
        %6307 = vmatprep.subr.bf16.mxu0 0
        %6308 = vmatpush1.bf16.xpose.msra.mxu0 0
        %6309 = vmatprep.subr.bf16.mxu0 0
        %6310 = vmatpush1.bf16.xpose.msra.mxu0 0
        %6311 = vmatprep.subr.bf16.mxu0 0
        %6312 = vmatpush1.bf16.xpose.msra.mxu0 0
        %6313 = vmatprep.subr.bf16.mxu0 0
        %6314 = vmatpush1.bf16.xpose.msra.mxu0 0
        %6315 = vmatprep.subr.bf16.mxu0 0
        %6316 = vmatpush1.bf16.xpose.msra.mxu0 0
        %6317 = vmatprep.mubr.bf16.mxu0 0
        %6318 = vmatmul.mubr.bf16.gmra.mrb[0].mxu0 %v6256
        %v6319 = vpop.f32.mrb[0].mxu0
        %v6320 = vadd.f32 0.0, %v6319
        %v6321 = vpop.f32.mrb[0].mxu0
        %v6322 = vpop.f32.mrb[0].mxu0
        %v6323 = vadd.f32 0.0, %v6322
        %v6324 = vpop.f32.mrb[0].mxu0
        %6325 = vmatprep.mubr.bf16.mxu0 0
        %6326 = vmatmul.mubr.bf16.gmra.mrb[0].mxu0 %v6259
        %v6327 = vpop.f32.mrb[0].mxu0
        %v6328 = vadd.f32 0.0, %v6327
        %v6329 = vpop.f32.mrb[0].mxu0
        %v6330 = vpop.f32.mrb[0].mxu0
        %v6331 = vadd.f32 0.0, %v6330
        %v6332 = vpop.f32.mrb[0].mxu0
        %6333 = vdwg.mxu0
        %6334 = vmax.xlane.f32.xlu0 %v6320
        %v6335 = vpop.xlane.xlu0 %6334
        %6336 = vmax.xlane.f32.xlu0 %v6323
        %v6337 = vpop.xlane.xlu0 %6336
        %6338 = vmax.xlane.f32.xlu0 %v6328
        %v6339 = vpop.xlane.xlu0 %6338
        %6340 = vmax.xlane.f32.xlu0 %v6331
        %v6341 = vpop.xlane.xlu0 %6340
        %v6342 = vsub.f32 %v6320, %v6335
        %v6343 = vsub.f32 %v6323, %v6337
        %v6344 = vsub.f32 %v6328, %v6339
        %v6345 = vsub.f32 %v6331, %v6341
        %v6346 = vmul.f32 %v6342, 1.442695
        %v6347 = vpow.pop %v6346
        %v6348 = vmul.f32 %v6343, 1.442695
        %v6349 = vpow.pop %v6348
        %v6350 = vmul.f32 %v6344, 1.442695
        %v6351 = vpow.pop %v6350
        %v6352 = vmul.f32 %v6345, 1.442695
        %v6353 = vpow.pop %v6352
        %v6354 = vpack.c.bf16 %v6349, %v6347
        %v6355 = vpack.c.bf16 %v6353, %v6351
        %6356 = vmatprep.subr.bf16.mxu0 0
        %6357 = vmatpush1.bf16.msra.mxu0 %v3160
        %6358 = vmatprep.subr.bf16.mxu0 0
        %6359 = vmatpush1.bf16.msra.mxu0 %v3161
        %6360 = vmatprep.subr.bf16.mxu0 0
        %6361 = vmatpush1.bf16.msra.mxu0 %v3162
        %6362 = vmatprep.subr.bf16.mxu0 0
        %6363 = vmatpush1.bf16.msra.mxu0 %v3163
        %6364 = vmatprep.subr.bf16.mxu0 0
        %6365 = vmatpush1.bf16.msra.mxu0 %v3164
        %6366 = vmatprep.subr.bf16.mxu0 0
        %6367 = vmatpush1.bf16.msra.mxu0 %v3165
        %6368 = vmatprep.subr.bf16.mxu0 0
        %6369 = vmatpush1.bf16.msra.mxu0 %v3166
        %6370 = vmatprep.subr.bf16.mxu0 0
        %6371 = vmatpush1.bf16.msra.mxu0 %v3167
        %6372 = vmatprep.subr.bf16.mxu0 0
        %6373 = vmatpush1.bf16.msra.mxu0 0
        %6374 = vmatprep.subr.bf16.mxu0 0
        %6375 = vmatpush1.bf16.msra.mxu0 0
        %6376 = vmatprep.subr.bf16.mxu0 0
        %6377 = vmatpush1.bf16.msra.mxu0 0
        %6378 = vmatprep.subr.bf16.mxu0 0
        %6379 = vmatpush1.bf16.msra.mxu0 0
        %6380 = vmatprep.subr.bf16.mxu0 0
        %6381 = vmatpush1.bf16.msra.mxu0 0
        %6382 = vmatprep.subr.bf16.mxu0 0
        %6383 = vmatpush1.bf16.msra.mxu0 0
        %6384 = vmatprep.subr.bf16.mxu0 0
        %6385 = vmatpush1.bf16.msra.mxu0 0
        %6386 = vmatprep.subr.bf16.mxu0 0
        %6387 = vmatpush1.bf16.msra.mxu0 0
        %6388 = vmatprep.mubr.bf16.mxu0 0
        %6389 = vmatmul.mubr.bf16.gmra.mrb[0].mxu0 %v6354
        %v6390 = vpop.f32.mrb[0].mxu0
        %v6391 = vadd.f32 0.0, %v6390
        %v6392 = vpop.f32.mrb[0].mxu0
        %v6393 = vpop.f32.mrb[0].mxu0
        %v6394 = vadd.f32 0.0, %v6393
        %v6395 = vpop.f32.mrb[0].mxu0
        %6396 = vmatprep.mubr.bf16.mxu0 0
        %6397 = vmatmul.mubr.bf16.gmra.mrb[0].mxu0 %v6355
        %v6398 = vpop.f32.mrb[0].mxu0
        %v6399 = vadd.f32 0.0, %v6398
        %v6400 = vpop.f32.mrb[0].mxu0
        %v6401 = vpop.f32.mrb[0].mxu0
        %v6402 = vadd.f32 0.0, %v6401
        %v6403 = vpop.f32.mrb[0].mxu0
        %6404 = vdwg.mxu0
        %v6405 = vrcp.pop %v6391
        %v6406 = vrcp.pop %v6394
        %v6407 = vrcp.pop %v6399
        %v6408 = vrcp.pop %v6402
        %v6409 = vmul.f32 %v6347, %v6405
        %v6410 = vmul.f32 %v6349, %v6406
        %v6411 = vmul.f32 %v6351, %v6407
        %v6412 = vmul.f32 %v6353, %v6408
        %v6413 = vpack.c.bf16 %v6410, %v6409
        %v6414 = vpack.c.bf16 %v6412, %v6411
        %6415 = vmatprep.subr.bf16.mxu0 0
        %6416 = vmatpush1.bf16.msra.mxu0 %v6247
        %6417 = vmatprep.subr.bf16.mxu0 0
        %6418 = vmatpush1.bf16.msra.mxu0 %v6248
        %6419 = vmatprep.subr.bf16.mxu0 0
        %6420 = vmatpush1.bf16.msra.mxu0 %v6249
        %6421 = vmatprep.subr.bf16.mxu0 0
        %6422 = vmatpush1.bf16.msra.mxu0 %v6250
        %6423 = vmatprep.subr.bf16.mxu0 0
        %6424 = vmatpush1.bf16.msra.mxu0 %v6251
        %6425 = vmatprep.subr.bf16.mxu0 0
        %6426 = vmatpush1.bf16.msra.mxu0 %v6252
        %6427 = vmatprep.subr.bf16.mxu0 0
        %6428 = vmatpush1.bf16.msra.mxu0 %v6253
        %6429 = vmatprep.subr.bf16.mxu0 0
        %6430 = vmatpush1.bf16.msra.mxu0 %v6254
        %6431 = vmatprep.subr.bf16.mxu0 0
        %6432 = vmatpush1.bf16.msra.mxu0 0
        %6433 = vmatprep.subr.bf16.mxu0 0
        %6434 = vmatpush1.bf16.msra.mxu0 0
        %6435 = vmatprep.subr.bf16.mxu0 0
        %6436 = vmatpush1.bf16.msra.mxu0 0
        %6437 = vmatprep.subr.bf16.mxu0 0
        %6438 = vmatpush1.bf16.msra.mxu0 0
        %6439 = vmatprep.subr.bf16.mxu0 0
        %6440 = vmatpush1.bf16.msra.mxu0 0
        %6441 = vmatprep.subr.bf16.mxu0 0
        %6442 = vmatpush1.bf16.msra.mxu0 0
        %6443 = vmatprep.subr.bf16.mxu0 0
        %6444 = vmatpush1.bf16.msra.mxu0 0
        %6445 = vmatprep.subr.bf16.mxu0 0
        %6446 = vmatpush1.bf16.msra.mxu0 0
        %6447 = vmatprep.mubr.bf16.mxu0 0
        %6448 = vmatmul.mubr.bf16.gmra.mrb[0].mxu0 %v6413
        %v6449 = vpop.f32.mrb[0].mxu0
        %v6450 = vadd.f32 0.0, %v6449
        %v6451 = vpop.f32.mrb[0].mxu0
        %v6452 = vpop.f32.mrb[0].mxu0
        %v6453 = vadd.f32 0.0, %v6452
        %v6454 = vpop.f32.mrb[0].mxu0
        %6455 = vmatprep.mubr.bf16.mxu0 0
        %6456 = vmatmul.mubr.bf16.gmra.mrb[0].mxu0 %v6414
        %v6457 = vpop.f32.mrb[0].mxu0
        %v6458 = vadd.f32 0.0, %v6457
        %v6459 = vpop.f32.mrb[0].mxu0
        %v6460 = vpop.f32.mrb[0].mxu0
        %v6461 = vadd.f32 0.0, %v6460
        %v6462 = vpop.f32.mrb[0].mxu0
        %6463 = vdwg.mxu0
        %v6464 = vpack.c.bf16 %v5978, %v5977
        %v6465 = vpack.c.bf16 %v5980, %v5979
        %6468 = vrot.lane.b32.xlu0 %v5991, 96
        %v6469 = vpop.permute.xlu0 %6468
        %6470 = vrot.lane.b32.xlu0 %v5992, 96
        %v6471 = vpop.permute.xlu0 %6470
        %6474 = vmatprep.subr.bf16.mxu0 0
        %6475 = vmatpush1.bf16.msra.mxu0 %v6469
        %6476 = vmatprep.subr.bf16.mxu0 0
        %6477 = vmatpush1.bf16.msra.mxu0 %v6471
        %6478 = vmatprep.subr.bf16.mxu0 0
        %6479 = vmatpush1.bf16.msra.mxu0 0
        %6480 = vmatprep.subr.bf16.mxu0 0
        %6481 = vmatpush1.bf16.msra.mxu0 0
        %6482 = vmatprep.subr.bf16.mxu0 0
        %6483 = vmatpush1.bf16.msra.mxu0 0
        %6484 = vmatprep.subr.bf16.mxu0 0
        %6485 = vmatpush1.bf16.msra.mxu0 0
        %6486 = vmatprep.subr.bf16.mxu0 0
        %6487 = vmatpush1.bf16.msra.mxu0 0
        %6488 = vmatprep.subr.bf16.mxu0 0
        %6489 = vmatpush1.bf16.msra.mxu0 0
        %6490 = vmatprep.subr.bf16.mxu0 0
        %6491 = vmatpush1.bf16.msra.mxu0 0
        %6492 = vmatprep.subr.bf16.mxu0 0
        %6493 = vmatpush1.bf16.msra.mxu0 0
        %6494 = vmatprep.subr.bf16.mxu0 0
        %6495 = vmatpush1.bf16.msra.mxu0 0
        %6496 = vmatprep.subr.bf16.mxu0 0
        %6497 = vmatpush1.bf16.msra.mxu0 0
        %6498 = vmatprep.subr.bf16.mxu0 0
        %6499 = vmatpush1.bf16.msra.mxu0 0
        %6500 = vmatprep.subr.bf16.mxu0 0
        %6501 = vmatpush1.bf16.msra.mxu0 0
        %6502 = vmatprep.subr.bf16.mxu0 0
        %6503 = vmatpush1.bf16.msra.mxu0 0
        %6504 = vmatprep.subr.bf16.mxu0 0
        %6505 = vmatpush1.bf16.msra.mxu0 0
        %6506 = vmatprep.mubr.bf16.mxu0 0
        %6507 = vmatmul.mubr.bf16.gmra.mrb[0].mxu0 %v2740
        %v6508 = vpop.f32.mrb[0].mxu0
        %v6509 = vadd.f32 0.0, %v6508
        %v6510 = vpop.f32.mrb[0].mxu0
        %v6511 = vpop.f32.mrb[0].mxu0
        %v6512 = vadd.f32 0.0, %v6511
        %v6513 = vpop.f32.mrb[0].mxu0
        %6514 = vmatprep.mubr.bf16.mxu0 0
        %6515 = vmatmul.mubr.bf16.gmra.mrb[0].mxu0 %v2743
        %v6516 = vpop.f32.mrb[0].mxu0
        %v6517 = vadd.f32 0.0, %v6516
        %v6518 = vpop.f32.mrb[0].mxu0
        %v6519 = vpop.f32.mrb[0].mxu0
        %v6520 = vadd.f32 0.0, %v6519
        %v6521 = vpop.f32.mrb[0].mxu0
        %6522 = vmatprep.mubr.bf16.mxu0 0
        %6523 = vmatmul.mubr.bf16.gmra.mrb[0].mxu0 %v2746
        %v6524 = vpop.f32.mrb[0].mxu0
        %v6525 = vadd.f32 0.0, %v6524
        %v6526 = vpop.f32.mrb[0].mxu0
        %v6527 = vpop.f32.mrb[0].mxu0
        %v6528 = vadd.f32 0.0, %v6527
        %v6529 = vpop.f32.mrb[0].mxu0
        %6530 = vmatprep.mubr.bf16.mxu0 0
        %6531 = vmatmul.mubr.bf16.gmra.mrb[0].mxu0 %v2749
        %v6532 = vpop.f32.mrb[0].mxu0
        %v6533 = vadd.f32 0.0, %v6532
        %v6534 = vpop.f32.mrb[0].mxu0
        %v6535 = vpop.f32.mrb[0].mxu0
        %v6536 = vadd.f32 0.0, %v6535
        %v6537 = vpop.f32.mrb[0].mxu0
        %6538 = vmatprep.mubr.bf16.mxu0 0
        %6539 = vmatmul.mubr.bf16.gmra.mrb[0].mxu0 %v2752
        %v6540 = vpop.f32.mrb[0].mxu0
        %v6541 = vadd.f32 0.0, %v6540
        %v6542 = vpop.f32.mrb[0].mxu0
        %v6543 = vpop.f32.mrb[0].mxu0
        %v6544 = vadd.f32 0.0, %v6543
        %v6545 = vpop.f32.mrb[0].mxu0
        %6546 = vmatprep.mubr.bf16.mxu0 0
        %6547 = vmatmul.mubr.bf16.gmra.mrb[0].mxu0 %v2755
        %v6548 = vpop.f32.mrb[0].mxu0
        %v6549 = vadd.f32 0.0, %v6548
        %v6550 = vpop.f32.mrb[0].mxu0
        %v6551 = vpop.f32.mrb[0].mxu0
        %v6552 = vadd.f32 0.0, %v6551
        %v6553 = vpop.f32.mrb[0].mxu0
        %6554 = vmatprep.mubr.bf16.mxu0 0
        %6555 = vmatmul.mubr.bf16.gmra.mrb[0].mxu0 %v2758
        %v6556 = vpop.f32.mrb[0].mxu0
        %v6557 = vadd.f32 0.0, %v6556
        %v6558 = vpop.f32.mrb[0].mxu0
        %v6559 = vpop.f32.mrb[0].mxu0
        %v6560 = vadd.f32 0.0, %v6559
        %v6561 = vpop.f32.mrb[0].mxu0
        %6562 = vmatprep.mubr.bf16.mxu0 0
        %6563 = vmatmul.mubr.bf16.gmra.mrb[0].mxu0 %v2761
        %v6564 = vpop.f32.mrb[0].mxu0
        %v6565 = vadd.f32 0.0, %v6564
        %v6566 = vpop.f32.mrb[0].mxu0
        %v6567 = vpop.f32.mrb[0].mxu0
        %v6568 = vadd.f32 0.0, %v6567
        %v6569 = vpop.f32.mrb[0].mxu0
        %6570 = vdwg.mxu0
        %v6571 = vmul.f32 %v6509, %v2860
        %v6572 = vmul.f32 %v6512, %v2861
        %v6573 = vmul.f32 %v6517, %v2862
        %v6574 = vmul.f32 %v6520, %v2863
        %v6575 = vmul.f32 %v6525, %v2864
        %v6576 = vmul.f32 %v6528, %v2865
        %v6577 = vmul.f32 %v6533, %v2866
        %v6578 = vmul.f32 %v6536, %v2867
        %v6579 = vmul.f32 %v6541, %v2868
        %v6580 = vmul.f32 %v6544, %v2869
        %v6581 = vmul.f32 %v6549, %v2870
        %v6582 = vmul.f32 %v6552, %v2871
        %v6583 = vmul.f32 %v6557, %v2872
        %v6584 = vmul.f32 %v6560, %v2873
        %v6585 = vmul.f32 %v6565, %v2874
        %v6586 = vmul.f32 %v6568, %v2875
        %v6587 = vpack.c.bf16 %v6572, %v6571
        %v6588 = vpack.c.bf16 %v6574, %v6573
        %v6589 = vpack.c.bf16 %v6576, %v6575
        %v6590 = vpack.c.bf16 %v6578, %v6577
        %v6591 = vpack.c.bf16 %v6580, %v6579
        %v6592 = vpack.c.bf16 %v6582, %v6581
        %v6593 = vpack.c.bf16 %v6584, %v6583
        %v6594 = vpack.c.bf16 %v6586, %v6585
        %6595 = vrot.lane.b32.xlu0 %v5991, 64
        %v6596 = vpop.permute.xlu0 %6595
        %6597 = vrot.lane.b32.xlu0 %v5992, 64
        %v6598 = vpop.permute.xlu0 %6597
        %6601 = vmatprep.subr.bf16.mxu0 0
        %6602 = vmatpush1.bf16.msra.mxu0 %v6596
        %6603 = vmatprep.subr.bf16.mxu0 0
        %6604 = vmatpush1.bf16.msra.mxu0 %v6598
        %6605 = vmatprep.subr.bf16.mxu0 0
        %6606 = vmatpush1.bf16.msra.mxu0 0
        %6607 = vmatprep.subr.bf16.mxu0 0
        %6608 = vmatpush1.bf16.msra.mxu0 0
        %6609 = vmatprep.subr.bf16.mxu0 0
        %6610 = vmatpush1.bf16.msra.mxu0 0
        %6611 = vmatprep.subr.bf16.mxu0 0
        %6612 = vmatpush1.bf16.msra.mxu0 0
        %6613 = vmatprep.subr.bf16.mxu0 0
        %6614 = vmatpush1.bf16.msra.mxu0 0
        %6615 = vmatprep.subr.bf16.mxu0 0
        %6616 = vmatpush1.bf16.msra.mxu0 0
        %6617 = vmatprep.subr.bf16.mxu0 0
        %6618 = vmatpush1.bf16.msra.mxu0 0
        %6619 = vmatprep.subr.bf16.mxu0 0
        %6620 = vmatpush1.bf16.msra.mxu0 0
        %6621 = vmatprep.subr.bf16.mxu0 0
        %6622 = vmatpush1.bf16.msra.mxu0 0
        %6623 = vmatprep.subr.bf16.mxu0 0
        %6624 = vmatpush1.bf16.msra.mxu0 0
        %6625 = vmatprep.subr.bf16.mxu0 0
        %6626 = vmatpush1.bf16.msra.mxu0 0
        %6627 = vmatprep.subr.bf16.mxu0 0
        %6628 = vmatpush1.bf16.msra.mxu0 0
        %6629 = vmatprep.subr.bf16.mxu0 0
        %6630 = vmatpush1.bf16.msra.mxu0 0
        %6631 = vmatprep.subr.bf16.mxu0 0
        %6632 = vmatpush1.bf16.msra.mxu0 0
        %6633 = vmatprep.mubr.bf16.mxu0 0
        %6634 = vmatmul.mubr.bf16.gmra.mrb[0].mxu0 %v2740
        %v6635 = vpop.f32.mrb[0].mxu0
        %v6636 = vadd.f32 0.0, %v6635
        %v6637 = vpop.f32.mrb[0].mxu0
        %v6638 = vpop.f32.mrb[0].mxu0
        %v6639 = vadd.f32 0.0, %v6638
        %v6640 = vpop.f32.mrb[0].mxu0
        %6641 = vmatprep.mubr.bf16.mxu0 0
        %6642 = vmatmul.mubr.bf16.gmra.mrb[0].mxu0 %v2743
        %v6643 = vpop.f32.mrb[0].mxu0
        %v6644 = vadd.f32 0.0, %v6643
        %v6645 = vpop.f32.mrb[0].mxu0
        %v6646 = vpop.f32.mrb[0].mxu0
        %v6647 = vadd.f32 0.0, %v6646
        %v6648 = vpop.f32.mrb[0].mxu0
        %6649 = vmatprep.mubr.bf16.mxu0 0
        %6650 = vmatmul.mubr.bf16.gmra.mrb[0].mxu0 %v2746
        %v6651 = vpop.f32.mrb[0].mxu0
        %v6652 = vadd.f32 0.0, %v6651
        %v6653 = vpop.f32.mrb[0].mxu0
        %v6654 = vpop.f32.mrb[0].mxu0
        %v6655 = vadd.f32 0.0, %v6654
        %v6656 = vpop.f32.mrb[0].mxu0
        %6657 = vmatprep.mubr.bf16.mxu0 0
        %6658 = vmatmul.mubr.bf16.gmra.mrb[0].mxu0 %v2749
        %v6659 = vpop.f32.mrb[0].mxu0
        %v6660 = vadd.f32 0.0, %v6659
        %v6661 = vpop.f32.mrb[0].mxu0
        %v6662 = vpop.f32.mrb[0].mxu0
        %v6663 = vadd.f32 0.0, %v6662
        %v6664 = vpop.f32.mrb[0].mxu0
        %6665 = vmatprep.mubr.bf16.mxu0 0
        %6666 = vmatmul.mubr.bf16.gmra.mrb[0].mxu0 %v2752
        %v6667 = vpop.f32.mrb[0].mxu0
        %v6668 = vadd.f32 0.0, %v6667
        %v6669 = vpop.f32.mrb[0].mxu0
        %v6670 = vpop.f32.mrb[0].mxu0
        %v6671 = vadd.f32 0.0, %v6670
        %v6672 = vpop.f32.mrb[0].mxu0
        %6673 = vmatprep.mubr.bf16.mxu0 0
        %6674 = vmatmul.mubr.bf16.gmra.mrb[0].mxu0 %v2755
        %v6675 = vpop.f32.mrb[0].mxu0
        %v6676 = vadd.f32 0.0, %v6675
        %v6677 = vpop.f32.mrb[0].mxu0
        %v6678 = vpop.f32.mrb[0].mxu0
        %v6679 = vadd.f32 0.0, %v6678
        %v6680 = vpop.f32.mrb[0].mxu0
        %6681 = vmatprep.mubr.bf16.mxu0 0
        %6682 = vmatmul.mubr.bf16.gmra.mrb[0].mxu0 %v2758
        %v6683 = vpop.f32.mrb[0].mxu0
        %v6684 = vadd.f32 0.0, %v6683
        %v6685 = vpop.f32.mrb[0].mxu0
        %v6686 = vpop.f32.mrb[0].mxu0
        %v6687 = vadd.f32 0.0, %v6686
        %v6688 = vpop.f32.mrb[0].mxu0
        %6689 = vmatprep.mubr.bf16.mxu0 0
        %6690 = vmatmul.mubr.bf16.gmra.mrb[0].mxu0 %v2761
        %v6691 = vpop.f32.mrb[0].mxu0
        %v6692 = vadd.f32 0.0, %v6691
        %v6693 = vpop.f32.mrb[0].mxu0
        %v6694 = vpop.f32.mrb[0].mxu0
        %v6695 = vadd.f32 0.0, %v6694
        %v6696 = vpop.f32.mrb[0].mxu0
        %6697 = vdwg.mxu0
        %v6698 = vmul.f32 %v6636, %v2860
        %v6699 = vmul.f32 %v6639, %v2861
        %v6700 = vmul.f32 %v6644, %v2862
        %v6701 = vmul.f32 %v6647, %v2863
        %v6702 = vmul.f32 %v6652, %v2864
        %v6703 = vmul.f32 %v6655, %v2865
        %v6704 = vmul.f32 %v6660, %v2866
        %v6705 = vmul.f32 %v6663, %v2867
        %v6706 = vmul.f32 %v6668, %v2868
        %v6707 = vmul.f32 %v6671, %v2869
        %v6708 = vmul.f32 %v6676, %v2870
        %v6709 = vmul.f32 %v6679, %v2871
        %v6710 = vmul.f32 %v6684, %v2872
        %v6711 = vmul.f32 %v6687, %v2873
        %v6712 = vmul.f32 %v6692, %v2874
        %v6713 = vmul.f32 %v6695, %v2875
        %v6714 = vpack.c.bf16 %v6699, %v6698
        %v6715 = vpack.c.bf16 %v6701, %v6700
        %v6716 = vpack.c.bf16 %v6703, %v6702
        %v6717 = vpack.c.bf16 %v6705, %v6704
        %v6718 = vpack.c.bf16 %v6707, %v6706
        %v6719 = vpack.c.bf16 %v6709, %v6708
        %v6720 = vpack.c.bf16 %v6711, %v6710
        %v6721 = vpack.c.bf16 %v6713, %v6712
        %v6723 = vsel %vm2277, %v6464, 0
        %v6726 = vsel %vm2277, %v6465, 0
        %v6729 = vsel %vm2277, %v6587, 0
        %v6732 = vsel %vm2277, %v6588, 0
        %v6735 = vsel %vm2277, %v6589, 0
        %v6738 = vsel %vm2277, %v6590, 0
        %v6741 = vsel %vm2277, %v6591, 0
        %v6744 = vsel %vm2277, %v6592, 0
        %v6747 = vsel %vm2277, %v6593, 0
        %v6750 = vsel %vm2277, %v6594, 0
        %6752 = vmatprep.subr.bf16.mxu0 0
        %6753 = vmatpush1.bf16.xpose.msra.mxu0 %v6729
        %6754 = vmatprep.subr.bf16.mxu0 0
        %6755 = vmatpush1.bf16.xpose.msra.mxu0 %v6732
        %6756 = vmatprep.subr.bf16.mxu0 0
        %6757 = vmatpush1.bf16.xpose.msra.mxu0 %v6735
        %6758 = vmatprep.subr.bf16.mxu0 0
        %6759 = vmatpush1.bf16.xpose.msra.mxu0 %v6738
        %6760 = vmatprep.subr.bf16.mxu0 0
        %6761 = vmatpush1.bf16.xpose.msra.mxu0 %v6741
        %6762 = vmatprep.subr.bf16.mxu0 0
        %6763 = vmatpush1.bf16.xpose.msra.mxu0 %v6744
        %6764 = vmatprep.subr.bf16.mxu0 0
        %6765 = vmatpush1.bf16.xpose.msra.mxu0 %v6747
        %6766 = vmatprep.subr.bf16.mxu0 0
        %6767 = vmatpush1.bf16.xpose.msra.mxu0 %v6750
        %6768 = vmatprep.subr.bf16.mxu0 0
        %6769 = vmatpush1.bf16.xpose.msra.mxu0 0
        %6770 = vmatprep.subr.bf16.mxu0 0
        %6771 = vmatpush1.bf16.xpose.msra.mxu0 0
        %6772 = vmatprep.subr.bf16.mxu0 0
        %6773 = vmatpush1.bf16.xpose.msra.mxu0 0
        %6774 = vmatprep.subr.bf16.mxu0 0
        %6775 = vmatpush1.bf16.xpose.msra.mxu0 0
        %6776 = vmatprep.subr.bf16.mxu0 0
        %6777 = vmatpush1.bf16.xpose.msra.mxu0 0
        %6778 = vmatprep.subr.bf16.mxu0 0
        %6779 = vmatpush1.bf16.xpose.msra.mxu0 0
        %6780 = vmatprep.subr.bf16.mxu0 0
        %6781 = vmatpush1.bf16.xpose.msra.mxu0 0
        %6782 = vmatprep.subr.bf16.mxu0 0
        %6783 = vmatpush1.bf16.xpose.msra.mxu0 0
        %6784 = vmatprep.mubr.bf16.mxu0 0
        %6785 = vmatmul.mubr.bf16.gmra.mrb[0].mxu0 %v6723
        %v6786 = vpop.f32.mrb[0].mxu0
        %v6787 = vadd.f32 0.0, %v6786
        %v6788 = vpop.f32.mrb[0].mxu0
        %v6789 = vpop.f32.mrb[0].mxu0
        %v6790 = vadd.f32 0.0, %v6789
        %v6791 = vpop.f32.mrb[0].mxu0
        %6792 = vmatprep.mubr.bf16.mxu0 0
        %6793 = vmatmul.mubr.bf16.gmra.mrb[0].mxu0 %v6726
        %v6794 = vpop.f32.mrb[0].mxu0
        %v6795 = vadd.f32 0.0, %v6794
        %v6796 = vpop.f32.mrb[0].mxu0
        %v6797 = vpop.f32.mrb[0].mxu0
        %v6798 = vadd.f32 0.0, %v6797
        %v6799 = vpop.f32.mrb[0].mxu0
        %6800 = vdwg.mxu0
        %6801 = vmax.xlane.f32.xlu0 %v6787
        %v6802 = vpop.xlane.xlu0 %6801
        %6803 = vmax.xlane.f32.xlu0 %v6790
        %v6804 = vpop.xlane.xlu0 %6803
        %6805 = vmax.xlane.f32.xlu0 %v6795
        %v6806 = vpop.xlane.xlu0 %6805
        %6807 = vmax.xlane.f32.xlu0 %v6798
        %v6808 = vpop.xlane.xlu0 %6807
        %v6809 = vsub.f32 %v6787, %v6802
        %v6810 = vsub.f32 %v6790, %v6804
        %v6811 = vsub.f32 %v6795, %v6806
        %v6812 = vsub.f32 %v6798, %v6808
        %v6813 = vmul.f32 %v6809, 1.442695
        %v6814 = vpow.pop %v6813
        %v6815 = vmul.f32 %v6810, 1.442695
        %v6816 = vpow.pop %v6815
        %v6817 = vmul.f32 %v6811, 1.442695
        %v6818 = vpow.pop %v6817
        %v6819 = vmul.f32 %v6812, 1.442695
        %v6820 = vpow.pop %v6819
        %v6821 = vpack.c.bf16 %v6816, %v6814
        %v6822 = vpack.c.bf16 %v6820, %v6818
        %6823 = vmatprep.subr.bf16.mxu0 0
        %6824 = vmatpush1.bf16.msra.mxu0 %v3160
        %6825 = vmatprep.subr.bf16.mxu0 0
        %6826 = vmatpush1.bf16.msra.mxu0 %v3161
        %6827 = vmatprep.subr.bf16.mxu0 0
        %6828 = vmatpush1.bf16.msra.mxu0 %v3162
        %6829 = vmatprep.subr.bf16.mxu0 0
        %6830 = vmatpush1.bf16.msra.mxu0 %v3163
        %6831 = vmatprep.subr.bf16.mxu0 0
        %6832 = vmatpush1.bf16.msra.mxu0 %v3164
        %6833 = vmatprep.subr.bf16.mxu0 0
        %6834 = vmatpush1.bf16.msra.mxu0 %v3165
        %6835 = vmatprep.subr.bf16.mxu0 0
        %6836 = vmatpush1.bf16.msra.mxu0 %v3166
        %6837 = vmatprep.subr.bf16.mxu0 0
        %6838 = vmatpush1.bf16.msra.mxu0 %v3167
        %6839 = vmatprep.subr.bf16.mxu0 0
        %6840 = vmatpush1.bf16.msra.mxu0 0
        %6841 = vmatprep.subr.bf16.mxu0 0
        %6842 = vmatpush1.bf16.msra.mxu0 0
        %6843 = vmatprep.subr.bf16.mxu0 0
        %6844 = vmatpush1.bf16.msra.mxu0 0
        %6845 = vmatprep.subr.bf16.mxu0 0
        %6846 = vmatpush1.bf16.msra.mxu0 0
        %6847 = vmatprep.subr.bf16.mxu0 0
        %6848 = vmatpush1.bf16.msra.mxu0 0
        %6849 = vmatprep.subr.bf16.mxu0 0
        %6850 = vmatpush1.bf16.msra.mxu0 0
        %6851 = vmatprep.subr.bf16.mxu0 0
        %6852 = vmatpush1.bf16.msra.mxu0 0
        %6853 = vmatprep.subr.bf16.mxu0 0
        %6854 = vmatpush1.bf16.msra.mxu0 0
        %6855 = vmatprep.mubr.bf16.mxu0 0
        %6856 = vmatmul.mubr.bf16.gmra.mrb[0].mxu0 %v6821
        %v6857 = vpop.f32.mrb[0].mxu0
        %v6858 = vadd.f32 0.0, %v6857
        %v6859 = vpop.f32.mrb[0].mxu0
        %v6860 = vpop.f32.mrb[0].mxu0
        %v6861 = vadd.f32 0.0, %v6860
        %v6862 = vpop.f32.mrb[0].mxu0
        %6863 = vmatprep.mubr.bf16.mxu0 0
        %6864 = vmatmul.mubr.bf16.gmra.mrb[0].mxu0 %v6822
        %v6865 = vpop.f32.mrb[0].mxu0
        %v6866 = vadd.f32 0.0, %v6865
        %v6867 = vpop.f32.mrb[0].mxu0
        %v6868 = vpop.f32.mrb[0].mxu0
        %v6869 = vadd.f32 0.0, %v6868
        %v6870 = vpop.f32.mrb[0].mxu0
        %6871 = vdwg.mxu0
        %v6872 = vrcp.pop %v6858
        %v6873 = vrcp.pop %v6861
        %v6874 = vrcp.pop %v6866
        %v6875 = vrcp.pop %v6869
        %v6876 = vmul.f32 %v6814, %v6872
        %v6877 = vmul.f32 %v6816, %v6873
        %v6878 = vmul.f32 %v6818, %v6874
        %v6879 = vmul.f32 %v6820, %v6875
        %v6880 = vpack.c.bf16 %v6877, %v6876
        %v6881 = vpack.c.bf16 %v6879, %v6878
        %6882 = vmatprep.subr.bf16.mxu0 0
        %6883 = vmatpush1.bf16.msra.mxu0 %v6714
        %6884 = vmatprep.subr.bf16.mxu0 0
        %6885 = vmatpush1.bf16.msra.mxu0 %v6715
        %6886 = vmatprep.subr.bf16.mxu0 0
        %6887 = vmatpush1.bf16.msra.mxu0 %v6716
        %6888 = vmatprep.subr.bf16.mxu0 0
        %6889 = vmatpush1.bf16.msra.mxu0 %v6717
        %6890 = vmatprep.subr.bf16.mxu0 0
        %6891 = vmatpush1.bf16.msra.mxu0 %v6718
        %6892 = vmatprep.subr.bf16.mxu0 0
        %6893 = vmatpush1.bf16.msra.mxu0 %v6719
        %6894 = vmatprep.subr.bf16.mxu0 0
        %6895 = vmatpush1.bf16.msra.mxu0 %v6720
        %6896 = vmatprep.subr.bf16.mxu0 0
        %6897 = vmatpush1.bf16.msra.mxu0 %v6721
        %6898 = vmatprep.subr.bf16.mxu0 0
        %6899 = vmatpush1.bf16.msra.mxu0 0
        %6900 = vmatprep.subr.bf16.mxu0 0
        %6901 = vmatpush1.bf16.msra.mxu0 0
        %6902 = vmatprep.subr.bf16.mxu0 0
        %6903 = vmatpush1.bf16.msra.mxu0 0
        %6904 = vmatprep.subr.bf16.mxu0 0
        %6905 = vmatpush1.bf16.msra.mxu0 0
        %6906 = vmatprep.subr.bf16.mxu0 0
        %6907 = vmatpush1.bf16.msra.mxu0 0
        %6908 = vmatprep.subr.bf16.mxu0 0
        %6909 = vmatpush1.bf16.msra.mxu0 0
        %6910 = vmatprep.subr.bf16.mxu0 0
        %6911 = vmatpush1.bf16.msra.mxu0 0
        %6912 = vmatprep.subr.bf16.mxu0 0
        %6913 = vmatpush1.bf16.msra.mxu0 0
        %6914 = vmatprep.mubr.bf16.mxu0 0
        %6915 = vmatmul.mubr.bf16.gmra.mrb[0].mxu0 %v6880
        %v6916 = vpop.f32.mrb[0].mxu0
        %v6917 = vadd.f32 0.0, %v6916
        %v6918 = vpop.f32.mrb[0].mxu0
        %v6919 = vpop.f32.mrb[0].mxu0
        %v6920 = vadd.f32 0.0, %v6919
        %v6921 = vpop.f32.mrb[0].mxu0
        %6922 = vmatprep.mubr.bf16.mxu0 0
        %6923 = vmatmul.mubr.bf16.gmra.mrb[0].mxu0 %v6881
        %v6924 = vpop.f32.mrb[0].mxu0
        %v6925 = vadd.f32 0.0, %v6924
        %v6926 = vpop.f32.mrb[0].mxu0
        %v6927 = vpop.f32.mrb[0].mxu0
        %v6928 = vadd.f32 0.0, %v6927
        %v6929 = vpop.f32.mrb[0].mxu0
        %6930 = vdwg.mxu0
        %v6931 = vpack.c.bf16 %v5982, %v5981
        %v6932 = vpack.c.bf16 %v5984, %v5983
        %6935 = vrot.lane.b32.xlu0 %v5993, 96
        %v6936 = vpop.permute.xlu0 %6935
        %6937 = vrot.lane.b32.xlu0 %v5994, 96
        %v6938 = vpop.permute.xlu0 %6937
        %6941 = vmatprep.subr.bf16.mxu0 0
        %6942 = vmatpush1.bf16.msra.mxu0 %v6936
        %6943 = vmatprep.subr.bf16.mxu0 0
        %6944 = vmatpush1.bf16.msra.mxu0 %v6938
        %6945 = vmatprep.subr.bf16.mxu0 0
        %6946 = vmatpush1.bf16.msra.mxu0 0
        %6947 = vmatprep.subr.bf16.mxu0 0
        %6948 = vmatpush1.bf16.msra.mxu0 0
        %6949 = vmatprep.subr.bf16.mxu0 0
        %6950 = vmatpush1.bf16.msra.mxu0 0
        %6951 = vmatprep.subr.bf16.mxu0 0
        %6952 = vmatpush1.bf16.msra.mxu0 0
        %6953 = vmatprep.subr.bf16.mxu0 0
        %6954 = vmatpush1.bf16.msra.mxu0 0
        %6955 = vmatprep.subr.bf16.mxu0 0
        %6956 = vmatpush1.bf16.msra.mxu0 0
        %6957 = vmatprep.subr.bf16.mxu0 0
        %6958 = vmatpush1.bf16.msra.mxu0 0
        %6959 = vmatprep.subr.bf16.mxu0 0
        %6960 = vmatpush1.bf16.msra.mxu0 0
        %6961 = vmatprep.subr.bf16.mxu0 0
        %6962 = vmatpush1.bf16.msra.mxu0 0
        %6963 = vmatprep.subr.bf16.mxu0 0
        %6964 = vmatpush1.bf16.msra.mxu0 0
        %6965 = vmatprep.subr.bf16.mxu0 0
        %6966 = vmatpush1.bf16.msra.mxu0 0
        %6967 = vmatprep.subr.bf16.mxu0 0
        %6968 = vmatpush1.bf16.msra.mxu0 0
        %6969 = vmatprep.subr.bf16.mxu0 0
        %6970 = vmatpush1.bf16.msra.mxu0 0
        %6971 = vmatprep.subr.bf16.mxu0 0
        %6972 = vmatpush1.bf16.msra.mxu0 0
        %6973 = vmatprep.mubr.bf16.mxu0 0
        %6974 = vmatmul.mubr.bf16.gmra.mrb[0].mxu0 %v2740
        %v6975 = vpop.f32.mrb[0].mxu0
        %v6976 = vadd.f32 0.0, %v6975
        %v6977 = vpop.f32.mrb[0].mxu0
        %v6978 = vpop.f32.mrb[0].mxu0
        %v6979 = vadd.f32 0.0, %v6978
        %v6980 = vpop.f32.mrb[0].mxu0
        %6981 = vmatprep.mubr.bf16.mxu0 0
        %6982 = vmatmul.mubr.bf16.gmra.mrb[0].mxu0 %v2743
        %v6983 = vpop.f32.mrb[0].mxu0
        %v6984 = vadd.f32 0.0, %v6983
        %v6985 = vpop.f32.mrb[0].mxu0
        %v6986 = vpop.f32.mrb[0].mxu0
        %v6987 = vadd.f32 0.0, %v6986
        %v6988 = vpop.f32.mrb[0].mxu0
        %6989 = vmatprep.mubr.bf16.mxu0 0
        %6990 = vmatmul.mubr.bf16.gmra.mrb[0].mxu0 %v2746
        %v6991 = vpop.f32.mrb[0].mxu0
        %v6992 = vadd.f32 0.0, %v6991
        %v6993 = vpop.f32.mrb[0].mxu0
        %v6994 = vpop.f32.mrb[0].mxu0
        %v6995 = vadd.f32 0.0, %v6994
        %v6996 = vpop.f32.mrb[0].mxu0
        %6997 = vmatprep.mubr.bf16.mxu0 0
        %6998 = vmatmul.mubr.bf16.gmra.mrb[0].mxu0 %v2749
        %v6999 = vpop.f32.mrb[0].mxu0
        %v7000 = vadd.f32 0.0, %v6999
        %v7001 = vpop.f32.mrb[0].mxu0
        %v7002 = vpop.f32.mrb[0].mxu0
        %v7003 = vadd.f32 0.0, %v7002
        %v7004 = vpop.f32.mrb[0].mxu0
        %7005 = vmatprep.mubr.bf16.mxu0 0
        %7006 = vmatmul.mubr.bf16.gmra.mrb[0].mxu0 %v2752
        %v7007 = vpop.f32.mrb[0].mxu0
        %v7008 = vadd.f32 0.0, %v7007
        %v7009 = vpop.f32.mrb[0].mxu0
        %v7010 = vpop.f32.mrb[0].mxu0
        %v7011 = vadd.f32 0.0, %v7010
        %v7012 = vpop.f32.mrb[0].mxu0
        %7013 = vmatprep.mubr.bf16.mxu0 0
        %7014 = vmatmul.mubr.bf16.gmra.mrb[0].mxu0 %v2755
        %v7015 = vpop.f32.mrb[0].mxu0
        %v7016 = vadd.f32 0.0, %v7015
        %v7017 = vpop.f32.mrb[0].mxu0
        %v7018 = vpop.f32.mrb[0].mxu0
        %v7019 = vadd.f32 0.0, %v7018
        %v7020 = vpop.f32.mrb[0].mxu0
        %7021 = vmatprep.mubr.bf16.mxu0 0
        %7022 = vmatmul.mubr.bf16.gmra.mrb[0].mxu0 %v2758
        %v7023 = vpop.f32.mrb[0].mxu0
        %v7024 = vadd.f32 0.0, %v7023
        %v7025 = vpop.f32.mrb[0].mxu0
        %v7026 = vpop.f32.mrb[0].mxu0
        %v7027 = vadd.f32 0.0, %v7026
        %v7028 = vpop.f32.mrb[0].mxu0
        %7029 = vmatprep.mubr.bf16.mxu0 0
        %7030 = vmatmul.mubr.bf16.gmra.mrb[0].mxu0 %v2761
        %v7031 = vpop.f32.mrb[0].mxu0
        %v7032 = vadd.f32 0.0, %v7031
        %v7033 = vpop.f32.mrb[0].mxu0
        %v7034 = vpop.f32.mrb[0].mxu0
        %v7035 = vadd.f32 0.0, %v7034
        %v7036 = vpop.f32.mrb[0].mxu0
        %7037 = vdwg.mxu0
        %v7038 = vmul.f32 %v6976, %v2860
        %v7039 = vmul.f32 %v6979, %v2861
        %v7040 = vmul.f32 %v6984, %v2862
        %v7041 = vmul.f32 %v6987, %v2863
        %v7042 = vmul.f32 %v6992, %v2864
        %v7043 = vmul.f32 %v6995, %v2865
        %v7044 = vmul.f32 %v7000, %v2866
        %v7045 = vmul.f32 %v7003, %v2867
        %v7046 = vmul.f32 %v7008, %v2868
        %v7047 = vmul.f32 %v7011, %v2869
        %v7048 = vmul.f32 %v7016, %v2870
        %v7049 = vmul.f32 %v7019, %v2871
        %v7050 = vmul.f32 %v7024, %v2872
        %v7051 = vmul.f32 %v7027, %v2873
        %v7052 = vmul.f32 %v7032, %v2874
        %v7053 = vmul.f32 %v7035, %v2875
        %v7054 = vpack.c.bf16 %v7039, %v7038
        %v7055 = vpack.c.bf16 %v7041, %v7040
        %v7056 = vpack.c.bf16 %v7043, %v7042
        %v7057 = vpack.c.bf16 %v7045, %v7044
        %v7058 = vpack.c.bf16 %v7047, %v7046
        %v7059 = vpack.c.bf16 %v7049, %v7048
        %v7060 = vpack.c.bf16 %v7051, %v7050
        %v7061 = vpack.c.bf16 %v7053, %v7052
        %7062 = vrot.lane.b32.xlu0 %v5993, 64
        %v7063 = vpop.permute.xlu0 %7062
        %7064 = vrot.lane.b32.xlu0 %v5994, 64
        %v7065 = vpop.permute.xlu0 %7064
        %7068 = vmatprep.subr.bf16.mxu0 0
        %7069 = vmatpush1.bf16.msra.mxu0 %v7063
        %7070 = vmatprep.subr.bf16.mxu0 0
        %7071 = vmatpush1.bf16.msra.mxu0 %v7065
        %7072 = vmatprep.subr.bf16.mxu0 0
        %7073 = vmatpush1.bf16.msra.mxu0 0
        %7074 = vmatprep.subr.bf16.mxu0 0
        %7075 = vmatpush1.bf16.msra.mxu0 0
        %7076 = vmatprep.subr.bf16.mxu0 0
        %7077 = vmatpush1.bf16.msra.mxu0 0
        %7078 = vmatprep.subr.bf16.mxu0 0
        %7079 = vmatpush1.bf16.msra.mxu0 0
        %7080 = vmatprep.subr.bf16.mxu0 0
        %7081 = vmatpush1.bf16.msra.mxu0 0
        %7082 = vmatprep.subr.bf16.mxu0 0
        %7083 = vmatpush1.bf16.msra.mxu0 0
        %7084 = vmatprep.subr.bf16.mxu0 0
        %7085 = vmatpush1.bf16.msra.mxu0 0
        %7086 = vmatprep.subr.bf16.mxu0 0
        %7087 = vmatpush1.bf16.msra.mxu0 0
        %7088 = vmatprep.subr.bf16.mxu0 0
        %7089 = vmatpush1.bf16.msra.mxu0 0
        %7090 = vmatprep.subr.bf16.mxu0 0
        %7091 = vmatpush1.bf16.msra.mxu0 0
        %7092 = vmatprep.subr.bf16.mxu0 0
        %7093 = vmatpush1.bf16.msra.mxu0 0
        %7094 = vmatprep.subr.bf16.mxu0 0
        %7095 = vmatpush1.bf16.msra.mxu0 0
        %7096 = vmatprep.subr.bf16.mxu0 0
        %7097 = vmatpush1.bf16.msra.mxu0 0
        %7098 = vmatprep.subr.bf16.mxu0 0
        %7099 = vmatpush1.bf16.msra.mxu0 0
        %7100 = vmatprep.mubr.bf16.mxu0 0
        %7101 = vmatmul.mubr.bf16.gmra.mrb[0].mxu0 %v2740
        %v7102 = vpop.f32.mrb[0].mxu0
        %v7103 = vadd.f32 0.0, %v7102
        %v7104 = vpop.f32.mrb[0].mxu0
        %v7105 = vpop.f32.mrb[0].mxu0
        %v7106 = vadd.f32 0.0, %v7105
        %v7107 = vpop.f32.mrb[0].mxu0
        %7108 = vmatprep.mubr.bf16.mxu0 0
        %7109 = vmatmul.mubr.bf16.gmra.mrb[0].mxu0 %v2743
        %v7110 = vpop.f32.mrb[0].mxu0
        %v7111 = vadd.f32 0.0, %v7110
        %v7112 = vpop.f32.mrb[0].mxu0
        %v7113 = vpop.f32.mrb[0].mxu0
        %v7114 = vadd.f32 0.0, %v7113
        %v7115 = vpop.f32.mrb[0].mxu0
        %7116 = vmatprep.mubr.bf16.mxu0 0
        %7117 = vmatmul.mubr.bf16.gmra.mrb[0].mxu0 %v2746
        %v7118 = vpop.f32.mrb[0].mxu0
        %v7119 = vadd.f32 0.0, %v7118
        %v7120 = vpop.f32.mrb[0].mxu0
        %v7121 = vpop.f32.mrb[0].mxu0
        %v7122 = vadd.f32 0.0, %v7121
        %v7123 = vpop.f32.mrb[0].mxu0
        %7124 = vmatprep.mubr.bf16.mxu0 0
        %7125 = vmatmul.mubr.bf16.gmra.mrb[0].mxu0 %v2749
        %v7126 = vpop.f32.mrb[0].mxu0
        %v7127 = vadd.f32 0.0, %v7126
        %v7128 = vpop.f32.mrb[0].mxu0
        %v7129 = vpop.f32.mrb[0].mxu0
        %v7130 = vadd.f32 0.0, %v7129
        %v7131 = vpop.f32.mrb[0].mxu0
        %7132 = vmatprep.mubr.bf16.mxu0 0
        %7133 = vmatmul.mubr.bf16.gmra.mrb[0].mxu0 %v2752
        %v7134 = vpop.f32.mrb[0].mxu0
        %v7135 = vadd.f32 0.0, %v7134
        %v7136 = vpop.f32.mrb[0].mxu0
        %v7137 = vpop.f32.mrb[0].mxu0
        %v7138 = vadd.f32 0.0, %v7137
        %v7139 = vpop.f32.mrb[0].mxu0
        %7140 = vmatprep.mubr.bf16.mxu0 0
        %7141 = vmatmul.mubr.bf16.gmra.mrb[0].mxu0 %v2755
        %v7142 = vpop.f32.mrb[0].mxu0
        %v7143 = vadd.f32 0.0, %v7142
        %v7144 = vpop.f32.mrb[0].mxu0
        %v7145 = vpop.f32.mrb[0].mxu0
        %v7146 = vadd.f32 0.0, %v7145
        %v7147 = vpop.f32.mrb[0].mxu0
        %7148 = vmatprep.mubr.bf16.mxu0 0
        %7149 = vmatmul.mubr.bf16.gmra.mrb[0].mxu0 %v2758
        %v7150 = vpop.f32.mrb[0].mxu0
        %v7151 = vadd.f32 0.0, %v7150
        %v7152 = vpop.f32.mrb[0].mxu0
        %v7153 = vpop.f32.mrb[0].mxu0
        %v7154 = vadd.f32 0.0, %v7153
        %v7155 = vpop.f32.mrb[0].mxu0
        %7156 = vmatprep.mubr.bf16.mxu0 0
        %7157 = vmatmul.mubr.bf16.gmra.mrb[0].mxu0 %v2761
        %v7158 = vpop.f32.mrb[0].mxu0
        %v7159 = vadd.f32 0.0, %v7158
        %v7160 = vpop.f32.mrb[0].mxu0
        %v7161 = vpop.f32.mrb[0].mxu0
        %v7162 = vadd.f32 0.0, %v7161
        %v7163 = vpop.f32.mrb[0].mxu0
        %7164 = vdwg.mxu0
        %v7165 = vmul.f32 %v7103, %v2860
        %v7166 = vmul.f32 %v7106, %v2861
        %v7167 = vmul.f32 %v7111, %v2862
        %v7168 = vmul.f32 %v7114, %v2863
        %v7169 = vmul.f32 %v7119, %v2864
        %v7170 = vmul.f32 %v7122, %v2865
        %v7171 = vmul.f32 %v7127, %v2866
        %v7172 = vmul.f32 %v7130, %v2867
        %v7173 = vmul.f32 %v7135, %v2868
        %v7174 = vmul.f32 %v7138, %v2869
        %v7175 = vmul.f32 %v7143, %v2870
        %v7176 = vmul.f32 %v7146, %v2871
        %v7177 = vmul.f32 %v7151, %v2872
        %v7178 = vmul.f32 %v7154, %v2873
        %v7179 = vmul.f32 %v7159, %v2874
        %v7180 = vmul.f32 %v7162, %v2875
        %v7181 = vpack.c.bf16 %v7166, %v7165
        %v7182 = vpack.c.bf16 %v7168, %v7167
        %v7183 = vpack.c.bf16 %v7170, %v7169
        %v7184 = vpack.c.bf16 %v7172, %v7171
        %v7185 = vpack.c.bf16 %v7174, %v7173
        %v7186 = vpack.c.bf16 %v7176, %v7175
        %v7187 = vpack.c.bf16 %v7178, %v7177
        %v7188 = vpack.c.bf16 %v7180, %v7179
        %v7190 = vsel %vm2277, %v6931, 0
        %v7193 = vsel %vm2277, %v6932, 0
        %v7196 = vsel %vm2277, %v7054, 0
        %v7199 = vsel %vm2277, %v7055, 0
        %v7202 = vsel %vm2277, %v7056, 0
        %v7205 = vsel %vm2277, %v7057, 0
        %v7208 = vsel %vm2277, %v7058, 0
        %v7211 = vsel %vm2277, %v7059, 0
        %v7214 = vsel %vm2277, %v7060, 0
        %v7217 = vsel %vm2277, %v7061, 0
        %7219 = vmatprep.subr.bf16.mxu0 0
        %7220 = vmatpush1.bf16.xpose.msra.mxu0 %v7196
        %7221 = vmatprep.subr.bf16.mxu0 0
        %7222 = vmatpush1.bf16.xpose.msra.mxu0 %v7199
        %7223 = vmatprep.subr.bf16.mxu0 0
        %7224 = vmatpush1.bf16.xpose.msra.mxu0 %v7202
        %7225 = vmatprep.subr.bf16.mxu0 0
        %7226 = vmatpush1.bf16.xpose.msra.mxu0 %v7205
        %7227 = vmatprep.subr.bf16.mxu0 0
        %7228 = vmatpush1.bf16.xpose.msra.mxu0 %v7208
        %7229 = vmatprep.subr.bf16.mxu0 0
        %7230 = vmatpush1.bf16.xpose.msra.mxu0 %v7211
        %7231 = vmatprep.subr.bf16.mxu0 0
        %7232 = vmatpush1.bf16.xpose.msra.mxu0 %v7214
        %7233 = vmatprep.subr.bf16.mxu0 0
        %7234 = vmatpush1.bf16.xpose.msra.mxu0 %v7217
        %7235 = vmatprep.subr.bf16.mxu0 0
        %7236 = vmatpush1.bf16.xpose.msra.mxu0 0
        %7237 = vmatprep.subr.bf16.mxu0 0
        %7238 = vmatpush1.bf16.xpose.msra.mxu0 0
        %7239 = vmatprep.subr.bf16.mxu0 0
        %7240 = vmatpush1.bf16.xpose.msra.mxu0 0
        %7241 = vmatprep.subr.bf16.mxu0 0
        %7242 = vmatpush1.bf16.xpose.msra.mxu0 0
        %7243 = vmatprep.subr.bf16.mxu0 0
        %7244 = vmatpush1.bf16.xpose.msra.mxu0 0
        %7245 = vmatprep.subr.bf16.mxu0 0
        %7246 = vmatpush1.bf16.xpose.msra.mxu0 0
        %7247 = vmatprep.subr.bf16.mxu0 0
        %7248 = vmatpush1.bf16.xpose.msra.mxu0 0
        %7249 = vmatprep.subr.bf16.mxu0 0
        %7250 = vmatpush1.bf16.xpose.msra.mxu0 0
        %7251 = vmatprep.mubr.bf16.mxu0 0
        %7252 = vmatmul.mubr.bf16.gmra.mrb[0].mxu0 %v7190
        %v7253 = vpop.f32.mrb[0].mxu0
        %v7254 = vadd.f32 0.0, %v7253
        %v7255 = vpop.f32.mrb[0].mxu0
        %v7256 = vpop.f32.mrb[0].mxu0
        %v7257 = vadd.f32 0.0, %v7256
        %v7258 = vpop.f32.mrb[0].mxu0
        %7259 = vmatprep.mubr.bf16.mxu0 0
        %7260 = vmatmul.mubr.bf16.gmra.mrb[0].mxu0 %v7193
        %v7261 = vpop.f32.mrb[0].mxu0
        %v7262 = vadd.f32 0.0, %v7261
        %v7263 = vpop.f32.mrb[0].mxu0
        %v7264 = vpop.f32.mrb[0].mxu0
        %v7265 = vadd.f32 0.0, %v7264
        %v7266 = vpop.f32.mrb[0].mxu0
        %7267 = vdwg.mxu0
        %7268 = vmax.xlane.f32.xlu0 %v7254
        %v7269 = vpop.xlane.xlu0 %7268
        %7270 = vmax.xlane.f32.xlu0 %v7257
        %v7271 = vpop.xlane.xlu0 %7270
        %7272 = vmax.xlane.f32.xlu0 %v7262
        %v7273 = vpop.xlane.xlu0 %7272
        %7274 = vmax.xlane.f32.xlu0 %v7265
        %v7275 = vpop.xlane.xlu0 %7274
        %v7276 = vsub.f32 %v7254, %v7269
        %v7277 = vsub.f32 %v7257, %v7271
        %v7278 = vsub.f32 %v7262, %v7273
        %v7279 = vsub.f32 %v7265, %v7275
        %v7280 = vmul.f32 %v7276, 1.442695
        %v7281 = vpow.pop %v7280
        %v7282 = vmul.f32 %v7277, 1.442695
        %v7283 = vpow.pop %v7282
        %v7284 = vmul.f32 %v7278, 1.442695
        %v7285 = vpow.pop %v7284
        %v7286 = vmul.f32 %v7279, 1.442695
        %v7287 = vpow.pop %v7286
        %v7288 = vpack.c.bf16 %v7283, %v7281
        %v7289 = vpack.c.bf16 %v7287, %v7285
        %7290 = vmatprep.subr.bf16.mxu0 0
        %7291 = vmatpush1.bf16.msra.mxu0 %v3160
        %7292 = vmatprep.subr.bf16.mxu0 0
        %7293 = vmatpush1.bf16.msra.mxu0 %v3161
        %7294 = vmatprep.subr.bf16.mxu0 0
        %7295 = vmatpush1.bf16.msra.mxu0 %v3162
        %7296 = vmatprep.subr.bf16.mxu0 0
        %7297 = vmatpush1.bf16.msra.mxu0 %v3163
        %7298 = vmatprep.subr.bf16.mxu0 0
        %7299 = vmatpush1.bf16.msra.mxu0 %v3164
        %7300 = vmatprep.subr.bf16.mxu0 0
        %7301 = vmatpush1.bf16.msra.mxu0 %v3165
        %7302 = vmatprep.subr.bf16.mxu0 0
        %7303 = vmatpush1.bf16.msra.mxu0 %v3166
        %7304 = vmatprep.subr.bf16.mxu0 0
        %7305 = vmatpush1.bf16.msra.mxu0 %v3167
        %7306 = vmatprep.subr.bf16.mxu0 0
        %7307 = vmatpush1.bf16.msra.mxu0 0
        %7308 = vmatprep.subr.bf16.mxu0 0
        %7309 = vmatpush1.bf16.msra.mxu0 0
        %7310 = vmatprep.subr.bf16.mxu0 0
        %7311 = vmatpush1.bf16.msra.mxu0 0
        %7312 = vmatprep.subr.bf16.mxu0 0
        %7313 = vmatpush1.bf16.msra.mxu0 0
        %7314 = vmatprep.subr.bf16.mxu0 0
        %7315 = vmatpush1.bf16.msra.mxu0 0
        %7316 = vmatprep.subr.bf16.mxu0 0
        %7317 = vmatpush1.bf16.msra.mxu0 0
        %7318 = vmatprep.subr.bf16.mxu0 0
        %7319 = vmatpush1.bf16.msra.mxu0 0
        %7320 = vmatprep.subr.bf16.mxu0 0
        %7321 = vmatpush1.bf16.msra.mxu0 0
        %7322 = vmatprep.mubr.bf16.mxu0 0
        %7323 = vmatmul.mubr.bf16.gmra.mrb[0].mxu0 %v7288
        %v7324 = vpop.f32.mrb[0].mxu0
        %v7325 = vadd.f32 0.0, %v7324
        %v7326 = vpop.f32.mrb[0].mxu0
        %v7327 = vpop.f32.mrb[0].mxu0
        %v7328 = vadd.f32 0.0, %v7327
        %v7329 = vpop.f32.mrb[0].mxu0
        %7330 = vmatprep.mubr.bf16.mxu0 0
        %7331 = vmatmul.mubr.bf16.gmra.mrb[0].mxu0 %v7289
        %v7332 = vpop.f32.mrb[0].mxu0
        %v7333 = vadd.f32 0.0, %v7332
        %v7334 = vpop.f32.mrb[0].mxu0
        %v7335 = vpop.f32.mrb[0].mxu0
        %v7336 = vadd.f32 0.0, %v7335
        %v7337 = vpop.f32.mrb[0].mxu0
        %7338 = vdwg.mxu0
        %v7339 = vrcp.pop %v7325
        %v7340 = vrcp.pop %v7328
        %v7341 = vrcp.pop %v7333
        %v7342 = vrcp.pop %v7336
        %v7343 = vmul.f32 %v7281, %v7339
        %v7344 = vmul.f32 %v7283, %v7340
        %v7345 = vmul.f32 %v7285, %v7341
        %v7346 = vmul.f32 %v7287, %v7342
        %v7347 = vpack.c.bf16 %v7344, %v7343
        %v7348 = vpack.c.bf16 %v7346, %v7345
        %7349 = vmatprep.subr.bf16.mxu0 0
        %7350 = vmatpush1.bf16.msra.mxu0 %v7181
        %7351 = vmatprep.subr.bf16.mxu0 0
        %7352 = vmatpush1.bf16.msra.mxu0 %v7182
        %7353 = vmatprep.subr.bf16.mxu0 0
        %7354 = vmatpush1.bf16.msra.mxu0 %v7183
        %7355 = vmatprep.subr.bf16.mxu0 0
        %7356 = vmatpush1.bf16.msra.mxu0 %v7184
        %7357 = vmatprep.subr.bf16.mxu0 0
        %7358 = vmatpush1.bf16.msra.mxu0 %v7185
        %7359 = vmatprep.subr.bf16.mxu0 0
        %7360 = vmatpush1.bf16.msra.mxu0 %v7186
        %7361 = vmatprep.subr.bf16.mxu0 0
        %7362 = vmatpush1.bf16.msra.mxu0 %v7187
        %7363 = vmatprep.subr.bf16.mxu0 0
        %7364 = vmatpush1.bf16.msra.mxu0 %v7188
        %7365 = vmatprep.subr.bf16.mxu0 0
        %7366 = vmatpush1.bf16.msra.mxu0 0
        %7367 = vmatprep.subr.bf16.mxu0 0
        %7368 = vmatpush1.bf16.msra.mxu0 0
        %7369 = vmatprep.subr.bf16.mxu0 0
        %7370 = vmatpush1.bf16.msra.mxu0 0
        %7371 = vmatprep.subr.bf16.mxu0 0
        %7372 = vmatpush1.bf16.msra.mxu0 0
        %7373 = vmatprep.subr.bf16.mxu0 0
        %7374 = vmatpush1.bf16.msra.mxu0 0
        %7375 = vmatprep.subr.bf16.mxu0 0
        %7376 = vmatpush1.bf16.msra.mxu0 0
        %7377 = vmatprep.subr.bf16.mxu0 0
        %7378 = vmatpush1.bf16.msra.mxu0 0
        %7379 = vmatprep.subr.bf16.mxu0 0
        %7380 = vmatpush1.bf16.msra.mxu0 0
        %7381 = vmatprep.mubr.bf16.mxu0 0
        %7382 = vmatmul.mubr.bf16.gmra.mrb[0].mxu0 %v7347
        %v7383 = vpop.f32.mrb[0].mxu0
        %v7384 = vadd.f32 0.0, %v7383
        %v7385 = vpop.f32.mrb[0].mxu0
        %v7386 = vpop.f32.mrb[0].mxu0
        %v7387 = vadd.f32 0.0, %v7386
        %v7388 = vpop.f32.mrb[0].mxu0
        %7389 = vmatprep.mubr.bf16.mxu0 0
        %7390 = vmatmul.mubr.bf16.gmra.mrb[0].mxu0 %v7348
        %v7391 = vpop.f32.mrb[0].mxu0
        %v7392 = vadd.f32 0.0, %v7391
        %v7393 = vpop.f32.mrb[0].mxu0
        %v7394 = vpop.f32.mrb[0].mxu0
        %v7395 = vadd.f32 0.0, %v7394
        %v7396 = vpop.f32.mrb[0].mxu0
        %7397 = vdwg.mxu0
        %v7398 = vpack.c.bf16 %v5986, %v5985
        %v7399 = vpack.c.bf16 %v5988, %v5987
        %7402 = vrot.lane.b32.xlu0 %v5995, 96
        %v7403 = vpop.permute.xlu0 %7402
        %7404 = vrot.lane.b32.xlu0 %v5996, 96
        %v7405 = vpop.permute.xlu0 %7404
        %7408 = vmatprep.subr.bf16.mxu0 0
        %7409 = vmatpush1.bf16.msra.mxu0 %v7403
        %7410 = vmatprep.subr.bf16.mxu0 0
        %7411 = vmatpush1.bf16.msra.mxu0 %v7405
        %7412 = vmatprep.subr.bf16.mxu0 0
        %7413 = vmatpush1.bf16.msra.mxu0 0
        %7414 = vmatprep.subr.bf16.mxu0 0
        %7415 = vmatpush1.bf16.msra.mxu0 0
        %7416 = vmatprep.subr.bf16.mxu0 0
        %7417 = vmatpush1.bf16.msra.mxu0 0
        %7418 = vmatprep.subr.bf16.mxu0 0
        %7419 = vmatpush1.bf16.msra.mxu0 0
        %7420 = vmatprep.subr.bf16.mxu0 0
        %7421 = vmatpush1.bf16.msra.mxu0 0
        %7422 = vmatprep.subr.bf16.mxu0 0
        %7423 = vmatpush1.bf16.msra.mxu0 0
        %7424 = vmatprep.subr.bf16.mxu0 0
        %7425 = vmatpush1.bf16.msra.mxu0 0
        %7426 = vmatprep.subr.bf16.mxu0 0
        %7427 = vmatpush1.bf16.msra.mxu0 0
        %7428 = vmatprep.subr.bf16.mxu0 0
        %7429 = vmatpush1.bf16.msra.mxu0 0
        %7430 = vmatprep.subr.bf16.mxu0 0
        %7431 = vmatpush1.bf16.msra.mxu0 0
        %7432 = vmatprep.subr.bf16.mxu0 0
        %7433 = vmatpush1.bf16.msra.mxu0 0
        %7434 = vmatprep.subr.bf16.mxu0 0
        %7435 = vmatpush1.bf16.msra.mxu0 0
        %7436 = vmatprep.subr.bf16.mxu0 0
        %7437 = vmatpush1.bf16.msra.mxu0 0
        %7438 = vmatprep.subr.bf16.mxu0 0
        %7439 = vmatpush1.bf16.msra.mxu0 0
        %7440 = vmatprep.mubr.bf16.mxu0 0
        %7441 = vmatmul.mubr.bf16.gmra.mrb[0].mxu0 %v2740
        %v7442 = vpop.f32.mrb[0].mxu0
        %v7443 = vadd.f32 0.0, %v7442
        %v7444 = vpop.f32.mrb[0].mxu0
        %v7445 = vpop.f32.mrb[0].mxu0
        %v7446 = vadd.f32 0.0, %v7445
        %v7447 = vpop.f32.mrb[0].mxu0
        %7448 = vmatprep.mubr.bf16.mxu0 0
        %7449 = vmatmul.mubr.bf16.gmra.mrb[0].mxu0 %v2743
        %v7450 = vpop.f32.mrb[0].mxu0
        %v7451 = vadd.f32 0.0, %v7450
        %v7452 = vpop.f32.mrb[0].mxu0
        %v7453 = vpop.f32.mrb[0].mxu0
        %v7454 = vadd.f32 0.0, %v7453
        %v7455 = vpop.f32.mrb[0].mxu0
        %7456 = vmatprep.mubr.bf16.mxu0 0
        %7457 = vmatmul.mubr.bf16.gmra.mrb[0].mxu0 %v2746
        %v7458 = vpop.f32.mrb[0].mxu0
        %v7459 = vadd.f32 0.0, %v7458
        %v7460 = vpop.f32.mrb[0].mxu0
        %v7461 = vpop.f32.mrb[0].mxu0
        %v7462 = vadd.f32 0.0, %v7461
        %v7463 = vpop.f32.mrb[0].mxu0
        %7464 = vmatprep.mubr.bf16.mxu0 0
        %7465 = vmatmul.mubr.bf16.gmra.mrb[0].mxu0 %v2749
        %v7466 = vpop.f32.mrb[0].mxu0
        %v7467 = vadd.f32 0.0, %v7466
        %v7468 = vpop.f32.mrb[0].mxu0
        %v7469 = vpop.f32.mrb[0].mxu0
        %v7470 = vadd.f32 0.0, %v7469
        %v7471 = vpop.f32.mrb[0].mxu0
        %7472 = vmatprep.mubr.bf16.mxu0 0
        %7473 = vmatmul.mubr.bf16.gmra.mrb[0].mxu0 %v2752
        %v7474 = vpop.f32.mrb[0].mxu0
        %v7475 = vadd.f32 0.0, %v7474
        %v7476 = vpop.f32.mrb[0].mxu0
        %v7477 = vpop.f32.mrb[0].mxu0
        %v7478 = vadd.f32 0.0, %v7477
        %v7479 = vpop.f32.mrb[0].mxu0
        %7480 = vmatprep.mubr.bf16.mxu0 0
        %7481 = vmatmul.mubr.bf16.gmra.mrb[0].mxu0 %v2755
        %v7482 = vpop.f32.mrb[0].mxu0
        %v7483 = vadd.f32 0.0, %v7482
        %v7484 = vpop.f32.mrb[0].mxu0
        %v7485 = vpop.f32.mrb[0].mxu0
        %v7486 = vadd.f32 0.0, %v7485
        %v7487 = vpop.f32.mrb[0].mxu0
        %7488 = vmatprep.mubr.bf16.mxu0 0
        %7489 = vmatmul.mubr.bf16.gmra.mrb[0].mxu0 %v2758
        %v7490 = vpop.f32.mrb[0].mxu0
        %v7491 = vadd.f32 0.0, %v7490
        %v7492 = vpop.f32.mrb[0].mxu0
        %v7493 = vpop.f32.mrb[0].mxu0
        %v7494 = vadd.f32 0.0, %v7493
        %v7495 = vpop.f32.mrb[0].mxu0
        %7496 = vmatprep.mubr.bf16.mxu0 0
        %7497 = vmatmul.mubr.bf16.gmra.mrb[0].mxu0 %v2761
        %v7498 = vpop.f32.mrb[0].mxu0
        %v7499 = vadd.f32 0.0, %v7498
        %v7500 = vpop.f32.mrb[0].mxu0
        %v7501 = vpop.f32.mrb[0].mxu0
        %v7502 = vadd.f32 0.0, %v7501
        %v7503 = vpop.f32.mrb[0].mxu0
        %7504 = vdwg.mxu0
        %v7505 = vmul.f32 %v7443, %v2860
        %v7506 = vmul.f32 %v7446, %v2861
        %v7507 = vmul.f32 %v7451, %v2862
        %v7508 = vmul.f32 %v7454, %v2863
        %v7509 = vmul.f32 %v7459, %v2864
        %v7510 = vmul.f32 %v7462, %v2865
        %v7511 = vmul.f32 %v7467, %v2866
        %v7512 = vmul.f32 %v7470, %v2867
        %v7513 = vmul.f32 %v7475, %v2868
        %v7514 = vmul.f32 %v7478, %v2869
        %v7515 = vmul.f32 %v7483, %v2870
        %v7516 = vmul.f32 %v7486, %v2871
        %v7517 = vmul.f32 %v7491, %v2872
        %v7518 = vmul.f32 %v7494, %v2873
        %v7519 = vmul.f32 %v7499, %v2874
        %v7520 = vmul.f32 %v7502, %v2875
        %v7521 = vpack.c.bf16 %v7506, %v7505
        %v7522 = vpack.c.bf16 %v7508, %v7507
        %v7523 = vpack.c.bf16 %v7510, %v7509
        %v7524 = vpack.c.bf16 %v7512, %v7511
        %v7525 = vpack.c.bf16 %v7514, %v7513
        %v7526 = vpack.c.bf16 %v7516, %v7515
        %v7527 = vpack.c.bf16 %v7518, %v7517
        %v7528 = vpack.c.bf16 %v7520, %v7519
        %7529 = vrot.lane.b32.xlu0 %v5995, 64
        %v7530 = vpop.permute.xlu0 %7529
        %7531 = vrot.lane.b32.xlu0 %v5996, 64
        %v7532 = vpop.permute.xlu0 %7531
        %7535 = vmatprep.subr.bf16.mxu0 0
        %7536 = vmatpush1.bf16.msra.mxu0 %v7530
        %7537 = vmatprep.subr.bf16.mxu0 0
        %7538 = vmatpush1.bf16.msra.mxu0 %v7532
        %7539 = vmatprep.subr.bf16.mxu0 0
        %7540 = vmatpush1.bf16.msra.mxu0 0
        %7541 = vmatprep.subr.bf16.mxu0 0
        %7542 = vmatpush1.bf16.msra.mxu0 0
        %7543 = vmatprep.subr.bf16.mxu0 0
        %7544 = vmatpush1.bf16.msra.mxu0 0
        %7545 = vmatprep.subr.bf16.mxu0 0
        %7546 = vmatpush1.bf16.msra.mxu0 0
        %7547 = vmatprep.subr.bf16.mxu0 0
        %7548 = vmatpush1.bf16.msra.mxu0 0
        %7549 = vmatprep.subr.bf16.mxu0 0
        %7550 = vmatpush1.bf16.msra.mxu0 0
        %7551 = vmatprep.subr.bf16.mxu0 0
        %7552 = vmatpush1.bf16.msra.mxu0 0
        %7553 = vmatprep.subr.bf16.mxu0 0
        %7554 = vmatpush1.bf16.msra.mxu0 0
        %7555 = vmatprep.subr.bf16.mxu0 0
        %7556 = vmatpush1.bf16.msra.mxu0 0
        %7557 = vmatprep.subr.bf16.mxu0 0
        %7558 = vmatpush1.bf16.msra.mxu0 0
        %7559 = vmatprep.subr.bf16.mxu0 0
        %7560 = vmatpush1.bf16.msra.mxu0 0
        %7561 = vmatprep.subr.bf16.mxu0 0
        %7562 = vmatpush1.bf16.msra.mxu0 0
        %7563 = vmatprep.subr.bf16.mxu0 0
        %7564 = vmatpush1.bf16.msra.mxu0 0
        %7565 = vmatprep.subr.bf16.mxu0 0
        %7566 = vmatpush1.bf16.msra.mxu0 0
        %7567 = vmatprep.mubr.bf16.mxu0 0
        %7568 = vmatmul.mubr.bf16.gmra.mrb[0].mxu0 %v2740
        %v7569 = vpop.f32.mrb[0].mxu0
        %v7570 = vadd.f32 0.0, %v7569
        %v7571 = vpop.f32.mrb[0].mxu0
        %v7572 = vpop.f32.mrb[0].mxu0
        %v7573 = vadd.f32 0.0, %v7572
        %v7574 = vpop.f32.mrb[0].mxu0
        %7575 = vmatprep.mubr.bf16.mxu0 0
        %7576 = vmatmul.mubr.bf16.gmra.mrb[0].mxu0 %v2743
        %v7577 = vpop.f32.mrb[0].mxu0
        %v7578 = vadd.f32 0.0, %v7577
        %v7579 = vpop.f32.mrb[0].mxu0
        %v7580 = vpop.f32.mrb[0].mxu0
        %v7581 = vadd.f32 0.0, %v7580
        %v7582 = vpop.f32.mrb[0].mxu0
        %7583 = vmatprep.mubr.bf16.mxu0 0
        %7584 = vmatmul.mubr.bf16.gmra.mrb[0].mxu0 %v2746
        %v7585 = vpop.f32.mrb[0].mxu0
        %v7586 = vadd.f32 0.0, %v7585
        %v7587 = vpop.f32.mrb[0].mxu0
        %v7588 = vpop.f32.mrb[0].mxu0
        %v7589 = vadd.f32 0.0, %v7588
        %v7590 = vpop.f32.mrb[0].mxu0
        %7591 = vmatprep.mubr.bf16.mxu0 0
        %7592 = vmatmul.mubr.bf16.gmra.mrb[0].mxu0 %v2749
        %v7593 = vpop.f32.mrb[0].mxu0
        %v7594 = vadd.f32 0.0, %v7593
        %v7595 = vpop.f32.mrb[0].mxu0
        %v7596 = vpop.f32.mrb[0].mxu0
        %v7597 = vadd.f32 0.0, %v7596
        %v7598 = vpop.f32.mrb[0].mxu0
        %7599 = vmatprep.mubr.bf16.mxu0 0
        %7600 = vmatmul.mubr.bf16.gmra.mrb[0].mxu0 %v2752
        %v7601 = vpop.f32.mrb[0].mxu0
        %v7602 = vadd.f32 0.0, %v7601
        %v7603 = vpop.f32.mrb[0].mxu0
        %v7604 = vpop.f32.mrb[0].mxu0
        %v7605 = vadd.f32 0.0, %v7604
        %v7606 = vpop.f32.mrb[0].mxu0
        %7607 = vmatprep.mubr.bf16.mxu0 0
        %7608 = vmatmul.mubr.bf16.gmra.mrb[0].mxu0 %v2755
        %v7609 = vpop.f32.mrb[0].mxu0
        %v7610 = vadd.f32 0.0, %v7609
        %v7611 = vpop.f32.mrb[0].mxu0
        %v7612 = vpop.f32.mrb[0].mxu0
        %v7613 = vadd.f32 0.0, %v7612
        %v7614 = vpop.f32.mrb[0].mxu0
        %7615 = vmatprep.mubr.bf16.mxu0 0
        %7616 = vmatmul.mubr.bf16.gmra.mrb[0].mxu0 %v2758
        %v7617 = vpop.f32.mrb[0].mxu0
        %v7618 = vadd.f32 0.0, %v7617
        %v7619 = vpop.f32.mrb[0].mxu0
        %v7620 = vpop.f32.mrb[0].mxu0
        %v7621 = vadd.f32 0.0, %v7620
        %v7622 = vpop.f32.mrb[0].mxu0
        %7623 = vmatprep.mubr.bf16.mxu0 0
        %7624 = vmatmul.mubr.bf16.gmra.mrb[0].mxu0 %v2761
        %v7625 = vpop.f32.mrb[0].mxu0
        %v7626 = vadd.f32 0.0, %v7625
        %v7627 = vpop.f32.mrb[0].mxu0
        %v7628 = vpop.f32.mrb[0].mxu0
        %v7629 = vadd.f32 0.0, %v7628
        %v7630 = vpop.f32.mrb[0].mxu0
        %7631 = vdwg.mxu0
        %v7632 = vmul.f32 %v7570, %v2860
        %v7633 = vmul.f32 %v7573, %v2861
        %v7634 = vmul.f32 %v7578, %v2862
        %v7635 = vmul.f32 %v7581, %v2863
        %v7636 = vmul.f32 %v7586, %v2864
        %v7637 = vmul.f32 %v7589, %v2865
        %v7638 = vmul.f32 %v7594, %v2866
        %v7639 = vmul.f32 %v7597, %v2867
        %v7640 = vmul.f32 %v7602, %v2868
        %v7641 = vmul.f32 %v7605, %v2869
        %v7642 = vmul.f32 %v7610, %v2870
        %v7643 = vmul.f32 %v7613, %v2871
        %v7644 = vmul.f32 %v7618, %v2872
        %v7645 = vmul.f32 %v7621, %v2873
        %v7646 = vmul.f32 %v7626, %v2874
        %v7647 = vmul.f32 %v7629, %v2875
        %v7648 = vpack.c.bf16 %v7633, %v7632
        %v7649 = vpack.c.bf16 %v7635, %v7634
        %v7650 = vpack.c.bf16 %v7637, %v7636
        %v7651 = vpack.c.bf16 %v7639, %v7638
        %v7652 = vpack.c.bf16 %v7641, %v7640
        %v7653 = vpack.c.bf16 %v7643, %v7642
        %v7654 = vpack.c.bf16 %v7645, %v7644
        %v7655 = vpack.c.bf16 %v7647, %v7646
        %v7657 = vsel %vm2277, %v7398, 0
        %v7660 = vsel %vm2277, %v7399, 0
        %v7663 = vsel %vm2277, %v7521, 0
        %v7666 = vsel %vm2277, %v7522, 0
        %v7669 = vsel %vm2277, %v7523, 0
        %v7672 = vsel %vm2277, %v7524, 0
        %v7675 = vsel %vm2277, %v7525, 0
        %v7678 = vsel %vm2277, %v7526, 0
        %v7681 = vsel %vm2277, %v7527, 0
        %v7684 = vsel %vm2277, %v7528, 0
        %7686 = vmatprep.subr.bf16.mxu0 0
        %7687 = vmatpush1.bf16.xpose.msra.mxu0 %v7663
        %7688 = vmatprep.subr.bf16.mxu0 0
        %7689 = vmatpush1.bf16.xpose.msra.mxu0 %v7666
        %7690 = vmatprep.subr.bf16.mxu0 0
        %7691 = vmatpush1.bf16.xpose.msra.mxu0 %v7669
        %7692 = vmatprep.subr.bf16.mxu0 0
        %7693 = vmatpush1.bf16.xpose.msra.mxu0 %v7672
        %7694 = vmatprep.subr.bf16.mxu0 0
        %7695 = vmatpush1.bf16.xpose.msra.mxu0 %v7675
        %7696 = vmatprep.subr.bf16.mxu0 0
        %7697 = vmatpush1.bf16.xpose.msra.mxu0 %v7678
        %7698 = vmatprep.subr.bf16.mxu0 0
        %7699 = vmatpush1.bf16.xpose.msra.mxu0 %v7681
        %7700 = vmatprep.subr.bf16.mxu0 0
        %7701 = vmatpush1.bf16.xpose.msra.mxu0 %v7684
        %7702 = vmatprep.subr.bf16.mxu0 0
        %7703 = vmatpush1.bf16.xpose.msra.mxu0 0
        %7704 = vmatprep.subr.bf16.mxu0 0
        %7705 = vmatpush1.bf16.xpose.msra.mxu0 0
        %7706 = vmatprep.subr.bf16.mxu0 0
        %7707 = vmatpush1.bf16.xpose.msra.mxu0 0
        %7708 = vmatprep.subr.bf16.mxu0 0
        %7709 = vmatpush1.bf16.xpose.msra.mxu0 0
        %7710 = vmatprep.subr.bf16.mxu0 0
        %7711 = vmatpush1.bf16.xpose.msra.mxu0 0
        %7712 = vmatprep.subr.bf16.mxu0 0
        %7713 = vmatpush1.bf16.xpose.msra.mxu0 0
        %7714 = vmatprep.subr.bf16.mxu0 0
        %7715 = vmatpush1.bf16.xpose.msra.mxu0 0
        %7716 = vmatprep.subr.bf16.mxu0 0
        %7717 = vmatpush1.bf16.xpose.msra.mxu0 0
        %7718 = vmatprep.mubr.bf16.mxu0 0
        %7719 = vmatmul.mubr.bf16.gmra.mrb[0].mxu0 %v7657
        %v7720 = vpop.f32.mrb[0].mxu0
        %v7721 = vadd.f32 0.0, %v7720
        %v7722 = vpop.f32.mrb[0].mxu0
        %v7723 = vpop.f32.mrb[0].mxu0
        %v7724 = vadd.f32 0.0, %v7723
        %v7725 = vpop.f32.mrb[0].mxu0
        %7726 = vmatprep.mubr.bf16.mxu0 0
        %7727 = vmatmul.mubr.bf16.gmra.mrb[0].mxu0 %v7660
        %v7728 = vpop.f32.mrb[0].mxu0
        %v7729 = vadd.f32 0.0, %v7728
        %v7730 = vpop.f32.mrb[0].mxu0
        %v7731 = vpop.f32.mrb[0].mxu0
        %v7732 = vadd.f32 0.0, %v7731
        %v7733 = vpop.f32.mrb[0].mxu0
        %7734 = vdwg.mxu0
        %7735 = vmax.xlane.f32.xlu0 %v7721
        %v7736 = vpop.xlane.xlu0 %7735
        %7737 = vmax.xlane.f32.xlu0 %v7724
        %v7738 = vpop.xlane.xlu0 %7737
        %7739 = vmax.xlane.f32.xlu0 %v7729
        %v7740 = vpop.xlane.xlu0 %7739
        %7741 = vmax.xlane.f32.xlu0 %v7732
        %v7742 = vpop.xlane.xlu0 %7741
        %v7743 = vsub.f32 %v7721, %v7736
        %v7744 = vsub.f32 %v7724, %v7738
        %v7745 = vsub.f32 %v7729, %v7740
        %v7746 = vsub.f32 %v7732, %v7742
        %v7747 = vmul.f32 %v7743, 1.442695
        %v7748 = vpow.pop %v7747
        %v7749 = vmul.f32 %v7744, 1.442695
        %v7750 = vpow.pop %v7749
        %v7751 = vmul.f32 %v7745, 1.442695
        %v7752 = vpow.pop %v7751
        %v7753 = vmul.f32 %v7746, 1.442695
        %v7754 = vpow.pop %v7753
        %v7755 = vpack.c.bf16 %v7750, %v7748
        %v7756 = vpack.c.bf16 %v7754, %v7752
        %7757 = vmatprep.subr.bf16.mxu0 0
        %7758 = vmatpush1.bf16.msra.mxu0 %v3160
        %7759 = vmatprep.subr.bf16.mxu0 0
        %7760 = vmatpush1.bf16.msra.mxu0 %v3161
        %7761 = vmatprep.subr.bf16.mxu0 0
        %7762 = vmatpush1.bf16.msra.mxu0 %v3162
        %7763 = vmatprep.subr.bf16.mxu0 0
        %7764 = vmatpush1.bf16.msra.mxu0 %v3163
        %7765 = vmatprep.subr.bf16.mxu0 0
        %7766 = vmatpush1.bf16.msra.mxu0 %v3164
        %7767 = vmatprep.subr.bf16.mxu0 0
        %7768 = vmatpush1.bf16.msra.mxu0 %v3165
        %7769 = vmatprep.subr.bf16.mxu0 0
        %7770 = vmatpush1.bf16.msra.mxu0 %v3166
        %7771 = vmatprep.subr.bf16.mxu0 0
        %7772 = vmatpush1.bf16.msra.mxu0 %v3167
        %7773 = vmatprep.subr.bf16.mxu0 0
        %7774 = vmatpush1.bf16.msra.mxu0 0
        %7775 = vmatprep.subr.bf16.mxu0 0
        %7776 = vmatpush1.bf16.msra.mxu0 0
        %7777 = vmatprep.subr.bf16.mxu0 0
        %7778 = vmatpush1.bf16.msra.mxu0 0
        %7779 = vmatprep.subr.bf16.mxu0 0
        %7780 = vmatpush1.bf16.msra.mxu0 0
        %7781 = vmatprep.subr.bf16.mxu0 0
        %7782 = vmatpush1.bf16.msra.mxu0 0
        %7783 = vmatprep.subr.bf16.mxu0 0
        %7784 = vmatpush1.bf16.msra.mxu0 0
        %7785 = vmatprep.subr.bf16.mxu0 0
        %7786 = vmatpush1.bf16.msra.mxu0 0
        %7787 = vmatprep.subr.bf16.mxu0 0
        %7788 = vmatpush1.bf16.msra.mxu0 0
        %7789 = vmatprep.mubr.bf16.mxu0 0
        %7790 = vmatmul.mubr.bf16.gmra.mrb[0].mxu0 %v7755
        %v7791 = vpop.f32.mrb[0].mxu0
        %v7792 = vadd.f32 0.0, %v7791
        %v7793 = vpop.f32.mrb[0].mxu0
        %v7794 = vpop.f32.mrb[0].mxu0
        %v7795 = vadd.f32 0.0, %v7794
        %v7796 = vpop.f32.mrb[0].mxu0
        %7797 = vmatprep.mubr.bf16.mxu0 0
        %7798 = vmatmul.mubr.bf16.gmra.mrb[0].mxu0 %v7756
        %v7799 = vpop.f32.mrb[0].mxu0
        %v7800 = vadd.f32 0.0, %v7799
        %v7801 = vpop.f32.mrb[0].mxu0
        %v7802 = vpop.f32.mrb[0].mxu0
        %v7803 = vadd.f32 0.0, %v7802
        %v7804 = vpop.f32.mrb[0].mxu0
        %7805 = vdwg.mxu0
        %v7806 = vrcp.pop %v7792
        %v7807 = vrcp.pop %v7795
        %v7808 = vrcp.pop %v7800
        %v7809 = vrcp.pop %v7803
        %v7810 = vmul.f32 %v7748, %v7806
        %v7811 = vmul.f32 %v7750, %v7807
        %v7812 = vmul.f32 %v7752, %v7808
        %v7813 = vmul.f32 %v7754, %v7809
        %v7814 = vpack.c.bf16 %v7811, %v7810
        %v7815 = vpack.c.bf16 %v7813, %v7812
        %7816 = vmatprep.subr.bf16.mxu0 0
        %7817 = vmatpush1.bf16.msra.mxu0 %v7648
        %7818 = vmatprep.subr.bf16.mxu0 0
        %7819 = vmatpush1.bf16.msra.mxu0 %v7649
        %7820 = vmatprep.subr.bf16.mxu0 0
        %7821 = vmatpush1.bf16.msra.mxu0 %v7650
        %7822 = vmatprep.subr.bf16.mxu0 0
        %7823 = vmatpush1.bf16.msra.mxu0 %v7651
        %7824 = vmatprep.subr.bf16.mxu0 0
        %7825 = vmatpush1.bf16.msra.mxu0 %v7652
        %7826 = vmatprep.subr.bf16.mxu0 0
        %7827 = vmatpush1.bf16.msra.mxu0 %v7653
        %7828 = vmatprep.subr.bf16.mxu0 0
        %7829 = vmatpush1.bf16.msra.mxu0 %v7654
        %7830 = vmatprep.subr.bf16.mxu0 0
        %7831 = vmatpush1.bf16.msra.mxu0 %v7655
        %7832 = vmatprep.subr.bf16.mxu0 0
        %7833 = vmatpush1.bf16.msra.mxu0 0
        %7834 = vmatprep.subr.bf16.mxu0 0
        %7835 = vmatpush1.bf16.msra.mxu0 0
        %7836 = vmatprep.subr.bf16.mxu0 0
        %7837 = vmatpush1.bf16.msra.mxu0 0
        %7838 = vmatprep.subr.bf16.mxu0 0
        %7839 = vmatpush1.bf16.msra.mxu0 0
        %7840 = vmatprep.subr.bf16.mxu0 0
        %7841 = vmatpush1.bf16.msra.mxu0 0
        %7842 = vmatprep.subr.bf16.mxu0 0
        %7843 = vmatpush1.bf16.msra.mxu0 0
        %7844 = vmatprep.subr.bf16.mxu0 0
        %7845 = vmatpush1.bf16.msra.mxu0 0
        %7846 = vmatprep.subr.bf16.mxu0 0
        %7847 = vmatpush1.bf16.msra.mxu0 0
        %7848 = vmatprep.mubr.bf16.mxu0 0
        %7849 = vmatmul.mubr.bf16.gmra.mrb[0].mxu0 %v7814
        %v7850 = vpop.f32.mrb[0].mxu0
        %v7851 = vadd.f32 0.0, %v7850
        %v7852 = vpop.f32.mrb[0].mxu0
        %v7853 = vpop.f32.mrb[0].mxu0
        %v7854 = vadd.f32 0.0, %v7853
        %v7855 = vpop.f32.mrb[0].mxu0
        %7856 = vmatprep.mubr.bf16.mxu0 0
        %7857 = vmatmul.mubr.bf16.gmra.mrb[0].mxu0 %v7815
        %v7858 = vpop.f32.mrb[0].mxu0
        %v7859 = vadd.f32 0.0, %v7858
        %v7860 = vpop.f32.mrb[0].mxu0
        %v7861 = vpop.f32.mrb[0].mxu0
        %v7862 = vadd.f32 0.0, %v7861
        %v7863 = vpop.f32.mrb[0].mxu0
        %7864 = vdwg.mxu0
        %v7865 = vpack.c.bf16 %v6453, %v6450
        %v7866 = vpack.c.bf16 %v6461, %v6458
        %v7867 = vpack.c.bf16 %v6920, %v6917
        %v7868 = vpack.c.bf16 %v6928, %v6925
        %v7869 = vpack.c.bf16 %v7387, %v7384
        %v7870 = vpack.c.bf16 %v7395, %v7392
        %v7871 = vpack.c.bf16 %v7854, %v7851
        %v7872 = vpack.c.bf16 %v7862, %v7859
        %s7873 = scalar_lea.vmem %s5, 16
        %v7874 = vld [vmem:[%s7873] sm:$0xf]
        %v7875 = vld [vmem:[%s7873 + $0x4] sm:$0xf]
        %v7876 = vld [vmem:[%s7873 + $0x8] sm:$0xf]
        %v7877 = vld [vmem:[%s7873 + $0xc] sm:$0xf]
        %v7878 = vlaneseq
        %v7879 = vshrl.u32 %v7878, 7
        %v7880 = vsub.s32 1, %v7879
        %v7881 = vrot.slane %v5822, %v7880
        %v7886 = vunpack.c.l.b16 %v7874
        %v7887 = vunpack.c.l.b16 %v7875
        %v7888 = vunpack.c.l.b16 %v7876
        %v7889 = vunpack.c.l.b16 %v7877
        %v7890 = vpack.c.b16 %v7887, %v7886
        %v7891 = vpack.c.b16 %v7889, %v7888
        %v7895 = vsel %vm2277, %v7865, 0
        %v7898 = vsel %vm2277, %v7866, 0
        %v7901 = vsel %vm2277, %v7867, 0
        %v7904 = vsel %vm2277, %v7868, 0
        %v7907 = vsel %vm2277, %v7869, 0
        %v7910 = vsel %vm2277, %v7870, 0
        %v7913 = vsel %vm2277, %v7871, 0
        %v7916 = vsel %vm2277, %v7872, 0
        %7918 = vmatprep.subr.bf16.mxu0 0
        %7919 = vmatpush1.bf16.msra.mxu0 %v7890
        %7920 = vmatprep.subr.bf16.mxu0 0
        %7921 = vmatpush1.bf16.msra.mxu0 %v7891
        %7922 = vmatprep.subr.bf16.mxu0 0
        %7923 = vmatpush1.bf16.msra.mxu0 0
        %7924 = vmatprep.subr.bf16.mxu0 0
        %7925 = vmatpush1.bf16.msra.mxu0 0
        %7926 = vmatprep.subr.bf16.mxu0 0
        %7927 = vmatpush1.bf16.msra.mxu0 0
        %7928 = vmatprep.subr.bf16.mxu0 0
        %7929 = vmatpush1.bf16.msra.mxu0 0
        %7930 = vmatprep.subr.bf16.mxu0 0
        %7931 = vmatpush1.bf16.msra.mxu0 0
        %7932 = vmatprep.subr.bf16.mxu0 0
        %7933 = vmatpush1.bf16.msra.mxu0 0
        %7934 = vmatprep.subr.bf16.mxu0 0
        %7935 = vmatpush1.bf16.msra.mxu0 0
        %7936 = vmatprep.subr.bf16.mxu0 0
        %7937 = vmatpush1.bf16.msra.mxu0 0
        %7938 = vmatprep.subr.bf16.mxu0 0
        %7939 = vmatpush1.bf16.msra.mxu0 0
        %7940 = vmatprep.subr.bf16.mxu0 0
        %7941 = vmatpush1.bf16.msra.mxu0 0
        %7942 = vmatprep.subr.bf16.mxu0 0
        %7943 = vmatpush1.bf16.msra.mxu0 0
        %7944 = vmatprep.subr.bf16.mxu0 0
        %7945 = vmatpush1.bf16.msra.mxu0 0
        %7946 = vmatprep.subr.bf16.mxu0 0
        %7947 = vmatpush1.bf16.msra.mxu0 0
        %7948 = vmatprep.subr.bf16.mxu0 0
        %7949 = vmatpush1.bf16.msra.mxu0 0
        %7950 = vmatprep.mubr.bf16.mxu0 0
        %7951 = vmatmul.mubr.bf16.gmra.mrb[0].mxu0 %v7895
        %v7952 = vpop.f32.mrb[0].mxu0
        %v7953 = vadd.f32 %v7881, %v7952
        %v7954 = vpop.f32.mrb[0].mxu0
        %v7955 = vpop.f32.mrb[0].mxu0
        %v7956 = vadd.f32 %v7881, %v7955
        %v7957 = vpop.f32.mrb[0].mxu0
        %7958 = vmatprep.mubr.bf16.mxu0 0
        %7959 = vmatmul.mubr.bf16.gmra.mrb[0].mxu0 %v7898
        %v7960 = vpop.f32.mrb[0].mxu0
        %v7961 = vadd.f32 %v7881, %v7960
        %v7962 = vpop.f32.mrb[0].mxu0
        %v7963 = vpop.f32.mrb[0].mxu0
        %v7964 = vadd.f32 %v7881, %v7963
        %v7965 = vpop.f32.mrb[0].mxu0
        %7966 = vmatprep.mubr.bf16.mxu0 0
        %7967 = vmatmul.mubr.bf16.gmra.mrb[0].mxu0 %v7901
        %v7968 = vpop.f32.mrb[0].mxu0
        %v7969 = vadd.f32 %v7881, %v7968
        %v7970 = vpop.f32.mrb[0].mxu0
        %v7971 = vpop.f32.mrb[0].mxu0
        %v7972 = vadd.f32 %v7881, %v7971
        %v7973 = vpop.f32.mrb[0].mxu0
        %7974 = vmatprep.mubr.bf16.mxu0 0
        %7975 = vmatmul.mubr.bf16.gmra.mrb[0].mxu0 %v7904
        %v7976 = vpop.f32.mrb[0].mxu0
        %v7977 = vadd.f32 %v7881, %v7976
        %v7978 = vpop.f32.mrb[0].mxu0
        %v7979 = vpop.f32.mrb[0].mxu0
        %v7980 = vadd.f32 %v7881, %v7979
        %v7981 = vpop.f32.mrb[0].mxu0
        %7982 = vmatprep.mubr.bf16.mxu0 0
        %7983 = vmatmul.mubr.bf16.gmra.mrb[0].mxu0 %v7907
        %v7984 = vpop.f32.mrb[0].mxu0
        %v7985 = vadd.f32 %v7881, %v7984
        %v7986 = vpop.f32.mrb[0].mxu0
        %v7987 = vpop.f32.mrb[0].mxu0
        %v7988 = vadd.f32 %v7881, %v7987
        %v7989 = vpop.f32.mrb[0].mxu0
        %7990 = vmatprep.mubr.bf16.mxu0 0
        %7991 = vmatmul.mubr.bf16.gmra.mrb[0].mxu0 %v7910
        %v7992 = vpop.f32.mrb[0].mxu0
        %v7993 = vadd.f32 %v7881, %v7992
        %v7994 = vpop.f32.mrb[0].mxu0
        %v7995 = vpop.f32.mrb[0].mxu0
        %v7996 = vadd.f32 %v7881, %v7995
        %v7997 = vpop.f32.mrb[0].mxu0
        %7998 = vmatprep.mubr.bf16.mxu0 0
        %7999 = vmatmul.mubr.bf16.gmra.mrb[0].mxu0 %v7913
        %v8000 = vpop.f32.mrb[0].mxu0
        %v8001 = vadd.f32 %v7881, %v8000
        %v8002 = vpop.f32.mrb[0].mxu0
        %v8003 = vpop.f32.mrb[0].mxu0
        %v8004 = vadd.f32 %v7881, %v8003
        %v8005 = vpop.f32.mrb[0].mxu0
        %8006 = vmatprep.mubr.bf16.mxu0 0
        %8007 = vmatmul.mubr.bf16.gmra.mrb[0].mxu0 %v7916
        %v8008 = vpop.f32.mrb[0].mxu0
        %v8009 = vadd.f32 %v7881, %v8008
        %v8010 = vpop.f32.mrb[0].mxu0
        %v8011 = vpop.f32.mrb[0].mxu0
        %v8012 = vadd.f32 %v7881, %v8011
        %v8013 = vpop.f32.mrb[0].mxu0
        %8014 = vdwg.mxu0
        %v8015 = vadd.f32 %v5805, %v7953
        %v8016 = vadd.f32 %v5806, %v7956
        %v8017 = vadd.f32 %v5807, %v7961
        %v8018 = vadd.f32 %v5808, %v7964
        %v8019 = vadd.f32 %v5809, %v7969
        %v8020 = vadd.f32 %v5810, %v7972
        %v8021 = vadd.f32 %v5811, %v7977
        %v8022 = vadd.f32 %v5812, %v7980
        %v8023 = vadd.f32 %v5813, %v7985
        %v8024 = vadd.f32 %v5814, %v7988
        %v8025 = vadd.f32 %v5815, %v7993
        %v8026 = vadd.f32 %v5816, %v7996
        %v8027 = vadd.f32 %v5817, %v8001
        %v8028 = vadd.f32 %v5818, %v8004
        %v8029 = vadd.f32 %v5819, %v8009
        %v8030 = vadd.f32 %v5820, %v8012
        %v8031 = vsel %vm2277, %v8015, 0.0
        %8032 = vadd.xlane.f32.xlu0 %v8031
        %v8033 = vpop.xlane.xlu0 %8032
        %v8034 = vsel %vm2277, %v8016, 0.0
        %8035 = vadd.xlane.f32.xlu0 %v8034
        %v8036 = vpop.xlane.xlu0 %8035
        %v8037 = vsel %vm2277, %v8017, 0.0
        %8038 = vadd.xlane.f32.xlu0 %v8037
        %v8039 = vpop.xlane.xlu0 %8038
        %v8040 = vsel %vm2277, %v8018, 0.0
        %8041 = vadd.xlane.f32.xlu0 %v8040
        %v8042 = vpop.xlane.xlu0 %8041
        %v8043 = vsel %vm2277, %v8019, 0.0
        %8044 = vadd.xlane.f32.xlu0 %v8043
        %v8045 = vpop.xlane.xlu0 %8044
        %v8046 = vsel %vm2277, %v8020, 0.0
        %8047 = vadd.xlane.f32.xlu0 %v8046
        %v8048 = vpop.xlane.xlu0 %8047
        %v8049 = vsel %vm2277, %v8021, 0.0
        %8050 = vadd.xlane.f32.xlu0 %v8049
        %v8051 = vpop.xlane.xlu0 %8050
        %v8052 = vsel %vm2277, %v8022, 0.0
        %8053 = vadd.xlane.f32.xlu0 %v8052
        %v8054 = vpop.xlane.xlu0 %8053
        %v8055 = vsel %vm2277, %v8023, 0.0
        %8056 = vadd.xlane.f32.xlu0 %v8055
        %v8057 = vpop.xlane.xlu0 %8056
        %v8058 = vsel %vm2277, %v8024, 0.0
        %8059 = vadd.xlane.f32.xlu0 %v8058
        %v8060 = vpop.xlane.xlu0 %8059
        %v8061 = vsel %vm2277, %v8025, 0.0
        %8062 = vadd.xlane.f32.xlu0 %v8061
        %v8063 = vpop.xlane.xlu0 %8062
        %v8064 = vsel %vm2277, %v8026, 0.0
        %8065 = vadd.xlane.f32.xlu0 %v8064
        %v8066 = vpop.xlane.xlu0 %8065
        %v8067 = vsel %vm2277, %v8027, 0.0
        %8068 = vadd.xlane.f32.xlu0 %v8067
        %v8069 = vpop.xlane.xlu0 %8068
        %v8070 = vsel %vm2277, %v8028, 0.0
        %8071 = vadd.xlane.f32.xlu0 %v8070
        %v8072 = vpop.xlane.xlu0 %8071
        %v8073 = vsel %vm2277, %v8029, 0.0
        %8074 = vadd.xlane.f32.xlu0 %v8073
        %v8075 = vpop.xlane.xlu0 %8074
        %v8076 = vsel %vm2277, %v8030, 0.0
        %8077 = vadd.xlane.f32.xlu0 %v8076
        %v8078 = vpop.xlane.xlu0 %8077
        %v8079 = vmul.f32 %v8033, %v2326
        %v8080 = vmul.f32 %v8036, %v2326
        %v8081 = vmul.f32 %v8039, %v2326
        %v8082 = vmul.f32 %v8042, %v2326
        %v8083 = vmul.f32 %v8045, %v2326
        %v8084 = vmul.f32 %v8048, %v2326
        %v8085 = vmul.f32 %v8051, %v2326
        %v8086 = vmul.f32 %v8054, %v2326
        %v8087 = vmul.f32 %v8057, %v2326
        %v8088 = vmul.f32 %v8060, %v2326
        %v8089 = vmul.f32 %v8063, %v2326
        %v8090 = vmul.f32 %v8066, %v2326
        %v8091 = vmul.f32 %v8069, %v2326
        %v8092 = vmul.f32 %v8072, %v2326
        %v8093 = vmul.f32 %v8075, %v2326
        %v8094 = vmul.f32 %v8078, %v2326
        %v8095 = vsub.f32 %v8015, %v8079
        %v8096 = vsub.f32 %v8016, %v8080
        %v8097 = vsub.f32 %v8017, %v8081
        %v8098 = vsub.f32 %v8018, %v8082
        %v8099 = vsub.f32 %v8019, %v8083
        %v8100 = vsub.f32 %v8020, %v8084
        %v8101 = vsub.f32 %v8021, %v8085
        %v8102 = vsub.f32 %v8022, %v8086
        %v8103 = vsub.f32 %v8023, %v8087
        %v8104 = vsub.f32 %v8024, %v8088
        %v8105 = vsub.f32 %v8025, %v8089
        %v8106 = vsub.f32 %v8026, %v8090
        %v8107 = vsub.f32 %v8027, %v8091
        %v8108 = vsub.f32 %v8028, %v8092
        %v8109 = vsub.f32 %v8029, %v8093
        %v8110 = vsub.f32 %v8030, %v8094
        %v8111 = vmul.f32 %v8095, %v8095
        %v8112 = vmul.f32 %v8096, %v8096
        %v8113 = vmul.f32 %v8097, %v8097
        %v8114 = vmul.f32 %v8098, %v8098
        %v8115 = vmul.f32 %v8099, %v8099
        %v8116 = vmul.f32 %v8100, %v8100
        %v8117 = vmul.f32 %v8101, %v8101
        %v8118 = vmul.f32 %v8102, %v8102
        %v8119 = vmul.f32 %v8103, %v8103
        %v8120 = vmul.f32 %v8104, %v8104
        %v8121 = vmul.f32 %v8105, %v8105
        %v8122 = vmul.f32 %v8106, %v8106
        %v8123 = vmul.f32 %v8107, %v8107
        %v8124 = vmul.f32 %v8108, %v8108
        %v8125 = vmul.f32 %v8109, %v8109
        %v8126 = vmul.f32 %v8110, %v8110
        %v8127 = vsel %vm2277, %v8111, 0.0
        %8128 = vadd.xlane.f32.xlu0 %v8127
        %v8129 = vpop.xlane.xlu0 %8128
        %v8130 = vsel %vm2277, %v8112, 0.0
        %8131 = vadd.xlane.f32.xlu0 %v8130
        %v8132 = vpop.xlane.xlu0 %8131
        %v8133 = vsel %vm2277, %v8113, 0.0
        %8134 = vadd.xlane.f32.xlu0 %v8133
        %v8135 = vpop.xlane.xlu0 %8134
        %v8136 = vsel %vm2277, %v8114, 0.0
        %8137 = vadd.xlane.f32.xlu0 %v8136
        %v8138 = vpop.xlane.xlu0 %8137
        %v8139 = vsel %vm2277, %v8115, 0.0
        %8140 = vadd.xlane.f32.xlu0 %v8139
        %v8141 = vpop.xlane.xlu0 %8140
        %v8142 = vsel %vm2277, %v8116, 0.0
        %8143 = vadd.xlane.f32.xlu0 %v8142
        %v8144 = vpop.xlane.xlu0 %8143
        %v8145 = vsel %vm2277, %v8117, 0.0
        %8146 = vadd.xlane.f32.xlu0 %v8145
        %v8147 = vpop.xlane.xlu0 %8146
        %v8148 = vsel %vm2277, %v8118, 0.0
        %8149 = vadd.xlane.f32.xlu0 %v8148
        %v8150 = vpop.xlane.xlu0 %8149
        %v8151 = vsel %vm2277, %v8119, 0.0
        %8152 = vadd.xlane.f32.xlu0 %v8151
        %v8153 = vpop.xlane.xlu0 %8152
        %v8154 = vsel %vm2277, %v8120, 0.0
        %8155 = vadd.xlane.f32.xlu0 %v8154
        %v8156 = vpop.xlane.xlu0 %8155
        %v8157 = vsel %vm2277, %v8121, 0.0
        %8158 = vadd.xlane.f32.xlu0 %v8157
        %v8159 = vpop.xlane.xlu0 %8158
        %v8160 = vsel %vm2277, %v8122, 0.0
        %8161 = vadd.xlane.f32.xlu0 %v8160
        %v8162 = vpop.xlane.xlu0 %8161
        %v8163 = vsel %vm2277, %v8123, 0.0
        %8164 = vadd.xlane.f32.xlu0 %v8163
        %v8165 = vpop.xlane.xlu0 %8164
        %v8166 = vsel %vm2277, %v8124, 0.0
        %8167 = vadd.xlane.f32.xlu0 %v8166
        %v8168 = vpop.xlane.xlu0 %8167
        %v8169 = vsel %vm2277, %v8125, 0.0
        %8170 = vadd.xlane.f32.xlu0 %v8169
        %v8171 = vpop.xlane.xlu0 %8170
        %v8172 = vsel %vm2277, %v8126, 0.0
        %8173 = vadd.xlane.f32.xlu0 %v8172
        %v8174 = vpop.xlane.xlu0 %8173
        %v8175 = vmul.f32 %v8129, %v2326
        %v8176 = vmul.f32 %v8132, %v2326
        %v8177 = vmul.f32 %v8135, %v2326
        %v8178 = vmul.f32 %v8138, %v2326
        %v8179 = vmul.f32 %v8141, %v2326
        %v8180 = vmul.f32 %v8144, %v2326
        %v8181 = vmul.f32 %v8147, %v2326
        %v8182 = vmul.f32 %v8150, %v2326
        %v8183 = vmul.f32 %v8153, %v2326
        %v8184 = vmul.f32 %v8156, %v2326
        %v8185 = vmul.f32 %v8159, %v2326
        %v8186 = vmul.f32 %v8162, %v2326
        %v8187 = vmul.f32 %v8165, %v2326
        %v8188 = vmul.f32 %v8168, %v2326
        %v8189 = vmul.f32 %v8171, %v2326
        %v8190 = vmul.f32 %v8174, %v2326
        %v8191 = vadd.f32 %v8175, 1e-05
        %v8192 = vadd.f32 %v8176, 1e-05
        %v8193 = vadd.f32 %v8177, 1e-05
        %v8194 = vadd.f32 %v8178, 1e-05
        %v8195 = vadd.f32 %v8179, 1e-05
        %v8196 = vadd.f32 %v8180, 1e-05
        %v8197 = vadd.f32 %v8181, 1e-05
        %v8198 = vadd.f32 %v8182, 1e-05
        %v8199 = vadd.f32 %v8183, 1e-05
        %v8200 = vadd.f32 %v8184, 1e-05
        %v8201 = vadd.f32 %v8185, 1e-05
        %v8202 = vadd.f32 %v8186, 1e-05
        %v8203 = vadd.f32 %v8187, 1e-05
        %v8204 = vadd.f32 %v8188, 1e-05
        %v8205 = vadd.f32 %v8189, 1e-05
        %v8206 = vadd.f32 %v8190, 1e-05
        %v8207 = vrsqrt.pop %v8191
        %v8208 = vrsqrt.pop %v8192
        %v8209 = vrsqrt.pop %v8193
        %v8210 = vrsqrt.pop %v8194
        %v8211 = vrsqrt.pop %v8195
        %v8212 = vrsqrt.pop %v8196
        %v8213 = vrsqrt.pop %v8197
        %v8214 = vrsqrt.pop %v8198
        %v8215 = vrsqrt.pop %v8199
        %v8216 = vrsqrt.pop %v8200
        %v8217 = vrsqrt.pop %v8201
        %v8218 = vrsqrt.pop %v8202
        %v8219 = vrsqrt.pop %v8203
        %v8220 = vrsqrt.pop %v8204
        %v8221 = vrsqrt.pop %v8205
        %v8222 = vrsqrt.pop %v8206
        %v8223 = vmul.f32 %v8095, %v8207
        %v8224 = vmul.f32 %v8096, %v8208
        %v8225 = vmul.f32 %v8097, %v8209
        %v8226 = vmul.f32 %v8098, %v8210
        %v8227 = vmul.f32 %v8099, %v8211
        %v8228 = vmul.f32 %v8100, %v8212
        %v8229 = vmul.f32 %v8101, %v8213
        %v8230 = vmul.f32 %v8102, %v8214
        %v8231 = vmul.f32 %v8103, %v8215
        %v8232 = vmul.f32 %v8104, %v8216
        %v8233 = vmul.f32 %v8105, %v8217
        %v8234 = vmul.f32 %v8106, %v8218
        %v8235 = vmul.f32 %v8107, %v8219
        %v8236 = vmul.f32 %v8108, %v8220
        %v8237 = vmul.f32 %v8109, %v8221
        %v8238 = vmul.f32 %v8110, %v8222
        %v8239 = vlaneseq
        %v8240 = vshrl.u32 %v8239, 7
        %v8241 = vsub.s32 2, %v8240
        %v8242 = vrot.slane %v5822, %v8241
        %v8243 = vmul.f32 %v8223, %v8242
        %v8244 = vmul.f32 %v8224, %v8242
        %v8245 = vmul.f32 %v8225, %v8242
        %v8246 = vmul.f32 %v8226, %v8242
        %v8247 = vmul.f32 %v8227, %v8242
        %v8248 = vmul.f32 %v8228, %v8242
        %v8249 = vmul.f32 %v8229, %v8242
        %v8250 = vmul.f32 %v8230, %v8242
        %v8251 = vmul.f32 %v8231, %v8242
        %v8252 = vmul.f32 %v8232, %v8242
        %v8253 = vmul.f32 %v8233, %v8242
        %v8254 = vmul.f32 %v8234, %v8242
        %v8255 = vmul.f32 %v8235, %v8242
        %v8256 = vmul.f32 %v8236, %v8242
        %v8257 = vmul.f32 %v8237, %v8242
        %v8258 = vmul.f32 %v8238, %v8242
        %v8259 = vlaneseq
        %v8260 = vshrl.u32 %v8259, 7
        %v8261 = vsub.s32 3, %v8260
        %v8262 = vrot.slane %v5822, %v8261
        %v8263 = vadd.f32 %v8243, %v8262
        %v8264 = vadd.f32 %v8244, %v8262
        %v8265 = vadd.f32 %v8245, %v8262
        %v8266 = vadd.f32 %v8246, %v8262
        %v8267 = vadd.f32 %v8247, %v8262
        %v8268 = vadd.f32 %v8248, %v8262
        %v8269 = vadd.f32 %v8249, %v8262
        %v8270 = vadd.f32 %v8250, %v8262
        %v8271 = vadd.f32 %v8251, %v8262
        %v8272 = vadd.f32 %v8252, %v8262
        %v8273 = vadd.f32 %v8253, %v8262
        %v8274 = vadd.f32 %v8254, %v8262
        %v8275 = vadd.f32 %v8255, %v8262
        %v8276 = vadd.f32 %v8256, %v8262
        %v8277 = vadd.f32 %v8257, %v8262
        %v8278 = vadd.f32 %v8258, %v8262
        %v8279 = vpack.c.bf16 %v8264, %v8263
        %v8280 = vpack.c.bf16 %v8266, %v8265
        %v8281 = vpack.c.bf16 %v8268, %v8267
        %v8282 = vpack.c.bf16 %v8270, %v8269
        %v8283 = vpack.c.bf16 %v8272, %v8271
        %v8284 = vpack.c.bf16 %v8274, %v8273
        %v8285 = vpack.c.bf16 %v8276, %v8275
        %v8286 = vpack.c.bf16 %v8278, %v8277
        %s8287 = scalar_lea.vmem %s6, 16
        %v8288 = vld [vmem:[%s8287] sm:$0xf]
        %v8289 = vld [vmem:[%s8287 + $0x4] sm:$0xf]
        %v8290 = vld [vmem:[%s8287 + $0x8] sm:$0xf]
        %v8291 = vld [vmem:[%s8287 + $0xc] sm:$0xf]
        %v8292 = vlaneseq
        %v8293 = vshrl.u32 %v8292, 7
        %v8294 = vsub.s32 4, %v8293
        %v8295 = vrot.slane %v5822, %v8294
        %v8300 = vunpack.c.l.b16 %v8288
        %v8301 = vunpack.c.l.b16 %v8289
        %v8302 = vunpack.c.l.b16 %v8290
        %v8303 = vunpack.c.l.b16 %v8291
        %v8304 = vpack.c.b16 %v8301, %v8300
        %v8305 = vpack.c.b16 %v8303, %v8302
        %v8309 = vsel %vm2277, %v8279, 0
        %v8312 = vsel %vm2277, %v8280, 0
        %v8315 = vsel %vm2277, %v8281, 0
        %v8318 = vsel %vm2277, %v8282, 0
        %v8321 = vsel %vm2277, %v8283, 0
        %v8324 = vsel %vm2277, %v8284, 0
        %v8327 = vsel %vm2277, %v8285, 0
        %v8330 = vsel %vm2277, %v8286, 0
        %8332 = vmatprep.subr.bf16.mxu0 0
        %8333 = vmatpush1.bf16.msra.mxu0 %v8304
        %8334 = vmatprep.subr.bf16.mxu0 0
        %8335 = vmatpush1.bf16.msra.mxu0 %v8305
        %8336 = vmatprep.subr.bf16.mxu0 0
        %8337 = vmatpush1.bf16.msra.mxu0 0
        %8338 = vmatprep.subr.bf16.mxu0 0
        %8339 = vmatpush1.bf16.msra.mxu0 0
        %8340 = vmatprep.subr.bf16.mxu0 0
        %8341 = vmatpush1.bf16.msra.mxu0 0
        %8342 = vmatprep.subr.bf16.mxu0 0
        %8343 = vmatpush1.bf16.msra.mxu0 0
        %8344 = vmatprep.subr.bf16.mxu0 0
        %8345 = vmatpush1.bf16.msra.mxu0 0
        %8346 = vmatprep.subr.bf16.mxu0 0
        %8347 = vmatpush1.bf16.msra.mxu0 0
        %8348 = vmatprep.subr.bf16.mxu0 0
        %8349 = vmatpush1.bf16.msra.mxu0 0
        %8350 = vmatprep.subr.bf16.mxu0 0
        %8351 = vmatpush1.bf16.msra.mxu0 0
        %8352 = vmatprep.subr.bf16.mxu0 0
        %8353 = vmatpush1.bf16.msra.mxu0 0
        %8354 = vmatprep.subr.bf16.mxu0 0
        %8355 = vmatpush1.bf16.msra.mxu0 0
        %8356 = vmatprep.subr.bf16.mxu0 0
        %8357 = vmatpush1.bf16.msra.mxu0 0
        %8358 = vmatprep.subr.bf16.mxu0 0
        %8359 = vmatpush1.bf16.msra.mxu0 0
        %8360 = vmatprep.subr.bf16.mxu0 0
        %8361 = vmatpush1.bf16.msra.mxu0 0
        %8362 = vmatprep.subr.bf16.mxu0 0
        %8363 = vmatpush1.bf16.msra.mxu0 0
        %8364 = vmatprep.mubr.bf16.mxu0 0
        %8365 = vmatmul.mubr.bf16.gmra.mrb[0].mxu0 %v8309
        %v8366 = vpop.f32.mrb[0].mxu0
        %v8367 = vadd.f32 %v8295, %v8366
        %v8368 = vpop.f32.mrb[0].mxu0
        %v8369 = vpop.f32.mrb[0].mxu0
        %v8370 = vadd.f32 %v8295, %v8369
        %v8371 = vpop.f32.mrb[0].mxu0
        %8372 = vmatprep.mubr.bf16.mxu0 0
        %8373 = vmatmul.mubr.bf16.gmra.mrb[0].mxu0 %v8312
        %v8374 = vpop.f32.mrb[0].mxu0
        %v8375 = vadd.f32 %v8295, %v8374
        %v8376 = vpop.f32.mrb[0].mxu0
        %v8377 = vpop.f32.mrb[0].mxu0
        %v8378 = vadd.f32 %v8295, %v8377
        %v8379 = vpop.f32.mrb[0].mxu0
        %8380 = vmatprep.mubr.bf16.mxu0 0
        %8381 = vmatmul.mubr.bf16.gmra.mrb[0].mxu0 %v8315
        %v8382 = vpop.f32.mrb[0].mxu0
        %v8383 = vadd.f32 %v8295, %v8382
        %v8384 = vpop.f32.mrb[0].mxu0
        %v8385 = vpop.f32.mrb[0].mxu0
        %v8386 = vadd.f32 %v8295, %v8385
        %v8387 = vpop.f32.mrb[0].mxu0
        %8388 = vmatprep.mubr.bf16.mxu0 0
        %8389 = vmatmul.mubr.bf16.gmra.mrb[0].mxu0 %v8318
        %v8390 = vpop.f32.mrb[0].mxu0
        %v8391 = vadd.f32 %v8295, %v8390
        %v8392 = vpop.f32.mrb[0].mxu0
        %v8393 = vpop.f32.mrb[0].mxu0
        %v8394 = vadd.f32 %v8295, %v8393
        %v8395 = vpop.f32.mrb[0].mxu0
        %8396 = vmatprep.mubr.bf16.mxu0 0
        %8397 = vmatmul.mubr.bf16.gmra.mrb[0].mxu0 %v8321
        %v8398 = vpop.f32.mrb[0].mxu0
        %v8399 = vadd.f32 %v8295, %v8398
        %v8400 = vpop.f32.mrb[0].mxu0
        %v8401 = vpop.f32.mrb[0].mxu0
        %v8402 = vadd.f32 %v8295, %v8401
        %v8403 = vpop.f32.mrb[0].mxu0
        %8404 = vmatprep.mubr.bf16.mxu0 0
        %8405 = vmatmul.mubr.bf16.gmra.mrb[0].mxu0 %v8324
        %v8406 = vpop.f32.mrb[0].mxu0
        %v8407 = vadd.f32 %v8295, %v8406
        %v8408 = vpop.f32.mrb[0].mxu0
        %v8409 = vpop.f32.mrb[0].mxu0
        %v8410 = vadd.f32 %v8295, %v8409
        %v8411 = vpop.f32.mrb[0].mxu0
        %8412 = vmatprep.mubr.bf16.mxu0 0
        %8413 = vmatmul.mubr.bf16.gmra.mrb[0].mxu0 %v8327
        %v8414 = vpop.f32.mrb[0].mxu0
        %v8415 = vadd.f32 %v8295, %v8414
        %v8416 = vpop.f32.mrb[0].mxu0
        %v8417 = vpop.f32.mrb[0].mxu0
        %v8418 = vadd.f32 %v8295, %v8417
        %v8419 = vpop.f32.mrb[0].mxu0
        %8420 = vmatprep.mubr.bf16.mxu0 0
        %8421 = vmatmul.mubr.bf16.gmra.mrb[0].mxu0 %v8330
        %v8422 = vpop.f32.mrb[0].mxu0
        %v8423 = vadd.f32 %v8295, %v8422
        %v8424 = vpop.f32.mrb[0].mxu0
        %v8425 = vpop.f32.mrb[0].mxu0
        %v8426 = vadd.f32 %v8295, %v8425
        %v8427 = vpop.f32.mrb[0].mxu0
        %8428 = vdwg.mxu0
        %v8429 = vmul.f32 %v8367, %v8367
        %v8430 = vmul.f32 %v8370, %v8370
        %v8431 = vmul.f32 %v8375, %v8375
        %v8432 = vmul.f32 %v8378, %v8378
        %v8433 = vmul.f32 %v8383, %v8383
        %v8434 = vmul.f32 %v8386, %v8386
        %v8435 = vmul.f32 %v8391, %v8391
        %v8436 = vmul.f32 %v8394, %v8394
        %v8437 = vmul.f32 %v8399, %v8399
        %v8438 = vmul.f32 %v8402, %v8402
        %v8439 = vmul.f32 %v8407, %v8407
        %v8440 = vmul.f32 %v8410, %v8410
        %v8441 = vmul.f32 %v8415, %v8415
        %v8442 = vmul.f32 %v8418, %v8418
        %v8443 = vmul.f32 %v8423, %v8423
        %v8444 = vmul.f32 %v8426, %v8426
        %v8445 = vmul.f32 %v8367, %v8429
        %v8446 = vmul.f32 %v8370, %v8430
        %v8447 = vmul.f32 %v8375, %v8431
        %v8448 = vmul.f32 %v8378, %v8432
        %v8449 = vmul.f32 %v8383, %v8433
        %v8450 = vmul.f32 %v8386, %v8434
        %v8451 = vmul.f32 %v8391, %v8435
        %v8452 = vmul.f32 %v8394, %v8436
        %v8453 = vmul.f32 %v8399, %v8437
        %v8454 = vmul.f32 %v8402, %v8438
        %v8455 = vmul.f32 %v8407, %v8439
        %v8456 = vmul.f32 %v8410, %v8440
        %v8457 = vmul.f32 %v8415, %v8441
        %v8458 = vmul.f32 %v8418, %v8442
        %v8459 = vmul.f32 %v8423, %v8443
        %v8460 = vmul.f32 %v8426, %v8444
        %v8461 = vmul.f32 %v8445, 0.044715
        %v8462 = vmul.f32 %v8446, 0.044715
        %v8463 = vmul.f32 %v8447, 0.044715
        %v8464 = vmul.f32 %v8448, 0.044715
        %v8465 = vmul.f32 %v8449, 0.044715
        %v8466 = vmul.f32 %v8450, 0.044715
        %v8467 = vmul.f32 %v8451, 0.044715
        %v8468 = vmul.f32 %v8452, 0.044715
        %v8469 = vmul.f32 %v8453, 0.044715
        %v8470 = vmul.f32 %v8454, 0.044715
        %v8471 = vmul.f32 %v8455, 0.044715
        %v8472 = vmul.f32 %v8456, 0.044715
        %v8473 = vmul.f32 %v8457, 0.044715
        %v8474 = vmul.f32 %v8458, 0.044715
        %v8475 = vmul.f32 %v8459, 0.044715
        %v8476 = vmul.f32 %v8460, 0.044715
        %v8477 = vadd.f32 %v8367, %v8461
        %v8478 = vadd.f32 %v8370, %v8462
        %v8479 = vadd.f32 %v8375, %v8463
        %v8480 = vadd.f32 %v8378, %v8464
        %v8481 = vadd.f32 %v8383, %v8465
        %v8482 = vadd.f32 %v8386, %v8466
        %v8483 = vadd.f32 %v8391, %v8467
        %v8484 = vadd.f32 %v8394, %v8468
        %v8485 = vadd.f32 %v8399, %v8469
        %v8486 = vadd.f32 %v8402, %v8470
        %v8487 = vadd.f32 %v8407, %v8471
        %v8488 = vadd.f32 %v8410, %v8472
        %v8489 = vadd.f32 %v8415, %v8473
        %v8490 = vadd.f32 %v8418, %v8474
        %v8491 = vadd.f32 %v8423, %v8475
        %v8492 = vadd.f32 %v8426, %v8476
        %v8493 = vmul.f32 %v8477, 0.7978846
        %v8494 = vmul.f32 %v8478, 0.7978846
        %v8495 = vmul.f32 %v8479, 0.7978846
        %v8496 = vmul.f32 %v8480, 0.7978846
        %v8497 = vmul.f32 %v8481, 0.7978846
        %v8498 = vmul.f32 %v8482, 0.7978846
        %v8499 = vmul.f32 %v8483, 0.7978846
        %v8500 = vmul.f32 %v8484, 0.7978846
        %v8501 = vmul.f32 %v8485, 0.7978846
        %v8502 = vmul.f32 %v8486, 0.7978846
        %v8503 = vmul.f32 %v8487, 0.7978846
        %v8504 = vmul.f32 %v8488, 0.7978846
        %v8505 = vmul.f32 %v8489, 0.7978846
        %v8506 = vmul.f32 %v8490, 0.7978846
        %v8507 = vmul.f32 %v8491, 0.7978846
        %v8508 = vmul.f32 %v8492, 0.7978846
        %v8509 = vtanh.pop %v8493
        %v8510 = vtanh.pop %v8494
        %v8511 = vtanh.pop %v8495
        %v8512 = vtanh.pop %v8496
        %v8513 = vtanh.pop %v8497
        %v8514 = vtanh.pop %v8498
        %v8515 = vtanh.pop %v8499
        %v8516 = vtanh.pop %v8500
        %v8517 = vtanh.pop %v8501
        %v8518 = vtanh.pop %v8502
        %v8519 = vtanh.pop %v8503
        %v8520 = vtanh.pop %v8504
        %v8521 = vtanh.pop %v8505
        %v8522 = vtanh.pop %v8506
        %v8523 = vtanh.pop %v8507
        %v8524 = vtanh.pop %v8508
        %v8525 = vadd.f32 %v8509, 1.0
        %v8526 = vadd.f32 %v8510, 1.0
        %v8527 = vadd.f32 %v8511, 1.0
        %v8528 = vadd.f32 %v8512, 1.0
        %v8529 = vadd.f32 %v8513, 1.0
        %v8530 = vadd.f32 %v8514, 1.0
        %v8531 = vadd.f32 %v8515, 1.0
        %v8532 = vadd.f32 %v8516, 1.0
        %v8533 = vadd.f32 %v8517, 1.0
        %v8534 = vadd.f32 %v8518, 1.0
        %v8535 = vadd.f32 %v8519, 1.0
        %v8536 = vadd.f32 %v8520, 1.0
        %v8537 = vadd.f32 %v8521, 1.0
        %v8538 = vadd.f32 %v8522, 1.0
        %v8539 = vadd.f32 %v8523, 1.0
        %v8540 = vadd.f32 %v8524, 1.0
        %v8541 = vmul.f32 %v8525, 0.5
        %v8542 = vmul.f32 %v8526, 0.5
        %v8543 = vmul.f32 %v8527, 0.5
        %v8544 = vmul.f32 %v8528, 0.5
        %v8545 = vmul.f32 %v8529, 0.5
        %v8546 = vmul.f32 %v8530, 0.5
        %v8547 = vmul.f32 %v8531, 0.5
        %v8548 = vmul.f32 %v8532, 0.5
        %v8549 = vmul.f32 %v8533, 0.5
        %v8550 = vmul.f32 %v8534, 0.5
        %v8551 = vmul.f32 %v8535, 0.5
        %v8552 = vmul.f32 %v8536, 0.5
        %v8553 = vmul.f32 %v8537, 0.5
        %v8554 = vmul.f32 %v8538, 0.5
        %v8555 = vmul.f32 %v8539, 0.5
        %v8556 = vmul.f32 %v8540, 0.5
        %v8557 = vmul.f32 %v8367, %v8541
        %v8558 = vmul.f32 %v8370, %v8542
        %v8559 = vmul.f32 %v8375, %v8543
        %v8560 = vmul.f32 %v8378, %v8544
        %v8561 = vmul.f32 %v8383, %v8545
        %v8562 = vmul.f32 %v8386, %v8546
        %v8563 = vmul.f32 %v8391, %v8547
        %v8564 = vmul.f32 %v8394, %v8548
        %v8565 = vmul.f32 %v8399, %v8549
        %v8566 = vmul.f32 %v8402, %v8550
        %v8567 = vmul.f32 %v8407, %v8551
        %v8568 = vmul.f32 %v8410, %v8552
        %v8569 = vmul.f32 %v8415, %v8553
        %v8570 = vmul.f32 %v8418, %v8554
        %v8571 = vmul.f32 %v8423, %v8555
        %v8572 = vmul.f32 %v8426, %v8556
        %v8573 = vpack.c.bf16 %v8558, %v8557
        %v8574 = vpack.c.bf16 %v8560, %v8559
        %v8575 = vpack.c.bf16 %v8562, %v8561
        %v8576 = vpack.c.bf16 %v8564, %v8563
        %v8577 = vpack.c.bf16 %v8566, %v8565
        %v8578 = vpack.c.bf16 %v8568, %v8567
        %v8579 = vpack.c.bf16 %v8570, %v8569
        %v8580 = vpack.c.bf16 %v8572, %v8571
        %s8581 = scalar_lea.vmem %s7, 32
        %v8582 = vld [vmem:[%s8581] sm:$0xf]
        %v8583 = vld [vmem:[%s8581 + $0x4] sm:$0xf]
        %v8584 = vld [vmem:[%s8581 + $0x8] sm:$0xf]
        %v8585 = vld [vmem:[%s8581 + $0xc] sm:$0xf]
        %v8586 = vld [vmem:[%s8581 + $0x10] sm:$0xf]
        %v8587 = vld [vmem:[%s8581 + $0x14] sm:$0xf]
        %v8588 = vld [vmem:[%s8581 + $0x18] sm:$0xf]
        %v8589 = vld [vmem:[%s8581 + $0x1c] sm:$0xf]
        %v8590 = vlaneseq
        %v8591 = vshrl.u32 %v8590, 7
        %v8592 = vsub.s32 5, %v8591
        %v8593 = vrot.slane %v5822, %v8592
        %v8602 = vunpack.c.l.b16 %v8582
        %v8603 = vunpack.c.l.b16 %v8583
        %v8604 = vunpack.c.l.b16 %v8584
        %v8605 = vunpack.c.l.b16 %v8585
        %v8606 = vunpack.c.l.b16 %v8586
        %v8607 = vunpack.c.l.b16 %v8587
        %v8608 = vunpack.c.l.b16 %v8588
        %v8609 = vunpack.c.l.b16 %v8589
        %v8610 = vpack.c.b16 %v8603, %v8602
        %v8611 = vpack.c.b16 %v8605, %v8604
        %v8612 = vpack.c.b16 %v8607, %v8606
        %v8613 = vpack.c.b16 %v8609, %v8608
        %v8619 = vsel %vm5435, %v8573, 0
        %v8622 = vsel %vm5435, %v8574, 0
        %v8625 = vsel %vm5435, %v8575, 0
        %v8628 = vsel %vm5435, %v8576, 0
        %v8631 = vsel %vm5435, %v8577, 0
        %v8634 = vsel %vm5435, %v8578, 0
        %v8637 = vsel %vm5435, %v8579, 0
        %v8640 = vsel %vm5435, %v8580, 0
        %8642 = vmatprep.subr.bf16.mxu0 0
        %8643 = vmatpush1.bf16.msra.mxu0 %v8610
        %8644 = vmatprep.subr.bf16.mxu0 0
        %8645 = vmatpush1.bf16.msra.mxu0 %v8611
        %8646 = vmatprep.subr.bf16.mxu0 0
        %8647 = vmatpush1.bf16.msra.mxu0 %v8612
        %8648 = vmatprep.subr.bf16.mxu0 0
        %8649 = vmatpush1.bf16.msra.mxu0 %v8613
        %8650 = vmatprep.subr.bf16.mxu0 0
        %8651 = vmatpush1.bf16.msra.mxu0 0
        %8652 = vmatprep.subr.bf16.mxu0 0
        %8653 = vmatpush1.bf16.msra.mxu0 0
        %8654 = vmatprep.subr.bf16.mxu0 0
        %8655 = vmatpush1.bf16.msra.mxu0 0
        %8656 = vmatprep.subr.bf16.mxu0 0
        %8657 = vmatpush1.bf16.msra.mxu0 0
        %8658 = vmatprep.subr.bf16.mxu0 0
        %8659 = vmatpush1.bf16.msra.mxu0 0
        %8660 = vmatprep.subr.bf16.mxu0 0
        %8661 = vmatpush1.bf16.msra.mxu0 0
        %8662 = vmatprep.subr.bf16.mxu0 0
        %8663 = vmatpush1.bf16.msra.mxu0 0
        %8664 = vmatprep.subr.bf16.mxu0 0
        %8665 = vmatpush1.bf16.msra.mxu0 0
        %8666 = vmatprep.subr.bf16.mxu0 0
        %8667 = vmatpush1.bf16.msra.mxu0 0
        %8668 = vmatprep.subr.bf16.mxu0 0
        %8669 = vmatpush1.bf16.msra.mxu0 0
        %8670 = vmatprep.subr.bf16.mxu0 0
        %8671 = vmatpush1.bf16.msra.mxu0 0
        %8672 = vmatprep.subr.bf16.mxu0 0
        %8673 = vmatpush1.bf16.msra.mxu0 0
        %8674 = vmatprep.mubr.bf16.mxu0 0
        %8675 = vmatmul.mubr.bf16.gmra.mrb[0].mxu0 %v8619
        %v8676 = vpop.f32.mrb[0].mxu0
        %v8677 = vadd.f32 %v8593, %v8676
        %v8678 = vpop.f32.mrb[0].mxu0
        %v8679 = vpop.f32.mrb[0].mxu0
        %v8680 = vadd.f32 %v8593, %v8679
        %v8681 = vpop.f32.mrb[0].mxu0
        %8682 = vmatprep.mubr.bf16.mxu0 0
        %8683 = vmatmul.mubr.bf16.gmra.mrb[0].mxu0 %v8622
        %v8684 = vpop.f32.mrb[0].mxu0
        %v8685 = vadd.f32 %v8593, %v8684
        %v8686 = vpop.f32.mrb[0].mxu0
        %v8687 = vpop.f32.mrb[0].mxu0
        %v8688 = vadd.f32 %v8593, %v8687
        %v8689 = vpop.f32.mrb[0].mxu0
        %8690 = vmatprep.mubr.bf16.mxu0 0
        %8691 = vmatmul.mubr.bf16.gmra.mrb[0].mxu0 %v8625
        %v8692 = vpop.f32.mrb[0].mxu0
        %v8693 = vadd.f32 %v8593, %v8692
        %v8694 = vpop.f32.mrb[0].mxu0
        %v8695 = vpop.f32.mrb[0].mxu0
        %v8696 = vadd.f32 %v8593, %v8695
        %v8697 = vpop.f32.mrb[0].mxu0
        %8698 = vmatprep.mubr.bf16.mxu0 0
        %8699 = vmatmul.mubr.bf16.gmra.mrb[0].mxu0 %v8628
        %v8700 = vpop.f32.mrb[0].mxu0
        %v8701 = vadd.f32 %v8593, %v8700
        %v8702 = vpop.f32.mrb[0].mxu0
        %v8703 = vpop.f32.mrb[0].mxu0
        %v8704 = vadd.f32 %v8593, %v8703
        %v8705 = vpop.f32.mrb[0].mxu0
        %8706 = vmatprep.mubr.bf16.mxu0 0
        %8707 = vmatmul.mubr.bf16.gmra.mrb[0].mxu0 %v8631
        %v8708 = vpop.f32.mrb[0].mxu0
        %v8709 = vadd.f32 %v8593, %v8708
        %v8710 = vpop.f32.mrb[0].mxu0
        %v8711 = vpop.f32.mrb[0].mxu0
        %v8712 = vadd.f32 %v8593, %v8711
        %v8713 = vpop.f32.mrb[0].mxu0
        %8714 = vmatprep.mubr.bf16.mxu0 0
        %8715 = vmatmul.mubr.bf16.gmra.mrb[0].mxu0 %v8634
        %v8716 = vpop.f32.mrb[0].mxu0
        %v8717 = vadd.f32 %v8593, %v8716
        %v8718 = vpop.f32.mrb[0].mxu0
        %v8719 = vpop.f32.mrb[0].mxu0
        %v8720 = vadd.f32 %v8593, %v8719
        %v8721 = vpop.f32.mrb[0].mxu0
        %8722 = vmatprep.mubr.bf16.mxu0 0
        %8723 = vmatmul.mubr.bf16.gmra.mrb[0].mxu0 %v8637
        %v8724 = vpop.f32.mrb[0].mxu0
        %v8725 = vadd.f32 %v8593, %v8724
        %v8726 = vpop.f32.mrb[0].mxu0
        %v8727 = vpop.f32.mrb[0].mxu0
        %v8728 = vadd.f32 %v8593, %v8727
        %v8729 = vpop.f32.mrb[0].mxu0
        %8730 = vmatprep.mubr.bf16.mxu0 0
        %8731 = vmatmul.mubr.bf16.gmra.mrb[0].mxu0 %v8640
        %v8732 = vpop.f32.mrb[0].mxu0
        %v8733 = vadd.f32 %v8593, %v8732
        %v8734 = vpop.f32.mrb[0].mxu0
        %v8735 = vpop.f32.mrb[0].mxu0
        %v8736 = vadd.f32 %v8593, %v8735
        %v8737 = vpop.f32.mrb[0].mxu0
        %8738 = vdwg.mxu0
        %v8739 = vadd.f32 %v8263, %v8677
        %v8740 = vadd.f32 %v8264, %v8680
        %v8741 = vadd.f32 %v8265, %v8685
        %v8742 = vadd.f32 %v8266, %v8688
        %v8743 = vadd.f32 %v8267, %v8693
        %v8744 = vadd.f32 %v8268, %v8696
        %v8745 = vadd.f32 %v8269, %v8701
        %v8746 = vadd.f32 %v8270, %v8704
        %v8747 = vadd.f32 %v8271, %v8709
        %v8748 = vadd.f32 %v8272, %v8712
        %v8749 = vadd.f32 %v8273, %v8717
        %v8750 = vadd.f32 %v8274, %v8720
        %v8751 = vadd.f32 %v8275, %v8725
        %v8752 = vadd.f32 %v8276, %v8728
        %v8753 = vadd.f32 %v8277, %v8733
        %v8754 = vadd.f32 %v8278, %v8736
        %v8755 = vsel %vm2277, %v8739, 0.0
        %8756 = vadd.xlane.f32.xlu0 %v8755
        %v8757 = vpop.xlane.xlu0 %8756
        %v8758 = vsel %vm2277, %v8740, 0.0
        %8759 = vadd.xlane.f32.xlu0 %v8758
        %v8760 = vpop.xlane.xlu0 %8759
        %v8761 = vsel %vm2277, %v8741, 0.0
        %8762 = vadd.xlane.f32.xlu0 %v8761
        %v8763 = vpop.xlane.xlu0 %8762
        %v8764 = vsel %vm2277, %v8742, 0.0
        %8765 = vadd.xlane.f32.xlu0 %v8764
        %v8766 = vpop.xlane.xlu0 %8765
        %v8767 = vsel %vm2277, %v8743, 0.0
        %8768 = vadd.xlane.f32.xlu0 %v8767
        %v8769 = vpop.xlane.xlu0 %8768
        %v8770 = vsel %vm2277, %v8744, 0.0
        %8771 = vadd.xlane.f32.xlu0 %v8770
        %v8772 = vpop.xlane.xlu0 %8771
        %v8773 = vsel %vm2277, %v8745, 0.0
        %8774 = vadd.xlane.f32.xlu0 %v8773
        %v8775 = vpop.xlane.xlu0 %8774
        %v8776 = vsel %vm2277, %v8746, 0.0
        %8777 = vadd.xlane.f32.xlu0 %v8776
        %v8778 = vpop.xlane.xlu0 %8777
        %v8779 = vsel %vm2277, %v8747, 0.0
        %8780 = vadd.xlane.f32.xlu0 %v8779
        %v8781 = vpop.xlane.xlu0 %8780
        %v8782 = vsel %vm2277, %v8748, 0.0
        %8783 = vadd.xlane.f32.xlu0 %v8782
        %v8784 = vpop.xlane.xlu0 %8783
        %v8785 = vsel %vm2277, %v8749, 0.0
        %8786 = vadd.xlane.f32.xlu0 %v8785
        %v8787 = vpop.xlane.xlu0 %8786
        %v8788 = vsel %vm2277, %v8750, 0.0
        %8789 = vadd.xlane.f32.xlu0 %v8788
        %v8790 = vpop.xlane.xlu0 %8789
        %v8791 = vsel %vm2277, %v8751, 0.0
        %8792 = vadd.xlane.f32.xlu0 %v8791
        %v8793 = vpop.xlane.xlu0 %8792
        %v8794 = vsel %vm2277, %v8752, 0.0
        %8795 = vadd.xlane.f32.xlu0 %v8794
        %v8796 = vpop.xlane.xlu0 %8795
        %v8797 = vsel %vm2277, %v8753, 0.0
        %8798 = vadd.xlane.f32.xlu0 %v8797
        %v8799 = vpop.xlane.xlu0 %8798
        %v8800 = vsel %vm2277, %v8754, 0.0
        %8801 = vadd.xlane.f32.xlu0 %v8800
        %v8802 = vpop.xlane.xlu0 %8801
        %v8803 = vmul.f32 %v8757, %v2326
        %v8804 = vmul.f32 %v8760, %v2326
        %v8805 = vmul.f32 %v8763, %v2326
        %v8806 = vmul.f32 %v8766, %v2326
        %v8807 = vmul.f32 %v8769, %v2326
        %v8808 = vmul.f32 %v8772, %v2326
        %v8809 = vmul.f32 %v8775, %v2326
        %v8810 = vmul.f32 %v8778, %v2326
        %v8811 = vmul.f32 %v8781, %v2326
        %v8812 = vmul.f32 %v8784, %v2326
        %v8813 = vmul.f32 %v8787, %v2326
        %v8814 = vmul.f32 %v8790, %v2326
        %v8815 = vmul.f32 %v8793, %v2326
        %v8816 = vmul.f32 %v8796, %v2326
        %v8817 = vmul.f32 %v8799, %v2326
        %v8818 = vmul.f32 %v8802, %v2326
        %v8819 = vsub.f32 %v8739, %v8803
        %v8820 = vsub.f32 %v8740, %v8804
        %v8821 = vsub.f32 %v8741, %v8805
        %v8822 = vsub.f32 %v8742, %v8806
        %v8823 = vsub.f32 %v8743, %v8807
        %v8824 = vsub.f32 %v8744, %v8808
        %v8825 = vsub.f32 %v8745, %v8809
        %v8826 = vsub.f32 %v8746, %v8810
        %v8827 = vsub.f32 %v8747, %v8811
        %v8828 = vsub.f32 %v8748, %v8812
        %v8829 = vsub.f32 %v8749, %v8813
        %v8830 = vsub.f32 %v8750, %v8814
        %v8831 = vsub.f32 %v8751, %v8815
        %v8832 = vsub.f32 %v8752, %v8816
        %v8833 = vsub.f32 %v8753, %v8817
        %v8834 = vsub.f32 %v8754, %v8818
        %v8835 = vmul.f32 %v8819, %v8819
        %v8836 = vmul.f32 %v8820, %v8820
        %v8837 = vmul.f32 %v8821, %v8821
        %v8838 = vmul.f32 %v8822, %v8822
        %v8839 = vmul.f32 %v8823, %v8823
        %v8840 = vmul.f32 %v8824, %v8824
        %v8841 = vmul.f32 %v8825, %v8825
        %v8842 = vmul.f32 %v8826, %v8826
        %v8843 = vmul.f32 %v8827, %v8827
        %v8844 = vmul.f32 %v8828, %v8828
        %v8845 = vmul.f32 %v8829, %v8829
        %v8846 = vmul.f32 %v8830, %v8830
        %v8847 = vmul.f32 %v8831, %v8831
        %v8848 = vmul.f32 %v8832, %v8832
        %v8849 = vmul.f32 %v8833, %v8833
        %v8850 = vmul.f32 %v8834, %v8834
        %v8851 = vsel %vm2277, %v8835, 0.0
        %8852 = vadd.xlane.f32.xlu0 %v8851
        %v8853 = vpop.xlane.xlu0 %8852
        %v8854 = vsel %vm2277, %v8836, 0.0
        %8855 = vadd.xlane.f32.xlu0 %v8854
        %v8856 = vpop.xlane.xlu0 %8855
        %v8857 = vsel %vm2277, %v8837, 0.0
        %8858 = vadd.xlane.f32.xlu0 %v8857
        %v8859 = vpop.xlane.xlu0 %8858
        %v8860 = vsel %vm2277, %v8838, 0.0
        %8861 = vadd.xlane.f32.xlu0 %v8860
        %v8862 = vpop.xlane.xlu0 %8861
        %v8863 = vsel %vm2277, %v8839, 0.0
        %8864 = vadd.xlane.f32.xlu0 %v8863
        %v8865 = vpop.xlane.xlu0 %8864
        %v8866 = vsel %vm2277, %v8840, 0.0
        %8867 = vadd.xlane.f32.xlu0 %v8866
        %v8868 = vpop.xlane.xlu0 %8867
        %v8869 = vsel %vm2277, %v8841, 0.0
        %8870 = vadd.xlane.f32.xlu0 %v8869
        %v8871 = vpop.xlane.xlu0 %8870
        %v8872 = vsel %vm2277, %v8842, 0.0
        %8873 = vadd.xlane.f32.xlu0 %v8872
        %v8874 = vpop.xlane.xlu0 %8873
        %v8875 = vsel %vm2277, %v8843, 0.0
        %8876 = vadd.xlane.f32.xlu0 %v8875
        %v8877 = vpop.xlane.xlu0 %8876
        %v8878 = vsel %vm2277, %v8844, 0.0
        %8879 = vadd.xlane.f32.xlu0 %v8878
        %v8880 = vpop.xlane.xlu0 %8879
        %v8881 = vsel %vm2277, %v8845, 0.0
        %8882 = vadd.xlane.f32.xlu0 %v8881
        %v8883 = vpop.xlane.xlu0 %8882
        %v8884 = vsel %vm2277, %v8846, 0.0
        %8885 = vadd.xlane.f32.xlu0 %v8884
        %v8886 = vpop.xlane.xlu0 %8885
        %v8887 = vsel %vm2277, %v8847, 0.0
        %8888 = vadd.xlane.f32.xlu0 %v8887
        %v8889 = vpop.xlane.xlu0 %8888
        %v8890 = vsel %vm2277, %v8848, 0.0
        %8891 = vadd.xlane.f32.xlu0 %v8890
        %v8892 = vpop.xlane.xlu0 %8891
        %v8893 = vsel %vm2277, %v8849, 0.0
        %8894 = vadd.xlane.f32.xlu0 %v8893
        %v8895 = vpop.xlane.xlu0 %8894
        %v8896 = vsel %vm2277, %v8850, 0.0
        %8897 = vadd.xlane.f32.xlu0 %v8896
        %v8898 = vpop.xlane.xlu0 %8897
        %v8899 = vmul.f32 %v8853, %v2326
        %v8900 = vmul.f32 %v8856, %v2326
        %v8901 = vmul.f32 %v8859, %v2326
        %v8902 = vmul.f32 %v8862, %v2326
        %v8903 = vmul.f32 %v8865, %v2326
        %v8904 = vmul.f32 %v8868, %v2326
        %v8905 = vmul.f32 %v8871, %v2326
        %v8906 = vmul.f32 %v8874, %v2326
        %v8907 = vmul.f32 %v8877, %v2326
        %v8908 = vmul.f32 %v8880, %v2326
        %v8909 = vmul.f32 %v8883, %v2326
        %v8910 = vmul.f32 %v8886, %v2326
        %v8911 = vmul.f32 %v8889, %v2326
        %v8912 = vmul.f32 %v8892, %v2326
        %v8913 = vmul.f32 %v8895, %v2326
        %v8914 = vmul.f32 %v8898, %v2326
        %v8915 = vadd.f32 %v8899, 1e-05
        %v8916 = vadd.f32 %v8900, 1e-05
        %v8917 = vadd.f32 %v8901, 1e-05
        %v8918 = vadd.f32 %v8902, 1e-05
        %v8919 = vadd.f32 %v8903, 1e-05
        %v8920 = vadd.f32 %v8904, 1e-05
        %v8921 = vadd.f32 %v8905, 1e-05
        %v8922 = vadd.f32 %v8906, 1e-05
        %v8923 = vadd.f32 %v8907, 1e-05
        %v8924 = vadd.f32 %v8908, 1e-05
        %v8925 = vadd.f32 %v8909, 1e-05
        %v8926 = vadd.f32 %v8910, 1e-05
        %v8927 = vadd.f32 %v8911, 1e-05
        %v8928 = vadd.f32 %v8912, 1e-05
        %v8929 = vadd.f32 %v8913, 1e-05
        %v8930 = vadd.f32 %v8914, 1e-05
        %v8931 = vrsqrt.pop %v8915
        %v8932 = vrsqrt.pop %v8916
        %v8933 = vrsqrt.pop %v8917
        %v8934 = vrsqrt.pop %v8918
        %v8935 = vrsqrt.pop %v8919
        %v8936 = vrsqrt.pop %v8920
        %v8937 = vrsqrt.pop %v8921
        %v8938 = vrsqrt.pop %v8922
        %v8939 = vrsqrt.pop %v8923
        %v8940 = vrsqrt.pop %v8924
        %v8941 = vrsqrt.pop %v8925
        %v8942 = vrsqrt.pop %v8926
        %v8943 = vrsqrt.pop %v8927
        %v8944 = vrsqrt.pop %v8928
        %v8945 = vrsqrt.pop %v8929
        %v8946 = vrsqrt.pop %v8930
        %v8947 = vmul.f32 %v8819, %v8931
        %v8948 = vmul.f32 %v8820, %v8932
        %v8949 = vmul.f32 %v8821, %v8933
        %v8950 = vmul.f32 %v8822, %v8934
        %v8951 = vmul.f32 %v8823, %v8935
        %v8952 = vmul.f32 %v8824, %v8936
        %v8953 = vmul.f32 %v8825, %v8937
        %v8954 = vmul.f32 %v8826, %v8938
        %v8955 = vmul.f32 %v8827, %v8939
        %v8956 = vmul.f32 %v8828, %v8940
        %v8957 = vmul.f32 %v8829, %v8941
        %v8958 = vmul.f32 %v8830, %v8942
        %v8959 = vmul.f32 %v8831, %v8943
        %v8960 = vmul.f32 %v8832, %v8944
        %v8961 = vmul.f32 %v8833, %v8945
        %v8962 = vmul.f32 %v8834, %v8946
        %v8963 = vlaneseq
        %v8964 = vshrl.u32 %v8963, 7
        %v8965 = vsub.s32 6, %v8964
        %v8966 = vrot.slane %v5822, %v8965
        %v8967 = vmul.f32 %v8947, %v8966
        %v8968 = vmul.f32 %v8948, %v8966
        %v8969 = vmul.f32 %v8949, %v8966
        %v8970 = vmul.f32 %v8950, %v8966
        %v8971 = vmul.f32 %v8951, %v8966
        %v8972 = vmul.f32 %v8952, %v8966
        %v8973 = vmul.f32 %v8953, %v8966
        %v8974 = vmul.f32 %v8954, %v8966
        %v8975 = vmul.f32 %v8955, %v8966
        %v8976 = vmul.f32 %v8956, %v8966
        %v8977 = vmul.f32 %v8957, %v8966
        %v8978 = vmul.f32 %v8958, %v8966
        %v8979 = vmul.f32 %v8959, %v8966
        %v8980 = vmul.f32 %v8960, %v8966
        %v8981 = vmul.f32 %v8961, %v8966
        %v8982 = vmul.f32 %v8962, %v8966
        %v8983 = vlaneseq
        %v8984 = vshrl.u32 %v8983, 7
        %v8985 = vsub.s32 7, %v8984
        %v8986 = vrot.slane %v5822, %v8985
        %v8987 = vadd.f32 %v8967, %v8986
        %v8988 = vadd.f32 %v8968, %v8986
        %v8989 = vadd.f32 %v8969, %v8986
        %v8990 = vadd.f32 %v8970, %v8986
        %v8991 = vadd.f32 %v8971, %v8986
        %v8992 = vadd.f32 %v8972, %v8986
        %v8993 = vadd.f32 %v8973, %v8986
        %v8994 = vadd.f32 %v8974, %v8986
        %v8995 = vadd.f32 %v8975, %v8986
        %v8996 = vadd.f32 %v8976, %v8986
        %v8997 = vadd.f32 %v8977, %v8986
        %v8998 = vadd.f32 %v8978, %v8986
        %v8999 = vadd.f32 %v8979, %v8986
        %v9000 = vadd.f32 %v8980, %v8986
        %v9001 = vadd.f32 %v8981, %v8986
        %v9002 = vadd.f32 %v8982, %v8986
        %v9003 = vsel %vm2277, %v8987, 0.0
        %v9004 = vsel %vm2277, %v8988, 0.0
        %v9005 = vadd.f32 %v9003, %v9004
        %v9006 = vsel %vm2277, %v8989, 0.0
        %v9007 = vadd.f32 %v9005, %v9006
        %v9008 = vsel %vm2277, %v8990, 0.0
        %v9009 = vadd.f32 %v9007, %v9008
        %v9010 = vrot.slane %v9009, 4
        %v9011 = vadd.f32 %v9009, %v9010
        %v9012 = vrot.slane %v9011, 2
        %v9013 = vadd.f32 %v9011, %v9012
        %v9014 = vrot.slane %v9013, 1
        %v9015 = vadd.f32 %v9013, %v9014
        %v9016 = vsel %vm2277, %v8991, 0.0
        %v9017 = vsel %vm2277, %v8992, 0.0
        %v9018 = vadd.f32 %v9016, %v9017
        %v9019 = vsel %vm2277, %v8993, 0.0
        %v9020 = vadd.f32 %v9018, %v9019
        %v9021 = vsel %vm2277, %v8994, 0.0
        %v9022 = vadd.f32 %v9020, %v9021
        %v9023 = vrot.slane %v9022, 4
        %v9024 = vadd.f32 %v9022, %v9023
        %v9025 = vrot.slane %v9024, 2
        %v9026 = vadd.f32 %v9024, %v9025
        %v9027 = vrot.slane %v9026, 1
        %v9028 = vadd.f32 %v9026, %v9027
        %v9029 = vsel %vm2277, %v8995, 0.0
        %v9030 = vsel %vm2277, %v8996, 0.0
        %v9031 = vadd.f32 %v9029, %v9030
        %v9032 = vsel %vm2277, %v8997, 0.0
        %v9033 = vadd.f32 %v9031, %v9032
        %v9034 = vsel %vm2277, %v8998, 0.0
        %v9035 = vadd.f32 %v9033, %v9034
        %v9036 = vrot.slane %v9035, 4
        %v9037 = vadd.f32 %v9035, %v9036
        %v9038 = vrot.slane %v9037, 2
        %v9039 = vadd.f32 %v9037, %v9038
        %v9040 = vrot.slane %v9039, 1
        %v9041 = vadd.f32 %v9039, %v9040
        %v9042 = vsel %vm2277, %v8999, 0.0
        %v9043 = vsel %vm2277, %v9000, 0.0
        %v9044 = vadd.f32 %v9042, %v9043
        %v9045 = vsel %vm2277, %v9001, 0.0
        %v9046 = vadd.f32 %v9044, %v9045
        %v9047 = vsel %vm2277, %v9002, 0.0
        %v9048 = vadd.f32 %v9046, %v9047
        %v9049 = vrot.slane %v9048, 4
        %v9050 = vadd.f32 %v9048, %v9049
        %v9051 = vrot.slane %v9050, 2
        %v9052 = vadd.f32 %v9050, %v9051
        %v9053 = vrot.slane %v9052, 1
        %v9054 = vadd.f32 %v9052, %v9053
        %v9055 = vmul.f32 %v9015, %v2326
        %v9056 = vmul.f32 %v9028, %v2326
        %v9057 = vmul.f32 %v9041, %v2326
        %v9058 = vmul.f32 %v9054, %v2326
        %vm9063 = vcmask 1041409
        %v9064 = vsel %vm9063, %v9056, %v9055
        %vm9065 = vcmask 1042434
        %v9066 = vsel %vm9065, %v9057, %v9064
        %vm9067 = vcmask 1043459
        %v9068 = vsel %vm9067, %v9058, %v9066
        %vm9070 = vcmask 257024
        %9071 = vst.msk [vmem:[%s433] sm:$0xf] %vm9070, %v9068
        %s9072 = sand.u32 %s313, 1
        %s9073 = scalar_lea.sflag [#allocation3], %s9072
        %s9074 = sand.u32 %s313, 1
        %s9075 = smul.addr %s9074, 4
        %s9076 = scalar_lea.vmem [#allocation2], %s9075
        // Predicated region
        $region73: #{wav2vec2_pooled_forward.1} parent=71 // pred_check
          %p9077 = pneg %p323
        $region74: #{wav2vec2_pooled_forward.1} parent=71 // pred_check_branch
          %9079 = sbr.rel (%p9077) target = $region76
        $region75: #{wav2vec2_pooled_forward.1} parent=71 // pred_region
          %s9081 = ssub.s32 64, 64
          %9082 = vsyncadd %s9073, %s9081
          %s9083 = smul.addr %s27, 64
          %s9084 = scalar_lea.hbm %s13, %s9083
          %s9086 = sshll.u32 %s9076, 4
          %s9087 = int_to_ptr.vmem [resolvable:$true] %s9086
          %9089 = dma.vmem_to_hbm [thread:$0]  %s9087, 64, %s9084, %s9073
        $region76: #{wav2vec2_pooled_forward.1} parent=71 // pred_fallthru
          _
      $region72: #{wav2vec2_pooled_forward.1} parent=5 // pred_fallthru
        _
      %p9090 = scmp.le.s32.totalorder 2, %s22
      // Predicated region
      $region77: #{wav2vec2_pooled_forward.1} parent=5 // pred_check
        %p9091 = pneg %p9090
      $region78: #{wav2vec2_pooled_forward.1} parent=5 // pred_check_branch
        %9093 = sbr.rel (%p9091) target = $region80
      $region79: #{wav2vec2_pooled_forward.1} parent=5 // pred_region
        %s9094 = ssub.s32 %s22, 2
        // Predicated region
        $region81: #{wav2vec2_pooled_forward.1} parent=79 // pred_check
          %p9095 = pneg %p329
        $region82: #{wav2vec2_pooled_forward.1} parent=79 // pred_check_branch
          %9097 = sbr.rel (%p9095) target = $region84
        $region83: #{wav2vec2_pooled_forward.1} parent=79 // pred_region
          %s9098 = sand.u32 %s314, 1
          %s9099 = scalar_lea.sflag [#allocation3], %s9098
          %s9100 = sand.u32 %s314, 1
          %s9101 = smul.addr %s9100, 4
          %s9102 = scalar_lea.vmem [#allocation2], %s9101
          %9103 = dma.done %s9099, 64
        $region84: #{wav2vec2_pooled_forward.1} parent=79 // pred_fallthru
          _
      $region80: #{wav2vec2_pooled_forward.1} parent=5 // pred_fallthru
        _
    $region6: #{wav2vec2_pooled_forward.1} parent=1 // loop_footer
      %s26 = sadd.s32 1, %s22
    $region7: #{wav2vec2_pooled_forward.1} parent=1 // loop_footer_branch
      %21 = sbr.rel target = $region3
    $region8: #{wav2vec2_pooled_forward.1} parent=1 // loop_exit
      _
    %9104 = vsyncpa [#allocation3], 1
    %s9105 = scalar_lea.sflag [#allocation3], 1
    %9106 = vsyncpa %s9105, 1

</llo_original>
